<compile_context>
chip_gen: v5e
topology: v5e:2x2
jax: 0.10.0
libtpu: 0.0.40
codegen_flags: <defaults>
</compile_context>

<pallas_src>
import jax
import jax.numpy as jnp
from jax import lax
from jax.experimental import pallas as pl
from jax.experimental.pallas import tpu as pltpu

WP = 32          # padded spatial extent (power of two >= 28 + 2)
MP = WP * WP     # flattened padded positions per image = 1024 lanes
REAL = 28        # real image extent


# ----------------------------------------------------------------------------
# In-kernel building blocks (operate on lane-major (channels, MP) values)
# ----------------------------------------------------------------------------
def _shift(x, off):
    """tap[p] = x[(p + off) mod n] along lanes (static offset, XLU rotate)."""
    if off == 0:
        return x
    n = x.shape[-1]
    return pltpu.roll(x, (-off) % n, axis=1)


def _conv3x3(x, w_ref, b_ref, *, cin, dil, mask):
    """3x3 'same' conv + bias + ReLU on a (cin, MP) lane-major value.

    Each spatial tap is a whole-store lane rotation; `dil` = 1 for the 28x28
    layers and 2 for the layers that (logically) run on the pooled 14x14 grid
    but are evaluated on the 32x32 grid with dilated taps.  `mask` re-zeroes
    the lanes the next consumer must read as SAME zero-padding.
    """
    acc = None
    for ky in range(3):
        for kx in range(3):
            off = dil * ((ky - 1) * WP + (kx - 1))
            tap = _shift(x, off)                      # (cin, MP)
            w = w_ref[ky * 3 + kx]                    # (cout, cin)
            if cin == 1:
                term = w * tap                        # VPU outer product
            else:
                term = jnp.dot(w, tap, preferred_element_type=jnp.float32)
            acc = term if acc is None else acc + term
    out = jnp.maximum(acc + b_ref[...], 0.0)          # bias (cout,1) broadcast
    if mask is not None:
        out = jnp.where(mask, out, 0.0)
    return out


def _maxpool2x2(x, *, step):
    """2x2 / stride-2 max pool as two whole-store roll+max passes.

    The stride-2 decimation is not materialized; downstream consumers read the
    pooled values at the anchor lanes only (dilated conv taps / FC weight).
    step=1 pools the stride-1 grid, step=2 pools the dilation-2 grid.
    """
    h = jnp.maximum(x, _shift(x, step))
    return jnp.maximum(h, _shift(h, step * WP))


# ----------------------------------------------------------------------------
# Fused forward kernel (one grid step per batch element)
# ----------------------------------------------------------------------------
def _fused_kernel(x_ref, w1_ref, b1_ref, w2_ref, b2_ref, w3_ref, b3_ref,
                  w4_ref, b4_ref, wfc_ref, bfc_ref, o_ref):
    # Hoisted masks: built once, shared by both conv pairs of each geometry.
    lane = lax.broadcasted_iota(jnp.int32, (1, MP), 1)
    xx = lane & (WP - 1)
    yy = lane >> 5
    # interior of the zero-padded 28x28 image
    interior = (xx >= 1) & (xx <= REAL) & (yy >= 1) & (yy <= REAL)
    # anchor lanes of the pooled 14x14 grid: (y, x) odd and <= 27
    anchor = ((xx & 1) == 1) & ((yy & 1) == 1) & (xx <= 27) & (yy <= 27)

    x0 = x_ref[0]                                          # (1, MP), padded
    c1 = _conv3x3(x0, w1_ref, b1_ref, cin=1, dil=1, mask=interior)
    c2 = _conv3x3(c1, w2_ref, b2_ref, cin=10, dil=1, mask=None)
    p1 = jnp.where(anchor, _maxpool2x2(c2, step=1), 0.0)   # pooled @ anchors
    c3 = _conv3x3(p1, w3_ref, b3_ref, cin=16, dil=2, mask=anchor)
    c4 = _conv3x3(c3, w4_ref, b4_ref, cin=20, dil=2, mask=None)
    p2 = _maxpool2x2(c4, step=2)                           # valid @ 1-mod-4 anchors

    # FC: pool2 decimation + PyTorch NCHW flatten order are folded into
    # wfc_ref (zeros off the 49 anchor lanes) -> 10 lane-dense K=1024 dots.
    logits = bfc_ref[...]                                  # (1, 10)
    for c in range(10):
        logits = logits + lax.dot_general(
            p2[c:c + 1, :], wfc_ref[c],
            dimension_numbers=(((1,), (1,)), ((), ())),
            preferred_element_type=jnp.float32)
    o_ref[0] = logits


@jax.jit
def simple_cnn_forward(prep, x_nchw):
    batch = x_nchw.shape[0]
    assert x_nchw.shape[1:] == (1, 28, 28)

    # Minimal XLA glue: zero-pad the 28x28 image into the 32x32 grid with a
    # one-pixel top/left halo, flatten to lanes.  (8 KB; no transposes.)
    x = jnp.pad(x_nchw[:, 0].astype(jnp.float32),
                ((0, 0), (1, WP - 1 - REAL), (1, WP - 1 - REAL)))
    x = x.reshape(batch, 1, MP)

    flops = (2 * batch * MP * 9 * (1 * 10 + 10 * 16 + 16 * 20 + 20 * 10)
             + 2 * batch * 10 * 10 * MP)
    param_bytes = 4 * sum(int(v.size) for v in jax.tree_util.tree_leaves(prep))
    bytes_accessed = 4 * batch * MP + param_bytes + 4 * batch * 10

    out = pl.pallas_call(
        _fused_kernel,
        grid=(batch,),
        out_shape=jax.ShapeDtypeStruct((batch, 1, 10), jnp.float32),
        in_specs=[
            pl.BlockSpec((1, 1, MP), lambda b: (b, 0, 0)),      # x (per-batch)
            pl.BlockSpec((9, 10, 1), lambda b: (0, 0, 0)),      # w1
            pl.BlockSpec((10, 1), lambda b: (0, 0)),            # b1
            pl.BlockSpec((9, 16, 10), lambda b: (0, 0, 0)),     # w2
            pl.BlockSpec((16, 1), lambda b: (0, 0)),            # b2
            pl.BlockSpec((9, 20, 16), lambda b: (0, 0, 0)),     # w3
            pl.BlockSpec((20, 1), lambda b: (0, 0)),            # b3
            pl.BlockSpec((9, 10, 20), lambda b: (0, 0, 0)),     # w4
            pl.BlockSpec((10, 1), lambda b: (0, 0)),            # b4
            pl.BlockSpec((10, 10, MP), lambda b: (0, 0, 0)),    # fc weight
            pl.BlockSpec((1, 10), lambda b: (0, 0)),            # fc bias
        ],
        out_specs=pl.BlockSpec((1, 1, 10), lambda b: (b, 0, 0)),
        compiler_params=pltpu.CompilerParams(
            dimension_semantics=("parallel",),      # batch across v7x cores
            vmem_limit_bytes=8 * 1024 * 1024),      # ~3 MiB used + headroom
        cost_estimate=pl.CostEstimate(flops=flops, transcendentals=0,
                                      bytes_accessed=bytes_accessed),
    )(x, prep["w1"], prep["b1"], prep["w2"], prep["b2"],
      prep["w3"], prep["b3"], prep["w4"], prep["b4"],
      prep["wfc"], prep["bfc"])
    return out.reshape(batch, 10)


# ----------------------------------------------------------------------------
# One-time parameter re-layout for the fused kernel (pure glue, done once)
# ----------------------------------------------------------------------------
def prepare_params(params):
    prep = {}
    for i in (1, 2, 3, 4):
        w = params[f"w{i}"]                               # (3,3,cin,cout) HWIO
        cout, cin = w.shape[3], w.shape[2]
        prep[f"w{i}"] = jnp.transpose(w, (0, 1, 3, 2)).reshape(9, cout, cin)
        prep[f"b{i}"] = params[f"b{i}"].reshape(-1, 1)
    # Fold (a) PyTorch's NCHW flatten order (c*49 + y*7 + x) and (b) pool2's
    # stride-2 decimation into a per-channel (10 out, MP) weight that is zero
    # at every lane except the 49 pool2 anchor lanes (4*yo+1, 4*xo+1).
    wfc = params["wfc"].reshape(10, 7, 7, 10)             # (c, yo, xo, n)
    idx = 4 * jnp.arange(7) + 1
    pos = (idx[:, None] * WP + idx[None, :]).reshape(-1)  # (49,) anchor lanes
    big = jnp.zeros((10, 10, MP), jnp.float32)
    big = big.at[:, :, pos].set(
        jnp.transpose(wfc, (0, 3, 1, 2)).reshape(10, 10, 49))
    prep["wfc"] = big
    prep["bfc"] = params["bfc"].reshape(1, 10)
    return prep


# ----------------------------------------------------------------------------
# Pure-JAX reference (correctness check only)
# ----------------------------------------------------------------------------
def reference_forward(params, x_nchw):
    def conv_relu(x, w, b):
        y = jax.lax.conv_general_dilated(
            x, w, window_strides=(1, 1), padding="SAME",
            dimension_numbers=("NHWC", "HWIO", "NHWC"))
        return jnp.maximum(y + b, 0.0)

    def pool(x):
        bsz, h, wd, c = x.shape
        return x.reshape(bsz, h // 2, 2, wd // 2, 2, c).max(axis=(2, 4))

    x = jnp.transpose(x_nchw, (0, 2, 3, 1))
    x = conv_relu(x, params["w1"], params["b1"])
    x = pool(conv_relu(x, params["w2"], params["b2"]))
    x = conv_relu(x, params["w3"], params["b3"])
    x = pool(conv_relu(x, params["w4"], params["b4"]))
    x = jnp.transpose(x, (0, 3, 1, 2)).reshape(x.shape[0], -1)
    return x @ params["wfc"] + params["bfc"]


# ----------------------------------------------------------------------------
# Deterministic parameter init (PyTorch-default-style uniform bounds)
# ----------------------------------------------------------------------------
def init_params(key):
    def conv_init(key, cin, cout):
        kw, kb = jax.random.split(key)
        bound = 1.0 / jnp.sqrt(cin * 9.0)
        w = jax.random.uniform(kw, (3, 3, cin, cout), jnp.float32, -bound, bound)
        b = jax.random.uniform(kb, (cout,), jnp.float32, -bound, bound)
        return w, b

    def fc_init(key, fin, fout):
        kw, kb = jax.random.split(key)
        bound = 1.0 / jnp.sqrt(float(fin))
        w = jax.random.uniform(kw, (fin, fout), jnp.float32, -bound, bound)
        b = jax.random.uniform(kb, (fout,), jnp.float32, -bound, bound)
        return w, b

    keys = jax.random.split(key, 5)
    p = {}
    p["w1"], p["b1"] = conv_init(keys[0], 1, 10)
    p["w2"], p["b2"] = conv_init(keys[1], 10, 16)
    p["w3"], p["b3"] = conv_init(keys[2], 16, 20)
    p["w4"], p["b4"] = conv_init(keys[3], 20, 10)
    p["wfc"], p["bfc"] = fc_init(keys[4], 10 * 7 * 7, 10)
    return p


if __name__ == "__main__":
    key = jax.random.PRNGKey(0)
    kx, kp = jax.random.split(key)
    # fc expects 10*7*7 after two 2x2 pools -> 28x28 single-channel input.
    x = jax.random.normal(kx, (2, 1, 28, 28), jnp.float32)
    params = init_params(kp)
    prep = prepare_params(params)

    out = jax.block_until_ready(simple_cnn_forward(prep, x))
    ref = jax.block_until_ready(reference_forward(params, x))

    assert out.shape == (2, 10), out.shape
    # Both paths use the MXU at default matmul precision, so allow ~1e-2.
    err = float(jnp.abs(out - ref).max())
    assert jnp.allclose(out, ref, rtol=1e-2, atol=1e-2), err
    print("KERNEL_OK")
</pallas_src>

<mosaic_0001>
module attributes {stable_mosaic.version = 11 : i64} {
  func.func @_fused_kernel(%arg0: i32, %arg1: memref<1x1x1024xf32, #tpu.memory_space<vmem>>, %arg2: memref<9x10x1xf32, #tpu.memory_space<vmem>>, %arg3: memref<10x1xf32, #tpu.memory_space<vmem>>, %arg4: memref<9x16x10xf32, #tpu.memory_space<vmem>>, %arg5: memref<16x1xf32, #tpu.memory_space<vmem>>, %arg6: memref<9x20x16xf32, #tpu.memory_space<vmem>>, %arg7: memref<20x1xf32, #tpu.memory_space<vmem>>, %arg8: memref<9x10x20xf32, #tpu.memory_space<vmem>>, %arg9: memref<10x1xf32, #tpu.memory_space<vmem>>, %arg10: memref<10x10x1024xf32, #tpu.memory_space<vmem>>, %arg11: memref<1x10xf32, #tpu.memory_space<vmem>>, %arg12: memref<1x1x10xf32, #tpu.memory_space<vmem>>) attributes {dimension_semantics = [#tpu.dimension_semantics<parallel>], iteration_bounds = array<i64: 2>, scalar_prefetch = 0 : i64, scratch_operands = 0 : i64, tpu.core_type = #tpu.core_type<tc>, window_params = [{transform_indices = @transform_0, window_bounds = array<i64: 1, 1, 1024>}, {pipeline_mode = #tpu.pipeline_mode<synchronous>, transform_indices = @transform_1, window_bounds = array<i64: 9, 10, 1>}, {pipeline_mode = #tpu.pipeline_mode<synchronous>, transform_indices = @transform_2, window_bounds = array<i64: 10, 1>}, {pipeline_mode = #tpu.pipeline_mode<synchronous>, transform_indices = @transform_3, window_bounds = array<i64: 9, 16, 10>}, {pipeline_mode = #tpu.pipeline_mode<synchronous>, transform_indices = @transform_4, window_bounds = array<i64: 16, 1>}, {pipeline_mode = #tpu.pipeline_mode<synchronous>, transform_indices = @transform_5, window_bounds = array<i64: 9, 20, 16>}, {pipeline_mode = #tpu.pipeline_mode<synchronous>, transform_indices = @transform_6, window_bounds = array<i64: 20, 1>}, {pipeline_mode = #tpu.pipeline_mode<synchronous>, transform_indices = @transform_7, window_bounds = array<i64: 9, 10, 20>}, {pipeline_mode = #tpu.pipeline_mode<synchronous>, transform_indices = @transform_8, window_bounds = array<i64: 10, 1>}, {pipeline_mode = #tpu.pipeline_mode<synchronous>, transform_indices = @transform_9, window_bounds = array<i64: 10, 10, 1024>}, {pipeline_mode = #tpu.pipeline_mode<synchronous>, transform_indices = @transform_10, window_bounds = array<i64: 1, 10>}, {transform_indices = @transform_11, window_bounds = array<i64: 1, 1, 10>}]} {
    %0 = tpu.iota {dimensions = array<i32: 1>} : vector<1x1024xi32>
    %c31_i32 = arith.constant 31 : i32
    %1 = vector.broadcast %c31_i32 : i32 to vector<1x1024xi32>
    %2 = arith.andi %0, %1 : vector<1x1024xi32>
    %c5_i32 = arith.constant 5 : i32
    %3 = vector.broadcast %c5_i32 : i32 to vector<1x1024xi32>
    %4 = arith.shrsi %0, %3 : vector<1x1024xi32>
    %c1_i32 = arith.constant 1 : i32
    %5 = vector.broadcast %c1_i32 : i32 to vector<1x1024xi32>
    %6 = arith.cmpi sge, %2, %5 : vector<1x1024xi32>
    %c28_i32 = arith.constant 28 : i32
    %7 = vector.broadcast %c28_i32 : i32 to vector<1x1024xi32>
    %8 = arith.cmpi sle, %2, %7 : vector<1x1024xi32>
    %9 = arith.andi %6, %8 : vector<1x1024xi1>
    %c1_i32_0 = arith.constant 1 : i32
    %10 = vector.broadcast %c1_i32_0 : i32 to vector<1x1024xi32>
    %11 = arith.cmpi sge, %4, %10 : vector<1x1024xi32>
    %12 = arith.andi %9, %11 : vector<1x1024xi1>
    %c28_i32_1 = arith.constant 28 : i32
    %13 = vector.broadcast %c28_i32_1 : i32 to vector<1x1024xi32>
    %14 = arith.cmpi sle, %4, %13 : vector<1x1024xi32>
    %15 = arith.andi %12, %14 : vector<1x1024xi1>
    %c1_i32_2 = arith.constant 1 : i32
    %16 = vector.broadcast %c1_i32_2 : i32 to vector<1x1024xi32>
    %17 = arith.andi %2, %16 : vector<1x1024xi32>
    %c1_i32_3 = arith.constant 1 : i32
    %18 = vector.broadcast %c1_i32_3 : i32 to vector<1x1024xi32>
    %19 = arith.cmpi eq, %17, %18 : vector<1x1024xi32>
    %c1_i32_4 = arith.constant 1 : i32
    %20 = vector.broadcast %c1_i32_4 : i32 to vector<1x1024xi32>
    %21 = arith.andi %4, %20 : vector<1x1024xi32>
    %c1_i32_5 = arith.constant 1 : i32
    %22 = vector.broadcast %c1_i32_5 : i32 to vector<1x1024xi32>
    %23 = arith.cmpi eq, %21, %22 : vector<1x1024xi32>
    %24 = arith.andi %19, %23 : vector<1x1024xi1>
    %c27_i32 = arith.constant 27 : i32
    %25 = vector.broadcast %c27_i32 : i32 to vector<1x1024xi32>
    %26 = arith.cmpi sle, %2, %25 : vector<1x1024xi32>
    %27 = arith.andi %24, %26 : vector<1x1024xi1>
    %c27_i32_6 = arith.constant 27 : i32
    %28 = vector.broadcast %c27_i32_6 : i32 to vector<1x1024xi32>
    %29 = arith.cmpi sle, %4, %28 : vector<1x1024xi32>
    %30 = arith.andi %27, %29 : vector<1x1024xi1>
    %c0 = arith.constant 0 : index
    %c0_7 = arith.constant 0 : index
    %c0_8 = arith.constant 0 : index
    %31 = vector.load %arg1[%c0, %c0_7, %c0_8] : memref<1x1x1024xf32, #tpu.memory_space<vmem>>, vector<1x1x1024xf32>
    %32 = vector.shape_cast %31 : vector<1x1x1024xf32> to vector<1x1024xf32>
    %c33_i32 = arith.constant 33 : i32
    %33 = tpu.dynamic_rotate %32 by %c33_i32 dim 1 : vector<1x1024xf32>, i32 -> vector<1x1024xf32>
    %c0_9 = arith.constant 0 : index
    %c0_10 = arith.constant 0 : index
    %c0_11 = arith.constant 0 : index
    %34 = vector.load %arg2[%c0_9, %c0_10, %c0_11] : memref<9x10x1xf32, #tpu.memory_space<vmem>>, vector<1x10x1xf32>
    %35 = vector.shape_cast %34 : vector<1x10x1xf32> to vector<10x1xf32>
    %36 = vector.broadcast %35 : vector<10x1xf32> to vector<10x1024xf32>
    %37 = vector.broadcast %33 : vector<1x1024xf32> to vector<10x1024xf32>
    %38 = arith.mulf %36, %37 : vector<10x1024xf32>
    %c32_i32 = arith.constant 32 : i32
    %39 = tpu.dynamic_rotate %32 by %c32_i32 dim 1 : vector<1x1024xf32>, i32 -> vector<1x1024xf32>
    %c1 = arith.constant 1 : index
    %c0_12 = arith.constant 0 : index
    %c0_13 = arith.constant 0 : index
    %40 = vector.load %arg2[%c1, %c0_12, %c0_13] : memref<9x10x1xf32, #tpu.memory_space<vmem>>, vector<1x10x1xf32>
    %41 = vector.shape_cast %40 : vector<1x10x1xf32> to vector<10x1xf32>
    %42 = vector.broadcast %41 : vector<10x1xf32> to vector<10x1024xf32>
    %43 = vector.broadcast %39 : vector<1x1024xf32> to vector<10x1024xf32>
    %44 = arith.mulf %42, %43 : vector<10x1024xf32>
    %45 = arith.addf %38, %44 : vector<10x1024xf32>
    %c31_i32_14 = arith.constant 31 : i32
    %46 = tpu.dynamic_rotate %32 by %c31_i32_14 dim 1 : vector<1x1024xf32>, i32 -> vector<1x1024xf32>
    %c2 = arith.constant 2 : index
    %c0_15 = arith.constant 0 : index
    %c0_16 = arith.constant 0 : index
    %47 = vector.load %arg2[%c2, %c0_15, %c0_16] : memref<9x10x1xf32, #tpu.memory_space<vmem>>, vector<1x10x1xf32>
    %48 = vector.shape_cast %47 : vector<1x10x1xf32> to vector<10x1xf32>
    %49 = vector.broadcast %48 : vector<10x1xf32> to vector<10x1024xf32>
    %50 = vector.broadcast %46 : vector<1x1024xf32> to vector<10x1024xf32>
    %51 = arith.mulf %49, %50 : vector<10x1024xf32>
    %52 = arith.addf %45, %51 : vector<10x1024xf32>
    %c1_i32_17 = arith.constant 1 : i32
    %53 = tpu.dynamic_rotate %32 by %c1_i32_17 dim 1 : vector<1x1024xf32>, i32 -> vector<1x1024xf32>
    %c3 = arith.constant 3 : index
    %c0_18 = arith.constant 0 : index
    %c0_19 = arith.constant 0 : index
    %54 = vector.load %arg2[%c3, %c0_18, %c0_19] : memref<9x10x1xf32, #tpu.memory_space<vmem>>, vector<1x10x1xf32>
    %55 = vector.shape_cast %54 : vector<1x10x1xf32> to vector<10x1xf32>
    %56 = vector.broadcast %55 : vector<10x1xf32> to vector<10x1024xf32>
    %57 = vector.broadcast %53 : vector<1x1024xf32> to vector<10x1024xf32>
    %58 = arith.mulf %56, %57 : vector<10x1024xf32>
    %59 = arith.addf %52, %58 : vector<10x1024xf32>
    %c4 = arith.constant 4 : index
    %c0_20 = arith.constant 0 : index
    %c0_21 = arith.constant 0 : index
    %60 = vector.load %arg2[%c4, %c0_20, %c0_21] : memref<9x10x1xf32, #tpu.memory_space<vmem>>, vector<1x10x1xf32>
    %61 = vector.shape_cast %60 : vector<1x10x1xf32> to vector<10x1xf32>
    %62 = vector.broadcast %61 : vector<10x1xf32> to vector<10x1024xf32>
    %63 = vector.broadcast %32 : vector<1x1024xf32> to vector<10x1024xf32>
    %64 = arith.mulf %62, %63 : vector<10x1024xf32>
    %65 = arith.addf %59, %64 : vector<10x1024xf32>
    %c1023_i32 = arith.constant 1023 : i32
    %66 = tpu.dynamic_rotate %32 by %c1023_i32 dim 1 : vector<1x1024xf32>, i32 -> vector<1x1024xf32>
    %c5 = arith.constant 5 : index
    %c0_22 = arith.constant 0 : index
    %c0_23 = arith.constant 0 : index
    %67 = vector.load %arg2[%c5, %c0_22, %c0_23] : memref<9x10x1xf32, #tpu.memory_space<vmem>>, vector<1x10x1xf32>
    %68 = vector.shape_cast %67 : vector<1x10x1xf32> to vector<10x1xf32>
    %69 = vector.broadcast %68 : vector<10x1xf32> to vector<10x1024xf32>
    %70 = vector.broadcast %66 : vector<1x1024xf32> to vector<10x1024xf32>
    %71 = arith.mulf %69, %70 : vector<10x1024xf32>
    %72 = arith.addf %65, %71 : vector<10x1024xf32>
    %c993_i32 = arith.constant 993 : i32
    %73 = tpu.dynamic_rotate %32 by %c993_i32 dim 1 : vector<1x1024xf32>, i32 -> vector<1x1024xf32>
    %c6 = arith.constant 6 : index
    %c0_24 = arith.constant 0 : index
    %c0_25 = arith.constant 0 : index
    %74 = vector.load %arg2[%c6, %c0_24, %c0_25] : memref<9x10x1xf32, #tpu.memory_space<vmem>>, vector<1x10x1xf32>
    %75 = vector.shape_cast %74 : vector<1x10x1xf32> to vector<10x1xf32>
    %76 = vector.broadcast %75 : vector<10x1xf32> to vector<10x1024xf32>
    %77 = vector.broadcast %73 : vector<1x1024xf32> to vector<10x1024xf32>
    %78 = arith.mulf %76, %77 : vector<10x1024xf32>
    %79 = arith.addf %72, %78 : vector<10x1024xf32>
    %c992_i32 = arith.constant 992 : i32
    %80 = tpu.dynamic_rotate %32 by %c992_i32 dim 1 : vector<1x1024xf32>, i32 -> vector<1x1024xf32>
    %c7 = arith.constant 7 : index
    %c0_26 = arith.constant 0 : index
    %c0_27 = arith.constant 0 : index
    %81 = vector.load %arg2[%c7, %c0_26, %c0_27] : memref<9x10x1xf32, #tpu.memory_space<vmem>>, vector<1x10x1xf32>
    %82 = vector.shape_cast %81 : vector<1x10x1xf32> to vector<10x1xf32>
    %83 = vector.broadcast %82 : vector<10x1xf32> to vector<10x1024xf32>
    %84 = vector.broadcast %80 : vector<1x1024xf32> to vector<10x1024xf32>
    %85 = arith.mulf %83, %84 : vector<10x1024xf32>
    %86 = arith.addf %79, %85 : vector<10x1024xf32>
    %c991_i32 = arith.constant 991 : i32
    %87 = tpu.dynamic_rotate %32 by %c991_i32 dim 1 : vector<1x1024xf32>, i32 -> vector<1x1024xf32>
    %c8 = arith.constant 8 : index
    %c0_28 = arith.constant 0 : index
    %c0_29 = arith.constant 0 : index
    %88 = vector.load %arg2[%c8, %c0_28, %c0_29] : memref<9x10x1xf32, #tpu.memory_space<vmem>>, vector<1x10x1xf32>
    %89 = vector.shape_cast %88 : vector<1x10x1xf32> to vector<10x1xf32>
    %90 = vector.broadcast %89 : vector<10x1xf32> to vector<10x1024xf32>
    %91 = vector.broadcast %87 : vector<1x1024xf32> to vector<10x1024xf32>
    %92 = arith.mulf %90, %91 : vector<10x1024xf32>
    %93 = arith.addf %86, %92 : vector<10x1024xf32>
    %c0_30 = arith.constant 0 : index
    %c0_31 = arith.constant 0 : index
    %94 = vector.load %arg3[%c0_30, %c0_31] : memref<10x1xf32, #tpu.memory_space<vmem>>, vector<10x1xf32>
    %95 = vector.broadcast %94 : vector<10x1xf32> to vector<10x1024xf32>
    %96 = arith.addf %93, %95 : vector<10x1024xf32>
    %cst = arith.constant 0.000000e+00 : f32
    %97 = vector.broadcast %cst : f32 to vector<10x1024xf32>
    %98 = arith.maximumf %96, %97 : vector<10x1024xf32>
    %cst_32 = arith.constant 0.000000e+00 : f32
    %99 = vector.shape_cast %15 : vector<1x1024xi1> to vector<1x1024xi1>
    %100 = vector.broadcast %99 : vector<1x1024xi1> to vector<10x1024xi1>
    %101 = vector.broadcast %cst_32 : f32 to vector<10x1024xf32>
    %102 = arith.select %100, %98, %101 : vector<10x1024xi1>, vector<10x1024xf32>
    %c33_i32_33 = arith.constant 33 : i32
    %103 = tpu.dynamic_rotate %102 by %c33_i32_33 dim 1 : vector<10x1024xf32>, i32 -> vector<10x1024xf32>
    %c0_34 = arith.constant 0 : index
    %c0_35 = arith.constant 0 : index
    %c0_36 = arith.constant 0 : index
    %104 = vector.load %arg4[%c0_34, %c0_35, %c0_36] : memref<9x16x10xf32, #tpu.memory_space<vmem>>, vector<1x16x10xf32>
    %105 = vector.shape_cast %104 : vector<1x16x10xf32> to vector<16x10xf32>
    %cst_37 = arith.constant dense<0.000000e+00> : vector<16x1024xf32>
    %106 = tpu.matmul %105, %103, %cst_37 {dimension_numbers = #tpu.dot_dimension_numbers<[1], [0], [0], [1], [0, 0, 1, 1], [], []>} : vector<16x10xf32>, vector<10x1024xf32>, vector<16x1024xf32> -> vector<16x1024xf32>
    %c32_i32_38 = arith.constant 32 : i32
    %107 = tpu.dynamic_rotate %102 by %c32_i32_38 dim 1 : vector<10x1024xf32>, i32 -> vector<10x1024xf32>
    %c1_39 = arith.constant 1 : index
    %c0_40 = arith.constant 0 : index
    %c0_41 = arith.constant 0 : index
    %108 = vector.load %arg4[%c1_39, %c0_40, %c0_41] : memref<9x16x10xf32, #tpu.memory_space<vmem>>, vector<1x16x10xf32>
    %109 = vector.shape_cast %108 : vector<1x16x10xf32> to vector<16x10xf32>
    %cst_42 = arith.constant dense<0.000000e+00> : vector<16x1024xf32>
    %110 = tpu.matmul %109, %107, %cst_42 {dimension_numbers = #tpu.dot_dimension_numbers<[1], [0], [0], [1], [0, 0, 1, 1], [], []>} : vector<16x10xf32>, vector<10x1024xf32>, vector<16x1024xf32> -> vector<16x1024xf32>
    %111 = arith.addf %106, %110 : vector<16x1024xf32>
    %c31_i32_43 = arith.constant 31 : i32
    %112 = tpu.dynamic_rotate %102 by %c31_i32_43 dim 1 : vector<10x1024xf32>, i32 -> vector<10x1024xf32>
    %c2_44 = arith.constant 2 : index
    %c0_45 = arith.constant 0 : index
    %c0_46 = arith.constant 0 : index
    %113 = vector.load %arg4[%c2_44, %c0_45, %c0_46] : memref<9x16x10xf32, #tpu.memory_space<vmem>>, vector<1x16x10xf32>
    %114 = vector.shape_cast %113 : vector<1x16x10xf32> to vector<16x10xf32>
    %cst_47 = arith.constant dense<0.000000e+00> : vector<16x1024xf32>
    %115 = tpu.matmul %114, %112, %cst_47 {dimension_numbers = #tpu.dot_dimension_numbers<[1], [0], [0], [1], [0, 0, 1, 1], [], []>} : vector<16x10xf32>, vector<10x1024xf32>, vector<16x1024xf32> -> vector<16x1024xf32>
    %116 = arith.addf %111, %115 : vector<16x1024xf32>
    %c1_i32_48 = arith.constant 1 : i32
    %117 = tpu.dynamic_rotate %102 by %c1_i32_48 dim 1 : vector<10x1024xf32>, i32 -> vector<10x1024xf32>
    %c3_49 = arith.constant 3 : index
    %c0_50 = arith.constant 0 : index
    %c0_51 = arith.constant 0 : index
    %118 = vector.load %arg4[%c3_49, %c0_50, %c0_51] : memref<9x16x10xf32, #tpu.memory_space<vmem>>, vector<1x16x10xf32>
    %119 = vector.shape_cast %118 : vector<1x16x10xf32> to vector<16x10xf32>
    %cst_52 = arith.constant dense<0.000000e+00> : vector<16x1024xf32>
    %120 = tpu.matmul %119, %117, %cst_52 {dimension_numbers = #tpu.dot_dimension_numbers<[1], [0], [0], [1], [0, 0, 1, 1], [], []>} : vector<16x10xf32>, vector<10x1024xf32>, vector<16x1024xf32> -> vector<16x1024xf32>
    %121 = arith.addf %116, %120 : vector<16x1024xf32>
    %c4_53 = arith.constant 4 : index
    %c0_54 = arith.constant 0 : index
    %c0_55 = arith.constant 0 : index
    %122 = vector.load %arg4[%c4_53, %c0_54, %c0_55] : memref<9x16x10xf32, #tpu.memory_space<vmem>>, vector<1x16x10xf32>
    %123 = vector.shape_cast %122 : vector<1x16x10xf32> to vector<16x10xf32>
    %cst_56 = arith.constant dense<0.000000e+00> : vector<16x1024xf32>
    %124 = tpu.matmul %123, %102, %cst_56 {dimension_numbers = #tpu.dot_dimension_numbers<[1], [0], [0], [1], [0, 0, 1, 1], [], []>} : vector<16x10xf32>, vector<10x1024xf32>, vector<16x1024xf32> -> vector<16x1024xf32>
    %125 = arith.addf %121, %124 : vector<16x1024xf32>
    %c1023_i32_57 = arith.constant 1023 : i32
    %126 = tpu.dynamic_rotate %102 by %c1023_i32_57 dim 1 : vector<10x1024xf32>, i32 -> vector<10x1024xf32>
    %c5_58 = arith.constant 5 : index
    %c0_59 = arith.constant 0 : index
    %c0_60 = arith.constant 0 : index
    %127 = vector.load %arg4[%c5_58, %c0_59, %c0_60] : memref<9x16x10xf32, #tpu.memory_space<vmem>>, vector<1x16x10xf32>
    %128 = vector.shape_cast %127 : vector<1x16x10xf32> to vector<16x10xf32>
    %cst_61 = arith.constant dense<0.000000e+00> : vector<16x1024xf32>
    %129 = tpu.matmul %128, %126, %cst_61 {dimension_numbers = #tpu.dot_dimension_numbers<[1], [0], [0], [1], [0, 0, 1, 1], [], []>} : vector<16x10xf32>, vector<10x1024xf32>, vector<16x1024xf32> -> vector<16x1024xf32>
    %130 = arith.addf %125, %129 : vector<16x1024xf32>
    %c993_i32_62 = arith.constant 993 : i32
    %131 = tpu.dynamic_rotate %102 by %c993_i32_62 dim 1 : vector<10x1024xf32>, i32 -> vector<10x1024xf32>
    %c6_63 = arith.constant 6 : index
    %c0_64 = arith.constant 0 : index
    %c0_65 = arith.constant 0 : index
    %132 = vector.load %arg4[%c6_63, %c0_64, %c0_65] : memref<9x16x10xf32, #tpu.memory_space<vmem>>, vector<1x16x10xf32>
    %133 = vector.shape_cast %132 : vector<1x16x10xf32> to vector<16x10xf32>
    %cst_66 = arith.constant dense<0.000000e+00> : vector<16x1024xf32>
    %134 = tpu.matmul %133, %131, %cst_66 {dimension_numbers = #tpu.dot_dimension_numbers<[1], [0], [0], [1], [0, 0, 1, 1], [], []>} : vector<16x10xf32>, vector<10x1024xf32>, vector<16x1024xf32> -> vector<16x1024xf32>
    %135 = arith.addf %130, %134 : vector<16x1024xf32>
    %c992_i32_67 = arith.constant 992 : i32
    %136 = tpu.dynamic_rotate %102 by %c992_i32_67 dim 1 : vector<10x1024xf32>, i32 -> vector<10x1024xf32>
    %c7_68 = arith.constant 7 : index
    %c0_69 = arith.constant 0 : index
    %c0_70 = arith.constant 0 : index
    %137 = vector.load %arg4[%c7_68, %c0_69, %c0_70] : memref<9x16x10xf32, #tpu.memory_space<vmem>>, vector<1x16x10xf32>
    %138 = vector.shape_cast %137 : vector<1x16x10xf32> to vector<16x10xf32>
    %cst_71 = arith.constant dense<0.000000e+00> : vector<16x1024xf32>
    %139 = tpu.matmul %138, %136, %cst_71 {dimension_numbers = #tpu.dot_dimension_numbers<[1], [0], [0], [1], [0, 0, 1, 1], [], []>} : vector<16x10xf32>, vector<10x1024xf32>, vector<16x1024xf32> -> vector<16x1024xf32>
    %140 = arith.addf %135, %139 : vector<16x1024xf32>
    %c991_i32_72 = arith.constant 991 : i32
    %141 = tpu.dynamic_rotate %102 by %c991_i32_72 dim 1 : vector<10x1024xf32>, i32 -> vector<10x1024xf32>
    %c8_73 = arith.constant 8 : index
    %c0_74 = arith.constant 0 : index
    %c0_75 = arith.constant 0 : index
    %142 = vector.load %arg4[%c8_73, %c0_74, %c0_75] : memref<9x16x10xf32, #tpu.memory_space<vmem>>, vector<1x16x10xf32>
    %143 = vector.shape_cast %142 : vector<1x16x10xf32> to vector<16x10xf32>
    %cst_76 = arith.constant dense<0.000000e+00> : vector<16x1024xf32>
    %144 = tpu.matmul %143, %141, %cst_76 {dimension_numbers = #tpu.dot_dimension_numbers<[1], [0], [0], [1], [0, 0, 1, 1], [], []>} : vector<16x10xf32>, vector<10x1024xf32>, vector<16x1024xf32> -> vector<16x1024xf32>
    %145 = arith.addf %140, %144 : vector<16x1024xf32>
    %c0_77 = arith.constant 0 : index
    %c0_78 = arith.constant 0 : index
    %146 = vector.load %arg5[%c0_77, %c0_78] : memref<16x1xf32, #tpu.memory_space<vmem>>, vector<16x1xf32>
    %147 = vector.broadcast %146 : vector<16x1xf32> to vector<16x1024xf32>
    %148 = arith.addf %145, %147 : vector<16x1024xf32>
    %cst_79 = arith.constant 0.000000e+00 : f32
    %149 = vector.broadcast %cst_79 : f32 to vector<16x1024xf32>
    %150 = arith.maximumf %148, %149 : vector<16x1024xf32>
    %c1023_i32_80 = arith.constant 1023 : i32
    %151 = tpu.dynamic_rotate %150 by %c1023_i32_80 dim 1 : vector<16x1024xf32>, i32 -> vector<16x1024xf32>
    %152 = arith.maximumf %150, %151 : vector<16x1024xf32>
    %c992_i32_81 = arith.constant 992 : i32
    %153 = tpu.dynamic_rotate %152 by %c992_i32_81 dim 1 : vector<16x1024xf32>, i32 -> vector<16x1024xf32>
    %154 = arith.maximumf %152, %153 : vector<16x1024xf32>
    %cst_82 = arith.constant 0.000000e+00 : f32
    %155 = vector.shape_cast %30 : vector<1x1024xi1> to vector<1x1024xi1>
    %156 = vector.broadcast %155 : vector<1x1024xi1> to vector<16x1024xi1>
    %157 = vector.broadcast %cst_82 : f32 to vector<16x1024xf32>
    %158 = arith.select %156, %154, %157 : vector<16x1024xi1>, vector<16x1024xf32>
    %c66_i32 = arith.constant 66 : i32
    %159 = tpu.dynamic_rotate %158 by %c66_i32 dim 1 : vector<16x1024xf32>, i32 -> vector<16x1024xf32>
    %c0_83 = arith.constant 0 : index
    %c0_84 = arith.constant 0 : index
    %c0_85 = arith.constant 0 : index
    %160 = vector.load %arg6[%c0_83, %c0_84, %c0_85] : memref<9x20x16xf32, #tpu.memory_space<vmem>>, vector<1x20x16xf32>
    %161 = vector.shape_cast %160 : vector<1x20x16xf32> to vector<20x16xf32>
    %cst_86 = arith.constant dense<0.000000e+00> : vector<20x1024xf32>
    %162 = tpu.matmul %161, %159, %cst_86 {dimension_numbers = #tpu.dot_dimension_numbers<[1], [0], [0], [1], [0, 0, 1, 1], [], []>} : vector<20x16xf32>, vector<16x1024xf32>, vector<20x1024xf32> -> vector<20x1024xf32>
    %c64_i32 = arith.constant 64 : i32
    %163 = tpu.dynamic_rotate %158 by %c64_i32 dim 1 : vector<16x1024xf32>, i32 -> vector<16x1024xf32>
    %c1_87 = arith.constant 1 : index
    %c0_88 = arith.constant 0 : index
    %c0_89 = arith.constant 0 : index
    %164 = vector.load %arg6[%c1_87, %c0_88, %c0_89] : memref<9x20x16xf32, #tpu.memory_space<vmem>>, vector<1x20x16xf32>
    %165 = vector.shape_cast %164 : vector<1x20x16xf32> to vector<20x16xf32>
    %cst_90 = arith.constant dense<0.000000e+00> : vector<20x1024xf32>
    %166 = tpu.matmul %165, %163, %cst_90 {dimension_numbers = #tpu.dot_dimension_numbers<[1], [0], [0], [1], [0, 0, 1, 1], [], []>} : vector<20x16xf32>, vector<16x1024xf32>, vector<20x1024xf32> -> vector<20x1024xf32>
    %167 = arith.addf %162, %166 : vector<20x1024xf32>
    %c62_i32 = arith.constant 62 : i32
    %168 = tpu.dynamic_rotate %158 by %c62_i32 dim 1 : vector<16x1024xf32>, i32 -> vector<16x1024xf32>
    %c2_91 = arith.constant 2 : index
    %c0_92 = arith.constant 0 : index
    %c0_93 = arith.constant 0 : index
    %169 = vector.load %arg6[%c2_91, %c0_92, %c0_93] : memref<9x20x16xf32, #tpu.memory_space<vmem>>, vector<1x20x16xf32>
    %170 = vector.shape_cast %169 : vector<1x20x16xf32> to vector<20x16xf32>
    %cst_94 = arith.constant dense<0.000000e+00> : vector<20x1024xf32>
    %171 = tpu.matmul %170, %168, %cst_94 {dimension_numbers = #tpu.dot_dimension_numbers<[1], [0], [0], [1], [0, 0, 1, 1], [], []>} : vector<20x16xf32>, vector<16x1024xf32>, vector<20x1024xf32> -> vector<20x1024xf32>
    %172 = arith.addf %167, %171 : vector<20x1024xf32>
    %c2_i32 = arith.constant 2 : i32
    %173 = tpu.dynamic_rotate %158 by %c2_i32 dim 1 : vector<16x1024xf32>, i32 -> vector<16x1024xf32>
    %c3_95 = arith.constant 3 : index
    %c0_96 = arith.constant 0 : index
    %c0_97 = arith.constant 0 : index
    %174 = vector.load %arg6[%c3_95, %c0_96, %c0_97] : memref<9x20x16xf32, #tpu.memory_space<vmem>>, vector<1x20x16xf32>
    %175 = vector.shape_cast %174 : vector<1x20x16xf32> to vector<20x16xf32>
    %cst_98 = arith.constant dense<0.000000e+00> : vector<20x1024xf32>
    %176 = tpu.matmul %175, %173, %cst_98 {dimension_numbers = #tpu.dot_dimension_numbers<[1], [0], [0], [1], [0, 0, 1, 1], [], []>} : vector<20x16xf32>, vector<16x1024xf32>, vector<20x1024xf32> -> vector<20x1024xf32>
    %177 = arith.addf %172, %176 : vector<20x1024xf32>
    %c4_99 = arith.constant 4 : index
    %c0_100 = arith.constant 0 : index
    %c0_101 = arith.constant 0 : index
    %178 = vector.load %arg6[%c4_99, %c0_100, %c0_101] : memref<9x20x16xf32, #tpu.memory_space<vmem>>, vector<1x20x16xf32>
    %179 = vector.shape_cast %178 : vector<1x20x16xf32> to vector<20x16xf32>
    %cst_102 = arith.constant dense<0.000000e+00> : vector<20x1024xf32>
    %180 = tpu.matmul %179, %158, %cst_102 {dimension_numbers = #tpu.dot_dimension_numbers<[1], [0], [0], [1], [0, 0, 1, 1], [], []>} : vector<20x16xf32>, vector<16x1024xf32>, vector<20x1024xf32> -> vector<20x1024xf32>
    %181 = arith.addf %177, %180 : vector<20x1024xf32>
    %c1022_i32 = arith.constant 1022 : i32
    %182 = tpu.dynamic_rotate %158 by %c1022_i32 dim 1 : vector<16x1024xf32>, i32 -> vector<16x1024xf32>
    %c5_103 = arith.constant 5 : index
    %c0_104 = arith.constant 0 : index
    %c0_105 = arith.constant 0 : index
    %183 = vector.load %arg6[%c5_103, %c0_104, %c0_105] : memref<9x20x16xf32, #tpu.memory_space<vmem>>, vector<1x20x16xf32>
    %184 = vector.shape_cast %183 : vector<1x20x16xf32> to vector<20x16xf32>
    %cst_106 = arith.constant dense<0.000000e+00> : vector<20x1024xf32>
    %185 = tpu.matmul %184, %182, %cst_106 {dimension_numbers = #tpu.dot_dimension_numbers<[1], [0], [0], [1], [0, 0, 1, 1], [], []>} : vector<20x16xf32>, vector<16x1024xf32>, vector<20x1024xf32> -> vector<20x1024xf32>
    %186 = arith.addf %181, %185 : vector<20x1024xf32>
    %c962_i32 = arith.constant 962 : i32
    %187 = tpu.dynamic_rotate %158 by %c962_i32 dim 1 : vector<16x1024xf32>, i32 -> vector<16x1024xf32>
    %c6_107 = arith.constant 6 : index
    %c0_108 = arith.constant 0 : index
    %c0_109 = arith.constant 0 : index
    %188 = vector.load %arg6[%c6_107, %c0_108, %c0_109] : memref<9x20x16xf32, #tpu.memory_space<vmem>>, vector<1x20x16xf32>
    %189 = vector.shape_cast %188 : vector<1x20x16xf32> to vector<20x16xf32>
    %cst_110 = arith.constant dense<0.000000e+00> : vector<20x1024xf32>
    %190 = tpu.matmul %189, %187, %cst_110 {dimension_numbers = #tpu.dot_dimension_numbers<[1], [0], [0], [1], [0, 0, 1, 1], [], []>} : vector<20x16xf32>, vector<16x1024xf32>, vector<20x1024xf32> -> vector<20x1024xf32>
    %191 = arith.addf %186, %190 : vector<20x1024xf32>
    %c960_i32 = arith.constant 960 : i32
    %192 = tpu.dynamic_rotate %158 by %c960_i32 dim 1 : vector<16x1024xf32>, i32 -> vector<16x1024xf32>
    %c7_111 = arith.constant 7 : index
    %c0_112 = arith.constant 0 : index
    %c0_113 = arith.constant 0 : index
    %193 = vector.load %arg6[%c7_111, %c0_112, %c0_113] : memref<9x20x16xf32, #tpu.memory_space<vmem>>, vector<1x20x16xf32>
    %194 = vector.shape_cast %193 : vector<1x20x16xf32> to vector<20x16xf32>
    %cst_114 = arith.constant dense<0.000000e+00> : vector<20x1024xf32>
    %195 = tpu.matmul %194, %192, %cst_114 {dimension_numbers = #tpu.dot_dimension_numbers<[1], [0], [0], [1], [0, 0, 1, 1], [], []>} : vector<20x16xf32>, vector<16x1024xf32>, vector<20x1024xf32> -> vector<20x1024xf32>
    %196 = arith.addf %191, %195 : vector<20x1024xf32>
    %c958_i32 = arith.constant 958 : i32
    %197 = tpu.dynamic_rotate %158 by %c958_i32 dim 1 : vector<16x1024xf32>, i32 -> vector<16x1024xf32>
    %c8_115 = arith.constant 8 : index
    %c0_116 = arith.constant 0 : index
    %c0_117 = arith.constant 0 : index
    %198 = vector.load %arg6[%c8_115, %c0_116, %c0_117] : memref<9x20x16xf32, #tpu.memory_space<vmem>>, vector<1x20x16xf32>
    %199 = vector.shape_cast %198 : vector<1x20x16xf32> to vector<20x16xf32>
    %cst_118 = arith.constant dense<0.000000e+00> : vector<20x1024xf32>
    %200 = tpu.matmul %199, %197, %cst_118 {dimension_numbers = #tpu.dot_dimension_numbers<[1], [0], [0], [1], [0, 0, 1, 1], [], []>} : vector<20x16xf32>, vector<16x1024xf32>, vector<20x1024xf32> -> vector<20x1024xf32>
    %201 = arith.addf %196, %200 : vector<20x1024xf32>
    %c0_119 = arith.constant 0 : index
    %c0_120 = arith.constant 0 : index
    %202 = vector.load %arg7[%c0_119, %c0_120] : memref<20x1xf32, #tpu.memory_space<vmem>>, vector<20x1xf32>
    %203 = vector.broadcast %202 : vector<20x1xf32> to vector<20x1024xf32>
    %204 = arith.addf %201, %203 : vector<20x1024xf32>
    %cst_121 = arith.constant 0.000000e+00 : f32
    %205 = vector.broadcast %cst_121 : f32 to vector<20x1024xf32>
    %206 = arith.maximumf %204, %205 : vector<20x1024xf32>
    %cst_122 = arith.constant 0.000000e+00 : f32
    %207 = vector.shape_cast %30 : vector<1x1024xi1> to vector<1x1024xi1>
    %208 = vector.broadcast %207 : vector<1x1024xi1> to vector<20x1024xi1>
    %209 = vector.broadcast %cst_122 : f32 to vector<20x1024xf32>
    %210 = arith.select %208, %206, %209 : vector<20x1024xi1>, vector<20x1024xf32>
    %c66_i32_123 = arith.constant 66 : i32
    %211 = tpu.dynamic_rotate %210 by %c66_i32_123 dim 1 : vector<20x1024xf32>, i32 -> vector<20x1024xf32>
    %c0_124 = arith.constant 0 : index
    %c0_125 = arith.constant 0 : index
    %c0_126 = arith.constant 0 : index
    %212 = vector.load %arg8[%c0_124, %c0_125, %c0_126] : memref<9x10x20xf32, #tpu.memory_space<vmem>>, vector<1x10x20xf32>
    %213 = vector.shape_cast %212 : vector<1x10x20xf32> to vector<10x20xf32>
    %cst_127 = arith.constant dense<0.000000e+00> : vector<10x1024xf32>
    %214 = tpu.matmul %213, %211, %cst_127 {dimension_numbers = #tpu.dot_dimension_numbers<[1], [0], [0], [1], [0, 0, 1, 1], [], []>} : vector<10x20xf32>, vector<20x1024xf32>, vector<10x1024xf32> -> vector<10x1024xf32>
    %c64_i32_128 = arith.constant 64 : i32
    %215 = tpu.dynamic_rotate %210 by %c64_i32_128 dim 1 : vector<20x1024xf32>, i32 -> vector<20x1024xf32>
    %c1_129 = arith.constant 1 : index
    %c0_130 = arith.constant 0 : index
    %c0_131 = arith.constant 0 : index
    %216 = vector.load %arg8[%c1_129, %c0_130, %c0_131] : memref<9x10x20xf32, #tpu.memory_space<vmem>>, vector<1x10x20xf32>
    %217 = vector.shape_cast %216 : vector<1x10x20xf32> to vector<10x20xf32>
    %cst_132 = arith.constant dense<0.000000e+00> : vector<10x1024xf32>
    %218 = tpu.matmul %217, %215, %cst_132 {dimension_numbers = #tpu.dot_dimension_numbers<[1], [0], [0], [1], [0, 0, 1, 1], [], []>} : vector<10x20xf32>, vector<20x1024xf32>, vector<10x1024xf32> -> vector<10x1024xf32>
    %219 = arith.addf %214, %218 : vector<10x1024xf32>
    %c62_i32_133 = arith.constant 62 : i32
    %220 = tpu.dynamic_rotate %210 by %c62_i32_133 dim 1 : vector<20x1024xf32>, i32 -> vector<20x1024xf32>
    %c2_134 = arith.constant 2 : index
    %c0_135 = arith.constant 0 : index
    %c0_136 = arith.constant 0 : index
    %221 = vector.load %arg8[%c2_134, %c0_135, %c0_136] : memref<9x10x20xf32, #tpu.memory_space<vmem>>, vector<1x10x20xf32>
    %222 = vector.shape_cast %221 : vector<1x10x20xf32> to vector<10x20xf32>
    %cst_137 = arith.constant dense<0.000000e+00> : vector<10x1024xf32>
    %223 = tpu.matmul %222, %220, %cst_137 {dimension_numbers = #tpu.dot_dimension_numbers<[1], [0], [0], [1], [0, 0, 1, 1], [], []>} : vector<10x20xf32>, vector<20x1024xf32>, vector<10x1024xf32> -> vector<10x1024xf32>
    %224 = arith.addf %219, %223 : vector<10x1024xf32>
    %c2_i32_138 = arith.constant 2 : i32
    %225 = tpu.dynamic_rotate %210 by %c2_i32_138 dim 1 : vector<20x1024xf32>, i32 -> vector<20x1024xf32>
    %c3_139 = arith.constant 3 : index
    %c0_140 = arith.constant 0 : index
    %c0_141 = arith.constant 0 : index
    %226 = vector.load %arg8[%c3_139, %c0_140, %c0_141] : memref<9x10x20xf32, #tpu.memory_space<vmem>>, vector<1x10x20xf32>
    %227 = vector.shape_cast %226 : vector<1x10x20xf32> to vector<10x20xf32>
    %cst_142 = arith.constant dense<0.000000e+00> : vector<10x1024xf32>
    %228 = tpu.matmul %227, %225, %cst_142 {dimension_numbers = #tpu.dot_dimension_numbers<[1], [0], [0], [1], [0, 0, 1, 1], [], []>} : vector<10x20xf32>, vector<20x1024xf32>, vector<10x1024xf32> -> vector<10x1024xf32>
    %229 = arith.addf %224, %228 : vector<10x1024xf32>
    %c4_143 = arith.constant 4 : index
    %c0_144 = arith.constant 0 : index
    %c0_145 = arith.constant 0 : index
    %230 = vector.load %arg8[%c4_143, %c0_144, %c0_145] : memref<9x10x20xf32, #tpu.memory_space<vmem>>, vector<1x10x20xf32>
    %231 = vector.shape_cast %230 : vector<1x10x20xf32> to vector<10x20xf32>
    %cst_146 = arith.constant dense<0.000000e+00> : vector<10x1024xf32>
    %232 = tpu.matmul %231, %210, %cst_146 {dimension_numbers = #tpu.dot_dimension_numbers<[1], [0], [0], [1], [0, 0, 1, 1], [], []>} : vector<10x20xf32>, vector<20x1024xf32>, vector<10x1024xf32> -> vector<10x1024xf32>
    %233 = arith.addf %229, %232 : vector<10x1024xf32>
    %c1022_i32_147 = arith.constant 1022 : i32
    %234 = tpu.dynamic_rotate %210 by %c1022_i32_147 dim 1 : vector<20x1024xf32>, i32 -> vector<20x1024xf32>
    %c5_148 = arith.constant 5 : index
    %c0_149 = arith.constant 0 : index
    %c0_150 = arith.constant 0 : index
    %235 = vector.load %arg8[%c5_148, %c0_149, %c0_150] : memref<9x10x20xf32, #tpu.memory_space<vmem>>, vector<1x10x20xf32>
    %236 = vector.shape_cast %235 : vector<1x10x20xf32> to vector<10x20xf32>
    %cst_151 = arith.constant dense<0.000000e+00> : vector<10x1024xf32>
    %237 = tpu.matmul %236, %234, %cst_151 {dimension_numbers = #tpu.dot_dimension_numbers<[1], [0], [0], [1], [0, 0, 1, 1], [], []>} : vector<10x20xf32>, vector<20x1024xf32>, vector<10x1024xf32> -> vector<10x1024xf32>
    %238 = arith.addf %233, %237 : vector<10x1024xf32>
    %c962_i32_152 = arith.constant 962 : i32
    %239 = tpu.dynamic_rotate %210 by %c962_i32_152 dim 1 : vector<20x1024xf32>, i32 -> vector<20x1024xf32>
    %c6_153 = arith.constant 6 : index
    %c0_154 = arith.constant 0 : index
    %c0_155 = arith.constant 0 : index
    %240 = vector.load %arg8[%c6_153, %c0_154, %c0_155] : memref<9x10x20xf32, #tpu.memory_space<vmem>>, vector<1x10x20xf32>
    %241 = vector.shape_cast %240 : vector<1x10x20xf32> to vector<10x20xf32>
    %cst_156 = arith.constant dense<0.000000e+00> : vector<10x1024xf32>
    %242 = tpu.matmul %241, %239, %cst_156 {dimension_numbers = #tpu.dot_dimension_numbers<[1], [0], [0], [1], [0, 0, 1, 1], [], []>} : vector<10x20xf32>, vector<20x1024xf32>, vector<10x1024xf32> -> vector<10x1024xf32>
    %243 = arith.addf %238, %242 : vector<10x1024xf32>
    %c960_i32_157 = arith.constant 960 : i32
    %244 = tpu.dynamic_rotate %210 by %c960_i32_157 dim 1 : vector<20x1024xf32>, i32 -> vector<20x1024xf32>
    %c7_158 = arith.constant 7 : index
    %c0_159 = arith.constant 0 : index
    %c0_160 = arith.constant 0 : index
    %245 = vector.load %arg8[%c7_158, %c0_159, %c0_160] : memref<9x10x20xf32, #tpu.memory_space<vmem>>, vector<1x10x20xf32>
    %246 = vector.shape_cast %245 : vector<1x10x20xf32> to vector<10x20xf32>
    %cst_161 = arith.constant dense<0.000000e+00> : vector<10x1024xf32>
    %247 = tpu.matmul %246, %244, %cst_161 {dimension_numbers = #tpu.dot_dimension_numbers<[1], [0], [0], [1], [0, 0, 1, 1], [], []>} : vector<10x20xf32>, vector<20x1024xf32>, vector<10x1024xf32> -> vector<10x1024xf32>
    %248 = arith.addf %243, %247 : vector<10x1024xf32>
    %c958_i32_162 = arith.constant 958 : i32
    %249 = tpu.dynamic_rotate %210 by %c958_i32_162 dim 1 : vector<20x1024xf32>, i32 -> vector<20x1024xf32>
    %c8_163 = arith.constant 8 : index
    %c0_164 = arith.constant 0 : index
    %c0_165 = arith.constant 0 : index
    %250 = vector.load %arg8[%c8_163, %c0_164, %c0_165] : memref<9x10x20xf32, #tpu.memory_space<vmem>>, vector<1x10x20xf32>
    %251 = vector.shape_cast %250 : vector<1x10x20xf32> to vector<10x20xf32>
    %cst_166 = arith.constant dense<0.000000e+00> : vector<10x1024xf32>
    %252 = tpu.matmul %251, %249, %cst_166 {dimension_numbers = #tpu.dot_dimension_numbers<[1], [0], [0], [1], [0, 0, 1, 1], [], []>} : vector<10x20xf32>, vector<20x1024xf32>, vector<10x1024xf32> -> vector<10x1024xf32>
    %253 = arith.addf %248, %252 : vector<10x1024xf32>
    %c0_167 = arith.constant 0 : index
    %c0_168 = arith.constant 0 : index
    %254 = vector.load %arg9[%c0_167, %c0_168] : memref<10x1xf32, #tpu.memory_space<vmem>>, vector<10x1xf32>
    %255 = vector.broadcast %254 : vector<10x1xf32> to vector<10x1024xf32>
    %256 = arith.addf %253, %255 : vector<10x1024xf32>
    %cst_169 = arith.constant 0.000000e+00 : f32
    %257 = vector.broadcast %cst_169 : f32 to vector<10x1024xf32>
    %258 = arith.maximumf %256, %257 : vector<10x1024xf32>
    %c1022_i32_170 = arith.constant 1022 : i32
    %259 = tpu.dynamic_rotate %258 by %c1022_i32_170 dim 1 : vector<10x1024xf32>, i32 -> vector<10x1024xf32>
    %260 = arith.maximumf %258, %259 : vector<10x1024xf32>
    %c960_i32_171 = arith.constant 960 : i32
    %261 = tpu.dynamic_rotate %260 by %c960_i32_171 dim 1 : vector<10x1024xf32>, i32 -> vector<10x1024xf32>
    %262 = arith.maximumf %260, %261 : vector<10x1024xf32>
    %c0_172 = arith.constant 0 : index
    %c0_173 = arith.constant 0 : index
    %263 = vector.load %arg11[%c0_172, %c0_173] : memref<1x10xf32, #tpu.memory_space<vmem>>, vector<1x10xf32>
    %264 = vector.extract_strided_slice %262 {offsets = [0, 0], sizes = [1, 1024], strides = [1, 1]} : vector<10x1024xf32> to vector<1x1024xf32>
    %c0_174 = arith.constant 0 : index
    %c0_175 = arith.constant 0 : index
    %c0_176 = arith.constant 0 : index
    %265 = vector.load %arg10[%c0_174, %c0_175, %c0_176] : memref<10x10x1024xf32, #tpu.memory_space<vmem>>, vector<1x10x1024xf32>
    %266 = vector.shape_cast %265 : vector<1x10x1024xf32> to vector<10x1024xf32>
    %cst_177 = arith.constant dense<0.000000e+00> : vector<1x10xf32>
    %267 = tpu.matmul %264, %266, %cst_177 {dimension_numbers = #tpu.dot_dimension_numbers<[1], [1], [0], [0], [0, 0, 1, 0], [], []>} : vector<1x1024xf32>, vector<10x1024xf32>, vector<1x10xf32> -> vector<1x10xf32>
    %268 = arith.addf %263, %267 : vector<1x10xf32>
    %269 = vector.extract_strided_slice %262 {offsets = [1, 0], sizes = [1, 1024], strides = [1, 1]} : vector<10x1024xf32> to vector<1x1024xf32>
    %c1_178 = arith.constant 1 : index
    %c0_179 = arith.constant 0 : index
    %c0_180 = arith.constant 0 : index
    %270 = vector.load %arg10[%c1_178, %c0_179, %c0_180] : memref<10x10x1024xf32, #tpu.memory_space<vmem>>, vector<1x10x1024xf32>
    %271 = vector.shape_cast %270 : vector<1x10x1024xf32> to vector<10x1024xf32>
    %cst_181 = arith.constant dense<0.000000e+00> : vector<1x10xf32>
    %272 = tpu.matmul %269, %271, %cst_181 {dimension_numbers = #tpu.dot_dimension_numbers<[1], [1], [0], [0], [0, 0, 1, 0], [], []>} : vector<1x1024xf32>, vector<10x1024xf32>, vector<1x10xf32> -> vector<1x10xf32>
    %273 = arith.addf %268, %272 : vector<1x10xf32>
    %274 = vector.extract_strided_slice %262 {offsets = [2, 0], sizes = [1, 1024], strides = [1, 1]} : vector<10x1024xf32> to vector<1x1024xf32>
    %c2_182 = arith.constant 2 : index
    %c0_183 = arith.constant 0 : index
    %c0_184 = arith.constant 0 : index
    %275 = vector.load %arg10[%c2_182, %c0_183, %c0_184] : memref<10x10x1024xf32, #tpu.memory_space<vmem>>, vector<1x10x1024xf32>
    %276 = vector.shape_cast %275 : vector<1x10x1024xf32> to vector<10x1024xf32>
    %cst_185 = arith.constant dense<0.000000e+00> : vector<1x10xf32>
    %277 = tpu.matmul %274, %276, %cst_185 {dimension_numbers = #tpu.dot_dimension_numbers<[1], [1], [0], [0], [0, 0, 1, 0], [], []>} : vector<1x1024xf32>, vector<10x1024xf32>, vector<1x10xf32> -> vector<1x10xf32>
    %278 = arith.addf %273, %277 : vector<1x10xf32>
    %279 = vector.extract_strided_slice %262 {offsets = [3, 0], sizes = [1, 1024], strides = [1, 1]} : vector<10x1024xf32> to vector<1x1024xf32>
    %c3_186 = arith.constant 3 : index
    %c0_187 = arith.constant 0 : index
    %c0_188 = arith.constant 0 : index
    %280 = vector.load %arg10[%c3_186, %c0_187, %c0_188] : memref<10x10x1024xf32, #tpu.memory_space<vmem>>, vector<1x10x1024xf32>
    %281 = vector.shape_cast %280 : vector<1x10x1024xf32> to vector<10x1024xf32>
    %cst_189 = arith.constant dense<0.000000e+00> : vector<1x10xf32>
    %282 = tpu.matmul %279, %281, %cst_189 {dimension_numbers = #tpu.dot_dimension_numbers<[1], [1], [0], [0], [0, 0, 1, 0], [], []>} : vector<1x1024xf32>, vector<10x1024xf32>, vector<1x10xf32> -> vector<1x10xf32>
    %283 = arith.addf %278, %282 : vector<1x10xf32>
    %284 = vector.extract_strided_slice %262 {offsets = [4, 0], sizes = [1, 1024], strides = [1, 1]} : vector<10x1024xf32> to vector<1x1024xf32>
    %c4_190 = arith.constant 4 : index
    %c0_191 = arith.constant 0 : index
    %c0_192 = arith.constant 0 : index
    %285 = vector.load %arg10[%c4_190, %c0_191, %c0_192] : memref<10x10x1024xf32, #tpu.memory_space<vmem>>, vector<1x10x1024xf32>
    %286 = vector.shape_cast %285 : vector<1x10x1024xf32> to vector<10x1024xf32>
    %cst_193 = arith.constant dense<0.000000e+00> : vector<1x10xf32>
    %287 = tpu.matmul %284, %286, %cst_193 {dimension_numbers = #tpu.dot_dimension_numbers<[1], [1], [0], [0], [0, 0, 1, 0], [], []>} : vector<1x1024xf32>, vector<10x1024xf32>, vector<1x10xf32> -> vector<1x10xf32>
    %288 = arith.addf %283, %287 : vector<1x10xf32>
    %289 = vector.extract_strided_slice %262 {offsets = [5, 0], sizes = [1, 1024], strides = [1, 1]} : vector<10x1024xf32> to vector<1x1024xf32>
    %c5_194 = arith.constant 5 : index
    %c0_195 = arith.constant 0 : index
    %c0_196 = arith.constant 0 : index
    %290 = vector.load %arg10[%c5_194, %c0_195, %c0_196] : memref<10x10x1024xf32, #tpu.memory_space<vmem>>, vector<1x10x1024xf32>
    %291 = vector.shape_cast %290 : vector<1x10x1024xf32> to vector<10x1024xf32>
    %cst_197 = arith.constant dense<0.000000e+00> : vector<1x10xf32>
    %292 = tpu.matmul %289, %291, %cst_197 {dimension_numbers = #tpu.dot_dimension_numbers<[1], [1], [0], [0], [0, 0, 1, 0], [], []>} : vector<1x1024xf32>, vector<10x1024xf32>, vector<1x10xf32> -> vector<1x10xf32>
    %293 = arith.addf %288, %292 : vector<1x10xf32>
    %294 = vector.extract_strided_slice %262 {offsets = [6, 0], sizes = [1, 1024], strides = [1, 1]} : vector<10x1024xf32> to vector<1x1024xf32>
    %c6_198 = arith.constant 6 : index
    %c0_199 = arith.constant 0 : index
    %c0_200 = arith.constant 0 : index
    %295 = vector.load %arg10[%c6_198, %c0_199, %c0_200] : memref<10x10x1024xf32, #tpu.memory_space<vmem>>, vector<1x10x1024xf32>
    %296 = vector.shape_cast %295 : vector<1x10x1024xf32> to vector<10x1024xf32>
    %cst_201 = arith.constant dense<0.000000e+00> : vector<1x10xf32>
    %297 = tpu.matmul %294, %296, %cst_201 {dimension_numbers = #tpu.dot_dimension_numbers<[1], [1], [0], [0], [0, 0, 1, 0], [], []>} : vector<1x1024xf32>, vector<10x1024xf32>, vector<1x10xf32> -> vector<1x10xf32>
    %298 = arith.addf %293, %297 : vector<1x10xf32>
    %299 = vector.extract_strided_slice %262 {offsets = [7, 0], sizes = [1, 1024], strides = [1, 1]} : vector<10x1024xf32> to vector<1x1024xf32>
    %c7_202 = arith.constant 7 : index
    %c0_203 = arith.constant 0 : index
    %c0_204 = arith.constant 0 : index
    %300 = vector.load %arg10[%c7_202, %c0_203, %c0_204] : memref<10x10x1024xf32, #tpu.memory_space<vmem>>, vector<1x10x1024xf32>
    %301 = vector.shape_cast %300 : vector<1x10x1024xf32> to vector<10x1024xf32>
    %cst_205 = arith.constant dense<0.000000e+00> : vector<1x10xf32>
    %302 = tpu.matmul %299, %301, %cst_205 {dimension_numbers = #tpu.dot_dimension_numbers<[1], [1], [0], [0], [0, 0, 1, 0], [], []>} : vector<1x1024xf32>, vector<10x1024xf32>, vector<1x10xf32> -> vector<1x10xf32>
    %303 = arith.addf %298, %302 : vector<1x10xf32>
    %304 = vector.extract_strided_slice %262 {offsets = [8, 0], sizes = [1, 1024], strides = [1, 1]} : vector<10x1024xf32> to vector<1x1024xf32>
    %c8_206 = arith.constant 8 : index
    %c0_207 = arith.constant 0 : index
    %c0_208 = arith.constant 0 : index
    %305 = vector.load %arg10[%c8_206, %c0_207, %c0_208] : memref<10x10x1024xf32, #tpu.memory_space<vmem>>, vector<1x10x1024xf32>
    %306 = vector.shape_cast %305 : vector<1x10x1024xf32> to vector<10x1024xf32>
    %cst_209 = arith.constant dense<0.000000e+00> : vector<1x10xf32>
    %307 = tpu.matmul %304, %306, %cst_209 {dimension_numbers = #tpu.dot_dimension_numbers<[1], [1], [0], [0], [0, 0, 1, 0], [], []>} : vector<1x1024xf32>, vector<10x1024xf32>, vector<1x10xf32> -> vector<1x10xf32>
    %308 = arith.addf %303, %307 : vector<1x10xf32>
    %309 = vector.extract_strided_slice %262 {offsets = [9, 0], sizes = [1, 1024], strides = [1, 1]} : vector<10x1024xf32> to vector<1x1024xf32>
    %c9 = arith.constant 9 : index
    %c0_210 = arith.constant 0 : index
    %c0_211 = arith.constant 0 : index
    %310 = vector.load %arg10[%c9, %c0_210, %c0_211] : memref<10x10x1024xf32, #tpu.memory_space<vmem>>, vector<1x10x1024xf32>
    %311 = vector.shape_cast %310 : vector<1x10x1024xf32> to vector<10x1024xf32>
    %cst_212 = arith.constant dense<0.000000e+00> : vector<1x10xf32>
    %312 = tpu.matmul %309, %311, %cst_212 {dimension_numbers = #tpu.dot_dimension_numbers<[1], [1], [0], [0], [0, 0, 1, 0], [], []>} : vector<1x1024xf32>, vector<10x1024xf32>, vector<1x10xf32> -> vector<1x10xf32>
    %313 = arith.addf %308, %312 : vector<1x10xf32>
    %c0_213 = arith.constant 0 : index
    %c0_214 = arith.constant 0 : index
    %c0_215 = arith.constant 0 : index
    %314 = vector.load %arg12[%c0_213, %c0_214, %c0_215] : memref<1x1x10xf32, #tpu.memory_space<vmem>>, vector<1x1x10xf32>
    %315 = vector.shape_cast %314 : vector<1x1x10xf32> to vector<1x10xf32>
    %316 = vector.shape_cast %313 : vector<1x10xf32> to vector<1x1x10xf32>
    tpu.vector_store %arg12[%c0_213, %c0_214, %c0_215], %316 {strides = array<i32>} : memref<1x1x10xf32, #tpu.memory_space<vmem>>, vector<1x1x10xf32>,
    return
  }
  func.func @transform_0(%arg0: i32) -> (i32, i32, i32) {
    %c0_i32 = arith.constant 0 : i32
    %c0_i32_0 = arith.constant 0 : i32
    %c0_i32_1 = arith.constant 0 : i32
    return %arg0, %c0_i32, %c0_i32_0 : i32, i32, i32
  }
  func.func @transform_1(%arg0: i32) -> (i32, i32, i32) {
    %c0_i32 = arith.constant 0 : i32
    %c0_i32_0 = arith.constant 0 : i32
    %c0_i32_1 = arith.constant 0 : i32
    %c0_i32_2 = arith.constant 0 : i32
    return %c0_i32, %c0_i32_0, %c0_i32_1 : i32, i32, i32
  }
  func.func @transform_2(%arg0: i32) -> (i32, i32) {
    %c0_i32 = arith.constant 0 : i32
    %c0_i32_0 = arith.constant 0 : i32
    %c0_i32_1 = arith.constant 0 : i32
    return %c0_i32, %c0_i32_0 : i32, i32
  }
  func.func @transform_3(%arg0: i32) -> (i32, i32, i32) {
    %c0_i32 = arith.constant 0 : i32
    %c0_i32_0 = arith.constant 0 : i32
    %c0_i32_1 = arith.constant 0 : i32
    %c0_i32_2 = arith.constant 0 : i32
    return %c0_i32, %c0_i32_0, %c0_i32_1 : i32, i32, i32
  }
  func.func @transform_4(%arg0: i32) -> (i32, i32) {
    %c0_i32 = arith.constant 0 : i32
    %c0_i32_0 = arith.constant 0 : i32
    %c0_i32_1 = arith.constant 0 : i32
    return %c0_i32, %c0_i32_0 : i32, i32
  }
  func.func @transform_5(%arg0: i32) -> (i32, i32, i32) {
    %c0_i32 = arith.constant 0 : i32
    %c0_i32_0 = arith.constant 0 : i32
    %c0_i32_1 = arith.constant 0 : i32
    %c0_i32_2 = arith.constant 0 : i32
    return %c0_i32, %c0_i32_0, %c0_i32_1 : i32, i32, i32
  }
  func.func @transform_6(%arg0: i32) -> (i32, i32) {
    %c0_i32 = arith.constant 0 : i32
    %c0_i32_0 = arith.constant 0 : i32
    %c0_i32_1 = arith.constant 0 : i32
    return %c0_i32, %c0_i32_0 : i32, i32
  }
  func.func @transform_7(%arg0: i32) -> (i32, i32, i32) {
    %c0_i32 = arith.constant 0 : i32
    %c0_i32_0 = arith.constant 0 : i32
    %c0_i32_1 = arith.constant 0 : i32
    %c0_i32_2 = arith.constant 0 : i32
    return %c0_i32, %c0_i32_0, %c0_i32_1 : i32, i32, i32
  }
  func.func @transform_8(%arg0: i32) -> (i32, i32) {
    %c0_i32 = arith.constant 0 : i32
    %c0_i32_0 = arith.constant 0 : i32
    %c0_i32_1 = arith.constant 0 : i32
    return %c0_i32, %c0_i32_0 : i32, i32
  }
  func.func @transform_9(%arg0: i32) -> (i32, i32, i32) {
    %c0_i32 = arith.constant 0 : i32
    %c0_i32_0 = arith.constant 0 : i32
    %c0_i32_1 = arith.constant 0 : i32
    %c0_i32_2 = arith.constant 0 : i32
    return %c0_i32, %c0_i32_0, %c0_i32_1 : i32, i32, i32
  }
  func.func @transform_10(%arg0: i32) -> (i32, i32) {
    %c0_i32 = arith.constant 0 : i32
    %c0_i32_0 = arith.constant 0 : i32
    %c0_i32_1 = arith.constant 0 : i32
    return %c0_i32, %c0_i32_0 : i32, i32
  }
  func.func @transform_11(%arg0: i32) -> (i32, i32, i32) {
    %c0_i32 = arith.constant 0 : i32
    %c0_i32_0 = arith.constant 0 : i32
    %c0_i32_1 = arith.constant 0 : i32
    return %arg0, %c0_i32, %c0_i32_0 : i32, i32, i32
  }
}

</mosaic_0001>

<llo_original>
// kernel: simple_cnn_forward.1
$region0: #{simple_cnn_forward.1}
  #allocation0 [shape = 'u32[]', space=smem, size = 0x4, offset = 0x4, fixed_abs, tag = 'smem constant byte address 0x4 - core index']
  #allocation1 [shape = 'u32[72,128]{1,0:T(1,128)}', space=vmem, size = 0x9000, scoped, tag = 'internal scratch']
  %s0 = inlined_call_operand.vmem [shape: f32[2,1,1024], index: 0, kind: input, shape index: {}]
  %s1 = inlined_call_operand.vmem [shape: f32[9,10,1], index: 1, kind: input, shape index: {}]
  %s2 = inlined_call_operand.vmem [shape: f32[10,1], index: 2, kind: input, shape index: {}]
  %s3 = inlined_call_operand.vmem [shape: f32[9,16,10], index: 3, kind: input, shape index: {}]
  %s4 = inlined_call_operand.vmem [shape: f32[16,1], index: 4, kind: input, shape index: {}]
  %s5 = inlined_call_operand.vmem [shape: f32[9,20,16], index: 5, kind: input, shape index: {}]
  %s6 = inlined_call_operand.vmem [shape: f32[20,1], index: 6, kind: input, shape index: {}]
  %s7 = inlined_call_operand.vmem [shape: f32[9,10,20], index: 7, kind: input, shape index: {}]
  %s8 = inlined_call_operand.vmem [shape: f32[10,1], index: 8, kind: input, shape index: {}]
  %s9 = inlined_call_operand.hbm [shape: f32[10,10,1024], index: 9, kind: input, shape index: {}]
  %s10 = inlined_call_operand.vmem [shape: f32[1,10], index: 10, kind: input, shape index: {}]
  %s11 = inlined_call_operand.hbm [shape: f32[2,1,10], index: 11, kind: output, shape index: {}]
  %s12 = sld [smem:[#allocation0]]
  $region81: #{simple_cnn_forward.1} parent=0
    _
  %s14 = ssub.s32 1, %s12
  %s15 = scalar_select 0, %s14, %s12
  $region1: #{simple_cnn_forward.1} parent=0
    #allocation2 [shape = 'u8[655360]{0}', space=vmem, size = 0xa0000, scoped, tag = 'input window, operand 9, single buffered']
    #allocation3 [shape = 's32[2]{0}', space=sflag, size = 0x8, scoped, tag = 'scoped memory for simple_cnn_forward.1']
    #allocation4 [shape = 's32[2]{0}', space=sflag, size = 0x8, scoped, tag = 'scoped memory for simple_cnn_forward.1']
    #allocation5 [shape = 'u8[1024]{0}', space=vmem, size = 0x400, scoped, tag = 'output window, operand 0']
    %16 = vsyncpa [#allocation3], 0
    %17 = vsyncpa [#allocation4], 0
    %s18 = scalar_lea.sflag [#allocation4], 1
    %19 = vsyncpa %s18, 0
    loop: start=0, step=1, limit=4
    $region2: #{simple_cnn_forward.1} parent=1 // loop_pre_header
      _
    $region3: #{simple_cnn_forward.1} parent=1 // loop_header
      %s21 = sphi 0, %s25
      %p22 = scmp.ge.s32.totalorder %s21, 4
      %s31 = sphi 0, %s33
      %s34 = sphi 0, %s31
      %s35 = sphi 0, %s34
      %s51 = sphi 0, %s35
      %s55 = sphi 0, %s55
      %s57 = sphi 0, %s55
      %s58 = sphi 0, %s57
      %s72 = sphi 0, %s58
      %s76 = sphi 0, %s76
      %s78 = sphi 0, %s76
      %s79 = sphi 0, %s78
      %s93 = sphi 0, %s79
      %s97 = sphi 0, %s97
      %s99 = sphi 0, %s97
      %s100 = sphi 0, %s99
      %s114 = sphi 0, %s100
      %s118 = sphi 0, %s118
      %s120 = sphi 0, %s118
      %s121 = sphi 0, %s120
      %s135 = sphi 0, %s121
      %s139 = sphi 0, %s139
      %s141 = sphi 0, %s139
      %s142 = sphi 0, %s141
      %s156 = sphi 0, %s142
      %s160 = sphi 0, %s160
      %s162 = sphi 0, %s160
      %s163 = sphi 0, %s162
      %s177 = sphi 0, %s163
      %s181 = sphi 0, %s181
      %s183 = sphi 0, %s181
      %s184 = sphi 0, %s183
      %s198 = sphi 0, %s184
      %s202 = sphi 0, %s202
      %s204 = sphi 0, %s202
      %s205 = sphi 0, %s204
      %s219 = sphi 0, %s205
      %s223 = sphi 0, %s223
      %s225 = sphi 0, %s223
      %s226 = sphi 0, %s225
      %s240 = sphi 0, %s226
      %s244 = sphi 0, %s244
      %s246 = sphi 0, %s244
      %s247 = sphi 0, %s246
      %s261 = sphi 0, %s247
      %s267 = sphi 0, %s269
      %s270 = sphi 0, %s267
      %s271 = sphi 0, %s270
      %s287 = sphi 0, %s271
    $region4: #{simple_cnn_forward.1} parent=1 // loop_header_branch
      %24 = sbr.rel (%p22) target = $region8
    $region5: #{simple_cnn_forward.1} parent=1 // loop_body
      %s26 = ssub.s32 %s21, 1
      %s27 = ssub.s32 %s21, 2
      %s28 = sadd.s32 %s21, 1
      %s29 = ssub.s32 %s21, %s28
      %p30 = scmp.eq.s32.totalorder %s29, 0
      %s32 = sadd.s32 %s31, 1
      %s33 = scalar_select %p30, %s31, %s32
      %p36 = pneg %p30
      %p37 = scmp.eq.s32.totalorder %s21, 1
      %p38 = por %p36, %p37
      %p39 = scmp.ne.s32.totalorder %s31, %s34
      %p40 = scmp.eq.s32.totalorder %s21, 0
      %p41 = por %p39, %p40
      %p42 = scmp.ne.s32.totalorder %s31, %s34
      %p43 = scmp.eq.s32.totalorder %s26, 1
      %p44 = por %p42, %p43
      %p45 = scmp.ne.s32.totalorder %s34, %s35
      %p46 = scmp.eq.s32.totalorder %s26, 0
      %p47 = por %p45, %p46
      %p48 = scmp.ne.s32.totalorder %s34, %s35
      %p49 = scmp.eq.s32.totalorder %s27, 1
      %p50 = por %p48, %p49
      %p52 = scmp.ne.s32.totalorder %s35, %s51
      %p53 = scmp.eq.s32.totalorder %s27, 0
      %p54 = por %p52, %p53
      %s56 = sadd.s32 %s55, 1
      %p59 = scmp.eq.s32.totalorder %s21, 1
      %p60 = scmp.ne.s32.totalorder %s55, %s57
      %p61 = scmp.eq.s32.totalorder %s21, 0
      %p62 = por %p60, %p61
      %p63 = scmp.ne.s32.totalorder %s55, %s57
      %p64 = scmp.eq.s32.totalorder %s26, 1
      %p65 = por %p63, %p64
      %p66 = scmp.ne.s32.totalorder %s57, %s58
      %p67 = scmp.eq.s32.totalorder %s26, 0
      %p68 = por %p66, %p67
      %p69 = scmp.ne.s32.totalorder %s57, %s58
      %p70 = scmp.eq.s32.totalorder %s27, 1
      %p71 = por %p69, %p70
      %p73 = scmp.ne.s32.totalorder %s58, %s72
      %p74 = scmp.eq.s32.totalorder %s27, 0
      %p75 = por %p73, %p74
      %s77 = sadd.s32 %s76, 1
      %p80 = scmp.eq.s32.totalorder %s21, 1
      %p81 = scmp.ne.s32.totalorder %s76, %s78
      %p82 = scmp.eq.s32.totalorder %s21, 0
      %p83 = por %p81, %p82
      %p84 = scmp.ne.s32.totalorder %s76, %s78
      %p85 = scmp.eq.s32.totalorder %s26, 1
      %p86 = por %p84, %p85
      %p87 = scmp.ne.s32.totalorder %s78, %s79
      %p88 = scmp.eq.s32.totalorder %s26, 0
      %p89 = por %p87, %p88
      %p90 = scmp.ne.s32.totalorder %s78, %s79
      %p91 = scmp.eq.s32.totalorder %s27, 1
      %p92 = por %p90, %p91
      %p94 = scmp.ne.s32.totalorder %s79, %s93
      %p95 = scmp.eq.s32.totalorder %s27, 0
      %p96 = por %p94, %p95
      %s98 = sadd.s32 %s97, 1
      %p101 = scmp.eq.s32.totalorder %s21, 1
      %p102 = scmp.ne.s32.totalorder %s97, %s99
      %p103 = scmp.eq.s32.totalorder %s21, 0
      %p104 = por %p102, %p103
      %p105 = scmp.ne.s32.totalorder %s97, %s99
      %p106 = scmp.eq.s32.totalorder %s26, 1
      %p107 = por %p105, %p106
      %p108 = scmp.ne.s32.totalorder %s99, %s100
      %p109 = scmp.eq.s32.totalorder %s26, 0
      %p110 = por %p108, %p109
      %p111 = scmp.ne.s32.totalorder %s99, %s100
      %p112 = scmp.eq.s32.totalorder %s27, 1
      %p113 = por %p111, %p112
      %p115 = scmp.ne.s32.totalorder %s100, %s114
      %p116 = scmp.eq.s32.totalorder %s27, 0
      %p117 = por %p115, %p116
      %s119 = sadd.s32 %s118, 1
      %p122 = scmp.eq.s32.totalorder %s21, 1
      %p123 = scmp.ne.s32.totalorder %s118, %s120
      %p124 = scmp.eq.s32.totalorder %s21, 0
      %p125 = por %p123, %p124
      %p126 = scmp.ne.s32.totalorder %s118, %s120
      %p127 = scmp.eq.s32.totalorder %s26, 1
      %p128 = por %p126, %p127
      %p129 = scmp.ne.s32.totalorder %s120, %s121
      %p130 = scmp.eq.s32.totalorder %s26, 0
      %p131 = por %p129, %p130
      %p132 = scmp.ne.s32.totalorder %s120, %s121
      %p133 = scmp.eq.s32.totalorder %s27, 1
      %p134 = por %p132, %p133
      %p136 = scmp.ne.s32.totalorder %s121, %s135
      %p137 = scmp.eq.s32.totalorder %s27, 0
      %p138 = por %p136, %p137
      %s140 = sadd.s32 %s139, 1
      %p143 = scmp.eq.s32.totalorder %s21, 1
      %p144 = scmp.ne.s32.totalorder %s139, %s141
      %p145 = scmp.eq.s32.totalorder %s21, 0
      %p146 = por %p144, %p145
      %p147 = scmp.ne.s32.totalorder %s139, %s141
      %p148 = scmp.eq.s32.totalorder %s26, 1
      %p149 = por %p147, %p148
      %p150 = scmp.ne.s32.totalorder %s141, %s142
      %p151 = scmp.eq.s32.totalorder %s26, 0
      %p152 = por %p150, %p151
      %p153 = scmp.ne.s32.totalorder %s141, %s142
      %p154 = scmp.eq.s32.totalorder %s27, 1
      %p155 = por %p153, %p154
      %p157 = scmp.ne.s32.totalorder %s142, %s156
      %p158 = scmp.eq.s32.totalorder %s27, 0
      %p159 = por %p157, %p158
      %s161 = sadd.s32 %s160, 1
      %p164 = scmp.eq.s32.totalorder %s21, 1
      %p165 = scmp.ne.s32.totalorder %s160, %s162
      %p166 = scmp.eq.s32.totalorder %s21, 0
      %p167 = por %p165, %p166
      %p168 = scmp.ne.s32.totalorder %s160, %s162
      %p169 = scmp.eq.s32.totalorder %s26, 1
      %p170 = por %p168, %p169
      %p171 = scmp.ne.s32.totalorder %s162, %s163
      %p172 = scmp.eq.s32.totalorder %s26, 0
      %p173 = por %p171, %p172
      %p174 = scmp.ne.s32.totalorder %s162, %s163
      %p175 = scmp.eq.s32.totalorder %s27, 1
      %p176 = por %p174, %p175
      %p178 = scmp.ne.s32.totalorder %s163, %s177
      %p179 = scmp.eq.s32.totalorder %s27, 0
      %p180 = por %p178, %p179
      %s182 = sadd.s32 %s181, 1
      %p185 = scmp.eq.s32.totalorder %s21, 1
      %p186 = scmp.ne.s32.totalorder %s181, %s183
      %p187 = scmp.eq.s32.totalorder %s21, 0
      %p188 = por %p186, %p187
      %p189 = scmp.ne.s32.totalorder %s181, %s183
      %p190 = scmp.eq.s32.totalorder %s26, 1
      %p191 = por %p189, %p190
      %p192 = scmp.ne.s32.totalorder %s183, %s184
      %p193 = scmp.eq.s32.totalorder %s26, 0
      %p194 = por %p192, %p193
      %p195 = scmp.ne.s32.totalorder %s183, %s184
      %p196 = scmp.eq.s32.totalorder %s27, 1
      %p197 = por %p195, %p196
      %p199 = scmp.ne.s32.totalorder %s184, %s198
      %p200 = scmp.eq.s32.totalorder %s27, 0
      %p201 = por %p199, %p200
      %s203 = sadd.s32 %s202, 1
      %p206 = scmp.eq.s32.totalorder %s21, 1
      %p207 = scmp.ne.s32.totalorder %s202, %s204
      %p208 = scmp.eq.s32.totalorder %s21, 0
      %p209 = por %p207, %p208
      %p210 = scmp.ne.s32.totalorder %s202, %s204
      %p211 = scmp.eq.s32.totalorder %s26, 1
      %p212 = por %p210, %p211
      %p213 = scmp.ne.s32.totalorder %s204, %s205
      %p214 = scmp.eq.s32.totalorder %s26, 0
      %p215 = por %p213, %p214
      %p216 = scmp.ne.s32.totalorder %s204, %s205
      %p217 = scmp.eq.s32.totalorder %s27, 1
      %p218 = por %p216, %p217
      %p220 = scmp.ne.s32.totalorder %s205, %s219
      %p221 = scmp.eq.s32.totalorder %s27, 0
      %p222 = por %p220, %p221
      %s224 = sadd.s32 %s223, 1
      %p227 = scmp.eq.s32.totalorder %s21, 1
      %p228 = scmp.ne.s32.totalorder %s223, %s225
      %p229 = scmp.eq.s32.totalorder %s21, 0
      %p230 = por %p228, %p229
      %p231 = scmp.ne.s32.totalorder %s223, %s225
      %p232 = scmp.eq.s32.totalorder %s26, 1
      %p233 = por %p231, %p232
      %p234 = scmp.ne.s32.totalorder %s225, %s226
      %p235 = scmp.eq.s32.totalorder %s26, 0
      %p236 = por %p234, %p235
      %p237 = scmp.ne.s32.totalorder %s225, %s226
      %p238 = scmp.eq.s32.totalorder %s27, 1
      %p239 = por %p237, %p238
      %p241 = scmp.ne.s32.totalorder %s226, %s240
      %p242 = scmp.eq.s32.totalorder %s27, 0
      %p243 = por %p241, %p242
      %s245 = sadd.s32 %s244, 1
      %p248 = scmp.eq.s32.totalorder %s21, 1
      %p249 = scmp.ne.s32.totalorder %s244, %s246
      %p250 = scmp.eq.s32.totalorder %s21, 0
      %p251 = por %p249, %p250
      %p252 = scmp.ne.s32.totalorder %s244, %s246
      %p253 = scmp.eq.s32.totalorder %s26, 1
      %p254 = por %p252, %p253
      %p255 = scmp.ne.s32.totalorder %s246, %s247
      %p256 = scmp.eq.s32.totalorder %s26, 0
      %p257 = por %p255, %p256
      %p258 = scmp.ne.s32.totalorder %s246, %s247
      %p259 = scmp.eq.s32.totalorder %s27, 1
      %p260 = por %p258, %p259
      %p262 = scmp.ne.s32.totalorder %s247, %s261
      %p263 = scmp.eq.s32.totalorder %s27, 0
      %p264 = por %p262, %p263
      %s265 = ssub.s32 %s21, %s28
      %p266 = scmp.eq.s32.totalorder %s265, 0
      %s268 = sadd.s32 %s267, 1
      %s269 = scalar_select %p266, %s267, %s268
      %p272 = pneg %p266
      %p273 = scmp.eq.s32.totalorder %s21, 1
      %p274 = por %p272, %p273
      %p275 = scmp.ne.s32.totalorder %s267, %s270
      %p276 = scmp.eq.s32.totalorder %s21, 0
      %p277 = por %p275, %p276
      %p278 = scmp.ne.s32.totalorder %s267, %s270
      %p279 = scmp.eq.s32.totalorder %s26, 1
      %p280 = por %p278, %p279
      %p281 = scmp.ne.s32.totalorder %s270, %s271
      %p282 = scmp.eq.s32.totalorder %s26, 0
      %p283 = por %p281, %p282
      %p284 = scmp.ne.s32.totalorder %s270, %s271
      %p285 = scmp.eq.s32.totalorder %s27, 1
      %p286 = por %p284, %p285
      %p288 = scmp.ne.s32.totalorder %s271, %s287
      %p289 = scmp.eq.s32.totalorder %s27, 0
      %p290 = por %p288, %p289
      %p291 = scmp.le.s32.totalorder 1, %s21
      %p292 = scmp.lt.s32.totalorder %s21, 3
      %p293 = pnand %p291, %p292
      %p294 = pneg %p293
      // Predicated region
      $region9: #{simple_cnn_forward.1} parent=5 // pred_check
        _
      $region10: #{simple_cnn_forward.1} parent=5 // pred_check_branch
        %296 = sbr.rel (%p293) target = $region12
      $region11: #{simple_cnn_forward.1} parent=5 // pred_region
        %s297 = ssub.s32 %s21, 1
        // Predicated region
        $region13: #{simple_cnn_forward.1} parent=11 // pred_check
          %p298 = pneg %p68
        $region14: #{simple_cnn_forward.1} parent=11 // pred_check_branch
          %300 = sbr.rel (%p298) target = $region16
        $region15: #{simple_cnn_forward.1} parent=11 // pred_region
          _
        $region16: #{simple_cnn_forward.1} parent=11 // pred_fallthru
          _
        // Predicated region
        $region17: #{simple_cnn_forward.1} parent=11 // pred_check
          %p301 = pneg %p89
        $region18: #{simple_cnn_forward.1} parent=11 // pred_check_branch
          %303 = sbr.rel (%p301) target = $region20
        $region19: #{simple_cnn_forward.1} parent=11 // pred_region
          _
        $region20: #{simple_cnn_forward.1} parent=11 // pred_fallthru
          _
        // Predicated region
        $region21: #{simple_cnn_forward.1} parent=11 // pred_check
          %p304 = pneg %p110
        $region22: #{simple_cnn_forward.1} parent=11 // pred_check_branch
          %306 = sbr.rel (%p304) target = $region24
        $region23: #{simple_cnn_forward.1} parent=11 // pred_region
          _
        $region24: #{simple_cnn_forward.1} parent=11 // pred_fallthru
          _
        // Predicated region
        $region25: #{simple_cnn_forward.1} parent=11 // pred_check
          %p307 = pneg %p131
        $region26: #{simple_cnn_forward.1} parent=11 // pred_check_branch
          %309 = sbr.rel (%p307) target = $region28
        $region27: #{simple_cnn_forward.1} parent=11 // pred_region
          _
        $region28: #{simple_cnn_forward.1} parent=11 // pred_fallthru
          _
        // Predicated region
        $region29: #{simple_cnn_forward.1} parent=11 // pred_check
          %p310 = pneg %p152
        $region30: #{simple_cnn_forward.1} parent=11 // pred_check_branch
          %312 = sbr.rel (%p310) target = $region32
        $region31: #{simple_cnn_forward.1} parent=11 // pred_region
          _
        $region32: #{simple_cnn_forward.1} parent=11 // pred_fallthru
          _
        // Predicated region
        $region33: #{simple_cnn_forward.1} parent=11 // pred_check
          %p313 = pneg %p173
        $region34: #{simple_cnn_forward.1} parent=11 // pred_check_branch
          %315 = sbr.rel (%p313) target = $region36
        $region35: #{simple_cnn_forward.1} parent=11 // pred_region
          _
        $region36: #{simple_cnn_forward.1} parent=11 // pred_fallthru
          _
        // Predicated region
        $region37: #{simple_cnn_forward.1} parent=11 // pred_check
          %p316 = pneg %p194
        $region38: #{simple_cnn_forward.1} parent=11 // pred_check_branch
          %318 = sbr.rel (%p316) target = $region40
        $region39: #{simple_cnn_forward.1} parent=11 // pred_region
          _
        $region40: #{simple_cnn_forward.1} parent=11 // pred_fallthru
          _
        // Predicated region
        $region41: #{simple_cnn_forward.1} parent=11 // pred_check
          %p319 = pneg %p215
        $region42: #{simple_cnn_forward.1} parent=11 // pred_check_branch
          %321 = sbr.rel (%p319) target = $region44
        $region43: #{simple_cnn_forward.1} parent=11 // pred_region
          _
        $region44: #{simple_cnn_forward.1} parent=11 // pred_fallthru
          _
        // Predicated region
        $region45: #{simple_cnn_forward.1} parent=11 // pred_check
          %p322 = pneg %p236
        $region46: #{simple_cnn_forward.1} parent=11 // pred_check_branch
          %324 = sbr.rel (%p322) target = $region48
        $region47: #{simple_cnn_forward.1} parent=11 // pred_region
          %326 = vsyncadd [#allocation3], 0
          %s327 = sshll.u32 %s9, 4
          %s328 = int_to_ptr.hbm [resolvable:$true] %s327
          %s329 = sshll.u32 [#allocation2], 4
          %s330 = int_to_ptr.vmem [resolvable:$true] %s329
          %335 = dma.hbm_to_vmem [thread:$0]  %s328, 20480, %s330, [#allocation3], 1024, 1024, 64
        $region48: #{simple_cnn_forward.1} parent=11 // pred_fallthru
          _
        // Predicated region
        $region49: #{simple_cnn_forward.1} parent=11 // pred_check
          %p336 = pneg %p257
        $region50: #{simple_cnn_forward.1} parent=11 // pred_check_branch
          %338 = sbr.rel (%p336) target = $region52
        $region51: #{simple_cnn_forward.1} parent=11 // pred_region
          _
        $region52: #{simple_cnn_forward.1} parent=11 // pred_fallthru
          _
      $region12: #{simple_cnn_forward.1} parent=5 // pred_fallthru
        _
      %p339 = scmp.lt.s32.totalorder %s21, 2
      // Predicated region
      $region53: #{simple_cnn_forward.1} parent=5 // pred_check
        %p340 = pneg %p339
      $region54: #{simple_cnn_forward.1} parent=5 // pred_check_branch
        %342 = sbr.rel (%p340) target = $region56
      $region55: #{simple_cnn_forward.1} parent=5 // pred_region
        // Predicated region
        $region57: #{simple_cnn_forward.1} parent=55 // pred_check
          %p343 = pneg %p41
        $region58: #{simple_cnn_forward.1} parent=55 // pred_check_branch
          %345 = sbr.rel (%p343) target = $region60
        $region59: #{simple_cnn_forward.1} parent=55 // pred_region
          %p346 = scmp.lt.s32.totalorder %s21, 1
          %s347 = scalar_select %p346, %s21, 1
          %s348 = smul.addr %s347, 8
          %s349 = scalar_lea.vmem %s0, %s348
        $region60: #{simple_cnn_forward.1} parent=55 // pred_fallthru
          _
      $region56: #{simple_cnn_forward.1} parent=5 // pred_fallthru
        _
      %p350 = scmp.le.s32.totalorder 1, %s21
      %p351 = scmp.lt.s32.totalorder %s21, 3
      %p352 = pnand %p350, %p351
      %p353 = pneg %p352
      // Predicated region
      $region61: #{simple_cnn_forward.1} parent=5 // pred_check
        _
      $region62: #{simple_cnn_forward.1} parent=5 // pred_check_branch
        %355 = sbr.rel (%p352) target = $region64
      $region63: #{simple_cnn_forward.1} parent=5 // pred_region
        %s356 = ssub.s32 %s21, 1
        // Predicated region
        $region65: #{simple_cnn_forward.1} parent=63 // pred_check
          %p357 = pneg %p236
        $region66: #{simple_cnn_forward.1} parent=63 // pred_check_branch
          %359 = sbr.rel (%p357) target = $region68
        $region67: #{simple_cnn_forward.1} parent=63 // pred_region
          %361 = dma.done [#allocation3], 20480
        $region68: #{simple_cnn_forward.1} parent=63 // pred_fallthru
          _
        %p362 = scmp.lt.s32.totalorder %s26, 1
        %s363 = scalar_select %p362, %s26, 1
        %s364 = smul.addr %s363, 8
        %s365 = scalar_lea.vmem %s0, %s364
        %p366 = pneg %p47
        %p367 = pneg %p44
        %p368 = pneg %p68
        %p369 = pneg %p65
        %p370 = pneg %p89
        %p371 = pneg %p86
        %p372 = pneg %p110
        %p373 = pneg %p107
        %p374 = pneg %p131
        %p375 = pneg %p128
        %p376 = pneg %p152
        %p377 = pneg %p149
        %p378 = pneg %p173
        %p379 = pneg %p170
        %p380 = pneg %p194
        %p381 = pneg %p191
        %p382 = pneg %p215
        %p383 = pneg %p212
        %p384 = pneg %p236
        %p385 = pneg %p233
        %p386 = pneg %p257
        %p387 = pneg %p254
        %p388 = pneg %p283
        %p389 = pneg %p280
        %s390 = sand.u32 %s270, 1
        %s391 = scalar_lea.sflag [#allocation4], %s390
        %s392 = sand.u32 %s270, 1
        %s393 = scalar_lea.vmem [#allocation5], %s392
        %p394 = scmp.lt.s32.totalorder %s26, 1
        %s395 = scalar_select %p394, %s26, 1
        %s396 = smul.addr %s395, 8
        %s397 = scalar_lea.vmem %s0, %s396
        %v398 = vlaneseq
        %v399 = vand.u32 %v398, 127
        %v400 = vadd.s32 %v399, 128
        %v401 = vadd.s32 %v399, 256
        %v402 = vadd.s32 %v399, 384
        %v403 = vadd.s32 %v399, 512
        %v404 = vadd.s32 %v399, 640
        %v405 = vadd.s32 %v399, 768
        %v406 = vadd.s32 %v399, 896
        %v407 = vand.u32 %v399, 31
        %v408 = vand.u32 %v400, 31
        %v409 = vand.u32 %v401, 31
        %v410 = vand.u32 %v402, 31
        %v411 = vand.u32 %v403, 31
        %v412 = vand.u32 %v404, 31
        %v413 = vand.u32 %v405, 31
        %v414 = vand.u32 %v406, 31
        %v415 = vshra.s32 %v399, 5
        %v416 = vshra.s32 %v400, 5
        %v417 = vshra.s32 %v401, 5
        %v418 = vshra.s32 %v402, 5
        %v419 = vshra.s32 %v403, 5
        %v420 = vshra.s32 %v404, 5
        %v421 = vshra.s32 %v405, 5
        %v422 = vshra.s32 %v406, 5
        %vm423 = vcmp.ge.s32.totalorder %v407, 1
        %vm424 = vcmp.ge.s32.totalorder %v408, 1
        %vm425 = vcmp.ge.s32.totalorder %v409, 1
        %vm426 = vcmp.ge.s32.totalorder %v410, 1
        %vm427 = vcmp.ge.s32.totalorder %v411, 1
        %vm428 = vcmp.ge.s32.totalorder %v412, 1
        %vm429 = vcmp.ge.s32.totalorder %v413, 1
        %vm430 = vcmp.ge.s32.totalorder %v414, 1
        %vm431 = vcmp.le.s32.totalorder %v407, 28
        %vm432 = vcmp.le.s32.totalorder %v408, 28
        %vm433 = vcmp.le.s32.totalorder %v409, 28
        %vm434 = vcmp.le.s32.totalorder %v410, 28
        %vm435 = vcmp.le.s32.totalorder %v411, 28
        %vm436 = vcmp.le.s32.totalorder %v412, 28
        %vm437 = vcmp.le.s32.totalorder %v413, 28
        %vm438 = vcmp.le.s32.totalorder %v414, 28
        %vm439 = vmand %vm423, %vm431
        %vm440 = vmand %vm424, %vm432
        %vm441 = vmand %vm425, %vm433
        %vm442 = vmand %vm426, %vm434
        %vm443 = vmand %vm427, %vm435
        %vm444 = vmand %vm428, %vm436
        %vm445 = vmand %vm429, %vm437
        %vm446 = vmand %vm430, %vm438
        %vm447 = vcmp.ge.s32.totalorder %v415, 1
        %vm448 = vcmp.ge.s32.totalorder %v416, 1
        %vm449 = vcmp.ge.s32.totalorder %v417, 1
        %vm450 = vcmp.ge.s32.totalorder %v418, 1
        %vm451 = vcmp.ge.s32.totalorder %v419, 1
        %vm452 = vcmp.ge.s32.totalorder %v420, 1
        %vm453 = vcmp.ge.s32.totalorder %v421, 1
        %vm454 = vcmp.ge.s32.totalorder %v422, 1
        %vm455 = vmand %vm439, %vm447
        %vm456 = vmand %vm440, %vm448
        %vm457 = vmand %vm441, %vm449
        %vm458 = vmand %vm442, %vm450
        %vm459 = vmand %vm443, %vm451
        %vm460 = vmand %vm444, %vm452
        %vm461 = vmand %vm445, %vm453
        %vm462 = vmand %vm446, %vm454
        %vm463 = vcmp.le.s32.totalorder %v415, 28
        %vm464 = vcmp.le.s32.totalorder %v416, 28
        %vm465 = vcmp.le.s32.totalorder %v417, 28
        %vm466 = vcmp.le.s32.totalorder %v418, 28
        %vm467 = vcmp.le.s32.totalorder %v419, 28
        %vm468 = vcmp.le.s32.totalorder %v420, 28
        %vm469 = vcmp.le.s32.totalorder %v421, 28
        %vm470 = vcmp.le.s32.totalorder %v422, 28
        %vm471 = vmand %vm455, %vm463
        %vm472 = vmand %vm456, %vm464
        %vm473 = vmand %vm457, %vm465
        %vm474 = vmand %vm458, %vm466
        %vm475 = vmand %vm459, %vm467
        %vm476 = vmand %vm460, %vm468
        %vm477 = vmand %vm461, %vm469
        %vm478 = vmand %vm462, %vm470
        %v479 = vand.u32 %v407, 1
        %v480 = vand.u32 %v408, 1
        %v481 = vand.u32 %v409, 1
        %v482 = vand.u32 %v410, 1
        %v483 = vand.u32 %v411, 1
        %v484 = vand.u32 %v412, 1
        %v485 = vand.u32 %v413, 1
        %v486 = vand.u32 %v414, 1
        %vm487 = vcmp.eq.s32.totalorder %v479, 1
        %vm488 = vcmp.eq.s32.totalorder %v480, 1
        %vm489 = vcmp.eq.s32.totalorder %v481, 1
        %vm490 = vcmp.eq.s32.totalorder %v482, 1
        %vm491 = vcmp.eq.s32.totalorder %v483, 1
        %vm492 = vcmp.eq.s32.totalorder %v484, 1
        %vm493 = vcmp.eq.s32.totalorder %v485, 1
        %vm494 = vcmp.eq.s32.totalorder %v486, 1
        %v495 = vand.u32 %v415, 1
        %v496 = vand.u32 %v416, 1
        %v497 = vand.u32 %v417, 1
        %v498 = vand.u32 %v418, 1
        %v499 = vand.u32 %v419, 1
        %v500 = vand.u32 %v420, 1
        %v501 = vand.u32 %v421, 1
        %v502 = vand.u32 %v422, 1
        %vm503 = vcmp.eq.s32.totalorder %v495, 1
        %vm504 = vcmp.eq.s32.totalorder %v496, 1
        %vm505 = vcmp.eq.s32.totalorder %v497, 1
        %vm506 = vcmp.eq.s32.totalorder %v498, 1
        %vm507 = vcmp.eq.s32.totalorder %v499, 1
        %vm508 = vcmp.eq.s32.totalorder %v500, 1
        %vm509 = vcmp.eq.s32.totalorder %v501, 1
        %vm510 = vcmp.eq.s32.totalorder %v502, 1
        %vm511 = vmand %vm487, %vm503
        %vm512 = vmand %vm488, %vm504
        %vm513 = vmand %vm489, %vm505
        %vm514 = vmand %vm490, %vm506
        %vm515 = vmand %vm491, %vm507
        %vm516 = vmand %vm492, %vm508
        %vm517 = vmand %vm493, %vm509
        %vm518 = vmand %vm494, %vm510
        %vm519 = vcmp.le.s32.totalorder %v407, 27
        %vm520 = vcmp.le.s32.totalorder %v408, 27
        %vm521 = vcmp.le.s32.totalorder %v409, 27
        %vm522 = vcmp.le.s32.totalorder %v410, 27
        %vm523 = vcmp.le.s32.totalorder %v411, 27
        %vm524 = vcmp.le.s32.totalorder %v412, 27
        %vm525 = vcmp.le.s32.totalorder %v413, 27
        %vm526 = vcmp.le.s32.totalorder %v414, 27
        %vm527 = vmand %vm511, %vm519
        %vm528 = vmand %vm512, %vm520
        %vm529 = vmand %vm513, %vm521
        %vm530 = vmand %vm514, %vm522
        %vm531 = vmand %vm515, %vm523
        %vm532 = vmand %vm516, %vm524
        %vm533 = vmand %vm517, %vm525
        %vm534 = vmand %vm518, %vm526
        %vm535 = vcmp.le.s32.totalorder %v415, 27
        %vm536 = vcmp.le.s32.totalorder %v416, 27
        %vm537 = vcmp.le.s32.totalorder %v417, 27
        %vm538 = vcmp.le.s32.totalorder %v418, 27
        %vm539 = vcmp.le.s32.totalorder %v419, 27
        %vm540 = vcmp.le.s32.totalorder %v420, 27
        %vm541 = vcmp.le.s32.totalorder %v421, 27
        %vm542 = vcmp.le.s32.totalorder %v422, 27
        %vm543 = vmand %vm527, %vm535
        %vm544 = vmand %vm528, %vm536
        %vm545 = vmand %vm529, %vm537
        %vm546 = vmand %vm530, %vm538
        %vm547 = vmand %vm531, %vm539
        %vm548 = vmand %vm532, %vm540
        %vm549 = vmand %vm533, %vm541
        %vm550 = vmand %vm534, %vm542
        %v551 = vld [vmem:[%s397] sm:$0xff]
        %v553 = vperm.slane %v551, 0
        %v554 = vperm.slane %v551, 1
        %v555 = vperm.slane %v551, 2
        %v556 = vperm.slane %v551, 3
        %v557 = vperm.slane %v551, 4
        %v558 = vperm.slane %v551, 5
        %v559 = vperm.slane %v551, 6
        %v560 = vperm.slane %v551, 7
        %569 = vrot.lane.b32.xlu0 %v553, 33
        %v570 = vpop.permute.xlu0 %569
        %571 = vrot.lane.b32.xlu0 %v554, 33
        %v572 = vpop.permute.xlu0 %571
        %573 = vrot.lane.b32.xlu0 %v555, 33
        %v574 = vpop.permute.xlu0 %573
        %575 = vrot.lane.b32.xlu0 %v556, 33
        %v576 = vpop.permute.xlu0 %575
        %577 = vrot.lane.b32.xlu0 %v557, 33
        %v578 = vpop.permute.xlu0 %577
        %579 = vrot.lane.b32.xlu0 %v558, 33
        %v580 = vpop.permute.xlu0 %579
        %581 = vrot.lane.b32.xlu0 %v559, 33
        %v582 = vpop.permute.xlu0 %581
        %583 = vrot.lane.b32.xlu0 %v560, 33
        %v584 = vpop.permute.xlu0 %583
        %vm585 = vcmp.lt.s32.totalorder %v399, 33
        %v586 = vsel %vm585, %v582, %v584
        %v587 = vsel %vm585, %v580, %v582
        %v588 = vsel %vm585, %v578, %v580
        %v589 = vsel %vm585, %v576, %v578
        %v590 = vsel %vm585, %v574, %v576
        %v591 = vsel %vm585, %v572, %v574
        %v592 = vsel %vm585, %v570, %v572
        %v593 = vsel %vm585, %v584, %v570
        %v594 = vld [vmem:[%s1] sm:$0xff]
        %v595 = vld [vmem:[%s1 + $0x8] sm:$0x3]
        %597 = vset.pattern.permute.xlu0 0
        %598 = vperm.xlu0 %597, %v594
        %v599 = vpop.permute.xlu0 %598
        %602 = vset.pattern.permute.xlu0 0
        %603 = vperm.xlu0 %602, %v595
        %v604 = vpop.permute.xlu0 %603
        %v606 = vperm.slane %v593, 0
        %v607 = vperm.slane %v592, 0
        %v608 = vperm.slane %v591, 0
        %v609 = vperm.slane %v590, 0
        %v610 = vperm.slane %v589, 0
        %v611 = vperm.slane %v588, 0
        %v612 = vperm.slane %v587, 0
        %v613 = vperm.slane %v586, 0
        %v614 = vmul.f32 %v599, %v606
        %v615 = vmul.f32 %v599, %v607
        %v616 = vmul.f32 %v599, %v608
        %v617 = vmul.f32 %v599, %v609
        %v618 = vmul.f32 %v599, %v610
        %v619 = vmul.f32 %v599, %v611
        %v620 = vmul.f32 %v599, %v612
        %v621 = vmul.f32 %v599, %v613
        %v622 = vmul.f32 %v604, %v606
        %v623 = vmul.f32 %v604, %v607
        %v624 = vmul.f32 %v604, %v608
        %v625 = vmul.f32 %v604, %v609
        %v626 = vmul.f32 %v604, %v610
        %v627 = vmul.f32 %v604, %v611
        %v628 = vmul.f32 %v604, %v612
        %v629 = vmul.f32 %v604, %v613
        %630 = vrot.lane.b32.xlu0 %v553, 32
        %v631 = vpop.permute.xlu0 %630
        %632 = vrot.lane.b32.xlu0 %v554, 32
        %v633 = vpop.permute.xlu0 %632
        %634 = vrot.lane.b32.xlu0 %v555, 32
        %v635 = vpop.permute.xlu0 %634
        %636 = vrot.lane.b32.xlu0 %v556, 32
        %v637 = vpop.permute.xlu0 %636
        %638 = vrot.lane.b32.xlu0 %v557, 32
        %v639 = vpop.permute.xlu0 %638
        %640 = vrot.lane.b32.xlu0 %v558, 32
        %v641 = vpop.permute.xlu0 %640
        %642 = vrot.lane.b32.xlu0 %v559, 32
        %v643 = vpop.permute.xlu0 %642
        %644 = vrot.lane.b32.xlu0 %v560, 32
        %v645 = vpop.permute.xlu0 %644
        %vm646 = vcmp.lt.s32.totalorder %v399, 32
        %v647 = vsel %vm646, %v643, %v645
        %v648 = vsel %vm646, %v641, %v643
        %v649 = vsel %vm646, %v639, %v641
        %v650 = vsel %vm646, %v637, %v639
        %v651 = vsel %vm646, %v635, %v637
        %v652 = vsel %vm646, %v633, %v635
        %v653 = vsel %vm646, %v631, %v633
        %v654 = vsel %vm646, %v645, %v631
        %s655 = scalar_lea.vmem %s1, 16
        %v656 = vld [vmem:[%s655] sm:$0xff]
        %v657 = vld [vmem:[%s655 + $0x8] sm:$0x3]
        %659 = vset.pattern.permute.xlu0 0
        %660 = vperm.xlu0 %659, %v656
        %v661 = vpop.permute.xlu0 %660
        %664 = vset.pattern.permute.xlu0 0
        %665 = vperm.xlu0 %664, %v657
        %v666 = vpop.permute.xlu0 %665
        %v668 = vperm.slane %v654, 0
        %v669 = vperm.slane %v653, 0
        %v670 = vperm.slane %v652, 0
        %v671 = vperm.slane %v651, 0
        %v672 = vperm.slane %v650, 0
        %v673 = vperm.slane %v649, 0
        %v674 = vperm.slane %v648, 0
        %v675 = vperm.slane %v647, 0
        %v676 = vmul.f32 %v661, %v668
        %v677 = vmul.f32 %v661, %v669
        %v678 = vmul.f32 %v661, %v670
        %v679 = vmul.f32 %v661, %v671
        %v680 = vmul.f32 %v661, %v672
        %v681 = vmul.f32 %v661, %v673
        %v682 = vmul.f32 %v661, %v674
        %v683 = vmul.f32 %v661, %v675
        %v684 = vmul.f32 %v666, %v668
        %v685 = vmul.f32 %v666, %v669
        %v686 = vmul.f32 %v666, %v670
        %v687 = vmul.f32 %v666, %v671
        %v688 = vmul.f32 %v666, %v672
        %v689 = vmul.f32 %v666, %v673
        %v690 = vmul.f32 %v666, %v674
        %v691 = vmul.f32 %v666, %v675
        %v692 = vadd.f32 %v614, %v676
        %v693 = vadd.f32 %v615, %v677
        %v694 = vadd.f32 %v616, %v678
        %v695 = vadd.f32 %v617, %v679
        %v696 = vadd.f32 %v618, %v680
        %v697 = vadd.f32 %v619, %v681
        %v698 = vadd.f32 %v620, %v682
        %v699 = vadd.f32 %v621, %v683
        %v700 = vadd.f32 %v622, %v684
        %v701 = vadd.f32 %v623, %v685
        %v702 = vadd.f32 %v624, %v686
        %v703 = vadd.f32 %v625, %v687
        %v704 = vadd.f32 %v626, %v688
        %v705 = vadd.f32 %v627, %v689
        %v706 = vadd.f32 %v628, %v690
        %v707 = vadd.f32 %v629, %v691
        %708 = vrot.lane.b32.xlu0 %v553, 31
        %v709 = vpop.permute.xlu0 %708
        %710 = vrot.lane.b32.xlu0 %v554, 31
        %v711 = vpop.permute.xlu0 %710
        %712 = vrot.lane.b32.xlu0 %v555, 31
        %v713 = vpop.permute.xlu0 %712
        %714 = vrot.lane.b32.xlu0 %v556, 31
        %v715 = vpop.permute.xlu0 %714
        %716 = vrot.lane.b32.xlu0 %v557, 31
        %v717 = vpop.permute.xlu0 %716
        %718 = vrot.lane.b32.xlu0 %v558, 31
        %v719 = vpop.permute.xlu0 %718
        %720 = vrot.lane.b32.xlu0 %v559, 31
        %v721 = vpop.permute.xlu0 %720
        %722 = vrot.lane.b32.xlu0 %v560, 31
        %v723 = vpop.permute.xlu0 %722
        %vm724 = vcmp.lt.s32.totalorder %v399, 31
        %v725 = vsel %vm724, %v721, %v723
        %v726 = vsel %vm724, %v719, %v721
        %v727 = vsel %vm724, %v717, %v719
        %v728 = vsel %vm724, %v715, %v717
        %v729 = vsel %vm724, %v713, %v715
        %v730 = vsel %vm724, %v711, %v713
        %v731 = vsel %vm724, %v709, %v711
        %v732 = vsel %vm724, %v723, %v709
        %s733 = scalar_lea.vmem %s1, 32
        %v734 = vld [vmem:[%s733] sm:$0xff]
        %v735 = vld [vmem:[%s733 + $0x8] sm:$0x3]
        %737 = vset.pattern.permute.xlu0 0
        %738 = vperm.xlu0 %737, %v734
        %v739 = vpop.permute.xlu0 %738
        %742 = vset.pattern.permute.xlu0 0
        %743 = vperm.xlu0 %742, %v735
        %v744 = vpop.permute.xlu0 %743
        %v746 = vperm.slane %v732, 0
        %v747 = vperm.slane %v731, 0
        %v748 = vperm.slane %v730, 0
        %v749 = vperm.slane %v729, 0
        %v750 = vperm.slane %v728, 0
        %v751 = vperm.slane %v727, 0
        %v752 = vperm.slane %v726, 0
        %v753 = vperm.slane %v725, 0
        %v754 = vmul.f32 %v739, %v746
        %v755 = vmul.f32 %v739, %v747
        %v756 = vmul.f32 %v739, %v748
        %v757 = vmul.f32 %v739, %v749
        %v758 = vmul.f32 %v739, %v750
        %v759 = vmul.f32 %v739, %v751
        %v760 = vmul.f32 %v739, %v752
        %v761 = vmul.f32 %v739, %v753
        %v762 = vmul.f32 %v744, %v746
        %v763 = vmul.f32 %v744, %v747
        %v764 = vmul.f32 %v744, %v748
        %v765 = vmul.f32 %v744, %v749
        %v766 = vmul.f32 %v744, %v750
        %v767 = vmul.f32 %v744, %v751
        %v768 = vmul.f32 %v744, %v752
        %v769 = vmul.f32 %v744, %v753
        %v770 = vadd.f32 %v692, %v754
        %v771 = vadd.f32 %v693, %v755
        %v772 = vadd.f32 %v694, %v756
        %v773 = vadd.f32 %v695, %v757
        %v774 = vadd.f32 %v696, %v758
        %v775 = vadd.f32 %v697, %v759
        %v776 = vadd.f32 %v698, %v760
        %v777 = vadd.f32 %v699, %v761
        %v778 = vadd.f32 %v700, %v762
        %v779 = vadd.f32 %v701, %v763
        %v780 = vadd.f32 %v702, %v764
        %v781 = vadd.f32 %v703, %v765
        %v782 = vadd.f32 %v704, %v766
        %v783 = vadd.f32 %v705, %v767
        %v784 = vadd.f32 %v706, %v768
        %v785 = vadd.f32 %v707, %v769
        %786 = vrot.lane.b32.xlu0 %v553, 1
        %v787 = vpop.permute.xlu0 %786
        %788 = vrot.lane.b32.xlu0 %v554, 1
        %v789 = vpop.permute.xlu0 %788
        %790 = vrot.lane.b32.xlu0 %v555, 1
        %v791 = vpop.permute.xlu0 %790
        %792 = vrot.lane.b32.xlu0 %v556, 1
        %v793 = vpop.permute.xlu0 %792
        %794 = vrot.lane.b32.xlu0 %v557, 1
        %v795 = vpop.permute.xlu0 %794
        %796 = vrot.lane.b32.xlu0 %v558, 1
        %v797 = vpop.permute.xlu0 %796
        %798 = vrot.lane.b32.xlu0 %v559, 1
        %v799 = vpop.permute.xlu0 %798
        %800 = vrot.lane.b32.xlu0 %v560, 1
        %v801 = vpop.permute.xlu0 %800
        %vm802 = vcmp.lt.s32.totalorder %v399, 1
        %v803 = vsel %vm802, %v799, %v801
        %v804 = vsel %vm802, %v797, %v799
        %v805 = vsel %vm802, %v795, %v797
        %v806 = vsel %vm802, %v793, %v795
        %v807 = vsel %vm802, %v791, %v793
        %v808 = vsel %vm802, %v789, %v791
        %v809 = vsel %vm802, %v787, %v789
        %v810 = vsel %vm802, %v801, %v787
        %s811 = scalar_lea.vmem %s1, 48
        %v812 = vld [vmem:[%s811] sm:$0xff]
        %v813 = vld [vmem:[%s811 + $0x8] sm:$0x3]
        %815 = vset.pattern.permute.xlu0 0
        %816 = vperm.xlu0 %815, %v812
        %v817 = vpop.permute.xlu0 %816
        %820 = vset.pattern.permute.xlu0 0
        %821 = vperm.xlu0 %820, %v813
        %v822 = vpop.permute.xlu0 %821
        %v824 = vperm.slane %v810, 0
        %v825 = vperm.slane %v809, 0
        %v826 = vperm.slane %v808, 0
        %v827 = vperm.slane %v807, 0
        %v828 = vperm.slane %v806, 0
        %v829 = vperm.slane %v805, 0
        %v830 = vperm.slane %v804, 0
        %v831 = vperm.slane %v803, 0
        %v832 = vmul.f32 %v817, %v824
        %v833 = vmul.f32 %v817, %v825
        %v834 = vmul.f32 %v817, %v826
        %v835 = vmul.f32 %v817, %v827
        %v836 = vmul.f32 %v817, %v828
        %v837 = vmul.f32 %v817, %v829
        %v838 = vmul.f32 %v817, %v830
        %v839 = vmul.f32 %v817, %v831
        %v840 = vmul.f32 %v822, %v824
        %v841 = vmul.f32 %v822, %v825
        %v842 = vmul.f32 %v822, %v826
        %v843 = vmul.f32 %v822, %v827
        %v844 = vmul.f32 %v822, %v828
        %v845 = vmul.f32 %v822, %v829
        %v846 = vmul.f32 %v822, %v830
        %v847 = vmul.f32 %v822, %v831
        %v848 = vadd.f32 %v770, %v832
        %v849 = vadd.f32 %v771, %v833
        %v850 = vadd.f32 %v772, %v834
        %v851 = vadd.f32 %v773, %v835
        %v852 = vadd.f32 %v774, %v836
        %v853 = vadd.f32 %v775, %v837
        %v854 = vadd.f32 %v776, %v838
        %v855 = vadd.f32 %v777, %v839
        %v856 = vadd.f32 %v778, %v840
        %v857 = vadd.f32 %v779, %v841
        %v858 = vadd.f32 %v780, %v842
        %v859 = vadd.f32 %v781, %v843
        %v860 = vadd.f32 %v782, %v844
        %v861 = vadd.f32 %v783, %v845
        %v862 = vadd.f32 %v784, %v846
        %v863 = vadd.f32 %v785, %v847
        %s864 = scalar_lea.vmem %s1, 64
        %v865 = vld [vmem:[%s864] sm:$0xff]
        %v866 = vld [vmem:[%s864 + $0x8] sm:$0x3]
        %868 = vset.pattern.permute.xlu0 0
        %869 = vperm.xlu0 %868, %v865
        %v870 = vpop.permute.xlu0 %869
        %873 = vset.pattern.permute.xlu0 0
        %874 = vperm.xlu0 %873, %v866
        %v875 = vpop.permute.xlu0 %874
        %v877 = vmul.f32 %v870, %v553
        %v878 = vmul.f32 %v870, %v554
        %v879 = vmul.f32 %v870, %v555
        %v880 = vmul.f32 %v870, %v556
        %v881 = vmul.f32 %v870, %v557
        %v882 = vmul.f32 %v870, %v558
        %v883 = vmul.f32 %v870, %v559
        %v884 = vmul.f32 %v870, %v560
        %v885 = vmul.f32 %v875, %v553
        %v886 = vmul.f32 %v875, %v554
        %v887 = vmul.f32 %v875, %v555
        %v888 = vmul.f32 %v875, %v556
        %v889 = vmul.f32 %v875, %v557
        %v890 = vmul.f32 %v875, %v558
        %v891 = vmul.f32 %v875, %v559
        %v892 = vmul.f32 %v875, %v560
        %v893 = vadd.f32 %v848, %v877
        %v894 = vadd.f32 %v849, %v878
        %v895 = vadd.f32 %v850, %v879
        %v896 = vadd.f32 %v851, %v880
        %v897 = vadd.f32 %v852, %v881
        %v898 = vadd.f32 %v853, %v882
        %v899 = vadd.f32 %v854, %v883
        %v900 = vadd.f32 %v855, %v884
        %v901 = vadd.f32 %v856, %v885
        %v902 = vadd.f32 %v857, %v886
        %v903 = vadd.f32 %v858, %v887
        %v904 = vadd.f32 %v859, %v888
        %v905 = vadd.f32 %v860, %v889
        %v906 = vadd.f32 %v861, %v890
        %v907 = vadd.f32 %v862, %v891
        %v908 = vadd.f32 %v863, %v892
        %909 = vrot.lane.b32.xlu0 %v553, 127
        %v910 = vpop.permute.xlu0 %909
        %911 = vrot.lane.b32.xlu0 %v554, 127
        %v912 = vpop.permute.xlu0 %911
        %913 = vrot.lane.b32.xlu0 %v555, 127
        %v914 = vpop.permute.xlu0 %913
        %915 = vrot.lane.b32.xlu0 %v556, 127
        %v916 = vpop.permute.xlu0 %915
        %917 = vrot.lane.b32.xlu0 %v557, 127
        %v918 = vpop.permute.xlu0 %917
        %919 = vrot.lane.b32.xlu0 %v558, 127
        %v920 = vpop.permute.xlu0 %919
        %921 = vrot.lane.b32.xlu0 %v559, 127
        %v922 = vpop.permute.xlu0 %921
        %923 = vrot.lane.b32.xlu0 %v560, 127
        %v924 = vpop.permute.xlu0 %923
        %vm925 = vcmp.lt.s32.totalorder %v399, 127
        %v926 = vsel %vm925, %v922, %v924
        %v927 = vsel %vm925, %v920, %v922
        %v928 = vsel %vm925, %v918, %v920
        %v929 = vsel %vm925, %v916, %v918
        %v930 = vsel %vm925, %v914, %v916
        %v931 = vsel %vm925, %v912, %v914
        %v932 = vsel %vm925, %v910, %v912
        %v933 = vsel %vm925, %v924, %v910
        %s934 = scalar_lea.vmem %s1, 80
        %v935 = vld [vmem:[%s934] sm:$0xff]
        %v936 = vld [vmem:[%s934 + $0x8] sm:$0x3]
        %938 = vset.pattern.permute.xlu0 0
        %939 = vperm.xlu0 %938, %v935
        %v940 = vpop.permute.xlu0 %939
        %943 = vset.pattern.permute.xlu0 0
        %944 = vperm.xlu0 %943, %v936
        %v945 = vpop.permute.xlu0 %944
        %v947 = vperm.slane %v932, 0
        %v948 = vperm.slane %v931, 0
        %v949 = vperm.slane %v930, 0
        %v950 = vperm.slane %v929, 0
        %v951 = vperm.slane %v928, 0
        %v952 = vperm.slane %v927, 0
        %v953 = vperm.slane %v926, 0
        %v954 = vperm.slane %v933, 0
        %v955 = vmul.f32 %v940, %v947
        %v956 = vmul.f32 %v940, %v948
        %v957 = vmul.f32 %v940, %v949
        %v958 = vmul.f32 %v940, %v950
        %v959 = vmul.f32 %v940, %v951
        %v960 = vmul.f32 %v940, %v952
        %v961 = vmul.f32 %v940, %v953
        %v962 = vmul.f32 %v940, %v954
        %v963 = vmul.f32 %v945, %v947
        %v964 = vmul.f32 %v945, %v948
        %v965 = vmul.f32 %v945, %v949
        %v966 = vmul.f32 %v945, %v950
        %v967 = vmul.f32 %v945, %v951
        %v968 = vmul.f32 %v945, %v952
        %v969 = vmul.f32 %v945, %v953
        %v970 = vmul.f32 %v945, %v954
        %v971 = vadd.f32 %v893, %v955
        %v972 = vadd.f32 %v894, %v956
        %v973 = vadd.f32 %v895, %v957
        %v974 = vadd.f32 %v896, %v958
        %v975 = vadd.f32 %v897, %v959
        %v976 = vadd.f32 %v898, %v960
        %v977 = vadd.f32 %v899, %v961
        %v978 = vadd.f32 %v900, %v962
        %v979 = vadd.f32 %v901, %v963
        %v980 = vadd.f32 %v902, %v964
        %v981 = vadd.f32 %v903, %v965
        %v982 = vadd.f32 %v904, %v966
        %v983 = vadd.f32 %v905, %v967
        %v984 = vadd.f32 %v906, %v968
        %v985 = vadd.f32 %v907, %v969
        %v986 = vadd.f32 %v908, %v970
        %987 = vrot.lane.b32.xlu0 %v553, 97
        %v988 = vpop.permute.xlu0 %987
        %989 = vrot.lane.b32.xlu0 %v554, 97
        %v990 = vpop.permute.xlu0 %989
        %991 = vrot.lane.b32.xlu0 %v555, 97
        %v992 = vpop.permute.xlu0 %991
        %993 = vrot.lane.b32.xlu0 %v556, 97
        %v994 = vpop.permute.xlu0 %993
        %995 = vrot.lane.b32.xlu0 %v557, 97
        %v996 = vpop.permute.xlu0 %995
        %997 = vrot.lane.b32.xlu0 %v558, 97
        %v998 = vpop.permute.xlu0 %997
        %999 = vrot.lane.b32.xlu0 %v559, 97
        %v1000 = vpop.permute.xlu0 %999
        %1001 = vrot.lane.b32.xlu0 %v560, 97
        %v1002 = vpop.permute.xlu0 %1001
        %vm1003 = vcmp.lt.s32.totalorder %v399, 97
        %v1004 = vsel %vm1003, %v1000, %v1002
        %v1005 = vsel %vm1003, %v998, %v1000
        %v1006 = vsel %vm1003, %v996, %v998
        %v1007 = vsel %vm1003, %v994, %v996
        %v1008 = vsel %vm1003, %v992, %v994
        %v1009 = vsel %vm1003, %v990, %v992
        %v1010 = vsel %vm1003, %v988, %v990
        %v1011 = vsel %vm1003, %v1002, %v988
        %s1012 = scalar_lea.vmem %s1, 96
        %v1013 = vld [vmem:[%s1012] sm:$0xff]
        %v1014 = vld [vmem:[%s1012 + $0x8] sm:$0x3]
        %1016 = vset.pattern.permute.xlu0 0
        %1017 = vperm.xlu0 %1016, %v1013
        %v1018 = vpop.permute.xlu0 %1017
        %1021 = vset.pattern.permute.xlu0 0
        %1022 = vperm.xlu0 %1021, %v1014
        %v1023 = vpop.permute.xlu0 %1022
        %v1025 = vperm.slane %v1010, 0
        %v1026 = vperm.slane %v1009, 0
        %v1027 = vperm.slane %v1008, 0
        %v1028 = vperm.slane %v1007, 0
        %v1029 = vperm.slane %v1006, 0
        %v1030 = vperm.slane %v1005, 0
        %v1031 = vperm.slane %v1004, 0
        %v1032 = vperm.slane %v1011, 0
        %v1033 = vmul.f32 %v1018, %v1025
        %v1034 = vmul.f32 %v1018, %v1026
        %v1035 = vmul.f32 %v1018, %v1027
        %v1036 = vmul.f32 %v1018, %v1028
        %v1037 = vmul.f32 %v1018, %v1029
        %v1038 = vmul.f32 %v1018, %v1030
        %v1039 = vmul.f32 %v1018, %v1031
        %v1040 = vmul.f32 %v1018, %v1032
        %v1041 = vmul.f32 %v1023, %v1025
        %v1042 = vmul.f32 %v1023, %v1026
        %v1043 = vmul.f32 %v1023, %v1027
        %v1044 = vmul.f32 %v1023, %v1028
        %v1045 = vmul.f32 %v1023, %v1029
        %v1046 = vmul.f32 %v1023, %v1030
        %v1047 = vmul.f32 %v1023, %v1031
        %v1048 = vmul.f32 %v1023, %v1032
        %v1049 = vadd.f32 %v971, %v1033
        %v1050 = vadd.f32 %v972, %v1034
        %v1051 = vadd.f32 %v973, %v1035
        %v1052 = vadd.f32 %v974, %v1036
        %v1053 = vadd.f32 %v975, %v1037
        %v1054 = vadd.f32 %v976, %v1038
        %v1055 = vadd.f32 %v977, %v1039
        %v1056 = vadd.f32 %v978, %v1040
        %v1057 = vadd.f32 %v979, %v1041
        %v1058 = vadd.f32 %v980, %v1042
        %v1059 = vadd.f32 %v981, %v1043
        %v1060 = vadd.f32 %v982, %v1044
        %v1061 = vadd.f32 %v983, %v1045
        %v1062 = vadd.f32 %v984, %v1046
        %v1063 = vadd.f32 %v985, %v1047
        %v1064 = vadd.f32 %v986, %v1048
        %1065 = vrot.lane.b32.xlu0 %v553, 96
        %v1066 = vpop.permute.xlu0 %1065
        %1067 = vrot.lane.b32.xlu0 %v554, 96
        %v1068 = vpop.permute.xlu0 %1067
        %1069 = vrot.lane.b32.xlu0 %v555, 96
        %v1070 = vpop.permute.xlu0 %1069
        %1071 = vrot.lane.b32.xlu0 %v556, 96
        %v1072 = vpop.permute.xlu0 %1071
        %1073 = vrot.lane.b32.xlu0 %v557, 96
        %v1074 = vpop.permute.xlu0 %1073
        %1075 = vrot.lane.b32.xlu0 %v558, 96
        %v1076 = vpop.permute.xlu0 %1075
        %1077 = vrot.lane.b32.xlu0 %v559, 96
        %v1078 = vpop.permute.xlu0 %1077
        %1079 = vrot.lane.b32.xlu0 %v560, 96
        %v1080 = vpop.permute.xlu0 %1079
        %vm1081 = vcmp.lt.s32.totalorder %v399, 96
        %v1082 = vsel %vm1081, %v1078, %v1080
        %v1083 = vsel %vm1081, %v1076, %v1078
        %v1084 = vsel %vm1081, %v1074, %v1076
        %v1085 = vsel %vm1081, %v1072, %v1074
        %v1086 = vsel %vm1081, %v1070, %v1072
        %v1087 = vsel %vm1081, %v1068, %v1070
        %v1088 = vsel %vm1081, %v1066, %v1068
        %v1089 = vsel %vm1081, %v1080, %v1066
        %s1090 = scalar_lea.vmem %s1, 112
        %v1091 = vld [vmem:[%s1090] sm:$0xff]
        %v1092 = vld [vmem:[%s1090 + $0x8] sm:$0x3]
        %1094 = vset.pattern.permute.xlu0 0
        %1095 = vperm.xlu0 %1094, %v1091
        %v1096 = vpop.permute.xlu0 %1095
        %1099 = vset.pattern.permute.xlu0 0
        %1100 = vperm.xlu0 %1099, %v1092
        %v1101 = vpop.permute.xlu0 %1100
        %v1103 = vperm.slane %v1088, 0
        %v1104 = vperm.slane %v1087, 0
        %v1105 = vperm.slane %v1086, 0
        %v1106 = vperm.slane %v1085, 0
        %v1107 = vperm.slane %v1084, 0
        %v1108 = vperm.slane %v1083, 0
        %v1109 = vperm.slane %v1082, 0
        %v1110 = vperm.slane %v1089, 0
        %v1111 = vmul.f32 %v1096, %v1103
        %v1112 = vmul.f32 %v1096, %v1104
        %v1113 = vmul.f32 %v1096, %v1105
        %v1114 = vmul.f32 %v1096, %v1106
        %v1115 = vmul.f32 %v1096, %v1107
        %v1116 = vmul.f32 %v1096, %v1108
        %v1117 = vmul.f32 %v1096, %v1109
        %v1118 = vmul.f32 %v1096, %v1110
        %v1119 = vmul.f32 %v1101, %v1103
        %v1120 = vmul.f32 %v1101, %v1104
        %v1121 = vmul.f32 %v1101, %v1105
        %v1122 = vmul.f32 %v1101, %v1106
        %v1123 = vmul.f32 %v1101, %v1107
        %v1124 = vmul.f32 %v1101, %v1108
        %v1125 = vmul.f32 %v1101, %v1109
        %v1126 = vmul.f32 %v1101, %v1110
        %v1127 = vadd.f32 %v1049, %v1111
        %v1128 = vadd.f32 %v1050, %v1112
        %v1129 = vadd.f32 %v1051, %v1113
        %v1130 = vadd.f32 %v1052, %v1114
        %v1131 = vadd.f32 %v1053, %v1115
        %v1132 = vadd.f32 %v1054, %v1116
        %v1133 = vadd.f32 %v1055, %v1117
        %v1134 = vadd.f32 %v1056, %v1118
        %v1135 = vadd.f32 %v1057, %v1119
        %v1136 = vadd.f32 %v1058, %v1120
        %v1137 = vadd.f32 %v1059, %v1121
        %v1138 = vadd.f32 %v1060, %v1122
        %v1139 = vadd.f32 %v1061, %v1123
        %v1140 = vadd.f32 %v1062, %v1124
        %v1141 = vadd.f32 %v1063, %v1125
        %v1142 = vadd.f32 %v1064, %v1126
        %1143 = vrot.lane.b32.xlu0 %v553, 95
        %v1144 = vpop.permute.xlu0 %1143
        %1145 = vrot.lane.b32.xlu0 %v554, 95
        %v1146 = vpop.permute.xlu0 %1145
        %1147 = vrot.lane.b32.xlu0 %v555, 95
        %v1148 = vpop.permute.xlu0 %1147
        %1149 = vrot.lane.b32.xlu0 %v556, 95
        %v1150 = vpop.permute.xlu0 %1149
        %1151 = vrot.lane.b32.xlu0 %v557, 95
        %v1152 = vpop.permute.xlu0 %1151
        %1153 = vrot.lane.b32.xlu0 %v558, 95
        %v1154 = vpop.permute.xlu0 %1153
        %1155 = vrot.lane.b32.xlu0 %v559, 95
        %v1156 = vpop.permute.xlu0 %1155
        %1157 = vrot.lane.b32.xlu0 %v560, 95
        %v1158 = vpop.permute.xlu0 %1157
        %vm1159 = vcmp.lt.s32.totalorder %v399, 95
        %v1160 = vsel %vm1159, %v1156, %v1158
        %v1161 = vsel %vm1159, %v1154, %v1156
        %v1162 = vsel %vm1159, %v1152, %v1154
        %v1163 = vsel %vm1159, %v1150, %v1152
        %v1164 = vsel %vm1159, %v1148, %v1150
        %v1165 = vsel %vm1159, %v1146, %v1148
        %v1166 = vsel %vm1159, %v1144, %v1146
        %v1167 = vsel %vm1159, %v1158, %v1144
        %s1168 = scalar_lea.vmem %s1, 128
        %v1169 = vld [vmem:[%s1168] sm:$0xff]
        %v1170 = vld [vmem:[%s1168 + $0x8] sm:$0x3]
        %1172 = vset.pattern.permute.xlu0 0
        %1173 = vperm.xlu0 %1172, %v1169
        %v1174 = vpop.permute.xlu0 %1173
        %1177 = vset.pattern.permute.xlu0 0
        %1178 = vperm.xlu0 %1177, %v1170
        %v1179 = vpop.permute.xlu0 %1178
        %v1181 = vperm.slane %v1166, 0
        %v1182 = vperm.slane %v1165, 0
        %v1183 = vperm.slane %v1164, 0
        %v1184 = vperm.slane %v1163, 0
        %v1185 = vperm.slane %v1162, 0
        %v1186 = vperm.slane %v1161, 0
        %v1187 = vperm.slane %v1160, 0
        %v1188 = vperm.slane %v1167, 0
        %v1189 = vmul.f32 %v1174, %v1181
        %v1190 = vmul.f32 %v1174, %v1182
        %v1191 = vmul.f32 %v1174, %v1183
        %v1192 = vmul.f32 %v1174, %v1184
        %v1193 = vmul.f32 %v1174, %v1185
        %v1194 = vmul.f32 %v1174, %v1186
        %v1195 = vmul.f32 %v1174, %v1187
        %v1196 = vmul.f32 %v1174, %v1188
        %v1197 = vmul.f32 %v1179, %v1181
        %v1198 = vmul.f32 %v1179, %v1182
        %v1199 = vmul.f32 %v1179, %v1183
        %v1200 = vmul.f32 %v1179, %v1184
        %v1201 = vmul.f32 %v1179, %v1185
        %v1202 = vmul.f32 %v1179, %v1186
        %v1203 = vmul.f32 %v1179, %v1187
        %v1204 = vmul.f32 %v1179, %v1188
        %v1205 = vadd.f32 %v1127, %v1189
        %v1206 = vadd.f32 %v1128, %v1190
        %v1207 = vadd.f32 %v1129, %v1191
        %v1208 = vadd.f32 %v1130, %v1192
        %v1209 = vadd.f32 %v1131, %v1193
        %v1210 = vadd.f32 %v1132, %v1194
        %v1211 = vadd.f32 %v1133, %v1195
        %v1212 = vadd.f32 %v1134, %v1196
        %v1213 = vadd.f32 %v1135, %v1197
        %v1214 = vadd.f32 %v1136, %v1198
        %v1215 = vadd.f32 %v1137, %v1199
        %v1216 = vadd.f32 %v1138, %v1200
        %v1217 = vadd.f32 %v1139, %v1201
        %v1218 = vadd.f32 %v1140, %v1202
        %v1219 = vadd.f32 %v1141, %v1203
        %v1220 = vadd.f32 %v1142, %v1204
        %v1221 = vld [vmem:[%s2] sm:$0xff]
        %v1222 = vld [vmem:[%s2 + $0x8] sm:$0x3]
        %1224 = vset.pattern.permute.xlu0 0
        %1225 = vperm.xlu0 %1224, %v1221
        %v1226 = vpop.permute.xlu0 %1225
        %1229 = vset.pattern.permute.xlu0 0
        %1230 = vperm.xlu0 %1229, %v1222
        %v1231 = vpop.permute.xlu0 %1230
        %v1233 = vadd.f32 %v1205, %v1226
        %v1234 = vadd.f32 %v1206, %v1226
        %v1235 = vadd.f32 %v1207, %v1226
        %v1236 = vadd.f32 %v1208, %v1226
        %v1237 = vadd.f32 %v1209, %v1226
        %v1238 = vadd.f32 %v1210, %v1226
        %v1239 = vadd.f32 %v1211, %v1226
        %v1240 = vadd.f32 %v1212, %v1226
        %v1241 = vadd.f32 %v1213, %v1231
        %v1242 = vadd.f32 %v1214, %v1231
        %v1243 = vadd.f32 %v1215, %v1231
        %v1244 = vadd.f32 %v1216, %v1231
        %v1245 = vadd.f32 %v1217, %v1231
        %v1246 = vadd.f32 %v1218, %v1231
        %v1247 = vadd.f32 %v1219, %v1231
        %v1248 = vadd.f32 %v1220, %v1231
        %v1249 = vmax.f32 %v1233, 0.0
        %v1250 = vmax.f32 %v1234, 0.0
        %v1251 = vmax.f32 %v1235, 0.0
        %v1252 = vmax.f32 %v1236, 0.0
        %v1253 = vmax.f32 %v1237, 0.0
        %v1254 = vmax.f32 %v1238, 0.0
        %v1255 = vmax.f32 %v1239, 0.0
        %v1256 = vmax.f32 %v1240, 0.0
        %v1257 = vmax.f32 %v1241, 0.0
        %v1258 = vmax.f32 %v1242, 0.0
        %v1259 = vmax.f32 %v1243, 0.0
        %v1260 = vmax.f32 %v1244, 0.0
        %v1261 = vmax.f32 %v1245, 0.0
        %v1262 = vmax.f32 %v1246, 0.0
        %v1263 = vmax.f32 %v1247, 0.0
        %v1264 = vmax.f32 %v1248, 0.0
        %v1265 = vsel %vm471, 1, 0
        %v1266 = vsel %vm472, 1, 0
        %v1267 = vsel %vm473, 1, 0
        %v1268 = vsel %vm474, 1, 0
        %v1269 = vsel %vm475, 1, 0
        %v1270 = vsel %vm476, 1, 0
        %v1271 = vsel %vm477, 1, 0
        %v1272 = vsel %vm478, 1, 0
        %vm1273 = vcmp.eq.s32.totalorder %v1265, 1
        %vm1274 = vcmp.eq.s32.totalorder %v1266, 1
        %vm1275 = vcmp.eq.s32.totalorder %v1267, 1
        %vm1276 = vcmp.eq.s32.totalorder %v1268, 1
        %vm1277 = vcmp.eq.s32.totalorder %v1269, 1
        %vm1278 = vcmp.eq.s32.totalorder %v1270, 1
        %vm1279 = vcmp.eq.s32.totalorder %v1271, 1
        %vm1280 = vcmp.eq.s32.totalorder %v1272, 1
        %v1281 = vsel %vm1273, %v1249, 0.0
        %v1282 = vsel %vm1274, %v1250, 0.0
        %v1283 = vsel %vm1275, %v1251, 0.0
        %v1284 = vsel %vm1276, %v1252, 0.0
        %v1285 = vsel %vm1277, %v1253, 0.0
        %v1286 = vsel %vm1278, %v1254, 0.0
        %v1287 = vsel %vm1279, %v1255, 0.0
        %v1288 = vsel %vm1280, %v1256, 0.0
        %v1289 = vsel %vm1273, %v1257, 0.0
        %v1290 = vsel %vm1274, %v1258, 0.0
        %v1291 = vsel %vm1275, %v1259, 0.0
        %v1292 = vsel %vm1276, %v1260, 0.0
        %v1293 = vsel %vm1277, %v1261, 0.0
        %v1294 = vsel %vm1278, %v1262, 0.0
        %v1295 = vsel %vm1279, %v1263, 0.0
        %v1296 = vsel %vm1280, %v1264, 0.0
        %1297 = vrot.lane.b32.xlu0 %v1281, 33
        %v1298 = vpop.permute.xlu0 %1297
        %1299 = vrot.lane.b32.xlu0 %v1289, 33
        %v1300 = vpop.permute.xlu0 %1299
        %1301 = vrot.lane.b32.xlu0 %v1282, 33
        %v1302 = vpop.permute.xlu0 %1301
        %1303 = vrot.lane.b32.xlu0 %v1290, 33
        %v1304 = vpop.permute.xlu0 %1303
        %1305 = vrot.lane.b32.xlu0 %v1283, 33
        %v1306 = vpop.permute.xlu0 %1305
        %1307 = vrot.lane.b32.xlu0 %v1291, 33
        %v1308 = vpop.permute.xlu0 %1307
        %1309 = vrot.lane.b32.xlu0 %v1284, 33
        %v1310 = vpop.permute.xlu0 %1309
        %1311 = vrot.lane.b32.xlu0 %v1292, 33
        %v1312 = vpop.permute.xlu0 %1311
        %1313 = vrot.lane.b32.xlu0 %v1285, 33
        %v1314 = vpop.permute.xlu0 %1313
        %1315 = vrot.lane.b32.xlu0 %v1293, 33
        %v1316 = vpop.permute.xlu0 %1315
        %1317 = vrot.lane.b32.xlu0 %v1286, 33
        %v1318 = vpop.permute.xlu0 %1317
        %1319 = vrot.lane.b32.xlu0 %v1294, 33
        %v1320 = vpop.permute.xlu0 %1319
        %1321 = vrot.lane.b32.xlu0 %v1287, 33
        %v1322 = vpop.permute.xlu0 %1321
        %1323 = vrot.lane.b32.xlu0 %v1295, 33
        %v1324 = vpop.permute.xlu0 %1323
        %1325 = vrot.lane.b32.xlu0 %v1288, 33
        %v1326 = vpop.permute.xlu0 %1325
        %1327 = vrot.lane.b32.xlu0 %v1296, 33
        %v1328 = vpop.permute.xlu0 %1327
        %v1329 = vsel %vm585, %v1322, %v1326
        %v1330 = vsel %vm585, %v1324, %v1328
        %v1331 = vsel %vm585, %v1318, %v1322
        %v1332 = vsel %vm585, %v1320, %v1324
        %v1333 = vsel %vm585, %v1314, %v1318
        %v1334 = vsel %vm585, %v1316, %v1320
        %v1335 = vsel %vm585, %v1310, %v1314
        %v1336 = vsel %vm585, %v1312, %v1316
        %v1337 = vsel %vm585, %v1306, %v1310
        %v1338 = vsel %vm585, %v1308, %v1312
        %v1339 = vsel %vm585, %v1302, %v1306
        %v1340 = vsel %vm585, %v1304, %v1308
        %v1341 = vsel %vm585, %v1298, %v1302
        %v1342 = vsel %vm585, %v1300, %v1304
        %v1343 = vsel %vm585, %v1326, %v1298
        %v1344 = vsel %vm585, %v1328, %v1300
        %v1345 = vld [vmem:[%s3] sm:$0xff]
        %v1346 = vld [vmem:[%s3 + $0x8] sm:$0xff]
        %1347 = vrot.lane.b32.xlu0 %v1281, 32
        %v1348 = vpop.permute.xlu0 %1347
        %1349 = vrot.lane.b32.xlu0 %v1289, 32
        %v1350 = vpop.permute.xlu0 %1349
        %1351 = vrot.lane.b32.xlu0 %v1282, 32
        %v1352 = vpop.permute.xlu0 %1351
        %1353 = vrot.lane.b32.xlu0 %v1290, 32
        %v1354 = vpop.permute.xlu0 %1353
        %1355 = vrot.lane.b32.xlu0 %v1283, 32
        %v1356 = vpop.permute.xlu0 %1355
        %1357 = vrot.lane.b32.xlu0 %v1291, 32
        %v1358 = vpop.permute.xlu0 %1357
        %1359 = vrot.lane.b32.xlu0 %v1284, 32
        %v1360 = vpop.permute.xlu0 %1359
        %1361 = vrot.lane.b32.xlu0 %v1292, 32
        %v1362 = vpop.permute.xlu0 %1361
        %1363 = vrot.lane.b32.xlu0 %v1285, 32
        %v1364 = vpop.permute.xlu0 %1363
        %1365 = vrot.lane.b32.xlu0 %v1293, 32
        %v1366 = vpop.permute.xlu0 %1365
        %1367 = vrot.lane.b32.xlu0 %v1286, 32
        %v1368 = vpop.permute.xlu0 %1367
        %1369 = vrot.lane.b32.xlu0 %v1294, 32
        %v1370 = vpop.permute.xlu0 %1369
        %1371 = vrot.lane.b32.xlu0 %v1287, 32
        %v1372 = vpop.permute.xlu0 %1371
        %1373 = vrot.lane.b32.xlu0 %v1295, 32
        %v1374 = vpop.permute.xlu0 %1373
        %1375 = vrot.lane.b32.xlu0 %v1288, 32
        %v1376 = vpop.permute.xlu0 %1375
        %1377 = vrot.lane.b32.xlu0 %v1296, 32
        %v1378 = vpop.permute.xlu0 %1377
        %v1379 = vsel %vm646, %v1372, %v1376
        %v1380 = vsel %vm646, %v1374, %v1378
        %v1381 = vsel %vm646, %v1368, %v1372
        %v1382 = vsel %vm646, %v1370, %v1374
        %v1383 = vsel %vm646, %v1364, %v1368
        %v1384 = vsel %vm646, %v1366, %v1370
        %v1385 = vsel %vm646, %v1360, %v1364
        %v1386 = vsel %vm646, %v1362, %v1366
        %v1387 = vsel %vm646, %v1356, %v1360
        %v1388 = vsel %vm646, %v1358, %v1362
        %v1389 = vsel %vm646, %v1352, %v1356
        %v1390 = vsel %vm646, %v1354, %v1358
        %v1391 = vsel %vm646, %v1348, %v1352
        %v1392 = vsel %vm646, %v1350, %v1354
        %v1393 = vsel %vm646, %v1376, %v1348
        %v1394 = vsel %vm646, %v1378, %v1350
        %s1395 = scalar_lea.vmem %s3, 16
        %v1396 = vld [vmem:[%s1395] sm:$0xff]
        %v1397 = vld [vmem:[%s1395 + $0x8] sm:$0xff]
        %vm1398 = vcmask 80896
        %v1400 = vsel %vm1398, %v1396, 0
        %v1403 = vsel %vm1398, %v1397, 0
        %vm1405 = vcmask 1041408
        %v1407 = vsel %vm1405, %v1394, 0
        %v1410 = vsel %vm1405, %v1392, 0
        %v1413 = vsel %vm1405, %v1390, 0
        %v1416 = vsel %vm1405, %v1388, 0
        %v1419 = vsel %vm1405, %v1386, 0
        %v1422 = vsel %vm1405, %v1384, 0
        %v1425 = vsel %vm1405, %v1382, 0
        %v1428 = vsel %vm1405, %v1380, 0
        %1430 = vmatpush.msra.mxu0 0.0
        %1431 = vmatpush.msra.mxu0 0.0
        %1432 = vmatpush.msra.mxu0 0.0
        %1433 = vmatpush.msra.mxu0 0.0
        %1434 = vmatpush.msra.mxu0 0.0
        %1435 = vmatpush.msra.mxu0 0.0
        %1436 = vmatpush.msra.mxu0 0.0
        %1437 = vmatpush.msra.mxu0 0.0
        %1438 = vmatpush.msra.mxu0 0.0
        %1439 = vmatpush.msra.mxu0 0.0
        %1440 = vmatpush.msra.mxu0 0.0
        %1441 = vmatpush.msra.mxu0 0.0
        %1442 = vmatpush.msra.mxu0 0.0
        %1443 = vmatpush.msra.mxu0 0.0
        %1444 = vmatpush.msra.mxu0 %v1407
        %1445 = vmatpush.msra.mxu0 %v1393
        %1446 = vmatmul.f32.gmra.mxu0 %v1400
        %v1447 = vpop.f32.mrf.mxu0
        %v1448 = vadd.f32 0.0, %v1447
        %1449 = vmatmul.f32.gmra.mxu0 %v1403
        %v1450 = vpop.f32.mrf.mxu0
        %v1451 = vadd.f32 0.0, %v1450
        %1452 = vdwg.mxu0
        %1453 = vmatpush.msra.mxu0 0.0
        %1454 = vmatpush.msra.mxu0 0.0
        %1455 = vmatpush.msra.mxu0 0.0
        %1456 = vmatpush.msra.mxu0 0.0
        %1457 = vmatpush.msra.mxu0 0.0
        %1458 = vmatpush.msra.mxu0 0.0
        %1459 = vmatpush.msra.mxu0 0.0
        %1460 = vmatpush.msra.mxu0 0.0
        %1461 = vmatpush.msra.mxu0 0.0
        %1462 = vmatpush.msra.mxu0 0.0
        %1463 = vmatpush.msra.mxu0 0.0
        %1464 = vmatpush.msra.mxu0 0.0
        %1465 = vmatpush.msra.mxu0 0.0
        %1466 = vmatpush.msra.mxu0 0.0
        %1467 = vmatpush.msra.mxu0 %v1410
        %1468 = vmatpush.msra.mxu0 %v1391
        %1469 = vmatmul.f32.gmra.mxu0 %v1400
        %v1470 = vpop.f32.mrf.mxu0
        %v1471 = vadd.f32 0.0, %v1470
        %1472 = vmatmul.f32.gmra.mxu0 %v1403
        %v1473 = vpop.f32.mrf.mxu0
        %v1474 = vadd.f32 0.0, %v1473
        %1475 = vdwg.mxu0
        %1476 = vmatpush.msra.mxu0 0.0
        %1477 = vmatpush.msra.mxu0 0.0
        %1478 = vmatpush.msra.mxu0 0.0
        %1479 = vmatpush.msra.mxu0 0.0
        %1480 = vmatpush.msra.mxu0 0.0
        %1481 = vmatpush.msra.mxu0 0.0
        %1482 = vmatpush.msra.mxu0 0.0
        %1483 = vmatpush.msra.mxu0 0.0
        %1484 = vmatpush.msra.mxu0 0.0
        %1485 = vmatpush.msra.mxu0 0.0
        %1486 = vmatpush.msra.mxu0 0.0
        %1487 = vmatpush.msra.mxu0 0.0
        %1488 = vmatpush.msra.mxu0 0.0
        %1489 = vmatpush.msra.mxu0 0.0
        %1490 = vmatpush.msra.mxu0 %v1413
        %1491 = vmatpush.msra.mxu0 %v1389
        %1492 = vmatmul.f32.gmra.mxu0 %v1400
        %v1493 = vpop.f32.mrf.mxu0
        %v1494 = vadd.f32 0.0, %v1493
        %1495 = vmatmul.f32.gmra.mxu0 %v1403
        %v1496 = vpop.f32.mrf.mxu0
        %v1497 = vadd.f32 0.0, %v1496
        %1498 = vdwg.mxu0
        %1499 = vmatpush.msra.mxu0 0.0
        %1500 = vmatpush.msra.mxu0 0.0
        %1501 = vmatpush.msra.mxu0 0.0
        %1502 = vmatpush.msra.mxu0 0.0
        %1503 = vmatpush.msra.mxu0 0.0
        %1504 = vmatpush.msra.mxu0 0.0
        %1505 = vmatpush.msra.mxu0 0.0
        %1506 = vmatpush.msra.mxu0 0.0
        %1507 = vmatpush.msra.mxu0 0.0
        %1508 = vmatpush.msra.mxu0 0.0
        %1509 = vmatpush.msra.mxu0 0.0
        %1510 = vmatpush.msra.mxu0 0.0
        %1511 = vmatpush.msra.mxu0 0.0
        %1512 = vmatpush.msra.mxu0 0.0
        %1513 = vmatpush.msra.mxu0 %v1416
        %1514 = vmatpush.msra.mxu0 %v1387
        %1515 = vmatmul.f32.gmra.mxu0 %v1400
        %v1516 = vpop.f32.mrf.mxu0
        %v1517 = vadd.f32 0.0, %v1516
        %1518 = vmatmul.f32.gmra.mxu0 %v1403
        %v1519 = vpop.f32.mrf.mxu0
        %v1520 = vadd.f32 0.0, %v1519
        %1521 = vdwg.mxu0
        %1522 = vmatpush.msra.mxu0 0.0
        %1523 = vmatpush.msra.mxu0 0.0
        %1524 = vmatpush.msra.mxu0 0.0
        %1525 = vmatpush.msra.mxu0 0.0
        %1526 = vmatpush.msra.mxu0 0.0
        %1527 = vmatpush.msra.mxu0 0.0
        %1528 = vmatpush.msra.mxu0 0.0
        %1529 = vmatpush.msra.mxu0 0.0
        %1530 = vmatpush.msra.mxu0 0.0
        %1531 = vmatpush.msra.mxu0 0.0
        %1532 = vmatpush.msra.mxu0 0.0
        %1533 = vmatpush.msra.mxu0 0.0
        %1534 = vmatpush.msra.mxu0 0.0
        %1535 = vmatpush.msra.mxu0 0.0
        %1536 = vmatpush.msra.mxu0 %v1419
        %1537 = vmatpush.msra.mxu0 %v1385
        %1538 = vmatmul.f32.gmra.mxu0 %v1400
        %v1539 = vpop.f32.mrf.mxu0
        %v1540 = vadd.f32 0.0, %v1539
        %1541 = vmatmul.f32.gmra.mxu0 %v1403
        %v1542 = vpop.f32.mrf.mxu0
        %v1543 = vadd.f32 0.0, %v1542
        %1544 = vdwg.mxu0
        %1545 = vmatpush.msra.mxu0 0.0
        %1546 = vmatpush.msra.mxu0 0.0
        %1547 = vmatpush.msra.mxu0 0.0
        %1548 = vmatpush.msra.mxu0 0.0
        %1549 = vmatpush.msra.mxu0 0.0
        %1550 = vmatpush.msra.mxu0 0.0
        %1551 = vmatpush.msra.mxu0 0.0
        %1552 = vmatpush.msra.mxu0 0.0
        %1553 = vmatpush.msra.mxu0 0.0
        %1554 = vmatpush.msra.mxu0 0.0
        %1555 = vmatpush.msra.mxu0 0.0
        %1556 = vmatpush.msra.mxu0 0.0
        %1557 = vmatpush.msra.mxu0 0.0
        %1558 = vmatpush.msra.mxu0 0.0
        %1559 = vmatpush.msra.mxu0 %v1422
        %1560 = vmatpush.msra.mxu0 %v1383
        %1561 = vmatmul.f32.gmra.mxu0 %v1400
        %v1562 = vpop.f32.mrf.mxu0
        %v1563 = vadd.f32 0.0, %v1562
        %1564 = vmatmul.f32.gmra.mxu0 %v1403
        %v1565 = vpop.f32.mrf.mxu0
        %v1566 = vadd.f32 0.0, %v1565
        %1567 = vdwg.mxu0
        %1568 = vmatpush.msra.mxu0 0.0
        %1569 = vmatpush.msra.mxu0 0.0
        %1570 = vmatpush.msra.mxu0 0.0
        %1571 = vmatpush.msra.mxu0 0.0
        %1572 = vmatpush.msra.mxu0 0.0
        %1573 = vmatpush.msra.mxu0 0.0
        %1574 = vmatpush.msra.mxu0 0.0
        %1575 = vmatpush.msra.mxu0 0.0
        %1576 = vmatpush.msra.mxu0 0.0
        %1577 = vmatpush.msra.mxu0 0.0
        %1578 = vmatpush.msra.mxu0 0.0
        %1579 = vmatpush.msra.mxu0 0.0
        %1580 = vmatpush.msra.mxu0 0.0
        %1581 = vmatpush.msra.mxu0 0.0
        %1582 = vmatpush.msra.mxu0 %v1425
        %1583 = vmatpush.msra.mxu0 %v1381
        %1584 = vmatmul.f32.gmra.mxu0 %v1400
        %v1585 = vpop.f32.mrf.mxu0
        %v1586 = vadd.f32 0.0, %v1585
        %1587 = vmatmul.f32.gmra.mxu0 %v1403
        %v1588 = vpop.f32.mrf.mxu0
        %v1589 = vadd.f32 0.0, %v1588
        %1590 = vdwg.mxu0
        %1591 = vmatpush.msra.mxu0 0.0
        %1592 = vmatpush.msra.mxu0 0.0
        %1593 = vmatpush.msra.mxu0 0.0
        %1594 = vmatpush.msra.mxu0 0.0
        %1595 = vmatpush.msra.mxu0 0.0
        %1596 = vmatpush.msra.mxu0 0.0
        %1597 = vmatpush.msra.mxu0 0.0
        %1598 = vmatpush.msra.mxu0 0.0
        %1599 = vmatpush.msra.mxu0 0.0
        %1600 = vmatpush.msra.mxu0 0.0
        %1601 = vmatpush.msra.mxu0 0.0
        %1602 = vmatpush.msra.mxu0 0.0
        %1603 = vmatpush.msra.mxu0 0.0
        %1604 = vmatpush.msra.mxu0 0.0
        %1605 = vmatpush.msra.mxu0 %v1428
        %1606 = vmatpush.msra.mxu0 %v1379
        %1607 = vmatmul.f32.gmra.mxu0 %v1400
        %v1608 = vpop.f32.mrf.mxu0
        %v1609 = vadd.f32 0.0, %v1608
        %1610 = vmatmul.f32.gmra.mxu0 %v1403
        %v1611 = vpop.f32.mrf.mxu0
        %v1612 = vadd.f32 0.0, %v1611
        %1613 = vdwg.mxu0
        %v1615 = vsel %vm1398, %v1345, 0
        %v1618 = vsel %vm1398, %v1346, 0
        %v1621 = vsel %vm1405, %v1344, 0
        %v1624 = vsel %vm1405, %v1342, 0
        %v1627 = vsel %vm1405, %v1340, 0
        %v1630 = vsel %vm1405, %v1338, 0
        %v1633 = vsel %vm1405, %v1336, 0
        %v1636 = vsel %vm1405, %v1334, 0
        %v1639 = vsel %vm1405, %v1332, 0
        %v1642 = vsel %vm1405, %v1330, 0
        %1644 = vmatpush.msra.mxu0 0.0
        %1645 = vmatpush.msra.mxu0 0.0
        %1646 = vmatpush.msra.mxu0 0.0
        %1647 = vmatpush.msra.mxu0 0.0
        %1648 = vmatpush.msra.mxu0 0.0
        %1649 = vmatpush.msra.mxu0 0.0
        %1650 = vmatpush.msra.mxu0 0.0
        %1651 = vmatpush.msra.mxu0 0.0
        %1652 = vmatpush.msra.mxu0 0.0
        %1653 = vmatpush.msra.mxu0 0.0
        %1654 = vmatpush.msra.mxu0 0.0
        %1655 = vmatpush.msra.mxu0 0.0
        %1656 = vmatpush.msra.mxu0 0.0
        %1657 = vmatpush.msra.mxu0 0.0
        %1658 = vmatpush.msra.mxu0 %v1621
        %1659 = vmatpush.msra.mxu0 %v1343
        %1660 = vmatmul.f32.gmra.mxu0 %v1615
        %v1661 = vpop.f32.mrf.mxu0
        %v1662 = vadd.f32 %v1448, %v1661
        %1663 = vmatmul.f32.gmra.mxu0 %v1618
        %v1664 = vpop.f32.mrf.mxu0
        %v1665 = vadd.f32 %v1451, %v1664
        %1666 = vdwg.mxu0
        %1667 = vmatpush.msra.mxu0 0.0
        %1668 = vmatpush.msra.mxu0 0.0
        %1669 = vmatpush.msra.mxu0 0.0
        %1670 = vmatpush.msra.mxu0 0.0
        %1671 = vmatpush.msra.mxu0 0.0
        %1672 = vmatpush.msra.mxu0 0.0
        %1673 = vmatpush.msra.mxu0 0.0
        %1674 = vmatpush.msra.mxu0 0.0
        %1675 = vmatpush.msra.mxu0 0.0
        %1676 = vmatpush.msra.mxu0 0.0
        %1677 = vmatpush.msra.mxu0 0.0
        %1678 = vmatpush.msra.mxu0 0.0
        %1679 = vmatpush.msra.mxu0 0.0
        %1680 = vmatpush.msra.mxu0 0.0
        %1681 = vmatpush.msra.mxu0 %v1624
        %1682 = vmatpush.msra.mxu0 %v1341
        %1683 = vmatmul.f32.gmra.mxu0 %v1615
        %v1684 = vpop.f32.mrf.mxu0
        %v1685 = vadd.f32 %v1471, %v1684
        %1686 = vmatmul.f32.gmra.mxu0 %v1618
        %v1687 = vpop.f32.mrf.mxu0
        %v1688 = vadd.f32 %v1474, %v1687
        %1689 = vdwg.mxu0
        %1690 = vmatpush.msra.mxu0 0.0
        %1691 = vmatpush.msra.mxu0 0.0
        %1692 = vmatpush.msra.mxu0 0.0
        %1693 = vmatpush.msra.mxu0 0.0
        %1694 = vmatpush.msra.mxu0 0.0
        %1695 = vmatpush.msra.mxu0 0.0
        %1696 = vmatpush.msra.mxu0 0.0
        %1697 = vmatpush.msra.mxu0 0.0
        %1698 = vmatpush.msra.mxu0 0.0
        %1699 = vmatpush.msra.mxu0 0.0
        %1700 = vmatpush.msra.mxu0 0.0
        %1701 = vmatpush.msra.mxu0 0.0
        %1702 = vmatpush.msra.mxu0 0.0
        %1703 = vmatpush.msra.mxu0 0.0
        %1704 = vmatpush.msra.mxu0 %v1627
        %1705 = vmatpush.msra.mxu0 %v1339
        %1706 = vmatmul.f32.gmra.mxu0 %v1615
        %v1707 = vpop.f32.mrf.mxu0
        %v1708 = vadd.f32 %v1494, %v1707
        %1709 = vmatmul.f32.gmra.mxu0 %v1618
        %v1710 = vpop.f32.mrf.mxu0
        %v1711 = vadd.f32 %v1497, %v1710
        %1712 = vdwg.mxu0
        %1713 = vmatpush.msra.mxu0 0.0
        %1714 = vmatpush.msra.mxu0 0.0
        %1715 = vmatpush.msra.mxu0 0.0
        %1716 = vmatpush.msra.mxu0 0.0
        %1717 = vmatpush.msra.mxu0 0.0
        %1718 = vmatpush.msra.mxu0 0.0
        %1719 = vmatpush.msra.mxu0 0.0
        %1720 = vmatpush.msra.mxu0 0.0
        %1721 = vmatpush.msra.mxu0 0.0
        %1722 = vmatpush.msra.mxu0 0.0
        %1723 = vmatpush.msra.mxu0 0.0
        %1724 = vmatpush.msra.mxu0 0.0
        %1725 = vmatpush.msra.mxu0 0.0
        %1726 = vmatpush.msra.mxu0 0.0
        %1727 = vmatpush.msra.mxu0 %v1630
        %1728 = vmatpush.msra.mxu0 %v1337
        %1729 = vmatmul.f32.gmra.mxu0 %v1615
        %v1730 = vpop.f32.mrf.mxu0
        %v1731 = vadd.f32 %v1517, %v1730
        %1732 = vmatmul.f32.gmra.mxu0 %v1618
        %v1733 = vpop.f32.mrf.mxu0
        %v1734 = vadd.f32 %v1520, %v1733
        %1735 = vdwg.mxu0
        %1736 = vmatpush.msra.mxu0 0.0
        %1737 = vmatpush.msra.mxu0 0.0
        %1738 = vmatpush.msra.mxu0 0.0
        %1739 = vmatpush.msra.mxu0 0.0
        %1740 = vmatpush.msra.mxu0 0.0
        %1741 = vmatpush.msra.mxu0 0.0
        %1742 = vmatpush.msra.mxu0 0.0
        %1743 = vmatpush.msra.mxu0 0.0
        %1744 = vmatpush.msra.mxu0 0.0
        %1745 = vmatpush.msra.mxu0 0.0
        %1746 = vmatpush.msra.mxu0 0.0
        %1747 = vmatpush.msra.mxu0 0.0
        %1748 = vmatpush.msra.mxu0 0.0
        %1749 = vmatpush.msra.mxu0 0.0
        %1750 = vmatpush.msra.mxu0 %v1633
        %1751 = vmatpush.msra.mxu0 %v1335
        %1752 = vmatmul.f32.gmra.mxu0 %v1615
        %v1753 = vpop.f32.mrf.mxu0
        %v1754 = vadd.f32 %v1540, %v1753
        %1755 = vmatmul.f32.gmra.mxu0 %v1618
        %v1756 = vpop.f32.mrf.mxu0
        %v1757 = vadd.f32 %v1543, %v1756
        %1758 = vdwg.mxu0
        %1759 = vmatpush.msra.mxu0 0.0
        %1760 = vmatpush.msra.mxu0 0.0
        %1761 = vmatpush.msra.mxu0 0.0
        %1762 = vmatpush.msra.mxu0 0.0
        %1763 = vmatpush.msra.mxu0 0.0
        %1764 = vmatpush.msra.mxu0 0.0
        %1765 = vmatpush.msra.mxu0 0.0
        %1766 = vmatpush.msra.mxu0 0.0
        %1767 = vmatpush.msra.mxu0 0.0
        %1768 = vmatpush.msra.mxu0 0.0
        %1769 = vmatpush.msra.mxu0 0.0
        %1770 = vmatpush.msra.mxu0 0.0
        %1771 = vmatpush.msra.mxu0 0.0
        %1772 = vmatpush.msra.mxu0 0.0
        %1773 = vmatpush.msra.mxu0 %v1636
        %1774 = vmatpush.msra.mxu0 %v1333
        %1775 = vmatmul.f32.gmra.mxu0 %v1615
        %v1776 = vpop.f32.mrf.mxu0
        %v1777 = vadd.f32 %v1563, %v1776
        %1778 = vmatmul.f32.gmra.mxu0 %v1618
        %v1779 = vpop.f32.mrf.mxu0
        %v1780 = vadd.f32 %v1566, %v1779
        %1781 = vdwg.mxu0
        %1782 = vmatpush.msra.mxu0 0.0
        %1783 = vmatpush.msra.mxu0 0.0
        %1784 = vmatpush.msra.mxu0 0.0
        %1785 = vmatpush.msra.mxu0 0.0
        %1786 = vmatpush.msra.mxu0 0.0
        %1787 = vmatpush.msra.mxu0 0.0
        %1788 = vmatpush.msra.mxu0 0.0
        %1789 = vmatpush.msra.mxu0 0.0
        %1790 = vmatpush.msra.mxu0 0.0
        %1791 = vmatpush.msra.mxu0 0.0
        %1792 = vmatpush.msra.mxu0 0.0
        %1793 = vmatpush.msra.mxu0 0.0
        %1794 = vmatpush.msra.mxu0 0.0
        %1795 = vmatpush.msra.mxu0 0.0
        %1796 = vmatpush.msra.mxu0 %v1639
        %1797 = vmatpush.msra.mxu0 %v1331
        %1798 = vmatmul.f32.gmra.mxu0 %v1615
        %v1799 = vpop.f32.mrf.mxu0
        %v1800 = vadd.f32 %v1586, %v1799
        %1801 = vmatmul.f32.gmra.mxu0 %v1618
        %v1802 = vpop.f32.mrf.mxu0
        %v1803 = vadd.f32 %v1589, %v1802
        %1804 = vdwg.mxu0
        %1805 = vmatpush.msra.mxu0 0.0
        %1806 = vmatpush.msra.mxu0 0.0
        %1807 = vmatpush.msra.mxu0 0.0
        %1808 = vmatpush.msra.mxu0 0.0
        %1809 = vmatpush.msra.mxu0 0.0
        %1810 = vmatpush.msra.mxu0 0.0
        %1811 = vmatpush.msra.mxu0 0.0
        %1812 = vmatpush.msra.mxu0 0.0
        %1813 = vmatpush.msra.mxu0 0.0
        %1814 = vmatpush.msra.mxu0 0.0
        %1815 = vmatpush.msra.mxu0 0.0
        %1816 = vmatpush.msra.mxu0 0.0
        %1817 = vmatpush.msra.mxu0 0.0
        %1818 = vmatpush.msra.mxu0 0.0
        %1819 = vmatpush.msra.mxu0 %v1642
        %1820 = vmatpush.msra.mxu0 %v1329
        %1821 = vmatmul.f32.gmra.mxu0 %v1615
        %v1822 = vpop.f32.mrf.mxu0
        %v1823 = vadd.f32 %v1609, %v1822
        %1824 = vmatmul.f32.gmra.mxu0 %v1618
        %v1825 = vpop.f32.mrf.mxu0
        %v1826 = vadd.f32 %v1612, %v1825
        %1827 = vdwg.mxu0
        %1828 = vrot.lane.b32.xlu0 %v1281, 31
        %v1829 = vpop.permute.xlu0 %1828
        %1830 = vrot.lane.b32.xlu0 %v1289, 31
        %v1831 = vpop.permute.xlu0 %1830
        %1832 = vrot.lane.b32.xlu0 %v1282, 31
        %v1833 = vpop.permute.xlu0 %1832
        %1834 = vrot.lane.b32.xlu0 %v1290, 31
        %v1835 = vpop.permute.xlu0 %1834
        %1836 = vrot.lane.b32.xlu0 %v1283, 31
        %v1837 = vpop.permute.xlu0 %1836
        %1838 = vrot.lane.b32.xlu0 %v1291, 31
        %v1839 = vpop.permute.xlu0 %1838
        %1840 = vrot.lane.b32.xlu0 %v1284, 31
        %v1841 = vpop.permute.xlu0 %1840
        %1842 = vrot.lane.b32.xlu0 %v1292, 31
        %v1843 = vpop.permute.xlu0 %1842
        %1844 = vrot.lane.b32.xlu0 %v1285, 31
        %v1845 = vpop.permute.xlu0 %1844
        %1846 = vrot.lane.b32.xlu0 %v1293, 31
        %v1847 = vpop.permute.xlu0 %1846
        %1848 = vrot.lane.b32.xlu0 %v1286, 31
        %v1849 = vpop.permute.xlu0 %1848
        %1850 = vrot.lane.b32.xlu0 %v1294, 31
        %v1851 = vpop.permute.xlu0 %1850
        %1852 = vrot.lane.b32.xlu0 %v1287, 31
        %v1853 = vpop.permute.xlu0 %1852
        %1854 = vrot.lane.b32.xlu0 %v1295, 31
        %v1855 = vpop.permute.xlu0 %1854
        %1856 = vrot.lane.b32.xlu0 %v1288, 31
        %v1857 = vpop.permute.xlu0 %1856
        %1858 = vrot.lane.b32.xlu0 %v1296, 31
        %v1859 = vpop.permute.xlu0 %1858
        %v1860 = vsel %vm724, %v1853, %v1857
        %v1861 = vsel %vm724, %v1855, %v1859
        %v1862 = vsel %vm724, %v1849, %v1853
        %v1863 = vsel %vm724, %v1851, %v1855
        %v1864 = vsel %vm724, %v1845, %v1849
        %v1865 = vsel %vm724, %v1847, %v1851
        %v1866 = vsel %vm724, %v1841, %v1845
        %v1867 = vsel %vm724, %v1843, %v1847
        %v1868 = vsel %vm724, %v1837, %v1841
        %v1869 = vsel %vm724, %v1839, %v1843
        %v1870 = vsel %vm724, %v1833, %v1837
        %v1871 = vsel %vm724, %v1835, %v1839
        %v1872 = vsel %vm724, %v1829, %v1833
        %v1873 = vsel %vm724, %v1831, %v1835
        %v1874 = vsel %vm724, %v1857, %v1829
        %v1875 = vsel %vm724, %v1859, %v1831
        %s1876 = scalar_lea.vmem %s3, 32
        %v1877 = vld [vmem:[%s1876] sm:$0xff]
        %v1878 = vld [vmem:[%s1876 + $0x8] sm:$0xff]
        %v1880 = vsel %vm1398, %v1877, 0
        %v1883 = vsel %vm1398, %v1878, 0
        %v1886 = vsel %vm1405, %v1875, 0
        %v1889 = vsel %vm1405, %v1873, 0
        %v1892 = vsel %vm1405, %v1871, 0
        %v1895 = vsel %vm1405, %v1869, 0
        %v1898 = vsel %vm1405, %v1867, 0
        %v1901 = vsel %vm1405, %v1865, 0
        %v1904 = vsel %vm1405, %v1863, 0
        %v1907 = vsel %vm1405, %v1861, 0
        %1909 = vmatpush.msra.mxu0 0.0
        %1910 = vmatpush.msra.mxu0 0.0
        %1911 = vmatpush.msra.mxu0 0.0
        %1912 = vmatpush.msra.mxu0 0.0
        %1913 = vmatpush.msra.mxu0 0.0
        %1914 = vmatpush.msra.mxu0 0.0
        %1915 = vmatpush.msra.mxu0 0.0
        %1916 = vmatpush.msra.mxu0 0.0
        %1917 = vmatpush.msra.mxu0 0.0
        %1918 = vmatpush.msra.mxu0 0.0
        %1919 = vmatpush.msra.mxu0 0.0
        %1920 = vmatpush.msra.mxu0 0.0
        %1921 = vmatpush.msra.mxu0 0.0
        %1922 = vmatpush.msra.mxu0 0.0
        %1923 = vmatpush.msra.mxu0 %v1886
        %1924 = vmatpush.msra.mxu0 %v1874
        %1925 = vmatmul.f32.gmra.mxu0 %v1880
        %v1926 = vpop.f32.mrf.mxu0
        %v1927 = vadd.f32 0.0, %v1926
        %1928 = vmatmul.f32.gmra.mxu0 %v1883
        %v1929 = vpop.f32.mrf.mxu0
        %v1930 = vadd.f32 0.0, %v1929
        %1931 = vdwg.mxu0
        %1932 = vmatpush.msra.mxu0 0.0
        %1933 = vmatpush.msra.mxu0 0.0
        %1934 = vmatpush.msra.mxu0 0.0
        %1935 = vmatpush.msra.mxu0 0.0
        %1936 = vmatpush.msra.mxu0 0.0
        %1937 = vmatpush.msra.mxu0 0.0
        %1938 = vmatpush.msra.mxu0 0.0
        %1939 = vmatpush.msra.mxu0 0.0
        %1940 = vmatpush.msra.mxu0 0.0
        %1941 = vmatpush.msra.mxu0 0.0
        %1942 = vmatpush.msra.mxu0 0.0
        %1943 = vmatpush.msra.mxu0 0.0
        %1944 = vmatpush.msra.mxu0 0.0
        %1945 = vmatpush.msra.mxu0 0.0
        %1946 = vmatpush.msra.mxu0 %v1889
        %1947 = vmatpush.msra.mxu0 %v1872
        %1948 = vmatmul.f32.gmra.mxu0 %v1880
        %v1949 = vpop.f32.mrf.mxu0
        %v1950 = vadd.f32 0.0, %v1949
        %1951 = vmatmul.f32.gmra.mxu0 %v1883
        %v1952 = vpop.f32.mrf.mxu0
        %v1953 = vadd.f32 0.0, %v1952
        %1954 = vdwg.mxu0
        %1955 = vmatpush.msra.mxu0 0.0
        %1956 = vmatpush.msra.mxu0 0.0
        %1957 = vmatpush.msra.mxu0 0.0
        %1958 = vmatpush.msra.mxu0 0.0
        %1959 = vmatpush.msra.mxu0 0.0
        %1960 = vmatpush.msra.mxu0 0.0
        %1961 = vmatpush.msra.mxu0 0.0
        %1962 = vmatpush.msra.mxu0 0.0
        %1963 = vmatpush.msra.mxu0 0.0
        %1964 = vmatpush.msra.mxu0 0.0
        %1965 = vmatpush.msra.mxu0 0.0
        %1966 = vmatpush.msra.mxu0 0.0
        %1967 = vmatpush.msra.mxu0 0.0
        %1968 = vmatpush.msra.mxu0 0.0
        %1969 = vmatpush.msra.mxu0 %v1892
        %1970 = vmatpush.msra.mxu0 %v1870
        %1971 = vmatmul.f32.gmra.mxu0 %v1880
        %v1972 = vpop.f32.mrf.mxu0
        %v1973 = vadd.f32 0.0, %v1972
        %1974 = vmatmul.f32.gmra.mxu0 %v1883
        %v1975 = vpop.f32.mrf.mxu0
        %v1976 = vadd.f32 0.0, %v1975
        %1977 = vdwg.mxu0
        %1978 = vmatpush.msra.mxu0 0.0
        %1979 = vmatpush.msra.mxu0 0.0
        %1980 = vmatpush.msra.mxu0 0.0
        %1981 = vmatpush.msra.mxu0 0.0
        %1982 = vmatpush.msra.mxu0 0.0
        %1983 = vmatpush.msra.mxu0 0.0
        %1984 = vmatpush.msra.mxu0 0.0
        %1985 = vmatpush.msra.mxu0 0.0
        %1986 = vmatpush.msra.mxu0 0.0
        %1987 = vmatpush.msra.mxu0 0.0
        %1988 = vmatpush.msra.mxu0 0.0
        %1989 = vmatpush.msra.mxu0 0.0
        %1990 = vmatpush.msra.mxu0 0.0
        %1991 = vmatpush.msra.mxu0 0.0
        %1992 = vmatpush.msra.mxu0 %v1895
        %1993 = vmatpush.msra.mxu0 %v1868
        %1994 = vmatmul.f32.gmra.mxu0 %v1880
        %v1995 = vpop.f32.mrf.mxu0
        %v1996 = vadd.f32 0.0, %v1995
        %1997 = vmatmul.f32.gmra.mxu0 %v1883
        %v1998 = vpop.f32.mrf.mxu0
        %v1999 = vadd.f32 0.0, %v1998
        %2000 = vdwg.mxu0
        %2001 = vmatpush.msra.mxu0 0.0
        %2002 = vmatpush.msra.mxu0 0.0
        %2003 = vmatpush.msra.mxu0 0.0
        %2004 = vmatpush.msra.mxu0 0.0
        %2005 = vmatpush.msra.mxu0 0.0
        %2006 = vmatpush.msra.mxu0 0.0
        %2007 = vmatpush.msra.mxu0 0.0
        %2008 = vmatpush.msra.mxu0 0.0
        %2009 = vmatpush.msra.mxu0 0.0
        %2010 = vmatpush.msra.mxu0 0.0
        %2011 = vmatpush.msra.mxu0 0.0
        %2012 = vmatpush.msra.mxu0 0.0
        %2013 = vmatpush.msra.mxu0 0.0
        %2014 = vmatpush.msra.mxu0 0.0
        %2015 = vmatpush.msra.mxu0 %v1898
        %2016 = vmatpush.msra.mxu0 %v1866
        %2017 = vmatmul.f32.gmra.mxu0 %v1880
        %v2018 = vpop.f32.mrf.mxu0
        %v2019 = vadd.f32 0.0, %v2018
        %2020 = vmatmul.f32.gmra.mxu0 %v1883
        %v2021 = vpop.f32.mrf.mxu0
        %v2022 = vadd.f32 0.0, %v2021
        %2023 = vdwg.mxu0
        %2024 = vmatpush.msra.mxu0 0.0
        %2025 = vmatpush.msra.mxu0 0.0
        %2026 = vmatpush.msra.mxu0 0.0
        %2027 = vmatpush.msra.mxu0 0.0
        %2028 = vmatpush.msra.mxu0 0.0
        %2029 = vmatpush.msra.mxu0 0.0
        %2030 = vmatpush.msra.mxu0 0.0
        %2031 = vmatpush.msra.mxu0 0.0
        %2032 = vmatpush.msra.mxu0 0.0
        %2033 = vmatpush.msra.mxu0 0.0
        %2034 = vmatpush.msra.mxu0 0.0
        %2035 = vmatpush.msra.mxu0 0.0
        %2036 = vmatpush.msra.mxu0 0.0
        %2037 = vmatpush.msra.mxu0 0.0
        %2038 = vmatpush.msra.mxu0 %v1901
        %2039 = vmatpush.msra.mxu0 %v1864
        %2040 = vmatmul.f32.gmra.mxu0 %v1880
        %v2041 = vpop.f32.mrf.mxu0
        %v2042 = vadd.f32 0.0, %v2041
        %2043 = vmatmul.f32.gmra.mxu0 %v1883
        %v2044 = vpop.f32.mrf.mxu0
        %v2045 = vadd.f32 0.0, %v2044
        %2046 = vdwg.mxu0
        %2047 = vmatpush.msra.mxu0 0.0
        %2048 = vmatpush.msra.mxu0 0.0
        %2049 = vmatpush.msra.mxu0 0.0
        %2050 = vmatpush.msra.mxu0 0.0
        %2051 = vmatpush.msra.mxu0 0.0
        %2052 = vmatpush.msra.mxu0 0.0
        %2053 = vmatpush.msra.mxu0 0.0
        %2054 = vmatpush.msra.mxu0 0.0
        %2055 = vmatpush.msra.mxu0 0.0
        %2056 = vmatpush.msra.mxu0 0.0
        %2057 = vmatpush.msra.mxu0 0.0
        %2058 = vmatpush.msra.mxu0 0.0
        %2059 = vmatpush.msra.mxu0 0.0
        %2060 = vmatpush.msra.mxu0 0.0
        %2061 = vmatpush.msra.mxu0 %v1904
        %2062 = vmatpush.msra.mxu0 %v1862
        %2063 = vmatmul.f32.gmra.mxu0 %v1880
        %v2064 = vpop.f32.mrf.mxu0
        %v2065 = vadd.f32 0.0, %v2064
        %2066 = vmatmul.f32.gmra.mxu0 %v1883
        %v2067 = vpop.f32.mrf.mxu0
        %v2068 = vadd.f32 0.0, %v2067
        %2069 = vdwg.mxu0
        %2070 = vmatpush.msra.mxu0 0.0
        %2071 = vmatpush.msra.mxu0 0.0
        %2072 = vmatpush.msra.mxu0 0.0
        %2073 = vmatpush.msra.mxu0 0.0
        %2074 = vmatpush.msra.mxu0 0.0
        %2075 = vmatpush.msra.mxu0 0.0
        %2076 = vmatpush.msra.mxu0 0.0
        %2077 = vmatpush.msra.mxu0 0.0
        %2078 = vmatpush.msra.mxu0 0.0
        %2079 = vmatpush.msra.mxu0 0.0
        %2080 = vmatpush.msra.mxu0 0.0
        %2081 = vmatpush.msra.mxu0 0.0
        %2082 = vmatpush.msra.mxu0 0.0
        %2083 = vmatpush.msra.mxu0 0.0
        %2084 = vmatpush.msra.mxu0 %v1907
        %2085 = vmatpush.msra.mxu0 %v1860
        %2086 = vmatmul.f32.gmra.mxu0 %v1880
        %v2087 = vpop.f32.mrf.mxu0
        %v2088 = vadd.f32 0.0, %v2087
        %2089 = vmatmul.f32.gmra.mxu0 %v1883
        %v2090 = vpop.f32.mrf.mxu0
        %v2091 = vadd.f32 0.0, %v2090
        %2092 = vdwg.mxu0
        %v2093 = vadd.f32 %v1662, %v1927
        %v2094 = vadd.f32 %v1685, %v1950
        %v2095 = vadd.f32 %v1708, %v1973
        %v2096 = vadd.f32 %v1731, %v1996
        %v2097 = vadd.f32 %v1754, %v2019
        %v2098 = vadd.f32 %v1777, %v2042
        %v2099 = vadd.f32 %v1800, %v2065
        %v2100 = vadd.f32 %v1823, %v2088
        %v2101 = vadd.f32 %v1665, %v1930
        %v2102 = vadd.f32 %v1688, %v1953
        %v2103 = vadd.f32 %v1711, %v1976
        %v2104 = vadd.f32 %v1734, %v1999
        %v2105 = vadd.f32 %v1757, %v2022
        %v2106 = vadd.f32 %v1780, %v2045
        %v2107 = vadd.f32 %v1803, %v2068
        %v2108 = vadd.f32 %v1826, %v2091
        %2109 = vrot.lane.b32.xlu0 %v1281, 1
        %v2110 = vpop.permute.xlu0 %2109
        %2111 = vrot.lane.b32.xlu0 %v1289, 1
        %v2112 = vpop.permute.xlu0 %2111
        %2113 = vrot.lane.b32.xlu0 %v1282, 1
        %v2114 = vpop.permute.xlu0 %2113
        %2115 = vrot.lane.b32.xlu0 %v1290, 1
        %v2116 = vpop.permute.xlu0 %2115
        %2117 = vrot.lane.b32.xlu0 %v1283, 1
        %v2118 = vpop.permute.xlu0 %2117
        %2119 = vrot.lane.b32.xlu0 %v1291, 1
        %v2120 = vpop.permute.xlu0 %2119
        %2121 = vrot.lane.b32.xlu0 %v1284, 1
        %v2122 = vpop.permute.xlu0 %2121
        %2123 = vrot.lane.b32.xlu0 %v1292, 1
        %v2124 = vpop.permute.xlu0 %2123
        %2125 = vrot.lane.b32.xlu0 %v1285, 1
        %v2126 = vpop.permute.xlu0 %2125
        %2127 = vrot.lane.b32.xlu0 %v1293, 1
        %v2128 = vpop.permute.xlu0 %2127
        %2129 = vrot.lane.b32.xlu0 %v1286, 1
        %v2130 = vpop.permute.xlu0 %2129
        %2131 = vrot.lane.b32.xlu0 %v1294, 1
        %v2132 = vpop.permute.xlu0 %2131
        %2133 = vrot.lane.b32.xlu0 %v1287, 1
        %v2134 = vpop.permute.xlu0 %2133
        %2135 = vrot.lane.b32.xlu0 %v1295, 1
        %v2136 = vpop.permute.xlu0 %2135
        %2137 = vrot.lane.b32.xlu0 %v1288, 1
        %v2138 = vpop.permute.xlu0 %2137
        %2139 = vrot.lane.b32.xlu0 %v1296, 1
        %v2140 = vpop.permute.xlu0 %2139
        %v2141 = vsel %vm802, %v2134, %v2138
        %v2142 = vsel %vm802, %v2136, %v2140
        %v2143 = vsel %vm802, %v2130, %v2134
        %v2144 = vsel %vm802, %v2132, %v2136
        %v2145 = vsel %vm802, %v2126, %v2130
        %v2146 = vsel %vm802, %v2128, %v2132
        %v2147 = vsel %vm802, %v2122, %v2126
        %v2148 = vsel %vm802, %v2124, %v2128
        %v2149 = vsel %vm802, %v2118, %v2122
        %v2150 = vsel %vm802, %v2120, %v2124
        %v2151 = vsel %vm802, %v2114, %v2118
        %v2152 = vsel %vm802, %v2116, %v2120
        %v2153 = vsel %vm802, %v2110, %v2114
        %v2154 = vsel %vm802, %v2112, %v2116
        %v2155 = vsel %vm802, %v2138, %v2110
        %v2156 = vsel %vm802, %v2140, %v2112
        %s2157 = scalar_lea.vmem %s3, 48
        %v2158 = vld [vmem:[%s2157] sm:$0xff]
        %v2159 = vld [vmem:[%s2157 + $0x8] sm:$0xff]
        %v2161 = vsel %vm1398, %v2158, 0
        %v2164 = vsel %vm1398, %v2159, 0
        %v2167 = vsel %vm1405, %v2156, 0
        %v2170 = vsel %vm1405, %v2154, 0
        %v2173 = vsel %vm1405, %v2152, 0
        %v2176 = vsel %vm1405, %v2150, 0
        %v2179 = vsel %vm1405, %v2148, 0
        %v2182 = vsel %vm1405, %v2146, 0
        %v2185 = vsel %vm1405, %v2144, 0
        %v2188 = vsel %vm1405, %v2142, 0
        %2190 = vmatpush.msra.mxu0 0.0
        %2191 = vmatpush.msra.mxu0 0.0
        %2192 = vmatpush.msra.mxu0 0.0
        %2193 = vmatpush.msra.mxu0 0.0
        %2194 = vmatpush.msra.mxu0 0.0
        %2195 = vmatpush.msra.mxu0 0.0
        %2196 = vmatpush.msra.mxu0 0.0
        %2197 = vmatpush.msra.mxu0 0.0
        %2198 = vmatpush.msra.mxu0 0.0
        %2199 = vmatpush.msra.mxu0 0.0
        %2200 = vmatpush.msra.mxu0 0.0
        %2201 = vmatpush.msra.mxu0 0.0
        %2202 = vmatpush.msra.mxu0 0.0
        %2203 = vmatpush.msra.mxu0 0.0
        %2204 = vmatpush.msra.mxu0 %v2167
        %2205 = vmatpush.msra.mxu0 %v2155
        %2206 = vmatmul.f32.gmra.mxu0 %v2161
        %v2207 = vpop.f32.mrf.mxu0
        %v2208 = vadd.f32 0.0, %v2207
        %2209 = vmatmul.f32.gmra.mxu0 %v2164
        %v2210 = vpop.f32.mrf.mxu0
        %v2211 = vadd.f32 0.0, %v2210
        %2212 = vdwg.mxu0
        %2213 = vmatpush.msra.mxu0 0.0
        %2214 = vmatpush.msra.mxu0 0.0
        %2215 = vmatpush.msra.mxu0 0.0
        %2216 = vmatpush.msra.mxu0 0.0
        %2217 = vmatpush.msra.mxu0 0.0
        %2218 = vmatpush.msra.mxu0 0.0
        %2219 = vmatpush.msra.mxu0 0.0
        %2220 = vmatpush.msra.mxu0 0.0
        %2221 = vmatpush.msra.mxu0 0.0
        %2222 = vmatpush.msra.mxu0 0.0
        %2223 = vmatpush.msra.mxu0 0.0
        %2224 = vmatpush.msra.mxu0 0.0
        %2225 = vmatpush.msra.mxu0 0.0
        %2226 = vmatpush.msra.mxu0 0.0
        %2227 = vmatpush.msra.mxu0 %v2170
        %2228 = vmatpush.msra.mxu0 %v2153
        %2229 = vmatmul.f32.gmra.mxu0 %v2161
        %v2230 = vpop.f32.mrf.mxu0
        %v2231 = vadd.f32 0.0, %v2230
        %2232 = vmatmul.f32.gmra.mxu0 %v2164
        %v2233 = vpop.f32.mrf.mxu0
        %v2234 = vadd.f32 0.0, %v2233
        %2235 = vdwg.mxu0
        %2236 = vmatpush.msra.mxu0 0.0
        %2237 = vmatpush.msra.mxu0 0.0
        %2238 = vmatpush.msra.mxu0 0.0
        %2239 = vmatpush.msra.mxu0 0.0
        %2240 = vmatpush.msra.mxu0 0.0
        %2241 = vmatpush.msra.mxu0 0.0
        %2242 = vmatpush.msra.mxu0 0.0
        %2243 = vmatpush.msra.mxu0 0.0
        %2244 = vmatpush.msra.mxu0 0.0
        %2245 = vmatpush.msra.mxu0 0.0
        %2246 = vmatpush.msra.mxu0 0.0
        %2247 = vmatpush.msra.mxu0 0.0
        %2248 = vmatpush.msra.mxu0 0.0
        %2249 = vmatpush.msra.mxu0 0.0
        %2250 = vmatpush.msra.mxu0 %v2173
        %2251 = vmatpush.msra.mxu0 %v2151
        %2252 = vmatmul.f32.gmra.mxu0 %v2161
        %v2253 = vpop.f32.mrf.mxu0
        %v2254 = vadd.f32 0.0, %v2253
        %2255 = vmatmul.f32.gmra.mxu0 %v2164
        %v2256 = vpop.f32.mrf.mxu0
        %v2257 = vadd.f32 0.0, %v2256
        %2258 = vdwg.mxu0
        %2259 = vmatpush.msra.mxu0 0.0
        %2260 = vmatpush.msra.mxu0 0.0
        %2261 = vmatpush.msra.mxu0 0.0
        %2262 = vmatpush.msra.mxu0 0.0
        %2263 = vmatpush.msra.mxu0 0.0
        %2264 = vmatpush.msra.mxu0 0.0
        %2265 = vmatpush.msra.mxu0 0.0
        %2266 = vmatpush.msra.mxu0 0.0
        %2267 = vmatpush.msra.mxu0 0.0
        %2268 = vmatpush.msra.mxu0 0.0
        %2269 = vmatpush.msra.mxu0 0.0
        %2270 = vmatpush.msra.mxu0 0.0
        %2271 = vmatpush.msra.mxu0 0.0
        %2272 = vmatpush.msra.mxu0 0.0
        %2273 = vmatpush.msra.mxu0 %v2176
        %2274 = vmatpush.msra.mxu0 %v2149
        %2275 = vmatmul.f32.gmra.mxu0 %v2161
        %v2276 = vpop.f32.mrf.mxu0
        %v2277 = vadd.f32 0.0, %v2276
        %2278 = vmatmul.f32.gmra.mxu0 %v2164
        %v2279 = vpop.f32.mrf.mxu0
        %v2280 = vadd.f32 0.0, %v2279
        %2281 = vdwg.mxu0
        %2282 = vmatpush.msra.mxu0 0.0
        %2283 = vmatpush.msra.mxu0 0.0
        %2284 = vmatpush.msra.mxu0 0.0
        %2285 = vmatpush.msra.mxu0 0.0
        %2286 = vmatpush.msra.mxu0 0.0
        %2287 = vmatpush.msra.mxu0 0.0
        %2288 = vmatpush.msra.mxu0 0.0
        %2289 = vmatpush.msra.mxu0 0.0
        %2290 = vmatpush.msra.mxu0 0.0
        %2291 = vmatpush.msra.mxu0 0.0
        %2292 = vmatpush.msra.mxu0 0.0
        %2293 = vmatpush.msra.mxu0 0.0
        %2294 = vmatpush.msra.mxu0 0.0
        %2295 = vmatpush.msra.mxu0 0.0
        %2296 = vmatpush.msra.mxu0 %v2179
        %2297 = vmatpush.msra.mxu0 %v2147
        %2298 = vmatmul.f32.gmra.mxu0 %v2161
        %v2299 = vpop.f32.mrf.mxu0
        %v2300 = vadd.f32 0.0, %v2299
        %2301 = vmatmul.f32.gmra.mxu0 %v2164
        %v2302 = vpop.f32.mrf.mxu0
        %v2303 = vadd.f32 0.0, %v2302
        %2304 = vdwg.mxu0
        %2305 = vmatpush.msra.mxu0 0.0
        %2306 = vmatpush.msra.mxu0 0.0
        %2307 = vmatpush.msra.mxu0 0.0
        %2308 = vmatpush.msra.mxu0 0.0
        %2309 = vmatpush.msra.mxu0 0.0
        %2310 = vmatpush.msra.mxu0 0.0
        %2311 = vmatpush.msra.mxu0 0.0
        %2312 = vmatpush.msra.mxu0 0.0
        %2313 = vmatpush.msra.mxu0 0.0
        %2314 = vmatpush.msra.mxu0 0.0
        %2315 = vmatpush.msra.mxu0 0.0
        %2316 = vmatpush.msra.mxu0 0.0
        %2317 = vmatpush.msra.mxu0 0.0
        %2318 = vmatpush.msra.mxu0 0.0
        %2319 = vmatpush.msra.mxu0 %v2182
        %2320 = vmatpush.msra.mxu0 %v2145
        %2321 = vmatmul.f32.gmra.mxu0 %v2161
        %v2322 = vpop.f32.mrf.mxu0
        %v2323 = vadd.f32 0.0, %v2322
        %2324 = vmatmul.f32.gmra.mxu0 %v2164
        %v2325 = vpop.f32.mrf.mxu0
        %v2326 = vadd.f32 0.0, %v2325
        %2327 = vdwg.mxu0
        %2328 = vmatpush.msra.mxu0 0.0
        %2329 = vmatpush.msra.mxu0 0.0
        %2330 = vmatpush.msra.mxu0 0.0
        %2331 = vmatpush.msra.mxu0 0.0
        %2332 = vmatpush.msra.mxu0 0.0
        %2333 = vmatpush.msra.mxu0 0.0
        %2334 = vmatpush.msra.mxu0 0.0
        %2335 = vmatpush.msra.mxu0 0.0
        %2336 = vmatpush.msra.mxu0 0.0
        %2337 = vmatpush.msra.mxu0 0.0
        %2338 = vmatpush.msra.mxu0 0.0
        %2339 = vmatpush.msra.mxu0 0.0
        %2340 = vmatpush.msra.mxu0 0.0
        %2341 = vmatpush.msra.mxu0 0.0
        %2342 = vmatpush.msra.mxu0 %v2185
        %2343 = vmatpush.msra.mxu0 %v2143
        %2344 = vmatmul.f32.gmra.mxu0 %v2161
        %v2345 = vpop.f32.mrf.mxu0
        %v2346 = vadd.f32 0.0, %v2345
        %2347 = vmatmul.f32.gmra.mxu0 %v2164
        %v2348 = vpop.f32.mrf.mxu0
        %v2349 = vadd.f32 0.0, %v2348
        %2350 = vdwg.mxu0
        %2351 = vmatpush.msra.mxu0 0.0
        %2352 = vmatpush.msra.mxu0 0.0
        %2353 = vmatpush.msra.mxu0 0.0
        %2354 = vmatpush.msra.mxu0 0.0
        %2355 = vmatpush.msra.mxu0 0.0
        %2356 = vmatpush.msra.mxu0 0.0
        %2357 = vmatpush.msra.mxu0 0.0
        %2358 = vmatpush.msra.mxu0 0.0
        %2359 = vmatpush.msra.mxu0 0.0
        %2360 = vmatpush.msra.mxu0 0.0
        %2361 = vmatpush.msra.mxu0 0.0
        %2362 = vmatpush.msra.mxu0 0.0
        %2363 = vmatpush.msra.mxu0 0.0
        %2364 = vmatpush.msra.mxu0 0.0
        %2365 = vmatpush.msra.mxu0 %v2188
        %2366 = vmatpush.msra.mxu0 %v2141
        %2367 = vmatmul.f32.gmra.mxu0 %v2161
        %v2368 = vpop.f32.mrf.mxu0
        %v2369 = vadd.f32 0.0, %v2368
        %2370 = vmatmul.f32.gmra.mxu0 %v2164
        %v2371 = vpop.f32.mrf.mxu0
        %v2372 = vadd.f32 0.0, %v2371
        %2373 = vdwg.mxu0
        %v2374 = vadd.f32 %v2093, %v2208
        %v2375 = vadd.f32 %v2094, %v2231
        %v2376 = vadd.f32 %v2095, %v2254
        %v2377 = vadd.f32 %v2096, %v2277
        %v2378 = vadd.f32 %v2097, %v2300
        %v2379 = vadd.f32 %v2098, %v2323
        %v2380 = vadd.f32 %v2099, %v2346
        %v2381 = vadd.f32 %v2100, %v2369
        %v2382 = vadd.f32 %v2101, %v2211
        %v2383 = vadd.f32 %v2102, %v2234
        %v2384 = vadd.f32 %v2103, %v2257
        %v2385 = vadd.f32 %v2104, %v2280
        %v2386 = vadd.f32 %v2105, %v2303
        %v2387 = vadd.f32 %v2106, %v2326
        %v2388 = vadd.f32 %v2107, %v2349
        %v2389 = vadd.f32 %v2108, %v2372
        %s2390 = scalar_lea.vmem %s3, 64
        %v2391 = vld [vmem:[%s2390] sm:$0xff]
        %v2392 = vld [vmem:[%s2390 + $0x8] sm:$0xff]
        %v2394 = vsel %vm1398, %v2391, 0
        %v2397 = vsel %vm1398, %v2392, 0
        %v2400 = vsel %vm1405, %v1289, 0
        %v2403 = vsel %vm1405, %v1290, 0
        %v2406 = vsel %vm1405, %v1291, 0
        %v2409 = vsel %vm1405, %v1292, 0
        %v2412 = vsel %vm1405, %v1293, 0
        %v2415 = vsel %vm1405, %v1294, 0
        %v2418 = vsel %vm1405, %v1295, 0
        %v2421 = vsel %vm1405, %v1296, 0
        %2423 = vmatpush.msra.mxu0 0.0
        %2424 = vmatpush.msra.mxu0 0.0
        %2425 = vmatpush.msra.mxu0 0.0
        %2426 = vmatpush.msra.mxu0 0.0
        %2427 = vmatpush.msra.mxu0 0.0
        %2428 = vmatpush.msra.mxu0 0.0
        %2429 = vmatpush.msra.mxu0 0.0
        %2430 = vmatpush.msra.mxu0 0.0
        %2431 = vmatpush.msra.mxu0 0.0
        %2432 = vmatpush.msra.mxu0 0.0
        %2433 = vmatpush.msra.mxu0 0.0
        %2434 = vmatpush.msra.mxu0 0.0
        %2435 = vmatpush.msra.mxu0 0.0
        %2436 = vmatpush.msra.mxu0 0.0
        %2437 = vmatpush.msra.mxu0 %v2400
        %2438 = vmatpush.msra.mxu0 %v1281
        %2439 = vmatmul.f32.gmra.mxu0 %v2394
        %v2440 = vpop.f32.mrf.mxu0
        %v2441 = vadd.f32 0.0, %v2440
        %2442 = vmatmul.f32.gmra.mxu0 %v2397
        %v2443 = vpop.f32.mrf.mxu0
        %v2444 = vadd.f32 0.0, %v2443
        %2445 = vdwg.mxu0
        %2446 = vmatpush.msra.mxu0 0.0
        %2447 = vmatpush.msra.mxu0 0.0
        %2448 = vmatpush.msra.mxu0 0.0
        %2449 = vmatpush.msra.mxu0 0.0
        %2450 = vmatpush.msra.mxu0 0.0
        %2451 = vmatpush.msra.mxu0 0.0
        %2452 = vmatpush.msra.mxu0 0.0
        %2453 = vmatpush.msra.mxu0 0.0
        %2454 = vmatpush.msra.mxu0 0.0
        %2455 = vmatpush.msra.mxu0 0.0
        %2456 = vmatpush.msra.mxu0 0.0
        %2457 = vmatpush.msra.mxu0 0.0
        %2458 = vmatpush.msra.mxu0 0.0
        %2459 = vmatpush.msra.mxu0 0.0
        %2460 = vmatpush.msra.mxu0 %v2403
        %2461 = vmatpush.msra.mxu0 %v1282
        %2462 = vmatmul.f32.gmra.mxu0 %v2394
        %v2463 = vpop.f32.mrf.mxu0
        %v2464 = vadd.f32 0.0, %v2463
        %2465 = vmatmul.f32.gmra.mxu0 %v2397
        %v2466 = vpop.f32.mrf.mxu0
        %v2467 = vadd.f32 0.0, %v2466
        %2468 = vdwg.mxu0
        %2469 = vmatpush.msra.mxu0 0.0
        %2470 = vmatpush.msra.mxu0 0.0
        %2471 = vmatpush.msra.mxu0 0.0
        %2472 = vmatpush.msra.mxu0 0.0
        %2473 = vmatpush.msra.mxu0 0.0
        %2474 = vmatpush.msra.mxu0 0.0
        %2475 = vmatpush.msra.mxu0 0.0
        %2476 = vmatpush.msra.mxu0 0.0
        %2477 = vmatpush.msra.mxu0 0.0
        %2478 = vmatpush.msra.mxu0 0.0
        %2479 = vmatpush.msra.mxu0 0.0
        %2480 = vmatpush.msra.mxu0 0.0
        %2481 = vmatpush.msra.mxu0 0.0
        %2482 = vmatpush.msra.mxu0 0.0
        %2483 = vmatpush.msra.mxu0 %v2406
        %2484 = vmatpush.msra.mxu0 %v1283
        %2485 = vmatmul.f32.gmra.mxu0 %v2394
        %v2486 = vpop.f32.mrf.mxu0
        %v2487 = vadd.f32 0.0, %v2486
        %2488 = vmatmul.f32.gmra.mxu0 %v2397
        %v2489 = vpop.f32.mrf.mxu0
        %v2490 = vadd.f32 0.0, %v2489
        %2491 = vdwg.mxu0
        %2492 = vmatpush.msra.mxu0 0.0
        %2493 = vmatpush.msra.mxu0 0.0
        %2494 = vmatpush.msra.mxu0 0.0
        %2495 = vmatpush.msra.mxu0 0.0
        %2496 = vmatpush.msra.mxu0 0.0
        %2497 = vmatpush.msra.mxu0 0.0
        %2498 = vmatpush.msra.mxu0 0.0
        %2499 = vmatpush.msra.mxu0 0.0
        %2500 = vmatpush.msra.mxu0 0.0
        %2501 = vmatpush.msra.mxu0 0.0
        %2502 = vmatpush.msra.mxu0 0.0
        %2503 = vmatpush.msra.mxu0 0.0
        %2504 = vmatpush.msra.mxu0 0.0
        %2505 = vmatpush.msra.mxu0 0.0
        %2506 = vmatpush.msra.mxu0 %v2409
        %2507 = vmatpush.msra.mxu0 %v1284
        %2508 = vmatmul.f32.gmra.mxu0 %v2394
        %v2509 = vpop.f32.mrf.mxu0
        %v2510 = vadd.f32 0.0, %v2509
        %2511 = vmatmul.f32.gmra.mxu0 %v2397
        %v2512 = vpop.f32.mrf.mxu0
        %v2513 = vadd.f32 0.0, %v2512
        %2514 = vdwg.mxu0
        %2515 = vmatpush.msra.mxu0 0.0
        %2516 = vmatpush.msra.mxu0 0.0
        %2517 = vmatpush.msra.mxu0 0.0
        %2518 = vmatpush.msra.mxu0 0.0
        %2519 = vmatpush.msra.mxu0 0.0
        %2520 = vmatpush.msra.mxu0 0.0
        %2521 = vmatpush.msra.mxu0 0.0
        %2522 = vmatpush.msra.mxu0 0.0
        %2523 = vmatpush.msra.mxu0 0.0
        %2524 = vmatpush.msra.mxu0 0.0
        %2525 = vmatpush.msra.mxu0 0.0
        %2526 = vmatpush.msra.mxu0 0.0
        %2527 = vmatpush.msra.mxu0 0.0
        %2528 = vmatpush.msra.mxu0 0.0
        %2529 = vmatpush.msra.mxu0 %v2412
        %2530 = vmatpush.msra.mxu0 %v1285
        %2531 = vmatmul.f32.gmra.mxu0 %v2394
        %v2532 = vpop.f32.mrf.mxu0
        %v2533 = vadd.f32 0.0, %v2532
        %2534 = vmatmul.f32.gmra.mxu0 %v2397
        %v2535 = vpop.f32.mrf.mxu0
        %v2536 = vadd.f32 0.0, %v2535
        %2537 = vdwg.mxu0
        %2538 = vmatpush.msra.mxu0 0.0
        %2539 = vmatpush.msra.mxu0 0.0
        %2540 = vmatpush.msra.mxu0 0.0
        %2541 = vmatpush.msra.mxu0 0.0
        %2542 = vmatpush.msra.mxu0 0.0
        %2543 = vmatpush.msra.mxu0 0.0
        %2544 = vmatpush.msra.mxu0 0.0
        %2545 = vmatpush.msra.mxu0 0.0
        %2546 = vmatpush.msra.mxu0 0.0
        %2547 = vmatpush.msra.mxu0 0.0
        %2548 = vmatpush.msra.mxu0 0.0
        %2549 = vmatpush.msra.mxu0 0.0
        %2550 = vmatpush.msra.mxu0 0.0
        %2551 = vmatpush.msra.mxu0 0.0
        %2552 = vmatpush.msra.mxu0 %v2415
        %2553 = vmatpush.msra.mxu0 %v1286
        %2554 = vmatmul.f32.gmra.mxu0 %v2394
        %v2555 = vpop.f32.mrf.mxu0
        %v2556 = vadd.f32 0.0, %v2555
        %2557 = vmatmul.f32.gmra.mxu0 %v2397
        %v2558 = vpop.f32.mrf.mxu0
        %v2559 = vadd.f32 0.0, %v2558
        %2560 = vdwg.mxu0
        %2561 = vmatpush.msra.mxu0 0.0
        %2562 = vmatpush.msra.mxu0 0.0
        %2563 = vmatpush.msra.mxu0 0.0
        %2564 = vmatpush.msra.mxu0 0.0
        %2565 = vmatpush.msra.mxu0 0.0
        %2566 = vmatpush.msra.mxu0 0.0
        %2567 = vmatpush.msra.mxu0 0.0
        %2568 = vmatpush.msra.mxu0 0.0
        %2569 = vmatpush.msra.mxu0 0.0
        %2570 = vmatpush.msra.mxu0 0.0
        %2571 = vmatpush.msra.mxu0 0.0
        %2572 = vmatpush.msra.mxu0 0.0
        %2573 = vmatpush.msra.mxu0 0.0
        %2574 = vmatpush.msra.mxu0 0.0
        %2575 = vmatpush.msra.mxu0 %v2418
        %2576 = vmatpush.msra.mxu0 %v1287
        %2577 = vmatmul.f32.gmra.mxu0 %v2394
        %v2578 = vpop.f32.mrf.mxu0
        %v2579 = vadd.f32 0.0, %v2578
        %2580 = vmatmul.f32.gmra.mxu0 %v2397
        %v2581 = vpop.f32.mrf.mxu0
        %v2582 = vadd.f32 0.0, %v2581
        %2583 = vdwg.mxu0
        %2584 = vmatpush.msra.mxu0 0.0
        %2585 = vmatpush.msra.mxu0 0.0
        %2586 = vmatpush.msra.mxu0 0.0
        %2587 = vmatpush.msra.mxu0 0.0
        %2588 = vmatpush.msra.mxu0 0.0
        %2589 = vmatpush.msra.mxu0 0.0
        %2590 = vmatpush.msra.mxu0 0.0
        %2591 = vmatpush.msra.mxu0 0.0
        %2592 = vmatpush.msra.mxu0 0.0
        %2593 = vmatpush.msra.mxu0 0.0
        %2594 = vmatpush.msra.mxu0 0.0
        %2595 = vmatpush.msra.mxu0 0.0
        %2596 = vmatpush.msra.mxu0 0.0
        %2597 = vmatpush.msra.mxu0 0.0
        %2598 = vmatpush.msra.mxu0 %v2421
        %2599 = vmatpush.msra.mxu0 %v1288
        %2600 = vmatmul.f32.gmra.mxu0 %v2394
        %v2601 = vpop.f32.mrf.mxu0
        %v2602 = vadd.f32 0.0, %v2601
        %2603 = vmatmul.f32.gmra.mxu0 %v2397
        %v2604 = vpop.f32.mrf.mxu0
        %v2605 = vadd.f32 0.0, %v2604
        %2606 = vdwg.mxu0
        %v2607 = vadd.f32 %v2374, %v2441
        %v2608 = vadd.f32 %v2375, %v2464
        %v2609 = vadd.f32 %v2376, %v2487
        %v2610 = vadd.f32 %v2377, %v2510
        %v2611 = vadd.f32 %v2378, %v2533
        %v2612 = vadd.f32 %v2379, %v2556
        %v2613 = vadd.f32 %v2380, %v2579
        %v2614 = vadd.f32 %v2381, %v2602
        %v2615 = vadd.f32 %v2382, %v2444
        %v2616 = vadd.f32 %v2383, %v2467
        %v2617 = vadd.f32 %v2384, %v2490
        %v2618 = vadd.f32 %v2385, %v2513
        %v2619 = vadd.f32 %v2386, %v2536
        %v2620 = vadd.f32 %v2387, %v2559
        %v2621 = vadd.f32 %v2388, %v2582
        %v2622 = vadd.f32 %v2389, %v2605
        %2623 = vrot.lane.b32.xlu0 %v1281, 127
        %v2624 = vpop.permute.xlu0 %2623
        %2625 = vrot.lane.b32.xlu0 %v1289, 127
        %v2626 = vpop.permute.xlu0 %2625
        %2627 = vrot.lane.b32.xlu0 %v1282, 127
        %v2628 = vpop.permute.xlu0 %2627
        %2629 = vrot.lane.b32.xlu0 %v1290, 127
        %v2630 = vpop.permute.xlu0 %2629
        %2631 = vrot.lane.b32.xlu0 %v1283, 127
        %v2632 = vpop.permute.xlu0 %2631
        %2633 = vrot.lane.b32.xlu0 %v1291, 127
        %v2634 = vpop.permute.xlu0 %2633
        %2635 = vrot.lane.b32.xlu0 %v1284, 127
        %v2636 = vpop.permute.xlu0 %2635
        %2637 = vrot.lane.b32.xlu0 %v1292, 127
        %v2638 = vpop.permute.xlu0 %2637
        %2639 = vrot.lane.b32.xlu0 %v1285, 127
        %v2640 = vpop.permute.xlu0 %2639
        %2641 = vrot.lane.b32.xlu0 %v1293, 127
        %v2642 = vpop.permute.xlu0 %2641
        %2643 = vrot.lane.b32.xlu0 %v1286, 127
        %v2644 = vpop.permute.xlu0 %2643
        %2645 = vrot.lane.b32.xlu0 %v1294, 127
        %v2646 = vpop.permute.xlu0 %2645
        %2647 = vrot.lane.b32.xlu0 %v1287, 127
        %v2648 = vpop.permute.xlu0 %2647
        %2649 = vrot.lane.b32.xlu0 %v1295, 127
        %v2650 = vpop.permute.xlu0 %2649
        %2651 = vrot.lane.b32.xlu0 %v1288, 127
        %v2652 = vpop.permute.xlu0 %2651
        %2653 = vrot.lane.b32.xlu0 %v1296, 127
        %v2654 = vpop.permute.xlu0 %2653
        %v2655 = vsel %vm925, %v2648, %v2652
        %v2656 = vsel %vm925, %v2650, %v2654
        %v2657 = vsel %vm925, %v2644, %v2648
        %v2658 = vsel %vm925, %v2646, %v2650
        %v2659 = vsel %vm925, %v2640, %v2644
        %v2660 = vsel %vm925, %v2642, %v2646
        %v2661 = vsel %vm925, %v2636, %v2640
        %v2662 = vsel %vm925, %v2638, %v2642
        %v2663 = vsel %vm925, %v2632, %v2636
        %v2664 = vsel %vm925, %v2634, %v2638
        %v2665 = vsel %vm925, %v2628, %v2632
        %v2666 = vsel %vm925, %v2630, %v2634
        %v2667 = vsel %vm925, %v2624, %v2628
        %v2668 = vsel %vm925, %v2626, %v2630
        %v2669 = vsel %vm925, %v2652, %v2624
        %v2670 = vsel %vm925, %v2654, %v2626
        %s2671 = scalar_lea.vmem %s3, 80
        %v2672 = vld [vmem:[%s2671] sm:$0xff]
        %v2673 = vld [vmem:[%s2671 + $0x8] sm:$0xff]
        %v2675 = vsel %vm1398, %v2672, 0
        %v2678 = vsel %vm1398, %v2673, 0
        %v2681 = vsel %vm1405, %v2668, 0
        %v2684 = vsel %vm1405, %v2666, 0
        %v2687 = vsel %vm1405, %v2664, 0
        %v2690 = vsel %vm1405, %v2662, 0
        %v2693 = vsel %vm1405, %v2660, 0
        %v2696 = vsel %vm1405, %v2658, 0
        %v2699 = vsel %vm1405, %v2656, 0
        %v2702 = vsel %vm1405, %v2670, 0
        %2704 = vmatpush.msra.mxu0 0.0
        %2705 = vmatpush.msra.mxu0 0.0
        %2706 = vmatpush.msra.mxu0 0.0
        %2707 = vmatpush.msra.mxu0 0.0
        %2708 = vmatpush.msra.mxu0 0.0
        %2709 = vmatpush.msra.mxu0 0.0
        %2710 = vmatpush.msra.mxu0 0.0
        %2711 = vmatpush.msra.mxu0 0.0
        %2712 = vmatpush.msra.mxu0 0.0
        %2713 = vmatpush.msra.mxu0 0.0
        %2714 = vmatpush.msra.mxu0 0.0
        %2715 = vmatpush.msra.mxu0 0.0
        %2716 = vmatpush.msra.mxu0 0.0
        %2717 = vmatpush.msra.mxu0 0.0
        %2718 = vmatpush.msra.mxu0 %v2681
        %2719 = vmatpush.msra.mxu0 %v2667
        %2720 = vmatmul.f32.gmra.mxu0 %v2675
        %v2721 = vpop.f32.mrf.mxu0
        %v2722 = vadd.f32 0.0, %v2721
        %2723 = vmatmul.f32.gmra.mxu0 %v2678
        %v2724 = vpop.f32.mrf.mxu0
        %v2725 = vadd.f32 0.0, %v2724
        %2726 = vdwg.mxu0
        %2727 = vmatpush.msra.mxu0 0.0
        %2728 = vmatpush.msra.mxu0 0.0
        %2729 = vmatpush.msra.mxu0 0.0
        %2730 = vmatpush.msra.mxu0 0.0
        %2731 = vmatpush.msra.mxu0 0.0
        %2732 = vmatpush.msra.mxu0 0.0
        %2733 = vmatpush.msra.mxu0 0.0
        %2734 = vmatpush.msra.mxu0 0.0
        %2735 = vmatpush.msra.mxu0 0.0
        %2736 = vmatpush.msra.mxu0 0.0
        %2737 = vmatpush.msra.mxu0 0.0
        %2738 = vmatpush.msra.mxu0 0.0
        %2739 = vmatpush.msra.mxu0 0.0
        %2740 = vmatpush.msra.mxu0 0.0
        %2741 = vmatpush.msra.mxu0 %v2684
        %2742 = vmatpush.msra.mxu0 %v2665
        %2743 = vmatmul.f32.gmra.mxu0 %v2675
        %v2744 = vpop.f32.mrf.mxu0
        %v2745 = vadd.f32 0.0, %v2744
        %2746 = vmatmul.f32.gmra.mxu0 %v2678
        %v2747 = vpop.f32.mrf.mxu0
        %v2748 = vadd.f32 0.0, %v2747
        %2749 = vdwg.mxu0
        %2750 = vmatpush.msra.mxu0 0.0
        %2751 = vmatpush.msra.mxu0 0.0
        %2752 = vmatpush.msra.mxu0 0.0
        %2753 = vmatpush.msra.mxu0 0.0
        %2754 = vmatpush.msra.mxu0 0.0
        %2755 = vmatpush.msra.mxu0 0.0
        %2756 = vmatpush.msra.mxu0 0.0
        %2757 = vmatpush.msra.mxu0 0.0
        %2758 = vmatpush.msra.mxu0 0.0
        %2759 = vmatpush.msra.mxu0 0.0
        %2760 = vmatpush.msra.mxu0 0.0
        %2761 = vmatpush.msra.mxu0 0.0
        %2762 = vmatpush.msra.mxu0 0.0
        %2763 = vmatpush.msra.mxu0 0.0
        %2764 = vmatpush.msra.mxu0 %v2687
        %2765 = vmatpush.msra.mxu0 %v2663
        %2766 = vmatmul.f32.gmra.mxu0 %v2675
        %v2767 = vpop.f32.mrf.mxu0
        %v2768 = vadd.f32 0.0, %v2767
        %2769 = vmatmul.f32.gmra.mxu0 %v2678
        %v2770 = vpop.f32.mrf.mxu0
        %v2771 = vadd.f32 0.0, %v2770
        %2772 = vdwg.mxu0
        %2773 = vmatpush.msra.mxu0 0.0
        %2774 = vmatpush.msra.mxu0 0.0
        %2775 = vmatpush.msra.mxu0 0.0
        %2776 = vmatpush.msra.mxu0 0.0
        %2777 = vmatpush.msra.mxu0 0.0
        %2778 = vmatpush.msra.mxu0 0.0
        %2779 = vmatpush.msra.mxu0 0.0
        %2780 = vmatpush.msra.mxu0 0.0
        %2781 = vmatpush.msra.mxu0 0.0
        %2782 = vmatpush.msra.mxu0 0.0
        %2783 = vmatpush.msra.mxu0 0.0
        %2784 = vmatpush.msra.mxu0 0.0
        %2785 = vmatpush.msra.mxu0 0.0
        %2786 = vmatpush.msra.mxu0 0.0
        %2787 = vmatpush.msra.mxu0 %v2690
        %2788 = vmatpush.msra.mxu0 %v2661
        %2789 = vmatmul.f32.gmra.mxu0 %v2675
        %v2790 = vpop.f32.mrf.mxu0
        %v2791 = vadd.f32 0.0, %v2790
        %2792 = vmatmul.f32.gmra.mxu0 %v2678
        %v2793 = vpop.f32.mrf.mxu0
        %v2794 = vadd.f32 0.0, %v2793
        %2795 = vdwg.mxu0
        %2796 = vmatpush.msra.mxu0 0.0
        %2797 = vmatpush.msra.mxu0 0.0
        %2798 = vmatpush.msra.mxu0 0.0
        %2799 = vmatpush.msra.mxu0 0.0
        %2800 = vmatpush.msra.mxu0 0.0
        %2801 = vmatpush.msra.mxu0 0.0
        %2802 = vmatpush.msra.mxu0 0.0
        %2803 = vmatpush.msra.mxu0 0.0
        %2804 = vmatpush.msra.mxu0 0.0
        %2805 = vmatpush.msra.mxu0 0.0
        %2806 = vmatpush.msra.mxu0 0.0
        %2807 = vmatpush.msra.mxu0 0.0
        %2808 = vmatpush.msra.mxu0 0.0
        %2809 = vmatpush.msra.mxu0 0.0
        %2810 = vmatpush.msra.mxu0 %v2693
        %2811 = vmatpush.msra.mxu0 %v2659
        %2812 = vmatmul.f32.gmra.mxu0 %v2675
        %v2813 = vpop.f32.mrf.mxu0
        %v2814 = vadd.f32 0.0, %v2813
        %2815 = vmatmul.f32.gmra.mxu0 %v2678
        %v2816 = vpop.f32.mrf.mxu0
        %v2817 = vadd.f32 0.0, %v2816
        %2818 = vdwg.mxu0
        %2819 = vmatpush.msra.mxu0 0.0
        %2820 = vmatpush.msra.mxu0 0.0
        %2821 = vmatpush.msra.mxu0 0.0
        %2822 = vmatpush.msra.mxu0 0.0
        %2823 = vmatpush.msra.mxu0 0.0
        %2824 = vmatpush.msra.mxu0 0.0
        %2825 = vmatpush.msra.mxu0 0.0
        %2826 = vmatpush.msra.mxu0 0.0
        %2827 = vmatpush.msra.mxu0 0.0
        %2828 = vmatpush.msra.mxu0 0.0
        %2829 = vmatpush.msra.mxu0 0.0
        %2830 = vmatpush.msra.mxu0 0.0
        %2831 = vmatpush.msra.mxu0 0.0
        %2832 = vmatpush.msra.mxu0 0.0
        %2833 = vmatpush.msra.mxu0 %v2696
        %2834 = vmatpush.msra.mxu0 %v2657
        %2835 = vmatmul.f32.gmra.mxu0 %v2675
        %v2836 = vpop.f32.mrf.mxu0
        %v2837 = vadd.f32 0.0, %v2836
        %2838 = vmatmul.f32.gmra.mxu0 %v2678
        %v2839 = vpop.f32.mrf.mxu0
        %v2840 = vadd.f32 0.0, %v2839
        %2841 = vdwg.mxu0
        %2842 = vmatpush.msra.mxu0 0.0
        %2843 = vmatpush.msra.mxu0 0.0
        %2844 = vmatpush.msra.mxu0 0.0
        %2845 = vmatpush.msra.mxu0 0.0
        %2846 = vmatpush.msra.mxu0 0.0
        %2847 = vmatpush.msra.mxu0 0.0
        %2848 = vmatpush.msra.mxu0 0.0
        %2849 = vmatpush.msra.mxu0 0.0
        %2850 = vmatpush.msra.mxu0 0.0
        %2851 = vmatpush.msra.mxu0 0.0
        %2852 = vmatpush.msra.mxu0 0.0
        %2853 = vmatpush.msra.mxu0 0.0
        %2854 = vmatpush.msra.mxu0 0.0
        %2855 = vmatpush.msra.mxu0 0.0
        %2856 = vmatpush.msra.mxu0 %v2699
        %2857 = vmatpush.msra.mxu0 %v2655
        %2858 = vmatmul.f32.gmra.mxu0 %v2675
        %v2859 = vpop.f32.mrf.mxu0
        %v2860 = vadd.f32 0.0, %v2859
        %2861 = vmatmul.f32.gmra.mxu0 %v2678
        %v2862 = vpop.f32.mrf.mxu0
        %v2863 = vadd.f32 0.0, %v2862
        %2864 = vdwg.mxu0
        %2865 = vmatpush.msra.mxu0 0.0
        %2866 = vmatpush.msra.mxu0 0.0
        %2867 = vmatpush.msra.mxu0 0.0
        %2868 = vmatpush.msra.mxu0 0.0
        %2869 = vmatpush.msra.mxu0 0.0
        %2870 = vmatpush.msra.mxu0 0.0
        %2871 = vmatpush.msra.mxu0 0.0
        %2872 = vmatpush.msra.mxu0 0.0
        %2873 = vmatpush.msra.mxu0 0.0
        %2874 = vmatpush.msra.mxu0 0.0
        %2875 = vmatpush.msra.mxu0 0.0
        %2876 = vmatpush.msra.mxu0 0.0
        %2877 = vmatpush.msra.mxu0 0.0
        %2878 = vmatpush.msra.mxu0 0.0
        %2879 = vmatpush.msra.mxu0 %v2702
        %2880 = vmatpush.msra.mxu0 %v2669
        %2881 = vmatmul.f32.gmra.mxu0 %v2675
        %v2882 = vpop.f32.mrf.mxu0
        %v2883 = vadd.f32 0.0, %v2882
        %2884 = vmatmul.f32.gmra.mxu0 %v2678
        %v2885 = vpop.f32.mrf.mxu0
        %v2886 = vadd.f32 0.0, %v2885
        %2887 = vdwg.mxu0
        %v2888 = vadd.f32 %v2607, %v2722
        %v2889 = vadd.f32 %v2608, %v2745
        %v2890 = vadd.f32 %v2609, %v2768
        %v2891 = vadd.f32 %v2610, %v2791
        %v2892 = vadd.f32 %v2611, %v2814
        %v2893 = vadd.f32 %v2612, %v2837
        %v2894 = vadd.f32 %v2613, %v2860
        %v2895 = vadd.f32 %v2614, %v2883
        %v2896 = vadd.f32 %v2615, %v2725
        %v2897 = vadd.f32 %v2616, %v2748
        %v2898 = vadd.f32 %v2617, %v2771
        %v2899 = vadd.f32 %v2618, %v2794
        %v2900 = vadd.f32 %v2619, %v2817
        %v2901 = vadd.f32 %v2620, %v2840
        %v2902 = vadd.f32 %v2621, %v2863
        %v2903 = vadd.f32 %v2622, %v2886
        %2904 = vrot.lane.b32.xlu0 %v1281, 97
        %v2905 = vpop.permute.xlu0 %2904
        %2906 = vrot.lane.b32.xlu0 %v1289, 97
        %v2907 = vpop.permute.xlu0 %2906
        %2908 = vrot.lane.b32.xlu0 %v1282, 97
        %v2909 = vpop.permute.xlu0 %2908
        %2910 = vrot.lane.b32.xlu0 %v1290, 97
        %v2911 = vpop.permute.xlu0 %2910
        %2912 = vrot.lane.b32.xlu0 %v1283, 97
        %v2913 = vpop.permute.xlu0 %2912
        %2914 = vrot.lane.b32.xlu0 %v1291, 97
        %v2915 = vpop.permute.xlu0 %2914
        %2916 = vrot.lane.b32.xlu0 %v1284, 97
        %v2917 = vpop.permute.xlu0 %2916
        %2918 = vrot.lane.b32.xlu0 %v1292, 97
        %v2919 = vpop.permute.xlu0 %2918
        %2920 = vrot.lane.b32.xlu0 %v1285, 97
        %v2921 = vpop.permute.xlu0 %2920
        %2922 = vrot.lane.b32.xlu0 %v1293, 97
        %v2923 = vpop.permute.xlu0 %2922
        %2924 = vrot.lane.b32.xlu0 %v1286, 97
        %v2925 = vpop.permute.xlu0 %2924
        %2926 = vrot.lane.b32.xlu0 %v1294, 97
        %v2927 = vpop.permute.xlu0 %2926
        %2928 = vrot.lane.b32.xlu0 %v1287, 97
        %v2929 = vpop.permute.xlu0 %2928
        %2930 = vrot.lane.b32.xlu0 %v1295, 97
        %v2931 = vpop.permute.xlu0 %2930
        %2932 = vrot.lane.b32.xlu0 %v1288, 97
        %v2933 = vpop.permute.xlu0 %2932
        %2934 = vrot.lane.b32.xlu0 %v1296, 97
        %v2935 = vpop.permute.xlu0 %2934
        %v2936 = vsel %vm1003, %v2929, %v2933
        %v2937 = vsel %vm1003, %v2931, %v2935
        %v2938 = vsel %vm1003, %v2925, %v2929
        %v2939 = vsel %vm1003, %v2927, %v2931
        %v2940 = vsel %vm1003, %v2921, %v2925
        %v2941 = vsel %vm1003, %v2923, %v2927
        %v2942 = vsel %vm1003, %v2917, %v2921
        %v2943 = vsel %vm1003, %v2919, %v2923
        %v2944 = vsel %vm1003, %v2913, %v2917
        %v2945 = vsel %vm1003, %v2915, %v2919
        %v2946 = vsel %vm1003, %v2909, %v2913
        %v2947 = vsel %vm1003, %v2911, %v2915
        %v2948 = vsel %vm1003, %v2905, %v2909
        %v2949 = vsel %vm1003, %v2907, %v2911
        %v2950 = vsel %vm1003, %v2933, %v2905
        %v2951 = vsel %vm1003, %v2935, %v2907
        %s2952 = scalar_lea.vmem %s3, 96
        %v2953 = vld [vmem:[%s2952] sm:$0xff]
        %v2954 = vld [vmem:[%s2952 + $0x8] sm:$0xff]
        %v2956 = vsel %vm1398, %v2953, 0
        %v2959 = vsel %vm1398, %v2954, 0
        %v2962 = vsel %vm1405, %v2949, 0
        %v2965 = vsel %vm1405, %v2947, 0
        %v2968 = vsel %vm1405, %v2945, 0
        %v2971 = vsel %vm1405, %v2943, 0
        %v2974 = vsel %vm1405, %v2941, 0
        %v2977 = vsel %vm1405, %v2939, 0
        %v2980 = vsel %vm1405, %v2937, 0
        %v2983 = vsel %vm1405, %v2951, 0
        %2985 = vmatpush.msra.mxu0 0.0
        %2986 = vmatpush.msra.mxu0 0.0
        %2987 = vmatpush.msra.mxu0 0.0
        %2988 = vmatpush.msra.mxu0 0.0
        %2989 = vmatpush.msra.mxu0 0.0
        %2990 = vmatpush.msra.mxu0 0.0
        %2991 = vmatpush.msra.mxu0 0.0
        %2992 = vmatpush.msra.mxu0 0.0
        %2993 = vmatpush.msra.mxu0 0.0
        %2994 = vmatpush.msra.mxu0 0.0
        %2995 = vmatpush.msra.mxu0 0.0
        %2996 = vmatpush.msra.mxu0 0.0
        %2997 = vmatpush.msra.mxu0 0.0
        %2998 = vmatpush.msra.mxu0 0.0
        %2999 = vmatpush.msra.mxu0 %v2962
        %3000 = vmatpush.msra.mxu0 %v2948
        %3001 = vmatmul.f32.gmra.mxu0 %v2956
        %v3002 = vpop.f32.mrf.mxu0
        %v3003 = vadd.f32 0.0, %v3002
        %3004 = vmatmul.f32.gmra.mxu0 %v2959
        %v3005 = vpop.f32.mrf.mxu0
        %v3006 = vadd.f32 0.0, %v3005
        %3007 = vdwg.mxu0
        %3008 = vmatpush.msra.mxu0 0.0
        %3009 = vmatpush.msra.mxu0 0.0
        %3010 = vmatpush.msra.mxu0 0.0
        %3011 = vmatpush.msra.mxu0 0.0
        %3012 = vmatpush.msra.mxu0 0.0
        %3013 = vmatpush.msra.mxu0 0.0
        %3014 = vmatpush.msra.mxu0 0.0
        %3015 = vmatpush.msra.mxu0 0.0
        %3016 = vmatpush.msra.mxu0 0.0
        %3017 = vmatpush.msra.mxu0 0.0
        %3018 = vmatpush.msra.mxu0 0.0
        %3019 = vmatpush.msra.mxu0 0.0
        %3020 = vmatpush.msra.mxu0 0.0
        %3021 = vmatpush.msra.mxu0 0.0
        %3022 = vmatpush.msra.mxu0 %v2965
        %3023 = vmatpush.msra.mxu0 %v2946
        %3024 = vmatmul.f32.gmra.mxu0 %v2956
        %v3025 = vpop.f32.mrf.mxu0
        %v3026 = vadd.f32 0.0, %v3025
        %3027 = vmatmul.f32.gmra.mxu0 %v2959
        %v3028 = vpop.f32.mrf.mxu0
        %v3029 = vadd.f32 0.0, %v3028
        %3030 = vdwg.mxu0
        %3031 = vmatpush.msra.mxu0 0.0
        %3032 = vmatpush.msra.mxu0 0.0
        %3033 = vmatpush.msra.mxu0 0.0
        %3034 = vmatpush.msra.mxu0 0.0
        %3035 = vmatpush.msra.mxu0 0.0
        %3036 = vmatpush.msra.mxu0 0.0
        %3037 = vmatpush.msra.mxu0 0.0
        %3038 = vmatpush.msra.mxu0 0.0
        %3039 = vmatpush.msra.mxu0 0.0
        %3040 = vmatpush.msra.mxu0 0.0
        %3041 = vmatpush.msra.mxu0 0.0
        %3042 = vmatpush.msra.mxu0 0.0
        %3043 = vmatpush.msra.mxu0 0.0
        %3044 = vmatpush.msra.mxu0 0.0
        %3045 = vmatpush.msra.mxu0 %v2968
        %3046 = vmatpush.msra.mxu0 %v2944
        %3047 = vmatmul.f32.gmra.mxu0 %v2956
        %v3048 = vpop.f32.mrf.mxu0
        %v3049 = vadd.f32 0.0, %v3048
        %3050 = vmatmul.f32.gmra.mxu0 %v2959
        %v3051 = vpop.f32.mrf.mxu0
        %v3052 = vadd.f32 0.0, %v3051
        %3053 = vdwg.mxu0
        %3054 = vmatpush.msra.mxu0 0.0
        %3055 = vmatpush.msra.mxu0 0.0
        %3056 = vmatpush.msra.mxu0 0.0
        %3057 = vmatpush.msra.mxu0 0.0
        %3058 = vmatpush.msra.mxu0 0.0
        %3059 = vmatpush.msra.mxu0 0.0
        %3060 = vmatpush.msra.mxu0 0.0
        %3061 = vmatpush.msra.mxu0 0.0
        %3062 = vmatpush.msra.mxu0 0.0
        %3063 = vmatpush.msra.mxu0 0.0
        %3064 = vmatpush.msra.mxu0 0.0
        %3065 = vmatpush.msra.mxu0 0.0
        %3066 = vmatpush.msra.mxu0 0.0
        %3067 = vmatpush.msra.mxu0 0.0
        %3068 = vmatpush.msra.mxu0 %v2971
        %3069 = vmatpush.msra.mxu0 %v2942
        %3070 = vmatmul.f32.gmra.mxu0 %v2956
        %v3071 = vpop.f32.mrf.mxu0
        %v3072 = vadd.f32 0.0, %v3071
        %3073 = vmatmul.f32.gmra.mxu0 %v2959
        %v3074 = vpop.f32.mrf.mxu0
        %v3075 = vadd.f32 0.0, %v3074
        %3076 = vdwg.mxu0
        %3077 = vmatpush.msra.mxu0 0.0
        %3078 = vmatpush.msra.mxu0 0.0
        %3079 = vmatpush.msra.mxu0 0.0
        %3080 = vmatpush.msra.mxu0 0.0
        %3081 = vmatpush.msra.mxu0 0.0
        %3082 = vmatpush.msra.mxu0 0.0
        %3083 = vmatpush.msra.mxu0 0.0
        %3084 = vmatpush.msra.mxu0 0.0
        %3085 = vmatpush.msra.mxu0 0.0
        %3086 = vmatpush.msra.mxu0 0.0
        %3087 = vmatpush.msra.mxu0 0.0
        %3088 = vmatpush.msra.mxu0 0.0
        %3089 = vmatpush.msra.mxu0 0.0
        %3090 = vmatpush.msra.mxu0 0.0
        %3091 = vmatpush.msra.mxu0 %v2974
        %3092 = vmatpush.msra.mxu0 %v2940
        %3093 = vmatmul.f32.gmra.mxu0 %v2956
        %v3094 = vpop.f32.mrf.mxu0
        %v3095 = vadd.f32 0.0, %v3094
        %3096 = vmatmul.f32.gmra.mxu0 %v2959
        %v3097 = vpop.f32.mrf.mxu0
        %v3098 = vadd.f32 0.0, %v3097
        %3099 = vdwg.mxu0
        %3100 = vmatpush.msra.mxu0 0.0
        %3101 = vmatpush.msra.mxu0 0.0
        %3102 = vmatpush.msra.mxu0 0.0
        %3103 = vmatpush.msra.mxu0 0.0
        %3104 = vmatpush.msra.mxu0 0.0
        %3105 = vmatpush.msra.mxu0 0.0
        %3106 = vmatpush.msra.mxu0 0.0
        %3107 = vmatpush.msra.mxu0 0.0
        %3108 = vmatpush.msra.mxu0 0.0
        %3109 = vmatpush.msra.mxu0 0.0
        %3110 = vmatpush.msra.mxu0 0.0
        %3111 = vmatpush.msra.mxu0 0.0
        %3112 = vmatpush.msra.mxu0 0.0
        %3113 = vmatpush.msra.mxu0 0.0
        %3114 = vmatpush.msra.mxu0 %v2977
        %3115 = vmatpush.msra.mxu0 %v2938
        %3116 = vmatmul.f32.gmra.mxu0 %v2956
        %v3117 = vpop.f32.mrf.mxu0
        %v3118 = vadd.f32 0.0, %v3117
        %3119 = vmatmul.f32.gmra.mxu0 %v2959
        %v3120 = vpop.f32.mrf.mxu0
        %v3121 = vadd.f32 0.0, %v3120
        %3122 = vdwg.mxu0
        %3123 = vmatpush.msra.mxu0 0.0
        %3124 = vmatpush.msra.mxu0 0.0
        %3125 = vmatpush.msra.mxu0 0.0
        %3126 = vmatpush.msra.mxu0 0.0
        %3127 = vmatpush.msra.mxu0 0.0
        %3128 = vmatpush.msra.mxu0 0.0
        %3129 = vmatpush.msra.mxu0 0.0
        %3130 = vmatpush.msra.mxu0 0.0
        %3131 = vmatpush.msra.mxu0 0.0
        %3132 = vmatpush.msra.mxu0 0.0
        %3133 = vmatpush.msra.mxu0 0.0
        %3134 = vmatpush.msra.mxu0 0.0
        %3135 = vmatpush.msra.mxu0 0.0
        %3136 = vmatpush.msra.mxu0 0.0
        %3137 = vmatpush.msra.mxu0 %v2980
        %3138 = vmatpush.msra.mxu0 %v2936
        %3139 = vmatmul.f32.gmra.mxu0 %v2956
        %v3140 = vpop.f32.mrf.mxu0
        %v3141 = vadd.f32 0.0, %v3140
        %3142 = vmatmul.f32.gmra.mxu0 %v2959
        %v3143 = vpop.f32.mrf.mxu0
        %v3144 = vadd.f32 0.0, %v3143
        %3145 = vdwg.mxu0
        %3146 = vmatpush.msra.mxu0 0.0
        %3147 = vmatpush.msra.mxu0 0.0
        %3148 = vmatpush.msra.mxu0 0.0
        %3149 = vmatpush.msra.mxu0 0.0
        %3150 = vmatpush.msra.mxu0 0.0
        %3151 = vmatpush.msra.mxu0 0.0
        %3152 = vmatpush.msra.mxu0 0.0
        %3153 = vmatpush.msra.mxu0 0.0
        %3154 = vmatpush.msra.mxu0 0.0
        %3155 = vmatpush.msra.mxu0 0.0
        %3156 = vmatpush.msra.mxu0 0.0
        %3157 = vmatpush.msra.mxu0 0.0
        %3158 = vmatpush.msra.mxu0 0.0
        %3159 = vmatpush.msra.mxu0 0.0
        %3160 = vmatpush.msra.mxu0 %v2983
        %3161 = vmatpush.msra.mxu0 %v2950
        %3162 = vmatmul.f32.gmra.mxu0 %v2956
        %v3163 = vpop.f32.mrf.mxu0
        %v3164 = vadd.f32 0.0, %v3163
        %3165 = vmatmul.f32.gmra.mxu0 %v2959
        %v3166 = vpop.f32.mrf.mxu0
        %v3167 = vadd.f32 0.0, %v3166
        %3168 = vdwg.mxu0
        %v3169 = vadd.f32 %v2888, %v3003
        %v3170 = vadd.f32 %v2889, %v3026
        %v3171 = vadd.f32 %v2890, %v3049
        %v3172 = vadd.f32 %v2891, %v3072
        %v3173 = vadd.f32 %v2892, %v3095
        %v3174 = vadd.f32 %v2893, %v3118
        %v3175 = vadd.f32 %v2894, %v3141
        %v3176 = vadd.f32 %v2895, %v3164
        %v3177 = vadd.f32 %v2896, %v3006
        %v3178 = vadd.f32 %v2897, %v3029
        %v3179 = vadd.f32 %v2898, %v3052
        %v3180 = vadd.f32 %v2899, %v3075
        %v3181 = vadd.f32 %v2900, %v3098
        %v3182 = vadd.f32 %v2901, %v3121
        %v3183 = vadd.f32 %v2902, %v3144
        %v3184 = vadd.f32 %v2903, %v3167
        %3185 = vrot.lane.b32.xlu0 %v1281, 96
        %v3186 = vpop.permute.xlu0 %3185
        %3187 = vrot.lane.b32.xlu0 %v1289, 96
        %v3188 = vpop.permute.xlu0 %3187
        %3189 = vrot.lane.b32.xlu0 %v1282, 96
        %v3190 = vpop.permute.xlu0 %3189
        %3191 = vrot.lane.b32.xlu0 %v1290, 96
        %v3192 = vpop.permute.xlu0 %3191
        %3193 = vrot.lane.b32.xlu0 %v1283, 96
        %v3194 = vpop.permute.xlu0 %3193
        %3195 = vrot.lane.b32.xlu0 %v1291, 96
        %v3196 = vpop.permute.xlu0 %3195
        %3197 = vrot.lane.b32.xlu0 %v1284, 96
        %v3198 = vpop.permute.xlu0 %3197
        %3199 = vrot.lane.b32.xlu0 %v1292, 96
        %v3200 = vpop.permute.xlu0 %3199
        %3201 = vrot.lane.b32.xlu0 %v1285, 96
        %v3202 = vpop.permute.xlu0 %3201
        %3203 = vrot.lane.b32.xlu0 %v1293, 96
        %v3204 = vpop.permute.xlu0 %3203
        %3205 = vrot.lane.b32.xlu0 %v1286, 96
        %v3206 = vpop.permute.xlu0 %3205
        %3207 = vrot.lane.b32.xlu0 %v1294, 96
        %v3208 = vpop.permute.xlu0 %3207
        %3209 = vrot.lane.b32.xlu0 %v1287, 96
        %v3210 = vpop.permute.xlu0 %3209
        %3211 = vrot.lane.b32.xlu0 %v1295, 96
        %v3212 = vpop.permute.xlu0 %3211
        %3213 = vrot.lane.b32.xlu0 %v1288, 96
        %v3214 = vpop.permute.xlu0 %3213
        %3215 = vrot.lane.b32.xlu0 %v1296, 96
        %v3216 = vpop.permute.xlu0 %3215
        %v3217 = vsel %vm1081, %v3210, %v3214
        %v3218 = vsel %vm1081, %v3212, %v3216
        %v3219 = vsel %vm1081, %v3206, %v3210
        %v3220 = vsel %vm1081, %v3208, %v3212
        %v3221 = vsel %vm1081, %v3202, %v3206
        %v3222 = vsel %vm1081, %v3204, %v3208
        %v3223 = vsel %vm1081, %v3198, %v3202
        %v3224 = vsel %vm1081, %v3200, %v3204
        %v3225 = vsel %vm1081, %v3194, %v3198
        %v3226 = vsel %vm1081, %v3196, %v3200
        %v3227 = vsel %vm1081, %v3190, %v3194
        %v3228 = vsel %vm1081, %v3192, %v3196
        %v3229 = vsel %vm1081, %v3186, %v3190
        %v3230 = vsel %vm1081, %v3188, %v3192
        %v3231 = vsel %vm1081, %v3214, %v3186
        %v3232 = vsel %vm1081, %v3216, %v3188
        %s3233 = scalar_lea.vmem %s3, 112
        %v3234 = vld [vmem:[%s3233] sm:$0xff]
        %v3235 = vld [vmem:[%s3233 + $0x8] sm:$0xff]
        %v3237 = vsel %vm1398, %v3234, 0
        %v3240 = vsel %vm1398, %v3235, 0
        %v3243 = vsel %vm1405, %v3230, 0
        %v3246 = vsel %vm1405, %v3228, 0
        %v3249 = vsel %vm1405, %v3226, 0
        %v3252 = vsel %vm1405, %v3224, 0
        %v3255 = vsel %vm1405, %v3222, 0
        %v3258 = vsel %vm1405, %v3220, 0
        %v3261 = vsel %vm1405, %v3218, 0
        %v3264 = vsel %vm1405, %v3232, 0
        %3266 = vmatpush.msra.mxu0 0.0
        %3267 = vmatpush.msra.mxu0 0.0
        %3268 = vmatpush.msra.mxu0 0.0
        %3269 = vmatpush.msra.mxu0 0.0
        %3270 = vmatpush.msra.mxu0 0.0
        %3271 = vmatpush.msra.mxu0 0.0
        %3272 = vmatpush.msra.mxu0 0.0
        %3273 = vmatpush.msra.mxu0 0.0
        %3274 = vmatpush.msra.mxu0 0.0
        %3275 = vmatpush.msra.mxu0 0.0
        %3276 = vmatpush.msra.mxu0 0.0
        %3277 = vmatpush.msra.mxu0 0.0
        %3278 = vmatpush.msra.mxu0 0.0
        %3279 = vmatpush.msra.mxu0 0.0
        %3280 = vmatpush.msra.mxu0 %v3243
        %3281 = vmatpush.msra.mxu0 %v3229
        %3282 = vmatmul.f32.gmra.mxu0 %v3237
        %v3283 = vpop.f32.mrf.mxu0
        %v3284 = vadd.f32 0.0, %v3283
        %3285 = vmatmul.f32.gmra.mxu0 %v3240
        %v3286 = vpop.f32.mrf.mxu0
        %v3287 = vadd.f32 0.0, %v3286
        %3288 = vdwg.mxu0
        %3289 = vmatpush.msra.mxu0 0.0
        %3290 = vmatpush.msra.mxu0 0.0
        %3291 = vmatpush.msra.mxu0 0.0
        %3292 = vmatpush.msra.mxu0 0.0
        %3293 = vmatpush.msra.mxu0 0.0
        %3294 = vmatpush.msra.mxu0 0.0
        %3295 = vmatpush.msra.mxu0 0.0
        %3296 = vmatpush.msra.mxu0 0.0
        %3297 = vmatpush.msra.mxu0 0.0
        %3298 = vmatpush.msra.mxu0 0.0
        %3299 = vmatpush.msra.mxu0 0.0
        %3300 = vmatpush.msra.mxu0 0.0
        %3301 = vmatpush.msra.mxu0 0.0
        %3302 = vmatpush.msra.mxu0 0.0
        %3303 = vmatpush.msra.mxu0 %v3246
        %3304 = vmatpush.msra.mxu0 %v3227
        %3305 = vmatmul.f32.gmra.mxu0 %v3237
        %v3306 = vpop.f32.mrf.mxu0
        %v3307 = vadd.f32 0.0, %v3306
        %3308 = vmatmul.f32.gmra.mxu0 %v3240
        %v3309 = vpop.f32.mrf.mxu0
        %v3310 = vadd.f32 0.0, %v3309
        %3311 = vdwg.mxu0
        %3312 = vmatpush.msra.mxu0 0.0
        %3313 = vmatpush.msra.mxu0 0.0
        %3314 = vmatpush.msra.mxu0 0.0
        %3315 = vmatpush.msra.mxu0 0.0
        %3316 = vmatpush.msra.mxu0 0.0
        %3317 = vmatpush.msra.mxu0 0.0
        %3318 = vmatpush.msra.mxu0 0.0
        %3319 = vmatpush.msra.mxu0 0.0
        %3320 = vmatpush.msra.mxu0 0.0
        %3321 = vmatpush.msra.mxu0 0.0
        %3322 = vmatpush.msra.mxu0 0.0
        %3323 = vmatpush.msra.mxu0 0.0
        %3324 = vmatpush.msra.mxu0 0.0
        %3325 = vmatpush.msra.mxu0 0.0
        %3326 = vmatpush.msra.mxu0 %v3249
        %3327 = vmatpush.msra.mxu0 %v3225
        %3328 = vmatmul.f32.gmra.mxu0 %v3237
        %v3329 = vpop.f32.mrf.mxu0
        %v3330 = vadd.f32 0.0, %v3329
        %3331 = vmatmul.f32.gmra.mxu0 %v3240
        %v3332 = vpop.f32.mrf.mxu0
        %v3333 = vadd.f32 0.0, %v3332
        %3334 = vdwg.mxu0
        %3335 = vmatpush.msra.mxu0 0.0
        %3336 = vmatpush.msra.mxu0 0.0
        %3337 = vmatpush.msra.mxu0 0.0
        %3338 = vmatpush.msra.mxu0 0.0
        %3339 = vmatpush.msra.mxu0 0.0
        %3340 = vmatpush.msra.mxu0 0.0
        %3341 = vmatpush.msra.mxu0 0.0
        %3342 = vmatpush.msra.mxu0 0.0
        %3343 = vmatpush.msra.mxu0 0.0
        %3344 = vmatpush.msra.mxu0 0.0
        %3345 = vmatpush.msra.mxu0 0.0
        %3346 = vmatpush.msra.mxu0 0.0
        %3347 = vmatpush.msra.mxu0 0.0
        %3348 = vmatpush.msra.mxu0 0.0
        %3349 = vmatpush.msra.mxu0 %v3252
        %3350 = vmatpush.msra.mxu0 %v3223
        %3351 = vmatmul.f32.gmra.mxu0 %v3237
        %v3352 = vpop.f32.mrf.mxu0
        %v3353 = vadd.f32 0.0, %v3352
        %3354 = vmatmul.f32.gmra.mxu0 %v3240
        %v3355 = vpop.f32.mrf.mxu0
        %v3356 = vadd.f32 0.0, %v3355
        %3357 = vdwg.mxu0
        %3358 = vmatpush.msra.mxu0 0.0
        %3359 = vmatpush.msra.mxu0 0.0
        %3360 = vmatpush.msra.mxu0 0.0
        %3361 = vmatpush.msra.mxu0 0.0
        %3362 = vmatpush.msra.mxu0 0.0
        %3363 = vmatpush.msra.mxu0 0.0
        %3364 = vmatpush.msra.mxu0 0.0
        %3365 = vmatpush.msra.mxu0 0.0
        %3366 = vmatpush.msra.mxu0 0.0
        %3367 = vmatpush.msra.mxu0 0.0
        %3368 = vmatpush.msra.mxu0 0.0
        %3369 = vmatpush.msra.mxu0 0.0
        %3370 = vmatpush.msra.mxu0 0.0
        %3371 = vmatpush.msra.mxu0 0.0
        %3372 = vmatpush.msra.mxu0 %v3255
        %3373 = vmatpush.msra.mxu0 %v3221
        %3374 = vmatmul.f32.gmra.mxu0 %v3237
        %v3375 = vpop.f32.mrf.mxu0
        %v3376 = vadd.f32 0.0, %v3375
        %3377 = vmatmul.f32.gmra.mxu0 %v3240
        %v3378 = vpop.f32.mrf.mxu0
        %v3379 = vadd.f32 0.0, %v3378
        %3380 = vdwg.mxu0
        %3381 = vmatpush.msra.mxu0 0.0
        %3382 = vmatpush.msra.mxu0 0.0
        %3383 = vmatpush.msra.mxu0 0.0
        %3384 = vmatpush.msra.mxu0 0.0
        %3385 = vmatpush.msra.mxu0 0.0
        %3386 = vmatpush.msra.mxu0 0.0
        %3387 = vmatpush.msra.mxu0 0.0
        %3388 = vmatpush.msra.mxu0 0.0
        %3389 = vmatpush.msra.mxu0 0.0
        %3390 = vmatpush.msra.mxu0 0.0
        %3391 = vmatpush.msra.mxu0 0.0
        %3392 = vmatpush.msra.mxu0 0.0
        %3393 = vmatpush.msra.mxu0 0.0
        %3394 = vmatpush.msra.mxu0 0.0
        %3395 = vmatpush.msra.mxu0 %v3258
        %3396 = vmatpush.msra.mxu0 %v3219
        %3397 = vmatmul.f32.gmra.mxu0 %v3237
        %v3398 = vpop.f32.mrf.mxu0
        %v3399 = vadd.f32 0.0, %v3398
        %3400 = vmatmul.f32.gmra.mxu0 %v3240
        %v3401 = vpop.f32.mrf.mxu0
        %v3402 = vadd.f32 0.0, %v3401
        %3403 = vdwg.mxu0
        %3404 = vmatpush.msra.mxu0 0.0
        %3405 = vmatpush.msra.mxu0 0.0
        %3406 = vmatpush.msra.mxu0 0.0
        %3407 = vmatpush.msra.mxu0 0.0
        %3408 = vmatpush.msra.mxu0 0.0
        %3409 = vmatpush.msra.mxu0 0.0
        %3410 = vmatpush.msra.mxu0 0.0
        %3411 = vmatpush.msra.mxu0 0.0
        %3412 = vmatpush.msra.mxu0 0.0
        %3413 = vmatpush.msra.mxu0 0.0
        %3414 = vmatpush.msra.mxu0 0.0
        %3415 = vmatpush.msra.mxu0 0.0
        %3416 = vmatpush.msra.mxu0 0.0
        %3417 = vmatpush.msra.mxu0 0.0
        %3418 = vmatpush.msra.mxu0 %v3261
        %3419 = vmatpush.msra.mxu0 %v3217
        %3420 = vmatmul.f32.gmra.mxu0 %v3237
        %v3421 = vpop.f32.mrf.mxu0
        %v3422 = vadd.f32 0.0, %v3421
        %3423 = vmatmul.f32.gmra.mxu0 %v3240
        %v3424 = vpop.f32.mrf.mxu0
        %v3425 = vadd.f32 0.0, %v3424
        %3426 = vdwg.mxu0
        %3427 = vmatpush.msra.mxu0 0.0
        %3428 = vmatpush.msra.mxu0 0.0
        %3429 = vmatpush.msra.mxu0 0.0
        %3430 = vmatpush.msra.mxu0 0.0
        %3431 = vmatpush.msra.mxu0 0.0
        %3432 = vmatpush.msra.mxu0 0.0
        %3433 = vmatpush.msra.mxu0 0.0
        %3434 = vmatpush.msra.mxu0 0.0
        %3435 = vmatpush.msra.mxu0 0.0
        %3436 = vmatpush.msra.mxu0 0.0
        %3437 = vmatpush.msra.mxu0 0.0
        %3438 = vmatpush.msra.mxu0 0.0
        %3439 = vmatpush.msra.mxu0 0.0
        %3440 = vmatpush.msra.mxu0 0.0
        %3441 = vmatpush.msra.mxu0 %v3264
        %3442 = vmatpush.msra.mxu0 %v3231
        %3443 = vmatmul.f32.gmra.mxu0 %v3237
        %v3444 = vpop.f32.mrf.mxu0
        %v3445 = vadd.f32 0.0, %v3444
        %3446 = vmatmul.f32.gmra.mxu0 %v3240
        %v3447 = vpop.f32.mrf.mxu0
        %v3448 = vadd.f32 0.0, %v3447
        %3449 = vdwg.mxu0
        %v3450 = vadd.f32 %v3169, %v3284
        %v3451 = vadd.f32 %v3170, %v3307
        %v3452 = vadd.f32 %v3171, %v3330
        %v3453 = vadd.f32 %v3172, %v3353
        %v3454 = vadd.f32 %v3173, %v3376
        %v3455 = vadd.f32 %v3174, %v3399
        %v3456 = vadd.f32 %v3175, %v3422
        %v3457 = vadd.f32 %v3176, %v3445
        %v3458 = vadd.f32 %v3177, %v3287
        %v3459 = vadd.f32 %v3178, %v3310
        %v3460 = vadd.f32 %v3179, %v3333
        %v3461 = vadd.f32 %v3180, %v3356
        %v3462 = vadd.f32 %v3181, %v3379
        %v3463 = vadd.f32 %v3182, %v3402
        %v3464 = vadd.f32 %v3183, %v3425
        %v3465 = vadd.f32 %v3184, %v3448
        %3466 = vrot.lane.b32.xlu0 %v1281, 95
        %v3467 = vpop.permute.xlu0 %3466
        %3468 = vrot.lane.b32.xlu0 %v1289, 95
        %v3469 = vpop.permute.xlu0 %3468
        %3470 = vrot.lane.b32.xlu0 %v1282, 95
        %v3471 = vpop.permute.xlu0 %3470
        %3472 = vrot.lane.b32.xlu0 %v1290, 95
        %v3473 = vpop.permute.xlu0 %3472
        %3474 = vrot.lane.b32.xlu0 %v1283, 95
        %v3475 = vpop.permute.xlu0 %3474
        %3476 = vrot.lane.b32.xlu0 %v1291, 95
        %v3477 = vpop.permute.xlu0 %3476
        %3478 = vrot.lane.b32.xlu0 %v1284, 95
        %v3479 = vpop.permute.xlu0 %3478
        %3480 = vrot.lane.b32.xlu0 %v1292, 95
        %v3481 = vpop.permute.xlu0 %3480
        %3482 = vrot.lane.b32.xlu0 %v1285, 95
        %v3483 = vpop.permute.xlu0 %3482
        %3484 = vrot.lane.b32.xlu0 %v1293, 95
        %v3485 = vpop.permute.xlu0 %3484
        %3486 = vrot.lane.b32.xlu0 %v1286, 95
        %v3487 = vpop.permute.xlu0 %3486
        %3488 = vrot.lane.b32.xlu0 %v1294, 95
        %v3489 = vpop.permute.xlu0 %3488
        %3490 = vrot.lane.b32.xlu0 %v1287, 95
        %v3491 = vpop.permute.xlu0 %3490
        %3492 = vrot.lane.b32.xlu0 %v1295, 95
        %v3493 = vpop.permute.xlu0 %3492
        %3494 = vrot.lane.b32.xlu0 %v1288, 95
        %v3495 = vpop.permute.xlu0 %3494
        %3496 = vrot.lane.b32.xlu0 %v1296, 95
        %v3497 = vpop.permute.xlu0 %3496
        %v3498 = vsel %vm1159, %v3491, %v3495
        %v3499 = vsel %vm1159, %v3493, %v3497
        %v3500 = vsel %vm1159, %v3487, %v3491
        %v3501 = vsel %vm1159, %v3489, %v3493
        %v3502 = vsel %vm1159, %v3483, %v3487
        %v3503 = vsel %vm1159, %v3485, %v3489
        %v3504 = vsel %vm1159, %v3479, %v3483
        %v3505 = vsel %vm1159, %v3481, %v3485
        %v3506 = vsel %vm1159, %v3475, %v3479
        %v3507 = vsel %vm1159, %v3477, %v3481
        %v3508 = vsel %vm1159, %v3471, %v3475
        %v3509 = vsel %vm1159, %v3473, %v3477
        %v3510 = vsel %vm1159, %v3467, %v3471
        %v3511 = vsel %vm1159, %v3469, %v3473
        %v3512 = vsel %vm1159, %v3495, %v3467
        %v3513 = vsel %vm1159, %v3497, %v3469
        %s3514 = scalar_lea.vmem %s3, 128
        %v3515 = vld [vmem:[%s3514] sm:$0xff]
        %v3516 = vld [vmem:[%s3514 + $0x8] sm:$0xff]
        %v3518 = vsel %vm1398, %v3515, 0
        %v3521 = vsel %vm1398, %v3516, 0
        %v3524 = vsel %vm1405, %v3511, 0
        %v3527 = vsel %vm1405, %v3509, 0
        %v3530 = vsel %vm1405, %v3507, 0
        %v3533 = vsel %vm1405, %v3505, 0
        %v3536 = vsel %vm1405, %v3503, 0
        %v3539 = vsel %vm1405, %v3501, 0
        %v3542 = vsel %vm1405, %v3499, 0
        %v3545 = vsel %vm1405, %v3513, 0
        %3547 = vmatpush.msra.mxu0 0.0
        %3548 = vmatpush.msra.mxu0 0.0
        %3549 = vmatpush.msra.mxu0 0.0
        %3550 = vmatpush.msra.mxu0 0.0
        %3551 = vmatpush.msra.mxu0 0.0
        %3552 = vmatpush.msra.mxu0 0.0
        %3553 = vmatpush.msra.mxu0 0.0
        %3554 = vmatpush.msra.mxu0 0.0
        %3555 = vmatpush.msra.mxu0 0.0
        %3556 = vmatpush.msra.mxu0 0.0
        %3557 = vmatpush.msra.mxu0 0.0
        %3558 = vmatpush.msra.mxu0 0.0
        %3559 = vmatpush.msra.mxu0 0.0
        %3560 = vmatpush.msra.mxu0 0.0
        %3561 = vmatpush.msra.mxu0 %v3524
        %3562 = vmatpush.msra.mxu0 %v3510
        %3563 = vmatmul.f32.gmra.mxu0 %v3518
        %v3564 = vpop.f32.mrf.mxu0
        %v3565 = vadd.f32 0.0, %v3564
        %3566 = vmatmul.f32.gmra.mxu0 %v3521
        %v3567 = vpop.f32.mrf.mxu0
        %v3568 = vadd.f32 0.0, %v3567
        %3569 = vdwg.mxu0
        %3570 = vmatpush.msra.mxu0 0.0
        %3571 = vmatpush.msra.mxu0 0.0
        %3572 = vmatpush.msra.mxu0 0.0
        %3573 = vmatpush.msra.mxu0 0.0
        %3574 = vmatpush.msra.mxu0 0.0
        %3575 = vmatpush.msra.mxu0 0.0
        %3576 = vmatpush.msra.mxu0 0.0
        %3577 = vmatpush.msra.mxu0 0.0
        %3578 = vmatpush.msra.mxu0 0.0
        %3579 = vmatpush.msra.mxu0 0.0
        %3580 = vmatpush.msra.mxu0 0.0
        %3581 = vmatpush.msra.mxu0 0.0
        %3582 = vmatpush.msra.mxu0 0.0
        %3583 = vmatpush.msra.mxu0 0.0
        %3584 = vmatpush.msra.mxu0 %v3527
        %3585 = vmatpush.msra.mxu0 %v3508
        %3586 = vmatmul.f32.gmra.mxu0 %v3518
        %v3587 = vpop.f32.mrf.mxu0
        %v3588 = vadd.f32 0.0, %v3587
        %3589 = vmatmul.f32.gmra.mxu0 %v3521
        %v3590 = vpop.f32.mrf.mxu0
        %v3591 = vadd.f32 0.0, %v3590
        %3592 = vdwg.mxu0
        %3593 = vmatpush.msra.mxu0 0.0
        %3594 = vmatpush.msra.mxu0 0.0
        %3595 = vmatpush.msra.mxu0 0.0
        %3596 = vmatpush.msra.mxu0 0.0
        %3597 = vmatpush.msra.mxu0 0.0
        %3598 = vmatpush.msra.mxu0 0.0
        %3599 = vmatpush.msra.mxu0 0.0
        %3600 = vmatpush.msra.mxu0 0.0
        %3601 = vmatpush.msra.mxu0 0.0
        %3602 = vmatpush.msra.mxu0 0.0
        %3603 = vmatpush.msra.mxu0 0.0
        %3604 = vmatpush.msra.mxu0 0.0
        %3605 = vmatpush.msra.mxu0 0.0
        %3606 = vmatpush.msra.mxu0 0.0
        %3607 = vmatpush.msra.mxu0 %v3530
        %3608 = vmatpush.msra.mxu0 %v3506
        %3609 = vmatmul.f32.gmra.mxu0 %v3518
        %v3610 = vpop.f32.mrf.mxu0
        %v3611 = vadd.f32 0.0, %v3610
        %3612 = vmatmul.f32.gmra.mxu0 %v3521
        %v3613 = vpop.f32.mrf.mxu0
        %v3614 = vadd.f32 0.0, %v3613
        %3615 = vdwg.mxu0
        %3616 = vmatpush.msra.mxu0 0.0
        %3617 = vmatpush.msra.mxu0 0.0
        %3618 = vmatpush.msra.mxu0 0.0
        %3619 = vmatpush.msra.mxu0 0.0
        %3620 = vmatpush.msra.mxu0 0.0
        %3621 = vmatpush.msra.mxu0 0.0
        %3622 = vmatpush.msra.mxu0 0.0
        %3623 = vmatpush.msra.mxu0 0.0
        %3624 = vmatpush.msra.mxu0 0.0
        %3625 = vmatpush.msra.mxu0 0.0
        %3626 = vmatpush.msra.mxu0 0.0
        %3627 = vmatpush.msra.mxu0 0.0
        %3628 = vmatpush.msra.mxu0 0.0
        %3629 = vmatpush.msra.mxu0 0.0
        %3630 = vmatpush.msra.mxu0 %v3533
        %3631 = vmatpush.msra.mxu0 %v3504
        %3632 = vmatmul.f32.gmra.mxu0 %v3518
        %v3633 = vpop.f32.mrf.mxu0
        %v3634 = vadd.f32 0.0, %v3633
        %3635 = vmatmul.f32.gmra.mxu0 %v3521
        %v3636 = vpop.f32.mrf.mxu0
        %v3637 = vadd.f32 0.0, %v3636
        %3638 = vdwg.mxu0
        %3639 = vmatpush.msra.mxu0 0.0
        %3640 = vmatpush.msra.mxu0 0.0
        %3641 = vmatpush.msra.mxu0 0.0
        %3642 = vmatpush.msra.mxu0 0.0
        %3643 = vmatpush.msra.mxu0 0.0
        %3644 = vmatpush.msra.mxu0 0.0
        %3645 = vmatpush.msra.mxu0 0.0
        %3646 = vmatpush.msra.mxu0 0.0
        %3647 = vmatpush.msra.mxu0 0.0
        %3648 = vmatpush.msra.mxu0 0.0
        %3649 = vmatpush.msra.mxu0 0.0
        %3650 = vmatpush.msra.mxu0 0.0
        %3651 = vmatpush.msra.mxu0 0.0
        %3652 = vmatpush.msra.mxu0 0.0
        %3653 = vmatpush.msra.mxu0 %v3536
        %3654 = vmatpush.msra.mxu0 %v3502
        %3655 = vmatmul.f32.gmra.mxu0 %v3518
        %v3656 = vpop.f32.mrf.mxu0
        %v3657 = vadd.f32 0.0, %v3656
        %3658 = vmatmul.f32.gmra.mxu0 %v3521
        %v3659 = vpop.f32.mrf.mxu0
        %v3660 = vadd.f32 0.0, %v3659
        %3661 = vdwg.mxu0
        %3662 = vmatpush.msra.mxu0 0.0
        %3663 = vmatpush.msra.mxu0 0.0
        %3664 = vmatpush.msra.mxu0 0.0
        %3665 = vmatpush.msra.mxu0 0.0
        %3666 = vmatpush.msra.mxu0 0.0
        %3667 = vmatpush.msra.mxu0 0.0
        %3668 = vmatpush.msra.mxu0 0.0
        %3669 = vmatpush.msra.mxu0 0.0
        %3670 = vmatpush.msra.mxu0 0.0
        %3671 = vmatpush.msra.mxu0 0.0
        %3672 = vmatpush.msra.mxu0 0.0
        %3673 = vmatpush.msra.mxu0 0.0
        %3674 = vmatpush.msra.mxu0 0.0
        %3675 = vmatpush.msra.mxu0 0.0
        %3676 = vmatpush.msra.mxu0 %v3539
        %3677 = vmatpush.msra.mxu0 %v3500
        %3678 = vmatmul.f32.gmra.mxu0 %v3518
        %v3679 = vpop.f32.mrf.mxu0
        %v3680 = vadd.f32 0.0, %v3679
        %3681 = vmatmul.f32.gmra.mxu0 %v3521
        %v3682 = vpop.f32.mrf.mxu0
        %v3683 = vadd.f32 0.0, %v3682
        %3684 = vdwg.mxu0
        %3685 = vmatpush.msra.mxu0 0.0
        %3686 = vmatpush.msra.mxu0 0.0
        %3687 = vmatpush.msra.mxu0 0.0
        %3688 = vmatpush.msra.mxu0 0.0
        %3689 = vmatpush.msra.mxu0 0.0
        %3690 = vmatpush.msra.mxu0 0.0
        %3691 = vmatpush.msra.mxu0 0.0
        %3692 = vmatpush.msra.mxu0 0.0
        %3693 = vmatpush.msra.mxu0 0.0
        %3694 = vmatpush.msra.mxu0 0.0
        %3695 = vmatpush.msra.mxu0 0.0
        %3696 = vmatpush.msra.mxu0 0.0
        %3697 = vmatpush.msra.mxu0 0.0
        %3698 = vmatpush.msra.mxu0 0.0
        %3699 = vmatpush.msra.mxu0 %v3542
        %3700 = vmatpush.msra.mxu0 %v3498
        %3701 = vmatmul.f32.gmra.mxu0 %v3518
        %v3702 = vpop.f32.mrf.mxu0
        %v3703 = vadd.f32 0.0, %v3702
        %3704 = vmatmul.f32.gmra.mxu0 %v3521
        %v3705 = vpop.f32.mrf.mxu0
        %v3706 = vadd.f32 0.0, %v3705
        %3707 = vdwg.mxu0
        %3708 = vmatpush.msra.mxu0 0.0
        %3709 = vmatpush.msra.mxu0 0.0
        %3710 = vmatpush.msra.mxu0 0.0
        %3711 = vmatpush.msra.mxu0 0.0
        %3712 = vmatpush.msra.mxu0 0.0
        %3713 = vmatpush.msra.mxu0 0.0
        %3714 = vmatpush.msra.mxu0 0.0
        %3715 = vmatpush.msra.mxu0 0.0
        %3716 = vmatpush.msra.mxu0 0.0
        %3717 = vmatpush.msra.mxu0 0.0
        %3718 = vmatpush.msra.mxu0 0.0
        %3719 = vmatpush.msra.mxu0 0.0
        %3720 = vmatpush.msra.mxu0 0.0
        %3721 = vmatpush.msra.mxu0 0.0
        %3722 = vmatpush.msra.mxu0 %v3545
        %3723 = vmatpush.msra.mxu0 %v3512
        %3724 = vmatmul.f32.gmra.mxu0 %v3518
        %v3725 = vpop.f32.mrf.mxu0
        %v3726 = vadd.f32 0.0, %v3725
        %3727 = vmatmul.f32.gmra.mxu0 %v3521
        %v3728 = vpop.f32.mrf.mxu0
        %v3729 = vadd.f32 0.0, %v3728
        %3730 = vdwg.mxu0
        %v3731 = vadd.f32 %v3450, %v3565
        %v3732 = vadd.f32 %v3451, %v3588
        %v3733 = vadd.f32 %v3452, %v3611
        %v3734 = vadd.f32 %v3453, %v3634
        %v3735 = vadd.f32 %v3454, %v3657
        %v3736 = vadd.f32 %v3455, %v3680
        %v3737 = vadd.f32 %v3456, %v3703
        %v3738 = vadd.f32 %v3457, %v3726
        %v3739 = vadd.f32 %v3458, %v3568
        %v3740 = vadd.f32 %v3459, %v3591
        %v3741 = vadd.f32 %v3460, %v3614
        %v3742 = vadd.f32 %v3461, %v3637
        %v3743 = vadd.f32 %v3462, %v3660
        %v3744 = vadd.f32 %v3463, %v3683
        %v3745 = vadd.f32 %v3464, %v3706
        %v3746 = vadd.f32 %v3465, %v3729
        %v3747 = vld [vmem:[%s4] sm:$0xff]
        %v3748 = vld [vmem:[%s4 + $0x8] sm:$0xff]
        %3750 = vset.pattern.permute.xlu0 0
        %3751 = vperm.xlu0 %3750, %v3747
        %v3752 = vpop.permute.xlu0 %3751
        %3755 = vset.pattern.permute.xlu0 0
        %3756 = vperm.xlu0 %3755, %v3748
        %v3757 = vpop.permute.xlu0 %3756
        %v3759 = vadd.f32 %v3731, %v3752
        %v3760 = vadd.f32 %v3732, %v3752
        %v3761 = vadd.f32 %v3733, %v3752
        %v3762 = vadd.f32 %v3734, %v3752
        %v3763 = vadd.f32 %v3735, %v3752
        %v3764 = vadd.f32 %v3736, %v3752
        %v3765 = vadd.f32 %v3737, %v3752
        %v3766 = vadd.f32 %v3738, %v3752
        %v3767 = vadd.f32 %v3739, %v3757
        %v3768 = vadd.f32 %v3740, %v3757
        %v3769 = vadd.f32 %v3741, %v3757
        %v3770 = vadd.f32 %v3742, %v3757
        %v3771 = vadd.f32 %v3743, %v3757
        %v3772 = vadd.f32 %v3744, %v3757
        %v3773 = vadd.f32 %v3745, %v3757
        %v3774 = vadd.f32 %v3746, %v3757
        %v3775 = vmax.f32 %v3759, 0.0
        %v3776 = vmax.f32 %v3760, 0.0
        %v3777 = vmax.f32 %v3761, 0.0
        %v3778 = vmax.f32 %v3762, 0.0
        %v3779 = vmax.f32 %v3763, 0.0
        %v3780 = vmax.f32 %v3764, 0.0
        %v3781 = vmax.f32 %v3765, 0.0
        %v3782 = vmax.f32 %v3766, 0.0
        %v3783 = vmax.f32 %v3767, 0.0
        %v3784 = vmax.f32 %v3768, 0.0
        %v3785 = vmax.f32 %v3769, 0.0
        %v3786 = vmax.f32 %v3770, 0.0
        %v3787 = vmax.f32 %v3771, 0.0
        %v3788 = vmax.f32 %v3772, 0.0
        %v3789 = vmax.f32 %v3773, 0.0
        %v3790 = vmax.f32 %v3774, 0.0
        %3791 = vrot.lane.b32.xlu0 %v3775, 127
        %v3792 = vpop.permute.xlu0 %3791
        %3793 = vrot.lane.b32.xlu0 %v3783, 127
        %v3794 = vpop.permute.xlu0 %3793
        %3795 = vrot.lane.b32.xlu0 %v3776, 127
        %v3796 = vpop.permute.xlu0 %3795
        %3797 = vrot.lane.b32.xlu0 %v3784, 127
        %v3798 = vpop.permute.xlu0 %3797
        %3799 = vrot.lane.b32.xlu0 %v3777, 127
        %v3800 = vpop.permute.xlu0 %3799
        %3801 = vrot.lane.b32.xlu0 %v3785, 127
        %v3802 = vpop.permute.xlu0 %3801
        %3803 = vrot.lane.b32.xlu0 %v3778, 127
        %v3804 = vpop.permute.xlu0 %3803
        %3805 = vrot.lane.b32.xlu0 %v3786, 127
        %v3806 = vpop.permute.xlu0 %3805
        %3807 = vrot.lane.b32.xlu0 %v3779, 127
        %v3808 = vpop.permute.xlu0 %3807
        %3809 = vrot.lane.b32.xlu0 %v3787, 127
        %v3810 = vpop.permute.xlu0 %3809
        %3811 = vrot.lane.b32.xlu0 %v3780, 127
        %v3812 = vpop.permute.xlu0 %3811
        %3813 = vrot.lane.b32.xlu0 %v3788, 127
        %v3814 = vpop.permute.xlu0 %3813
        %3815 = vrot.lane.b32.xlu0 %v3781, 127
        %v3816 = vpop.permute.xlu0 %3815
        %3817 = vrot.lane.b32.xlu0 %v3789, 127
        %v3818 = vpop.permute.xlu0 %3817
        %3819 = vrot.lane.b32.xlu0 %v3782, 127
        %v3820 = vpop.permute.xlu0 %3819
        %3821 = vrot.lane.b32.xlu0 %v3790, 127
        %v3822 = vpop.permute.xlu0 %3821
        %v3823 = vsel %vm925, %v3816, %v3820
        %v3824 = vsel %vm925, %v3818, %v3822
        %v3825 = vsel %vm925, %v3812, %v3816
        %v3826 = vsel %vm925, %v3814, %v3818
        %v3827 = vsel %vm925, %v3808, %v3812
        %v3828 = vsel %vm925, %v3810, %v3814
        %v3829 = vsel %vm925, %v3804, %v3808
        %v3830 = vsel %vm925, %v3806, %v3810
        %v3831 = vsel %vm925, %v3800, %v3804
        %v3832 = vsel %vm925, %v3802, %v3806
        %v3833 = vsel %vm925, %v3796, %v3800
        %v3834 = vsel %vm925, %v3798, %v3802
        %v3835 = vsel %vm925, %v3792, %v3796
        %v3836 = vsel %vm925, %v3794, %v3798
        %v3837 = vsel %vm925, %v3820, %v3792
        %v3838 = vsel %vm925, %v3822, %v3794
        %v3839 = vmax.f32 %v3775, %v3835
        %v3840 = vmax.f32 %v3776, %v3833
        %v3841 = vmax.f32 %v3777, %v3831
        %v3842 = vmax.f32 %v3778, %v3829
        %v3843 = vmax.f32 %v3779, %v3827
        %v3844 = vmax.f32 %v3780, %v3825
        %v3845 = vmax.f32 %v3781, %v3823
        %v3846 = vmax.f32 %v3782, %v3837
        %v3847 = vmax.f32 %v3783, %v3836
        %v3848 = vmax.f32 %v3784, %v3834
        %v3849 = vmax.f32 %v3785, %v3832
        %v3850 = vmax.f32 %v3786, %v3830
        %v3851 = vmax.f32 %v3787, %v3828
        %v3852 = vmax.f32 %v3788, %v3826
        %v3853 = vmax.f32 %v3789, %v3824
        %v3854 = vmax.f32 %v3790, %v3838
        %3855 = vrot.lane.b32.xlu0 %v3839, 96
        %v3856 = vpop.permute.xlu0 %3855
        %3857 = vrot.lane.b32.xlu0 %v3847, 96
        %v3858 = vpop.permute.xlu0 %3857
        %3859 = vrot.lane.b32.xlu0 %v3840, 96
        %v3860 = vpop.permute.xlu0 %3859
        %3861 = vrot.lane.b32.xlu0 %v3848, 96
        %v3862 = vpop.permute.xlu0 %3861
        %3863 = vrot.lane.b32.xlu0 %v3841, 96
        %v3864 = vpop.permute.xlu0 %3863
        %3865 = vrot.lane.b32.xlu0 %v3849, 96
        %v3866 = vpop.permute.xlu0 %3865
        %3867 = vrot.lane.b32.xlu0 %v3842, 96
        %v3868 = vpop.permute.xlu0 %3867
        %3869 = vrot.lane.b32.xlu0 %v3850, 96
        %v3870 = vpop.permute.xlu0 %3869
        %3871 = vrot.lane.b32.xlu0 %v3843, 96
        %v3872 = vpop.permute.xlu0 %3871
        %3873 = vrot.lane.b32.xlu0 %v3851, 96
        %v3874 = vpop.permute.xlu0 %3873
        %3875 = vrot.lane.b32.xlu0 %v3844, 96
        %v3876 = vpop.permute.xlu0 %3875
        %3877 = vrot.lane.b32.xlu0 %v3852, 96
        %v3878 = vpop.permute.xlu0 %3877
        %3879 = vrot.lane.b32.xlu0 %v3845, 96
        %v3880 = vpop.permute.xlu0 %3879
        %3881 = vrot.lane.b32.xlu0 %v3853, 96
        %v3882 = vpop.permute.xlu0 %3881
        %3883 = vrot.lane.b32.xlu0 %v3846, 96
        %v3884 = vpop.permute.xlu0 %3883
        %3885 = vrot.lane.b32.xlu0 %v3854, 96
        %v3886 = vpop.permute.xlu0 %3885
        %v3887 = vsel %vm1081, %v3880, %v3884
        %v3888 = vsel %vm1081, %v3882, %v3886
        %v3889 = vsel %vm1081, %v3876, %v3880
        %v3890 = vsel %vm1081, %v3878, %v3882
        %v3891 = vsel %vm1081, %v3872, %v3876
        %v3892 = vsel %vm1081, %v3874, %v3878
        %v3893 = vsel %vm1081, %v3868, %v3872
        %v3894 = vsel %vm1081, %v3870, %v3874
        %v3895 = vsel %vm1081, %v3864, %v3868
        %v3896 = vsel %vm1081, %v3866, %v3870
        %v3897 = vsel %vm1081, %v3860, %v3864
        %v3898 = vsel %vm1081, %v3862, %v3866
        %v3899 = vsel %vm1081, %v3856, %v3860
        %v3900 = vsel %vm1081, %v3858, %v3862
        %v3901 = vsel %vm1081, %v3884, %v3856
        %v3902 = vsel %vm1081, %v3886, %v3858
        %v3903 = vmax.f32 %v3839, %v3899
        %v3904 = vmax.f32 %v3840, %v3897
        %v3905 = vmax.f32 %v3841, %v3895
        %v3906 = vmax.f32 %v3842, %v3893
        %v3907 = vmax.f32 %v3843, %v3891
        %v3908 = vmax.f32 %v3844, %v3889
        %v3909 = vmax.f32 %v3845, %v3887
        %v3910 = vmax.f32 %v3846, %v3901
        %v3911 = vmax.f32 %v3847, %v3900
        %v3912 = vmax.f32 %v3848, %v3898
        %v3913 = vmax.f32 %v3849, %v3896
        %v3914 = vmax.f32 %v3850, %v3894
        %v3915 = vmax.f32 %v3851, %v3892
        %v3916 = vmax.f32 %v3852, %v3890
        %v3917 = vmax.f32 %v3853, %v3888
        %v3918 = vmax.f32 %v3854, %v3902
        %v3919 = vsel %vm543, 1, 0
        %v3920 = vsel %vm544, 1, 0
        %v3921 = vsel %vm545, 1, 0
        %v3922 = vsel %vm546, 1, 0
        %v3923 = vsel %vm547, 1, 0
        %v3924 = vsel %vm548, 1, 0
        %v3925 = vsel %vm549, 1, 0
        %v3926 = vsel %vm550, 1, 0
        %vm3927 = vcmp.eq.s32.totalorder %v3919, 1
        %vm3928 = vcmp.eq.s32.totalorder %v3920, 1
        %vm3929 = vcmp.eq.s32.totalorder %v3921, 1
        %vm3930 = vcmp.eq.s32.totalorder %v3922, 1
        %vm3931 = vcmp.eq.s32.totalorder %v3923, 1
        %vm3932 = vcmp.eq.s32.totalorder %v3924, 1
        %vm3933 = vcmp.eq.s32.totalorder %v3925, 1
        %vm3934 = vcmp.eq.s32.totalorder %v3926, 1
        %v3935 = vsel %vm3927, %v3903, 0.0
        %v3936 = vsel %vm3928, %v3904, 0.0
        %v3937 = vsel %vm3929, %v3905, 0.0
        %v3938 = vsel %vm3930, %v3906, 0.0
        %v3939 = vsel %vm3931, %v3907, 0.0
        %v3940 = vsel %vm3932, %v3908, 0.0
        %v3941 = vsel %vm3933, %v3909, 0.0
        %v3942 = vsel %vm3934, %v3910, 0.0
        %v3943 = vsel %vm3927, %v3911, 0.0
        %v3944 = vsel %vm3928, %v3912, 0.0
        %v3945 = vsel %vm3929, %v3913, 0.0
        %v3946 = vsel %vm3930, %v3914, 0.0
        %v3947 = vsel %vm3931, %v3915, 0.0
        %v3948 = vsel %vm3932, %v3916, 0.0
        %v3949 = vsel %vm3933, %v3917, 0.0
        %v3950 = vsel %vm3934, %v3918, 0.0
        %3951 = vrot.lane.b32.xlu0 %v3935, 66
        %v3952 = vpop.permute.xlu0 %3951
        %3953 = vrot.lane.b32.xlu0 %v3943, 66
        %v3954 = vpop.permute.xlu0 %3953
        %3955 = vrot.lane.b32.xlu0 %v3936, 66
        %v3956 = vpop.permute.xlu0 %3955
        %3957 = vrot.lane.b32.xlu0 %v3944, 66
        %v3958 = vpop.permute.xlu0 %3957
        %3959 = vrot.lane.b32.xlu0 %v3937, 66
        %v3960 = vpop.permute.xlu0 %3959
        %3961 = vrot.lane.b32.xlu0 %v3945, 66
        %v3962 = vpop.permute.xlu0 %3961
        %3963 = vrot.lane.b32.xlu0 %v3938, 66
        %v3964 = vpop.permute.xlu0 %3963
        %3965 = vrot.lane.b32.xlu0 %v3946, 66
        %v3966 = vpop.permute.xlu0 %3965
        %3967 = vrot.lane.b32.xlu0 %v3939, 66
        %v3968 = vpop.permute.xlu0 %3967
        %3969 = vrot.lane.b32.xlu0 %v3947, 66
        %v3970 = vpop.permute.xlu0 %3969
        %3971 = vrot.lane.b32.xlu0 %v3940, 66
        %v3972 = vpop.permute.xlu0 %3971
        %3973 = vrot.lane.b32.xlu0 %v3948, 66
        %v3974 = vpop.permute.xlu0 %3973
        %3975 = vrot.lane.b32.xlu0 %v3941, 66
        %v3976 = vpop.permute.xlu0 %3975
        %3977 = vrot.lane.b32.xlu0 %v3949, 66
        %v3978 = vpop.permute.xlu0 %3977
        %3979 = vrot.lane.b32.xlu0 %v3942, 66
        %v3980 = vpop.permute.xlu0 %3979
        %3981 = vrot.lane.b32.xlu0 %v3950, 66
        %v3982 = vpop.permute.xlu0 %3981
        %vm3983 = vcmp.lt.s32.totalorder %v399, 66
        %v3984 = vsel %vm3983, %v3976, %v3980
        %v3985 = vsel %vm3983, %v3978, %v3982
        %v3986 = vsel %vm3983, %v3972, %v3976
        %v3987 = vsel %vm3983, %v3974, %v3978
        %v3988 = vsel %vm3983, %v3968, %v3972
        %v3989 = vsel %vm3983, %v3970, %v3974
        %v3990 = vsel %vm3983, %v3964, %v3968
        %v3991 = vsel %vm3983, %v3966, %v3970
        %v3992 = vsel %vm3983, %v3960, %v3964
        %v3993 = vsel %vm3983, %v3962, %v3966
        %v3994 = vsel %vm3983, %v3956, %v3960
        %v3995 = vsel %vm3983, %v3958, %v3962
        %v3996 = vsel %vm3983, %v3952, %v3956
        %v3997 = vsel %vm3983, %v3954, %v3958
        %v3998 = vsel %vm3983, %v3980, %v3952
        %v3999 = vsel %vm3983, %v3982, %v3954
        %v4000 = vld [vmem:[%s5] sm:$0xff]
        %v4001 = vld [vmem:[%s5 + $0x8] sm:$0xff]
        %v4002 = vld [vmem:[%s5 + $0x10] sm:$0xf]
        %4003 = vrot.lane.b32.xlu0 %v3935, 64
        %v4004 = vpop.permute.xlu0 %4003
        %4005 = vrot.lane.b32.xlu0 %v3943, 64
        %v4006 = vpop.permute.xlu0 %4005
        %4007 = vrot.lane.b32.xlu0 %v3936, 64
        %v4008 = vpop.permute.xlu0 %4007
        %4009 = vrot.lane.b32.xlu0 %v3944, 64
        %v4010 = vpop.permute.xlu0 %4009
        %4011 = vrot.lane.b32.xlu0 %v3937, 64
        %v4012 = vpop.permute.xlu0 %4011
        %4013 = vrot.lane.b32.xlu0 %v3945, 64
        %v4014 = vpop.permute.xlu0 %4013
        %4015 = vrot.lane.b32.xlu0 %v3938, 64
        %v4016 = vpop.permute.xlu0 %4015
        %4017 = vrot.lane.b32.xlu0 %v3946, 64
        %v4018 = vpop.permute.xlu0 %4017
        %4019 = vrot.lane.b32.xlu0 %v3939, 64
        %v4020 = vpop.permute.xlu0 %4019
        %4021 = vrot.lane.b32.xlu0 %v3947, 64
        %v4022 = vpop.permute.xlu0 %4021
        %4023 = vrot.lane.b32.xlu0 %v3940, 64
        %v4024 = vpop.permute.xlu0 %4023
        %4025 = vrot.lane.b32.xlu0 %v3948, 64
        %v4026 = vpop.permute.xlu0 %4025
        %4027 = vrot.lane.b32.xlu0 %v3941, 64
        %v4028 = vpop.permute.xlu0 %4027
        %4029 = vrot.lane.b32.xlu0 %v3949, 64
        %v4030 = vpop.permute.xlu0 %4029
        %4031 = vrot.lane.b32.xlu0 %v3942, 64
        %v4032 = vpop.permute.xlu0 %4031
        %4033 = vrot.lane.b32.xlu0 %v3950, 64
        %v4034 = vpop.permute.xlu0 %4033
        %vm4035 = vcmp.lt.s32.totalorder %v399, 64
        %v4036 = vsel %vm4035, %v4028, %v4032
        %v4037 = vsel %vm4035, %v4030, %v4034
        %v4038 = vsel %vm4035, %v4024, %v4028
        %v4039 = vsel %vm4035, %v4026, %v4030
        %v4040 = vsel %vm4035, %v4020, %v4024
        %v4041 = vsel %vm4035, %v4022, %v4026
        %v4042 = vsel %vm4035, %v4016, %v4020
        %v4043 = vsel %vm4035, %v4018, %v4022
        %v4044 = vsel %vm4035, %v4012, %v4016
        %v4045 = vsel %vm4035, %v4014, %v4018
        %v4046 = vsel %vm4035, %v4008, %v4012
        %v4047 = vsel %vm4035, %v4010, %v4014
        %v4048 = vsel %vm4035, %v4004, %v4008
        %v4049 = vsel %vm4035, %v4006, %v4010
        %v4050 = vsel %vm4035, %v4032, %v4004
        %v4051 = vsel %vm4035, %v4034, %v4006
        %s4052 = scalar_lea.vmem %s5, 24
        %v4053 = vld [vmem:[%s4052] sm:$0xff]
        %v4054 = vld [vmem:[%s4052 + $0x8] sm:$0xff]
        %v4055 = vld [vmem:[%s4052 + $0x10] sm:$0xf]
        %vm4056 = vcmask 130048
        %v4058 = vsel %vm4056, %v4053, 0
        %v4061 = vsel %vm4056, %v4054, 0
        %v4064 = vsel %vm4056, %v4055, 0
        %4066 = vmatpush.msra.mxu0 0.0
        %4067 = vmatpush.msra.mxu0 0.0
        %4068 = vmatpush.msra.mxu0 0.0
        %4069 = vmatpush.msra.mxu0 0.0
        %4070 = vmatpush.msra.mxu0 0.0
        %4071 = vmatpush.msra.mxu0 0.0
        %4072 = vmatpush.msra.mxu0 0.0
        %4073 = vmatpush.msra.mxu0 0.0
        %4074 = vmatpush.msra.mxu0 0.0
        %4075 = vmatpush.msra.mxu0 0.0
        %4076 = vmatpush.msra.mxu0 0.0
        %4077 = vmatpush.msra.mxu0 0.0
        %4078 = vmatpush.msra.mxu0 0.0
        %4079 = vmatpush.msra.mxu0 0.0
        %4080 = vmatpush.msra.mxu0 %v4051
        %4081 = vmatpush.msra.mxu0 %v4050
        %4082 = vmatmul.f32.gmra.mxu0 %v4058
        %v4083 = vpop.f32.mrf.mxu0
        %v4084 = vadd.f32 0.0, %v4083
        %4085 = vmatmul.f32.gmra.mxu0 %v4061
        %v4086 = vpop.f32.mrf.mxu0
        %v4087 = vadd.f32 0.0, %v4086
        %4088 = vmatmul.f32.gmra.mxu0 %v4064
        %v4089 = vpop.f32.mrf.mxu0
        %v4090 = vadd.f32 0.0, %v4089
        %4091 = vdwg.mxu0
        %4092 = vmatpush.msra.mxu0 0.0
        %4093 = vmatpush.msra.mxu0 0.0
        %4094 = vmatpush.msra.mxu0 0.0
        %4095 = vmatpush.msra.mxu0 0.0
        %4096 = vmatpush.msra.mxu0 0.0
        %4097 = vmatpush.msra.mxu0 0.0
        %4098 = vmatpush.msra.mxu0 0.0
        %4099 = vmatpush.msra.mxu0 0.0
        %4100 = vmatpush.msra.mxu0 0.0
        %4101 = vmatpush.msra.mxu0 0.0
        %4102 = vmatpush.msra.mxu0 0.0
        %4103 = vmatpush.msra.mxu0 0.0
        %4104 = vmatpush.msra.mxu0 0.0
        %4105 = vmatpush.msra.mxu0 0.0
        %4106 = vmatpush.msra.mxu0 %v4049
        %4107 = vmatpush.msra.mxu0 %v4048
        %4108 = vmatmul.f32.gmra.mxu0 %v4058
        %v4109 = vpop.f32.mrf.mxu0
        %v4110 = vadd.f32 0.0, %v4109
        %4111 = vmatmul.f32.gmra.mxu0 %v4061
        %v4112 = vpop.f32.mrf.mxu0
        %v4113 = vadd.f32 0.0, %v4112
        %4114 = vmatmul.f32.gmra.mxu0 %v4064
        %v4115 = vpop.f32.mrf.mxu0
        %v4116 = vadd.f32 0.0, %v4115
        %4117 = vdwg.mxu0
        %4118 = vmatpush.msra.mxu0 0.0
        %4119 = vmatpush.msra.mxu0 0.0
        %4120 = vmatpush.msra.mxu0 0.0
        %4121 = vmatpush.msra.mxu0 0.0
        %4122 = vmatpush.msra.mxu0 0.0
        %4123 = vmatpush.msra.mxu0 0.0
        %4124 = vmatpush.msra.mxu0 0.0
        %4125 = vmatpush.msra.mxu0 0.0
        %4126 = vmatpush.msra.mxu0 0.0
        %4127 = vmatpush.msra.mxu0 0.0
        %4128 = vmatpush.msra.mxu0 0.0
        %4129 = vmatpush.msra.mxu0 0.0
        %4130 = vmatpush.msra.mxu0 0.0
        %4131 = vmatpush.msra.mxu0 0.0
        %4132 = vmatpush.msra.mxu0 %v4047
        %4133 = vmatpush.msra.mxu0 %v4046
        %4134 = vmatmul.f32.gmra.mxu0 %v4058
        %v4135 = vpop.f32.mrf.mxu0
        %v4136 = vadd.f32 0.0, %v4135
        %4137 = vmatmul.f32.gmra.mxu0 %v4061
        %v4138 = vpop.f32.mrf.mxu0
        %v4139 = vadd.f32 0.0, %v4138
        %4140 = vmatmul.f32.gmra.mxu0 %v4064
        %v4141 = vpop.f32.mrf.mxu0
        %v4142 = vadd.f32 0.0, %v4141
        %4143 = vdwg.mxu0
        %4144 = vmatpush.msra.mxu0 0.0
        %4145 = vmatpush.msra.mxu0 0.0
        %4146 = vmatpush.msra.mxu0 0.0
        %4147 = vmatpush.msra.mxu0 0.0
        %4148 = vmatpush.msra.mxu0 0.0
        %4149 = vmatpush.msra.mxu0 0.0
        %4150 = vmatpush.msra.mxu0 0.0
        %4151 = vmatpush.msra.mxu0 0.0
        %4152 = vmatpush.msra.mxu0 0.0
        %4153 = vmatpush.msra.mxu0 0.0
        %4154 = vmatpush.msra.mxu0 0.0
        %4155 = vmatpush.msra.mxu0 0.0
        %4156 = vmatpush.msra.mxu0 0.0
        %4157 = vmatpush.msra.mxu0 0.0
        %4158 = vmatpush.msra.mxu0 %v4045
        %4159 = vmatpush.msra.mxu0 %v4044
        %4160 = vmatmul.f32.gmra.mxu0 %v4058
        %v4161 = vpop.f32.mrf.mxu0
        %v4162 = vadd.f32 0.0, %v4161
        %4163 = vmatmul.f32.gmra.mxu0 %v4061
        %v4164 = vpop.f32.mrf.mxu0
        %v4165 = vadd.f32 0.0, %v4164
        %4166 = vmatmul.f32.gmra.mxu0 %v4064
        %v4167 = vpop.f32.mrf.mxu0
        %v4168 = vadd.f32 0.0, %v4167
        %4169 = vdwg.mxu0
        %4170 = vmatpush.msra.mxu0 0.0
        %4171 = vmatpush.msra.mxu0 0.0
        %4172 = vmatpush.msra.mxu0 0.0
        %4173 = vmatpush.msra.mxu0 0.0
        %4174 = vmatpush.msra.mxu0 0.0
        %4175 = vmatpush.msra.mxu0 0.0
        %4176 = vmatpush.msra.mxu0 0.0
        %4177 = vmatpush.msra.mxu0 0.0
        %4178 = vmatpush.msra.mxu0 0.0
        %4179 = vmatpush.msra.mxu0 0.0
        %4180 = vmatpush.msra.mxu0 0.0
        %4181 = vmatpush.msra.mxu0 0.0
        %4182 = vmatpush.msra.mxu0 0.0
        %4183 = vmatpush.msra.mxu0 0.0
        %4184 = vmatpush.msra.mxu0 %v4043
        %4185 = vmatpush.msra.mxu0 %v4042
        %4186 = vmatmul.f32.gmra.mxu0 %v4058
        %v4187 = vpop.f32.mrf.mxu0
        %v4188 = vadd.f32 0.0, %v4187
        %4189 = vmatmul.f32.gmra.mxu0 %v4061
        %v4190 = vpop.f32.mrf.mxu0
        %v4191 = vadd.f32 0.0, %v4190
        %4192 = vmatmul.f32.gmra.mxu0 %v4064
        %v4193 = vpop.f32.mrf.mxu0
        %v4194 = vadd.f32 0.0, %v4193
        %4195 = vdwg.mxu0
        %4196 = vmatpush.msra.mxu0 0.0
        %4197 = vmatpush.msra.mxu0 0.0
        %4198 = vmatpush.msra.mxu0 0.0
        %4199 = vmatpush.msra.mxu0 0.0
        %4200 = vmatpush.msra.mxu0 0.0
        %4201 = vmatpush.msra.mxu0 0.0
        %4202 = vmatpush.msra.mxu0 0.0
        %4203 = vmatpush.msra.mxu0 0.0
        %4204 = vmatpush.msra.mxu0 0.0
        %4205 = vmatpush.msra.mxu0 0.0
        %4206 = vmatpush.msra.mxu0 0.0
        %4207 = vmatpush.msra.mxu0 0.0
        %4208 = vmatpush.msra.mxu0 0.0
        %4209 = vmatpush.msra.mxu0 0.0
        %4210 = vmatpush.msra.mxu0 %v4041
        %4211 = vmatpush.msra.mxu0 %v4040
        %4212 = vmatmul.f32.gmra.mxu0 %v4058
        %v4213 = vpop.f32.mrf.mxu0
        %v4214 = vadd.f32 0.0, %v4213
        %4215 = vmatmul.f32.gmra.mxu0 %v4061
        %v4216 = vpop.f32.mrf.mxu0
        %v4217 = vadd.f32 0.0, %v4216
        %4218 = vmatmul.f32.gmra.mxu0 %v4064
        %v4219 = vpop.f32.mrf.mxu0
        %v4220 = vadd.f32 0.0, %v4219
        %4221 = vdwg.mxu0
        %4222 = vmatpush.msra.mxu0 0.0
        %4223 = vmatpush.msra.mxu0 0.0
        %4224 = vmatpush.msra.mxu0 0.0
        %4225 = vmatpush.msra.mxu0 0.0
        %4226 = vmatpush.msra.mxu0 0.0
        %4227 = vmatpush.msra.mxu0 0.0
        %4228 = vmatpush.msra.mxu0 0.0
        %4229 = vmatpush.msra.mxu0 0.0
        %4230 = vmatpush.msra.mxu0 0.0
        %4231 = vmatpush.msra.mxu0 0.0
        %4232 = vmatpush.msra.mxu0 0.0
        %4233 = vmatpush.msra.mxu0 0.0
        %4234 = vmatpush.msra.mxu0 0.0
        %4235 = vmatpush.msra.mxu0 0.0
        %4236 = vmatpush.msra.mxu0 %v4039
        %4237 = vmatpush.msra.mxu0 %v4038
        %4238 = vmatmul.f32.gmra.mxu0 %v4058
        %v4239 = vpop.f32.mrf.mxu0
        %v4240 = vadd.f32 0.0, %v4239
        %4241 = vmatmul.f32.gmra.mxu0 %v4061
        %v4242 = vpop.f32.mrf.mxu0
        %v4243 = vadd.f32 0.0, %v4242
        %4244 = vmatmul.f32.gmra.mxu0 %v4064
        %v4245 = vpop.f32.mrf.mxu0
        %v4246 = vadd.f32 0.0, %v4245
        %4247 = vdwg.mxu0
        %4248 = vmatpush.msra.mxu0 0.0
        %4249 = vmatpush.msra.mxu0 0.0
        %4250 = vmatpush.msra.mxu0 0.0
        %4251 = vmatpush.msra.mxu0 0.0
        %4252 = vmatpush.msra.mxu0 0.0
        %4253 = vmatpush.msra.mxu0 0.0
        %4254 = vmatpush.msra.mxu0 0.0
        %4255 = vmatpush.msra.mxu0 0.0
        %4256 = vmatpush.msra.mxu0 0.0
        %4257 = vmatpush.msra.mxu0 0.0
        %4258 = vmatpush.msra.mxu0 0.0
        %4259 = vmatpush.msra.mxu0 0.0
        %4260 = vmatpush.msra.mxu0 0.0
        %4261 = vmatpush.msra.mxu0 0.0
        %4262 = vmatpush.msra.mxu0 %v4037
        %4263 = vmatpush.msra.mxu0 %v4036
        %4264 = vmatmul.f32.gmra.mxu0 %v4058
        %v4265 = vpop.f32.mrf.mxu0
        %v4266 = vadd.f32 0.0, %v4265
        %4267 = vmatmul.f32.gmra.mxu0 %v4061
        %v4268 = vpop.f32.mrf.mxu0
        %v4269 = vadd.f32 0.0, %v4268
        %4270 = vmatmul.f32.gmra.mxu0 %v4064
        %v4271 = vpop.f32.mrf.mxu0
        %v4272 = vadd.f32 0.0, %v4271
        %4273 = vdwg.mxu0
        %v4275 = vsel %vm4056, %v4000, 0
        %v4278 = vsel %vm4056, %v4001, 0
        %v4281 = vsel %vm4056, %v4002, 0
        %4283 = vmatpush.msra.mxu0 0.0
        %4284 = vmatpush.msra.mxu0 0.0
        %4285 = vmatpush.msra.mxu0 0.0
        %4286 = vmatpush.msra.mxu0 0.0
        %4287 = vmatpush.msra.mxu0 0.0
        %4288 = vmatpush.msra.mxu0 0.0
        %4289 = vmatpush.msra.mxu0 0.0
        %4290 = vmatpush.msra.mxu0 0.0
        %4291 = vmatpush.msra.mxu0 0.0
        %4292 = vmatpush.msra.mxu0 0.0
        %4293 = vmatpush.msra.mxu0 0.0
        %4294 = vmatpush.msra.mxu0 0.0
        %4295 = vmatpush.msra.mxu0 0.0
        %4296 = vmatpush.msra.mxu0 0.0
        %4297 = vmatpush.msra.mxu0 %v3999
        %4298 = vmatpush.msra.mxu0 %v3998
        %4299 = vmatmul.f32.gmra.mxu0 %v4275
        %v4300 = vpop.f32.mrf.mxu0
        %v4301 = vadd.f32 %v4084, %v4300
        %4302 = vmatmul.f32.gmra.mxu0 %v4278
        %v4303 = vpop.f32.mrf.mxu0
        %v4304 = vadd.f32 %v4087, %v4303
        %4305 = vmatmul.f32.gmra.mxu0 %v4281
        %v4306 = vpop.f32.mrf.mxu0
        %v4307 = vadd.f32 %v4090, %v4306
        %4308 = vdwg.mxu0
        %4309 = vmatpush.msra.mxu0 0.0
        %4310 = vmatpush.msra.mxu0 0.0
        %4311 = vmatpush.msra.mxu0 0.0
        %4312 = vmatpush.msra.mxu0 0.0
        %4313 = vmatpush.msra.mxu0 0.0
        %4314 = vmatpush.msra.mxu0 0.0
        %4315 = vmatpush.msra.mxu0 0.0
        %4316 = vmatpush.msra.mxu0 0.0
        %4317 = vmatpush.msra.mxu0 0.0
        %4318 = vmatpush.msra.mxu0 0.0
        %4319 = vmatpush.msra.mxu0 0.0
        %4320 = vmatpush.msra.mxu0 0.0
        %4321 = vmatpush.msra.mxu0 0.0
        %4322 = vmatpush.msra.mxu0 0.0
        %4323 = vmatpush.msra.mxu0 %v3997
        %4324 = vmatpush.msra.mxu0 %v3996
        %4325 = vmatmul.f32.gmra.mxu0 %v4275
        %v4326 = vpop.f32.mrf.mxu0
        %v4327 = vadd.f32 %v4110, %v4326
        %4328 = vmatmul.f32.gmra.mxu0 %v4278
        %v4329 = vpop.f32.mrf.mxu0
        %v4330 = vadd.f32 %v4113, %v4329
        %4331 = vmatmul.f32.gmra.mxu0 %v4281
        %v4332 = vpop.f32.mrf.mxu0
        %v4333 = vadd.f32 %v4116, %v4332
        %4334 = vdwg.mxu0
        %4335 = vmatpush.msra.mxu0 0.0
        %4336 = vmatpush.msra.mxu0 0.0
        %4337 = vmatpush.msra.mxu0 0.0
        %4338 = vmatpush.msra.mxu0 0.0
        %4339 = vmatpush.msra.mxu0 0.0
        %4340 = vmatpush.msra.mxu0 0.0
        %4341 = vmatpush.msra.mxu0 0.0
        %4342 = vmatpush.msra.mxu0 0.0
        %4343 = vmatpush.msra.mxu0 0.0
        %4344 = vmatpush.msra.mxu0 0.0
        %4345 = vmatpush.msra.mxu0 0.0
        %4346 = vmatpush.msra.mxu0 0.0
        %4347 = vmatpush.msra.mxu0 0.0
        %4348 = vmatpush.msra.mxu0 0.0
        %4349 = vmatpush.msra.mxu0 %v3995
        %4350 = vmatpush.msra.mxu0 %v3994
        %4351 = vmatmul.f32.gmra.mxu0 %v4275
        %v4352 = vpop.f32.mrf.mxu0
        %v4353 = vadd.f32 %v4136, %v4352
        %4354 = vmatmul.f32.gmra.mxu0 %v4278
        %v4355 = vpop.f32.mrf.mxu0
        %v4356 = vadd.f32 %v4139, %v4355
        %4357 = vmatmul.f32.gmra.mxu0 %v4281
        %v4358 = vpop.f32.mrf.mxu0
        %v4359 = vadd.f32 %v4142, %v4358
        %4360 = vdwg.mxu0
        %4361 = vmatpush.msra.mxu0 0.0
        %4362 = vmatpush.msra.mxu0 0.0
        %4363 = vmatpush.msra.mxu0 0.0
        %4364 = vmatpush.msra.mxu0 0.0
        %4365 = vmatpush.msra.mxu0 0.0
        %4366 = vmatpush.msra.mxu0 0.0
        %4367 = vmatpush.msra.mxu0 0.0
        %4368 = vmatpush.msra.mxu0 0.0
        %4369 = vmatpush.msra.mxu0 0.0
        %4370 = vmatpush.msra.mxu0 0.0
        %4371 = vmatpush.msra.mxu0 0.0
        %4372 = vmatpush.msra.mxu0 0.0
        %4373 = vmatpush.msra.mxu0 0.0
        %4374 = vmatpush.msra.mxu0 0.0
        %4375 = vmatpush.msra.mxu0 %v3993
        %4376 = vmatpush.msra.mxu0 %v3992
        %4377 = vmatmul.f32.gmra.mxu0 %v4275
        %v4378 = vpop.f32.mrf.mxu0
        %v4379 = vadd.f32 %v4162, %v4378
        %4380 = vmatmul.f32.gmra.mxu0 %v4278
        %v4381 = vpop.f32.mrf.mxu0
        %v4382 = vadd.f32 %v4165, %v4381
        %4383 = vmatmul.f32.gmra.mxu0 %v4281
        %v4384 = vpop.f32.mrf.mxu0
        %v4385 = vadd.f32 %v4168, %v4384
        %4386 = vdwg.mxu0
        %4387 = vmatpush.msra.mxu0 0.0
        %4388 = vmatpush.msra.mxu0 0.0
        %4389 = vmatpush.msra.mxu0 0.0
        %4390 = vmatpush.msra.mxu0 0.0
        %4391 = vmatpush.msra.mxu0 0.0
        %4392 = vmatpush.msra.mxu0 0.0
        %4393 = vmatpush.msra.mxu0 0.0
        %4394 = vmatpush.msra.mxu0 0.0
        %4395 = vmatpush.msra.mxu0 0.0
        %4396 = vmatpush.msra.mxu0 0.0
        %4397 = vmatpush.msra.mxu0 0.0
        %4398 = vmatpush.msra.mxu0 0.0
        %4399 = vmatpush.msra.mxu0 0.0
        %4400 = vmatpush.msra.mxu0 0.0
        %4401 = vmatpush.msra.mxu0 %v3991
        %4402 = vmatpush.msra.mxu0 %v3990
        %4403 = vmatmul.f32.gmra.mxu0 %v4275
        %v4404 = vpop.f32.mrf.mxu0
        %v4405 = vadd.f32 %v4188, %v4404
        %4406 = vmatmul.f32.gmra.mxu0 %v4278
        %v4407 = vpop.f32.mrf.mxu0
        %v4408 = vadd.f32 %v4191, %v4407
        %4409 = vmatmul.f32.gmra.mxu0 %v4281
        %v4410 = vpop.f32.mrf.mxu0
        %v4411 = vadd.f32 %v4194, %v4410
        %4412 = vdwg.mxu0
        %4413 = vmatpush.msra.mxu0 0.0
        %4414 = vmatpush.msra.mxu0 0.0
        %4415 = vmatpush.msra.mxu0 0.0
        %4416 = vmatpush.msra.mxu0 0.0
        %4417 = vmatpush.msra.mxu0 0.0
        %4418 = vmatpush.msra.mxu0 0.0
        %4419 = vmatpush.msra.mxu0 0.0
        %4420 = vmatpush.msra.mxu0 0.0
        %4421 = vmatpush.msra.mxu0 0.0
        %4422 = vmatpush.msra.mxu0 0.0
        %4423 = vmatpush.msra.mxu0 0.0
        %4424 = vmatpush.msra.mxu0 0.0
        %4425 = vmatpush.msra.mxu0 0.0
        %4426 = vmatpush.msra.mxu0 0.0
        %4427 = vmatpush.msra.mxu0 %v3989
        %4428 = vmatpush.msra.mxu0 %v3988
        %4429 = vmatmul.f32.gmra.mxu0 %v4275
        %v4430 = vpop.f32.mrf.mxu0
        %v4431 = vadd.f32 %v4214, %v4430
        %4432 = vmatmul.f32.gmra.mxu0 %v4278
        %v4433 = vpop.f32.mrf.mxu0
        %v4434 = vadd.f32 %v4217, %v4433
        %4435 = vmatmul.f32.gmra.mxu0 %v4281
        %v4436 = vpop.f32.mrf.mxu0
        %v4437 = vadd.f32 %v4220, %v4436
        %4438 = vdwg.mxu0
        %4439 = vmatpush.msra.mxu0 0.0
        %4440 = vmatpush.msra.mxu0 0.0
        %4441 = vmatpush.msra.mxu0 0.0
        %4442 = vmatpush.msra.mxu0 0.0
        %4443 = vmatpush.msra.mxu0 0.0
        %4444 = vmatpush.msra.mxu0 0.0
        %4445 = vmatpush.msra.mxu0 0.0
        %4446 = vmatpush.msra.mxu0 0.0
        %4447 = vmatpush.msra.mxu0 0.0
        %4448 = vmatpush.msra.mxu0 0.0
        %4449 = vmatpush.msra.mxu0 0.0
        %4450 = vmatpush.msra.mxu0 0.0
        %4451 = vmatpush.msra.mxu0 0.0
        %4452 = vmatpush.msra.mxu0 0.0
        %4453 = vmatpush.msra.mxu0 %v3987
        %4454 = vmatpush.msra.mxu0 %v3986
        %4455 = vmatmul.f32.gmra.mxu0 %v4275
        %v4456 = vpop.f32.mrf.mxu0
        %v4457 = vadd.f32 %v4240, %v4456
        %4458 = vmatmul.f32.gmra.mxu0 %v4278
        %v4459 = vpop.f32.mrf.mxu0
        %v4460 = vadd.f32 %v4243, %v4459
        %4461 = vmatmul.f32.gmra.mxu0 %v4281
        %v4462 = vpop.f32.mrf.mxu0
        %v4463 = vadd.f32 %v4246, %v4462
        %4464 = vdwg.mxu0
        %4465 = vmatpush.msra.mxu0 0.0
        %4466 = vmatpush.msra.mxu0 0.0
        %4467 = vmatpush.msra.mxu0 0.0
        %4468 = vmatpush.msra.mxu0 0.0
        %4469 = vmatpush.msra.mxu0 0.0
        %4470 = vmatpush.msra.mxu0 0.0
        %4471 = vmatpush.msra.mxu0 0.0
        %4472 = vmatpush.msra.mxu0 0.0
        %4473 = vmatpush.msra.mxu0 0.0
        %4474 = vmatpush.msra.mxu0 0.0
        %4475 = vmatpush.msra.mxu0 0.0
        %4476 = vmatpush.msra.mxu0 0.0
        %4477 = vmatpush.msra.mxu0 0.0
        %4478 = vmatpush.msra.mxu0 0.0
        %4479 = vmatpush.msra.mxu0 %v3985
        %4480 = vmatpush.msra.mxu0 %v3984
        %4481 = vmatmul.f32.gmra.mxu0 %v4275
        %v4482 = vpop.f32.mrf.mxu0
        %v4483 = vadd.f32 %v4266, %v4482
        %4484 = vmatmul.f32.gmra.mxu0 %v4278
        %v4485 = vpop.f32.mrf.mxu0
        %v4486 = vadd.f32 %v4269, %v4485
        %4487 = vmatmul.f32.gmra.mxu0 %v4281
        %v4488 = vpop.f32.mrf.mxu0
        %v4489 = vadd.f32 %v4272, %v4488
        %4490 = vdwg.mxu0
        %4491 = vrot.lane.b32.xlu0 %v3935, 62
        %v4492 = vpop.permute.xlu0 %4491
        %4493 = vrot.lane.b32.xlu0 %v3943, 62
        %v4494 = vpop.permute.xlu0 %4493
        %4495 = vrot.lane.b32.xlu0 %v3936, 62
        %v4496 = vpop.permute.xlu0 %4495
        %4497 = vrot.lane.b32.xlu0 %v3944, 62
        %v4498 = vpop.permute.xlu0 %4497
        %4499 = vrot.lane.b32.xlu0 %v3937, 62
        %v4500 = vpop.permute.xlu0 %4499
        %4501 = vrot.lane.b32.xlu0 %v3945, 62
        %v4502 = vpop.permute.xlu0 %4501
        %4503 = vrot.lane.b32.xlu0 %v3938, 62
        %v4504 = vpop.permute.xlu0 %4503
        %4505 = vrot.lane.b32.xlu0 %v3946, 62
        %v4506 = vpop.permute.xlu0 %4505
        %4507 = vrot.lane.b32.xlu0 %v3939, 62
        %v4508 = vpop.permute.xlu0 %4507
        %4509 = vrot.lane.b32.xlu0 %v3947, 62
        %v4510 = vpop.permute.xlu0 %4509
        %4511 = vrot.lane.b32.xlu0 %v3940, 62
        %v4512 = vpop.permute.xlu0 %4511
        %4513 = vrot.lane.b32.xlu0 %v3948, 62
        %v4514 = vpop.permute.xlu0 %4513
        %4515 = vrot.lane.b32.xlu0 %v3941, 62
        %v4516 = vpop.permute.xlu0 %4515
        %4517 = vrot.lane.b32.xlu0 %v3949, 62
        %v4518 = vpop.permute.xlu0 %4517
        %4519 = vrot.lane.b32.xlu0 %v3942, 62
        %v4520 = vpop.permute.xlu0 %4519
        %4521 = vrot.lane.b32.xlu0 %v3950, 62
        %v4522 = vpop.permute.xlu0 %4521
        %vm4523 = vcmp.lt.s32.totalorder %v399, 62
        %v4524 = vsel %vm4523, %v4516, %v4520
        %v4525 = vsel %vm4523, %v4518, %v4522
        %v4526 = vsel %vm4523, %v4512, %v4516
        %v4527 = vsel %vm4523, %v4514, %v4518
        %v4528 = vsel %vm4523, %v4508, %v4512
        %v4529 = vsel %vm4523, %v4510, %v4514
        %v4530 = vsel %vm4523, %v4504, %v4508
        %v4531 = vsel %vm4523, %v4506, %v4510
        %v4532 = vsel %vm4523, %v4500, %v4504
        %v4533 = vsel %vm4523, %v4502, %v4506
        %v4534 = vsel %vm4523, %v4496, %v4500
        %v4535 = vsel %vm4523, %v4498, %v4502
        %v4536 = vsel %vm4523, %v4492, %v4496
        %v4537 = vsel %vm4523, %v4494, %v4498
        %v4538 = vsel %vm4523, %v4520, %v4492
        %v4539 = vsel %vm4523, %v4522, %v4494
        %s4540 = scalar_lea.vmem %s5, 48
        %v4541 = vld [vmem:[%s4540] sm:$0xff]
        %v4542 = vld [vmem:[%s4540 + $0x8] sm:$0xff]
        %v4543 = vld [vmem:[%s4540 + $0x10] sm:$0xf]
        %v4545 = vsel %vm4056, %v4541, 0
        %v4548 = vsel %vm4056, %v4542, 0
        %v4551 = vsel %vm4056, %v4543, 0
        %4553 = vmatpush.msra.mxu0 0.0
        %4554 = vmatpush.msra.mxu0 0.0
        %4555 = vmatpush.msra.mxu0 0.0
        %4556 = vmatpush.msra.mxu0 0.0
        %4557 = vmatpush.msra.mxu0 0.0
        %4558 = vmatpush.msra.mxu0 0.0
        %4559 = vmatpush.msra.mxu0 0.0
        %4560 = vmatpush.msra.mxu0 0.0
        %4561 = vmatpush.msra.mxu0 0.0
        %4562 = vmatpush.msra.mxu0 0.0
        %4563 = vmatpush.msra.mxu0 0.0
        %4564 = vmatpush.msra.mxu0 0.0
        %4565 = vmatpush.msra.mxu0 0.0
        %4566 = vmatpush.msra.mxu0 0.0
        %4567 = vmatpush.msra.mxu0 %v4539
        %4568 = vmatpush.msra.mxu0 %v4538
        %4569 = vmatmul.f32.gmra.mxu0 %v4545
        %v4570 = vpop.f32.mrf.mxu0
        %v4571 = vadd.f32 0.0, %v4570
        %4572 = vmatmul.f32.gmra.mxu0 %v4548
        %v4573 = vpop.f32.mrf.mxu0
        %v4574 = vadd.f32 0.0, %v4573
        %4575 = vmatmul.f32.gmra.mxu0 %v4551
        %v4576 = vpop.f32.mrf.mxu0
        %v4577 = vadd.f32 0.0, %v4576
        %4578 = vdwg.mxu0
        %4579 = vmatpush.msra.mxu0 0.0
        %4580 = vmatpush.msra.mxu0 0.0
        %4581 = vmatpush.msra.mxu0 0.0
        %4582 = vmatpush.msra.mxu0 0.0
        %4583 = vmatpush.msra.mxu0 0.0
        %4584 = vmatpush.msra.mxu0 0.0
        %4585 = vmatpush.msra.mxu0 0.0
        %4586 = vmatpush.msra.mxu0 0.0
        %4587 = vmatpush.msra.mxu0 0.0
        %4588 = vmatpush.msra.mxu0 0.0
        %4589 = vmatpush.msra.mxu0 0.0
        %4590 = vmatpush.msra.mxu0 0.0
        %4591 = vmatpush.msra.mxu0 0.0
        %4592 = vmatpush.msra.mxu0 0.0
        %4593 = vmatpush.msra.mxu0 %v4537
        %4594 = vmatpush.msra.mxu0 %v4536
        %4595 = vmatmul.f32.gmra.mxu0 %v4545
        %v4596 = vpop.f32.mrf.mxu0
        %v4597 = vadd.f32 0.0, %v4596
        %4598 = vmatmul.f32.gmra.mxu0 %v4548
        %v4599 = vpop.f32.mrf.mxu0
        %v4600 = vadd.f32 0.0, %v4599
        %4601 = vmatmul.f32.gmra.mxu0 %v4551
        %v4602 = vpop.f32.mrf.mxu0
        %v4603 = vadd.f32 0.0, %v4602
        %4604 = vdwg.mxu0
        %4605 = vmatpush.msra.mxu0 0.0
        %4606 = vmatpush.msra.mxu0 0.0
        %4607 = vmatpush.msra.mxu0 0.0
        %4608 = vmatpush.msra.mxu0 0.0
        %4609 = vmatpush.msra.mxu0 0.0
        %4610 = vmatpush.msra.mxu0 0.0
        %4611 = vmatpush.msra.mxu0 0.0
        %4612 = vmatpush.msra.mxu0 0.0
        %4613 = vmatpush.msra.mxu0 0.0
        %4614 = vmatpush.msra.mxu0 0.0
        %4615 = vmatpush.msra.mxu0 0.0
        %4616 = vmatpush.msra.mxu0 0.0
        %4617 = vmatpush.msra.mxu0 0.0
        %4618 = vmatpush.msra.mxu0 0.0
        %4619 = vmatpush.msra.mxu0 %v4535
        %4620 = vmatpush.msra.mxu0 %v4534
        %4621 = vmatmul.f32.gmra.mxu0 %v4545
        %v4622 = vpop.f32.mrf.mxu0
        %v4623 = vadd.f32 0.0, %v4622
        %4624 = vmatmul.f32.gmra.mxu0 %v4548
        %v4625 = vpop.f32.mrf.mxu0
        %v4626 = vadd.f32 0.0, %v4625
        %4627 = vmatmul.f32.gmra.mxu0 %v4551
        %v4628 = vpop.f32.mrf.mxu0
        %v4629 = vadd.f32 0.0, %v4628
        %4630 = vdwg.mxu0
        %4631 = vmatpush.msra.mxu0 0.0
        %4632 = vmatpush.msra.mxu0 0.0
        %4633 = vmatpush.msra.mxu0 0.0
        %4634 = vmatpush.msra.mxu0 0.0
        %4635 = vmatpush.msra.mxu0 0.0
        %4636 = vmatpush.msra.mxu0 0.0
        %4637 = vmatpush.msra.mxu0 0.0
        %4638 = vmatpush.msra.mxu0 0.0
        %4639 = vmatpush.msra.mxu0 0.0
        %4640 = vmatpush.msra.mxu0 0.0
        %4641 = vmatpush.msra.mxu0 0.0
        %4642 = vmatpush.msra.mxu0 0.0
        %4643 = vmatpush.msra.mxu0 0.0
        %4644 = vmatpush.msra.mxu0 0.0
        %4645 = vmatpush.msra.mxu0 %v4533
        %4646 = vmatpush.msra.mxu0 %v4532
        %4647 = vmatmul.f32.gmra.mxu0 %v4545
        %v4648 = vpop.f32.mrf.mxu0
        %v4649 = vadd.f32 0.0, %v4648
        %4650 = vmatmul.f32.gmra.mxu0 %v4548
        %v4651 = vpop.f32.mrf.mxu0
        %v4652 = vadd.f32 0.0, %v4651
        %4653 = vmatmul.f32.gmra.mxu0 %v4551
        %v4654 = vpop.f32.mrf.mxu0
        %v4655 = vadd.f32 0.0, %v4654
        %4656 = vdwg.mxu0
        %4657 = vmatpush.msra.mxu0 0.0
        %4658 = vmatpush.msra.mxu0 0.0
        %4659 = vmatpush.msra.mxu0 0.0
        %4660 = vmatpush.msra.mxu0 0.0
        %4661 = vmatpush.msra.mxu0 0.0
        %4662 = vmatpush.msra.mxu0 0.0
        %4663 = vmatpush.msra.mxu0 0.0
        %4664 = vmatpush.msra.mxu0 0.0
        %4665 = vmatpush.msra.mxu0 0.0
        %4666 = vmatpush.msra.mxu0 0.0
        %4667 = vmatpush.msra.mxu0 0.0
        %4668 = vmatpush.msra.mxu0 0.0
        %4669 = vmatpush.msra.mxu0 0.0
        %4670 = vmatpush.msra.mxu0 0.0
        %4671 = vmatpush.msra.mxu0 %v4531
        %4672 = vmatpush.msra.mxu0 %v4530
        %4673 = vmatmul.f32.gmra.mxu0 %v4545
        %v4674 = vpop.f32.mrf.mxu0
        %v4675 = vadd.f32 0.0, %v4674
        %4676 = vmatmul.f32.gmra.mxu0 %v4548
        %v4677 = vpop.f32.mrf.mxu0
        %v4678 = vadd.f32 0.0, %v4677
        %4679 = vmatmul.f32.gmra.mxu0 %v4551
        %v4680 = vpop.f32.mrf.mxu0
        %v4681 = vadd.f32 0.0, %v4680
        %4682 = vdwg.mxu0
        %4683 = vmatpush.msra.mxu0 0.0
        %4684 = vmatpush.msra.mxu0 0.0
        %4685 = vmatpush.msra.mxu0 0.0
        %4686 = vmatpush.msra.mxu0 0.0
        %4687 = vmatpush.msra.mxu0 0.0
        %4688 = vmatpush.msra.mxu0 0.0
        %4689 = vmatpush.msra.mxu0 0.0
        %4690 = vmatpush.msra.mxu0 0.0
        %4691 = vmatpush.msra.mxu0 0.0
        %4692 = vmatpush.msra.mxu0 0.0
        %4693 = vmatpush.msra.mxu0 0.0
        %4694 = vmatpush.msra.mxu0 0.0
        %4695 = vmatpush.msra.mxu0 0.0
        %4696 = vmatpush.msra.mxu0 0.0
        %4697 = vmatpush.msra.mxu0 %v4529
        %4698 = vmatpush.msra.mxu0 %v4528
        %4699 = vmatmul.f32.gmra.mxu0 %v4545
        %v4700 = vpop.f32.mrf.mxu0
        %v4701 = vadd.f32 0.0, %v4700
        %4702 = vmatmul.f32.gmra.mxu0 %v4548
        %v4703 = vpop.f32.mrf.mxu0
        %v4704 = vadd.f32 0.0, %v4703
        %4705 = vmatmul.f32.gmra.mxu0 %v4551
        %v4706 = vpop.f32.mrf.mxu0
        %v4707 = vadd.f32 0.0, %v4706
        %4708 = vdwg.mxu0
        %4709 = vmatpush.msra.mxu0 0.0
        %4710 = vmatpush.msra.mxu0 0.0
        %4711 = vmatpush.msra.mxu0 0.0
        %4712 = vmatpush.msra.mxu0 0.0
        %4713 = vmatpush.msra.mxu0 0.0
        %4714 = vmatpush.msra.mxu0 0.0
        %4715 = vmatpush.msra.mxu0 0.0
        %4716 = vmatpush.msra.mxu0 0.0
        %4717 = vmatpush.msra.mxu0 0.0
        %4718 = vmatpush.msra.mxu0 0.0
        %4719 = vmatpush.msra.mxu0 0.0
        %4720 = vmatpush.msra.mxu0 0.0
        %4721 = vmatpush.msra.mxu0 0.0
        %4722 = vmatpush.msra.mxu0 0.0
        %4723 = vmatpush.msra.mxu0 %v4527
        %4724 = vmatpush.msra.mxu0 %v4526
        %4725 = vmatmul.f32.gmra.mxu0 %v4545
        %v4726 = vpop.f32.mrf.mxu0
        %v4727 = vadd.f32 0.0, %v4726
        %4728 = vmatmul.f32.gmra.mxu0 %v4548
        %v4729 = vpop.f32.mrf.mxu0
        %v4730 = vadd.f32 0.0, %v4729
        %4731 = vmatmul.f32.gmra.mxu0 %v4551
        %v4732 = vpop.f32.mrf.mxu0
        %v4733 = vadd.f32 0.0, %v4732
        %4734 = vdwg.mxu0
        %4735 = vmatpush.msra.mxu0 0.0
        %4736 = vmatpush.msra.mxu0 0.0
        %4737 = vmatpush.msra.mxu0 0.0
        %4738 = vmatpush.msra.mxu0 0.0
        %4739 = vmatpush.msra.mxu0 0.0
        %4740 = vmatpush.msra.mxu0 0.0
        %4741 = vmatpush.msra.mxu0 0.0
        %4742 = vmatpush.msra.mxu0 0.0
        %4743 = vmatpush.msra.mxu0 0.0
        %4744 = vmatpush.msra.mxu0 0.0
        %4745 = vmatpush.msra.mxu0 0.0
        %4746 = vmatpush.msra.mxu0 0.0
        %4747 = vmatpush.msra.mxu0 0.0
        %4748 = vmatpush.msra.mxu0 0.0
        %4749 = vmatpush.msra.mxu0 %v4525
        %4750 = vmatpush.msra.mxu0 %v4524
        %4751 = vmatmul.f32.gmra.mxu0 %v4545
        %v4752 = vpop.f32.mrf.mxu0
        %v4753 = vadd.f32 0.0, %v4752
        %4754 = vmatmul.f32.gmra.mxu0 %v4548
        %v4755 = vpop.f32.mrf.mxu0
        %v4756 = vadd.f32 0.0, %v4755
        %4757 = vmatmul.f32.gmra.mxu0 %v4551
        %v4758 = vpop.f32.mrf.mxu0
        %v4759 = vadd.f32 0.0, %v4758
        %4760 = vdwg.mxu0
        %v4761 = vadd.f32 %v4301, %v4571
        %v4762 = vadd.f32 %v4327, %v4597
        %v4763 = vadd.f32 %v4353, %v4623
        %v4764 = vadd.f32 %v4379, %v4649
        %v4765 = vadd.f32 %v4405, %v4675
        %v4766 = vadd.f32 %v4431, %v4701
        %v4767 = vadd.f32 %v4457, %v4727
        %v4768 = vadd.f32 %v4483, %v4753
        %v4769 = vadd.f32 %v4304, %v4574
        %v4770 = vadd.f32 %v4330, %v4600
        %v4771 = vadd.f32 %v4356, %v4626
        %v4772 = vadd.f32 %v4382, %v4652
        %v4773 = vadd.f32 %v4408, %v4678
        %v4774 = vadd.f32 %v4434, %v4704
        %v4775 = vadd.f32 %v4460, %v4730
        %v4776 = vadd.f32 %v4486, %v4756
        %v4777 = vadd.f32 %v4307, %v4577
        %v4778 = vadd.f32 %v4333, %v4603
        %v4779 = vadd.f32 %v4359, %v4629
        %v4780 = vadd.f32 %v4385, %v4655
        %v4781 = vadd.f32 %v4411, %v4681
        %v4782 = vadd.f32 %v4437, %v4707
        %v4783 = vadd.f32 %v4463, %v4733
        %v4784 = vadd.f32 %v4489, %v4759
        %4785 = vrot.lane.b32.xlu0 %v3935, 2
        %v4786 = vpop.permute.xlu0 %4785
        %4787 = vrot.lane.b32.xlu0 %v3943, 2
        %v4788 = vpop.permute.xlu0 %4787
        %4789 = vrot.lane.b32.xlu0 %v3936, 2
        %v4790 = vpop.permute.xlu0 %4789
        %4791 = vrot.lane.b32.xlu0 %v3944, 2
        %v4792 = vpop.permute.xlu0 %4791
        %4793 = vrot.lane.b32.xlu0 %v3937, 2
        %v4794 = vpop.permute.xlu0 %4793
        %4795 = vrot.lane.b32.xlu0 %v3945, 2
        %v4796 = vpop.permute.xlu0 %4795
        %4797 = vrot.lane.b32.xlu0 %v3938, 2
        %v4798 = vpop.permute.xlu0 %4797
        %4799 = vrot.lane.b32.xlu0 %v3946, 2
        %v4800 = vpop.permute.xlu0 %4799
        %4801 = vrot.lane.b32.xlu0 %v3939, 2
        %v4802 = vpop.permute.xlu0 %4801
        %4803 = vrot.lane.b32.xlu0 %v3947, 2
        %v4804 = vpop.permute.xlu0 %4803
        %4805 = vrot.lane.b32.xlu0 %v3940, 2
        %v4806 = vpop.permute.xlu0 %4805
        %4807 = vrot.lane.b32.xlu0 %v3948, 2
        %v4808 = vpop.permute.xlu0 %4807
        %4809 = vrot.lane.b32.xlu0 %v3941, 2
        %v4810 = vpop.permute.xlu0 %4809
        %4811 = vrot.lane.b32.xlu0 %v3949, 2
        %v4812 = vpop.permute.xlu0 %4811
        %4813 = vrot.lane.b32.xlu0 %v3942, 2
        %v4814 = vpop.permute.xlu0 %4813
        %4815 = vrot.lane.b32.xlu0 %v3950, 2
        %v4816 = vpop.permute.xlu0 %4815
        %vm4817 = vcmp.lt.s32.totalorder %v399, 2
        %v4818 = vsel %vm4817, %v4810, %v4814
        %v4819 = vsel %vm4817, %v4812, %v4816
        %v4820 = vsel %vm4817, %v4806, %v4810
        %v4821 = vsel %vm4817, %v4808, %v4812
        %v4822 = vsel %vm4817, %v4802, %v4806
        %v4823 = vsel %vm4817, %v4804, %v4808
        %v4824 = vsel %vm4817, %v4798, %v4802
        %v4825 = vsel %vm4817, %v4800, %v4804
        %v4826 = vsel %vm4817, %v4794, %v4798
        %v4827 = vsel %vm4817, %v4796, %v4800
        %v4828 = vsel %vm4817, %v4790, %v4794
        %v4829 = vsel %vm4817, %v4792, %v4796
        %v4830 = vsel %vm4817, %v4786, %v4790
        %v4831 = vsel %vm4817, %v4788, %v4792
        %v4832 = vsel %vm4817, %v4814, %v4786
        %v4833 = vsel %vm4817, %v4816, %v4788
        %s4834 = scalar_lea.vmem %s5, 72
        %v4835 = vld [vmem:[%s4834] sm:$0xff]
        %v4836 = vld [vmem:[%s4834 + $0x8] sm:$0xff]
        %v4837 = vld [vmem:[%s4834 + $0x10] sm:$0xf]
        %v4839 = vsel %vm4056, %v4835, 0
        %v4842 = vsel %vm4056, %v4836, 0
        %v4845 = vsel %vm4056, %v4837, 0
        %4847 = vmatpush.msra.mxu0 0.0
        %4848 = vmatpush.msra.mxu0 0.0
        %4849 = vmatpush.msra.mxu0 0.0
        %4850 = vmatpush.msra.mxu0 0.0
        %4851 = vmatpush.msra.mxu0 0.0
        %4852 = vmatpush.msra.mxu0 0.0
        %4853 = vmatpush.msra.mxu0 0.0
        %4854 = vmatpush.msra.mxu0 0.0
        %4855 = vmatpush.msra.mxu0 0.0
        %4856 = vmatpush.msra.mxu0 0.0
        %4857 = vmatpush.msra.mxu0 0.0
        %4858 = vmatpush.msra.mxu0 0.0
        %4859 = vmatpush.msra.mxu0 0.0
        %4860 = vmatpush.msra.mxu0 0.0
        %4861 = vmatpush.msra.mxu0 %v4833
        %4862 = vmatpush.msra.mxu0 %v4832
        %4863 = vmatmul.f32.gmra.mxu0 %v4839
        %v4864 = vpop.f32.mrf.mxu0
        %v4865 = vadd.f32 0.0, %v4864
        %4866 = vmatmul.f32.gmra.mxu0 %v4842
        %v4867 = vpop.f32.mrf.mxu0
        %v4868 = vadd.f32 0.0, %v4867
        %4869 = vmatmul.f32.gmra.mxu0 %v4845
        %v4870 = vpop.f32.mrf.mxu0
        %v4871 = vadd.f32 0.0, %v4870
        %4872 = vdwg.mxu0
        %4873 = vmatpush.msra.mxu0 0.0
        %4874 = vmatpush.msra.mxu0 0.0
        %4875 = vmatpush.msra.mxu0 0.0
        %4876 = vmatpush.msra.mxu0 0.0
        %4877 = vmatpush.msra.mxu0 0.0
        %4878 = vmatpush.msra.mxu0 0.0
        %4879 = vmatpush.msra.mxu0 0.0
        %4880 = vmatpush.msra.mxu0 0.0
        %4881 = vmatpush.msra.mxu0 0.0
        %4882 = vmatpush.msra.mxu0 0.0
        %4883 = vmatpush.msra.mxu0 0.0
        %4884 = vmatpush.msra.mxu0 0.0
        %4885 = vmatpush.msra.mxu0 0.0
        %4886 = vmatpush.msra.mxu0 0.0
        %4887 = vmatpush.msra.mxu0 %v4831
        %4888 = vmatpush.msra.mxu0 %v4830
        %4889 = vmatmul.f32.gmra.mxu0 %v4839
        %v4890 = vpop.f32.mrf.mxu0
        %v4891 = vadd.f32 0.0, %v4890
        %4892 = vmatmul.f32.gmra.mxu0 %v4842
        %v4893 = vpop.f32.mrf.mxu0
        %v4894 = vadd.f32 0.0, %v4893
        %4895 = vmatmul.f32.gmra.mxu0 %v4845
        %v4896 = vpop.f32.mrf.mxu0
        %v4897 = vadd.f32 0.0, %v4896
        %4898 = vdwg.mxu0
        %4899 = vmatpush.msra.mxu0 0.0
        %4900 = vmatpush.msra.mxu0 0.0
        %4901 = vmatpush.msra.mxu0 0.0
        %4902 = vmatpush.msra.mxu0 0.0
        %4903 = vmatpush.msra.mxu0 0.0
        %4904 = vmatpush.msra.mxu0 0.0
        %4905 = vmatpush.msra.mxu0 0.0
        %4906 = vmatpush.msra.mxu0 0.0
        %4907 = vmatpush.msra.mxu0 0.0
        %4908 = vmatpush.msra.mxu0 0.0
        %4909 = vmatpush.msra.mxu0 0.0
        %4910 = vmatpush.msra.mxu0 0.0
        %4911 = vmatpush.msra.mxu0 0.0
        %4912 = vmatpush.msra.mxu0 0.0
        %4913 = vmatpush.msra.mxu0 %v4829
        %4914 = vmatpush.msra.mxu0 %v4828
        %4915 = vmatmul.f32.gmra.mxu0 %v4839
        %v4916 = vpop.f32.mrf.mxu0
        %v4917 = vadd.f32 0.0, %v4916
        %4918 = vmatmul.f32.gmra.mxu0 %v4842
        %v4919 = vpop.f32.mrf.mxu0
        %v4920 = vadd.f32 0.0, %v4919
        %4921 = vmatmul.f32.gmra.mxu0 %v4845
        %v4922 = vpop.f32.mrf.mxu0
        %v4923 = vadd.f32 0.0, %v4922
        %4924 = vdwg.mxu0
        %4925 = vmatpush.msra.mxu0 0.0
        %4926 = vmatpush.msra.mxu0 0.0
        %4927 = vmatpush.msra.mxu0 0.0
        %4928 = vmatpush.msra.mxu0 0.0
        %4929 = vmatpush.msra.mxu0 0.0
        %4930 = vmatpush.msra.mxu0 0.0
        %4931 = vmatpush.msra.mxu0 0.0
        %4932 = vmatpush.msra.mxu0 0.0
        %4933 = vmatpush.msra.mxu0 0.0
        %4934 = vmatpush.msra.mxu0 0.0
        %4935 = vmatpush.msra.mxu0 0.0
        %4936 = vmatpush.msra.mxu0 0.0
        %4937 = vmatpush.msra.mxu0 0.0
        %4938 = vmatpush.msra.mxu0 0.0
        %4939 = vmatpush.msra.mxu0 %v4827
        %4940 = vmatpush.msra.mxu0 %v4826
        %4941 = vmatmul.f32.gmra.mxu0 %v4839
        %v4942 = vpop.f32.mrf.mxu0
        %v4943 = vadd.f32 0.0, %v4942
        %4944 = vmatmul.f32.gmra.mxu0 %v4842
        %v4945 = vpop.f32.mrf.mxu0
        %v4946 = vadd.f32 0.0, %v4945
        %4947 = vmatmul.f32.gmra.mxu0 %v4845
        %v4948 = vpop.f32.mrf.mxu0
        %v4949 = vadd.f32 0.0, %v4948
        %4950 = vdwg.mxu0
        %4951 = vmatpush.msra.mxu0 0.0
        %4952 = vmatpush.msra.mxu0 0.0
        %4953 = vmatpush.msra.mxu0 0.0
        %4954 = vmatpush.msra.mxu0 0.0
        %4955 = vmatpush.msra.mxu0 0.0
        %4956 = vmatpush.msra.mxu0 0.0
        %4957 = vmatpush.msra.mxu0 0.0
        %4958 = vmatpush.msra.mxu0 0.0
        %4959 = vmatpush.msra.mxu0 0.0
        %4960 = vmatpush.msra.mxu0 0.0
        %4961 = vmatpush.msra.mxu0 0.0
        %4962 = vmatpush.msra.mxu0 0.0
        %4963 = vmatpush.msra.mxu0 0.0
        %4964 = vmatpush.msra.mxu0 0.0
        %4965 = vmatpush.msra.mxu0 %v4825
        %4966 = vmatpush.msra.mxu0 %v4824
        %4967 = vmatmul.f32.gmra.mxu0 %v4839
        %v4968 = vpop.f32.mrf.mxu0
        %v4969 = vadd.f32 0.0, %v4968
        %4970 = vmatmul.f32.gmra.mxu0 %v4842
        %v4971 = vpop.f32.mrf.mxu0
        %v4972 = vadd.f32 0.0, %v4971
        %4973 = vmatmul.f32.gmra.mxu0 %v4845
        %v4974 = vpop.f32.mrf.mxu0
        %v4975 = vadd.f32 0.0, %v4974
        %4976 = vdwg.mxu0
        %4977 = vmatpush.msra.mxu0 0.0
        %4978 = vmatpush.msra.mxu0 0.0
        %4979 = vmatpush.msra.mxu0 0.0
        %4980 = vmatpush.msra.mxu0 0.0
        %4981 = vmatpush.msra.mxu0 0.0
        %4982 = vmatpush.msra.mxu0 0.0
        %4983 = vmatpush.msra.mxu0 0.0
        %4984 = vmatpush.msra.mxu0 0.0
        %4985 = vmatpush.msra.mxu0 0.0
        %4986 = vmatpush.msra.mxu0 0.0
        %4987 = vmatpush.msra.mxu0 0.0
        %4988 = vmatpush.msra.mxu0 0.0
        %4989 = vmatpush.msra.mxu0 0.0
        %4990 = vmatpush.msra.mxu0 0.0
        %4991 = vmatpush.msra.mxu0 %v4823
        %4992 = vmatpush.msra.mxu0 %v4822
        %4993 = vmatmul.f32.gmra.mxu0 %v4839
        %v4994 = vpop.f32.mrf.mxu0
        %v4995 = vadd.f32 0.0, %v4994
        %4996 = vmatmul.f32.gmra.mxu0 %v4842
        %v4997 = vpop.f32.mrf.mxu0
        %v4998 = vadd.f32 0.0, %v4997
        %4999 = vmatmul.f32.gmra.mxu0 %v4845
        %v5000 = vpop.f32.mrf.mxu0
        %v5001 = vadd.f32 0.0, %v5000
        %5002 = vdwg.mxu0
        %5003 = vmatpush.msra.mxu0 0.0
        %5004 = vmatpush.msra.mxu0 0.0
        %5005 = vmatpush.msra.mxu0 0.0
        %5006 = vmatpush.msra.mxu0 0.0
        %5007 = vmatpush.msra.mxu0 0.0
        %5008 = vmatpush.msra.mxu0 0.0
        %5009 = vmatpush.msra.mxu0 0.0
        %5010 = vmatpush.msra.mxu0 0.0
        %5011 = vmatpush.msra.mxu0 0.0
        %5012 = vmatpush.msra.mxu0 0.0
        %5013 = vmatpush.msra.mxu0 0.0
        %5014 = vmatpush.msra.mxu0 0.0
        %5015 = vmatpush.msra.mxu0 0.0
        %5016 = vmatpush.msra.mxu0 0.0
        %5017 = vmatpush.msra.mxu0 %v4821
        %5018 = vmatpush.msra.mxu0 %v4820
        %5019 = vmatmul.f32.gmra.mxu0 %v4839
        %v5020 = vpop.f32.mrf.mxu0
        %v5021 = vadd.f32 0.0, %v5020
        %5022 = vmatmul.f32.gmra.mxu0 %v4842
        %v5023 = vpop.f32.mrf.mxu0
        %v5024 = vadd.f32 0.0, %v5023
        %5025 = vmatmul.f32.gmra.mxu0 %v4845
        %v5026 = vpop.f32.mrf.mxu0
        %v5027 = vadd.f32 0.0, %v5026
        %5028 = vdwg.mxu0
        %5029 = vmatpush.msra.mxu0 0.0
        %5030 = vmatpush.msra.mxu0 0.0
        %5031 = vmatpush.msra.mxu0 0.0
        %5032 = vmatpush.msra.mxu0 0.0
        %5033 = vmatpush.msra.mxu0 0.0
        %5034 = vmatpush.msra.mxu0 0.0
        %5035 = vmatpush.msra.mxu0 0.0
        %5036 = vmatpush.msra.mxu0 0.0
        %5037 = vmatpush.msra.mxu0 0.0
        %5038 = vmatpush.msra.mxu0 0.0
        %5039 = vmatpush.msra.mxu0 0.0
        %5040 = vmatpush.msra.mxu0 0.0
        %5041 = vmatpush.msra.mxu0 0.0
        %5042 = vmatpush.msra.mxu0 0.0
        %5043 = vmatpush.msra.mxu0 %v4819
        %5044 = vmatpush.msra.mxu0 %v4818
        %5045 = vmatmul.f32.gmra.mxu0 %v4839
        %v5046 = vpop.f32.mrf.mxu0
        %v5047 = vadd.f32 0.0, %v5046
        %5048 = vmatmul.f32.gmra.mxu0 %v4842
        %v5049 = vpop.f32.mrf.mxu0
        %v5050 = vadd.f32 0.0, %v5049
        %5051 = vmatmul.f32.gmra.mxu0 %v4845
        %v5052 = vpop.f32.mrf.mxu0
        %v5053 = vadd.f32 0.0, %v5052
        %5054 = vdwg.mxu0
        %v5055 = vadd.f32 %v4761, %v4865
        %v5056 = vadd.f32 %v4762, %v4891
        %v5057 = vadd.f32 %v4763, %v4917
        %v5058 = vadd.f32 %v4764, %v4943
        %v5059 = vadd.f32 %v4765, %v4969
        %v5060 = vadd.f32 %v4766, %v4995
        %v5061 = vadd.f32 %v4767, %v5021
        %v5062 = vadd.f32 %v4768, %v5047
        %v5063 = vadd.f32 %v4769, %v4868
        %v5064 = vadd.f32 %v4770, %v4894
        %v5065 = vadd.f32 %v4771, %v4920
        %v5066 = vadd.f32 %v4772, %v4946
        %v5067 = vadd.f32 %v4773, %v4972
        %v5068 = vadd.f32 %v4774, %v4998
        %v5069 = vadd.f32 %v4775, %v5024
        %v5070 = vadd.f32 %v4776, %v5050
        %v5071 = vadd.f32 %v4777, %v4871
        %v5072 = vadd.f32 %v4778, %v4897
        %v5073 = vadd.f32 %v4779, %v4923
        %v5074 = vadd.f32 %v4780, %v4949
        %v5075 = vadd.f32 %v4781, %v4975
        %v5076 = vadd.f32 %v4782, %v5001
        %v5077 = vadd.f32 %v4783, %v5027
        %v5078 = vadd.f32 %v4784, %v5053
        %s5079 = scalar_lea.vmem %s5, 96
        %v5080 = vld [vmem:[%s5079] sm:$0xff]
        %v5081 = vld [vmem:[%s5079 + $0x8] sm:$0xff]
        %v5082 = vld [vmem:[%s5079 + $0x10] sm:$0xf]
        %v5084 = vsel %vm4056, %v5080, 0
        %v5087 = vsel %vm4056, %v5081, 0
        %v5090 = vsel %vm4056, %v5082, 0
        %5092 = vmatpush.msra.mxu0 0.0
        %5093 = vmatpush.msra.mxu0 0.0
        %5094 = vmatpush.msra.mxu0 0.0
        %5095 = vmatpush.msra.mxu0 0.0
        %5096 = vmatpush.msra.mxu0 0.0
        %5097 = vmatpush.msra.mxu0 0.0
        %5098 = vmatpush.msra.mxu0 0.0
        %5099 = vmatpush.msra.mxu0 0.0
        %5100 = vmatpush.msra.mxu0 0.0
        %5101 = vmatpush.msra.mxu0 0.0
        %5102 = vmatpush.msra.mxu0 0.0
        %5103 = vmatpush.msra.mxu0 0.0
        %5104 = vmatpush.msra.mxu0 0.0
        %5105 = vmatpush.msra.mxu0 0.0
        %5106 = vmatpush.msra.mxu0 %v3943
        %5107 = vmatpush.msra.mxu0 %v3935
        %5108 = vmatmul.f32.gmra.mxu0 %v5084
        %v5109 = vpop.f32.mrf.mxu0
        %v5110 = vadd.f32 0.0, %v5109
        %5111 = vmatmul.f32.gmra.mxu0 %v5087
        %v5112 = vpop.f32.mrf.mxu0
        %v5113 = vadd.f32 0.0, %v5112
        %5114 = vmatmul.f32.gmra.mxu0 %v5090
        %v5115 = vpop.f32.mrf.mxu0
        %v5116 = vadd.f32 0.0, %v5115
        %5117 = vdwg.mxu0
        %5118 = vmatpush.msra.mxu0 0.0
        %5119 = vmatpush.msra.mxu0 0.0
        %5120 = vmatpush.msra.mxu0 0.0
        %5121 = vmatpush.msra.mxu0 0.0
        %5122 = vmatpush.msra.mxu0 0.0
        %5123 = vmatpush.msra.mxu0 0.0
        %5124 = vmatpush.msra.mxu0 0.0
        %5125 = vmatpush.msra.mxu0 0.0
        %5126 = vmatpush.msra.mxu0 0.0
        %5127 = vmatpush.msra.mxu0 0.0
        %5128 = vmatpush.msra.mxu0 0.0
        %5129 = vmatpush.msra.mxu0 0.0
        %5130 = vmatpush.msra.mxu0 0.0
        %5131 = vmatpush.msra.mxu0 0.0
        %5132 = vmatpush.msra.mxu0 %v3944
        %5133 = vmatpush.msra.mxu0 %v3936
        %5134 = vmatmul.f32.gmra.mxu0 %v5084
        %v5135 = vpop.f32.mrf.mxu0
        %v5136 = vadd.f32 0.0, %v5135
        %5137 = vmatmul.f32.gmra.mxu0 %v5087
        %v5138 = vpop.f32.mrf.mxu0
        %v5139 = vadd.f32 0.0, %v5138
        %5140 = vmatmul.f32.gmra.mxu0 %v5090
        %v5141 = vpop.f32.mrf.mxu0
        %v5142 = vadd.f32 0.0, %v5141
        %5143 = vdwg.mxu0
        %5144 = vmatpush.msra.mxu0 0.0
        %5145 = vmatpush.msra.mxu0 0.0
        %5146 = vmatpush.msra.mxu0 0.0
        %5147 = vmatpush.msra.mxu0 0.0
        %5148 = vmatpush.msra.mxu0 0.0
        %5149 = vmatpush.msra.mxu0 0.0
        %5150 = vmatpush.msra.mxu0 0.0
        %5151 = vmatpush.msra.mxu0 0.0
        %5152 = vmatpush.msra.mxu0 0.0
        %5153 = vmatpush.msra.mxu0 0.0
        %5154 = vmatpush.msra.mxu0 0.0
        %5155 = vmatpush.msra.mxu0 0.0
        %5156 = vmatpush.msra.mxu0 0.0
        %5157 = vmatpush.msra.mxu0 0.0
        %5158 = vmatpush.msra.mxu0 %v3945
        %5159 = vmatpush.msra.mxu0 %v3937
        %5160 = vmatmul.f32.gmra.mxu0 %v5084
        %v5161 = vpop.f32.mrf.mxu0
        %v5162 = vadd.f32 0.0, %v5161
        %5163 = vmatmul.f32.gmra.mxu0 %v5087
        %v5164 = vpop.f32.mrf.mxu0
        %v5165 = vadd.f32 0.0, %v5164
        %5166 = vmatmul.f32.gmra.mxu0 %v5090
        %v5167 = vpop.f32.mrf.mxu0
        %v5168 = vadd.f32 0.0, %v5167
        %5169 = vdwg.mxu0
        %5170 = vmatpush.msra.mxu0 0.0
        %5171 = vmatpush.msra.mxu0 0.0
        %5172 = vmatpush.msra.mxu0 0.0
        %5173 = vmatpush.msra.mxu0 0.0
        %5174 = vmatpush.msra.mxu0 0.0
        %5175 = vmatpush.msra.mxu0 0.0
        %5176 = vmatpush.msra.mxu0 0.0
        %5177 = vmatpush.msra.mxu0 0.0
        %5178 = vmatpush.msra.mxu0 0.0
        %5179 = vmatpush.msra.mxu0 0.0
        %5180 = vmatpush.msra.mxu0 0.0
        %5181 = vmatpush.msra.mxu0 0.0
        %5182 = vmatpush.msra.mxu0 0.0
        %5183 = vmatpush.msra.mxu0 0.0
        %5184 = vmatpush.msra.mxu0 %v3946
        %5185 = vmatpush.msra.mxu0 %v3938
        %5186 = vmatmul.f32.gmra.mxu0 %v5084
        %v5187 = vpop.f32.mrf.mxu0
        %v5188 = vadd.f32 0.0, %v5187
        %5189 = vmatmul.f32.gmra.mxu0 %v5087
        %v5190 = vpop.f32.mrf.mxu0
        %v5191 = vadd.f32 0.0, %v5190
        %5192 = vmatmul.f32.gmra.mxu0 %v5090
        %v5193 = vpop.f32.mrf.mxu0
        %v5194 = vadd.f32 0.0, %v5193
        %5195 = vdwg.mxu0
        %5196 = vmatpush.msra.mxu0 0.0
        %5197 = vmatpush.msra.mxu0 0.0
        %5198 = vmatpush.msra.mxu0 0.0
        %5199 = vmatpush.msra.mxu0 0.0
        %5200 = vmatpush.msra.mxu0 0.0
        %5201 = vmatpush.msra.mxu0 0.0
        %5202 = vmatpush.msra.mxu0 0.0
        %5203 = vmatpush.msra.mxu0 0.0
        %5204 = vmatpush.msra.mxu0 0.0
        %5205 = vmatpush.msra.mxu0 0.0
        %5206 = vmatpush.msra.mxu0 0.0
        %5207 = vmatpush.msra.mxu0 0.0
        %5208 = vmatpush.msra.mxu0 0.0
        %5209 = vmatpush.msra.mxu0 0.0
        %5210 = vmatpush.msra.mxu0 %v3947
        %5211 = vmatpush.msra.mxu0 %v3939
        %5212 = vmatmul.f32.gmra.mxu0 %v5084
        %v5213 = vpop.f32.mrf.mxu0
        %v5214 = vadd.f32 0.0, %v5213
        %5215 = vmatmul.f32.gmra.mxu0 %v5087
        %v5216 = vpop.f32.mrf.mxu0
        %v5217 = vadd.f32 0.0, %v5216
        %5218 = vmatmul.f32.gmra.mxu0 %v5090
        %v5219 = vpop.f32.mrf.mxu0
        %v5220 = vadd.f32 0.0, %v5219
        %5221 = vdwg.mxu0
        %5222 = vmatpush.msra.mxu0 0.0
        %5223 = vmatpush.msra.mxu0 0.0
        %5224 = vmatpush.msra.mxu0 0.0
        %5225 = vmatpush.msra.mxu0 0.0
        %5226 = vmatpush.msra.mxu0 0.0
        %5227 = vmatpush.msra.mxu0 0.0
        %5228 = vmatpush.msra.mxu0 0.0
        %5229 = vmatpush.msra.mxu0 0.0
        %5230 = vmatpush.msra.mxu0 0.0
        %5231 = vmatpush.msra.mxu0 0.0
        %5232 = vmatpush.msra.mxu0 0.0
        %5233 = vmatpush.msra.mxu0 0.0
        %5234 = vmatpush.msra.mxu0 0.0
        %5235 = vmatpush.msra.mxu0 0.0
        %5236 = vmatpush.msra.mxu0 %v3948
        %5237 = vmatpush.msra.mxu0 %v3940
        %5238 = vmatmul.f32.gmra.mxu0 %v5084
        %v5239 = vpop.f32.mrf.mxu0
        %v5240 = vadd.f32 0.0, %v5239
        %5241 = vmatmul.f32.gmra.mxu0 %v5087
        %v5242 = vpop.f32.mrf.mxu0
        %v5243 = vadd.f32 0.0, %v5242
        %5244 = vmatmul.f32.gmra.mxu0 %v5090
        %v5245 = vpop.f32.mrf.mxu0
        %v5246 = vadd.f32 0.0, %v5245
        %5247 = vdwg.mxu0
        %5248 = vmatpush.msra.mxu0 0.0
        %5249 = vmatpush.msra.mxu0 0.0
        %5250 = vmatpush.msra.mxu0 0.0
        %5251 = vmatpush.msra.mxu0 0.0
        %5252 = vmatpush.msra.mxu0 0.0
        %5253 = vmatpush.msra.mxu0 0.0
        %5254 = vmatpush.msra.mxu0 0.0
        %5255 = vmatpush.msra.mxu0 0.0
        %5256 = vmatpush.msra.mxu0 0.0
        %5257 = vmatpush.msra.mxu0 0.0
        %5258 = vmatpush.msra.mxu0 0.0
        %5259 = vmatpush.msra.mxu0 0.0
        %5260 = vmatpush.msra.mxu0 0.0
        %5261 = vmatpush.msra.mxu0 0.0
        %5262 = vmatpush.msra.mxu0 %v3949
        %5263 = vmatpush.msra.mxu0 %v3941
        %5264 = vmatmul.f32.gmra.mxu0 %v5084
        %v5265 = vpop.f32.mrf.mxu0
        %v5266 = vadd.f32 0.0, %v5265
        %5267 = vmatmul.f32.gmra.mxu0 %v5087
        %v5268 = vpop.f32.mrf.mxu0
        %v5269 = vadd.f32 0.0, %v5268
        %5270 = vmatmul.f32.gmra.mxu0 %v5090
        %v5271 = vpop.f32.mrf.mxu0
        %v5272 = vadd.f32 0.0, %v5271
        %5273 = vdwg.mxu0
        %5274 = vmatpush.msra.mxu0 0.0
        %5275 = vmatpush.msra.mxu0 0.0
        %5276 = vmatpush.msra.mxu0 0.0
        %5277 = vmatpush.msra.mxu0 0.0
        %5278 = vmatpush.msra.mxu0 0.0
        %5279 = vmatpush.msra.mxu0 0.0
        %5280 = vmatpush.msra.mxu0 0.0
        %5281 = vmatpush.msra.mxu0 0.0
        %5282 = vmatpush.msra.mxu0 0.0
        %5283 = vmatpush.msra.mxu0 0.0
        %5284 = vmatpush.msra.mxu0 0.0
        %5285 = vmatpush.msra.mxu0 0.0
        %5286 = vmatpush.msra.mxu0 0.0
        %5287 = vmatpush.msra.mxu0 0.0
        %5288 = vmatpush.msra.mxu0 %v3950
        %5289 = vmatpush.msra.mxu0 %v3942
        %5290 = vmatmul.f32.gmra.mxu0 %v5084
        %v5291 = vpop.f32.mrf.mxu0
        %v5292 = vadd.f32 0.0, %v5291
        %5293 = vmatmul.f32.gmra.mxu0 %v5087
        %v5294 = vpop.f32.mrf.mxu0
        %v5295 = vadd.f32 0.0, %v5294
        %5296 = vmatmul.f32.gmra.mxu0 %v5090
        %v5297 = vpop.f32.mrf.mxu0
        %v5298 = vadd.f32 0.0, %v5297
        %5299 = vdwg.mxu0
        %v5300 = vadd.f32 %v5055, %v5110
        %v5301 = vadd.f32 %v5056, %v5136
        %v5302 = vadd.f32 %v5057, %v5162
        %v5303 = vadd.f32 %v5058, %v5188
        %v5304 = vadd.f32 %v5059, %v5214
        %v5305 = vadd.f32 %v5060, %v5240
        %v5306 = vadd.f32 %v5061, %v5266
        %v5307 = vadd.f32 %v5062, %v5292
        %v5308 = vadd.f32 %v5063, %v5113
        %v5309 = vadd.f32 %v5064, %v5139
        %v5310 = vadd.f32 %v5065, %v5165
        %v5311 = vadd.f32 %v5066, %v5191
        %v5312 = vadd.f32 %v5067, %v5217
        %v5313 = vadd.f32 %v5068, %v5243
        %v5314 = vadd.f32 %v5069, %v5269
        %v5315 = vadd.f32 %v5070, %v5295
        %v5316 = vadd.f32 %v5071, %v5116
        %v5317 = vadd.f32 %v5072, %v5142
        %v5318 = vadd.f32 %v5073, %v5168
        %v5319 = vadd.f32 %v5074, %v5194
        %v5320 = vadd.f32 %v5075, %v5220
        %v5321 = vadd.f32 %v5076, %v5246
        %v5322 = vadd.f32 %v5077, %v5272
        %v5323 = vadd.f32 %v5078, %v5298
        %5324 = vrot.lane.b32.xlu0 %v3935, 126
        %v5325 = vpop.permute.xlu0 %5324
        %5326 = vrot.lane.b32.xlu0 %v3943, 126
        %v5327 = vpop.permute.xlu0 %5326
        %5328 = vrot.lane.b32.xlu0 %v3936, 126
        %v5329 = vpop.permute.xlu0 %5328
        %5330 = vrot.lane.b32.xlu0 %v3944, 126
        %v5331 = vpop.permute.xlu0 %5330
        %5332 = vrot.lane.b32.xlu0 %v3937, 126
        %v5333 = vpop.permute.xlu0 %5332
        %5334 = vrot.lane.b32.xlu0 %v3945, 126
        %v5335 = vpop.permute.xlu0 %5334
        %5336 = vrot.lane.b32.xlu0 %v3938, 126
        %v5337 = vpop.permute.xlu0 %5336
        %5338 = vrot.lane.b32.xlu0 %v3946, 126
        %v5339 = vpop.permute.xlu0 %5338
        %5340 = vrot.lane.b32.xlu0 %v3939, 126
        %v5341 = vpop.permute.xlu0 %5340
        %5342 = vrot.lane.b32.xlu0 %v3947, 126
        %v5343 = vpop.permute.xlu0 %5342
        %5344 = vrot.lane.b32.xlu0 %v3940, 126
        %v5345 = vpop.permute.xlu0 %5344
        %5346 = vrot.lane.b32.xlu0 %v3948, 126
        %v5347 = vpop.permute.xlu0 %5346
        %5348 = vrot.lane.b32.xlu0 %v3941, 126
        %v5349 = vpop.permute.xlu0 %5348
        %5350 = vrot.lane.b32.xlu0 %v3949, 126
        %v5351 = vpop.permute.xlu0 %5350
        %5352 = vrot.lane.b32.xlu0 %v3942, 126
        %v5353 = vpop.permute.xlu0 %5352
        %5354 = vrot.lane.b32.xlu0 %v3950, 126
        %v5355 = vpop.permute.xlu0 %5354
        %vm5356 = vcmp.lt.s32.totalorder %v399, 126
        %v5357 = vsel %vm5356, %v5349, %v5353
        %v5358 = vsel %vm5356, %v5351, %v5355
        %v5359 = vsel %vm5356, %v5345, %v5349
        %v5360 = vsel %vm5356, %v5347, %v5351
        %v5361 = vsel %vm5356, %v5341, %v5345
        %v5362 = vsel %vm5356, %v5343, %v5347
        %v5363 = vsel %vm5356, %v5337, %v5341
        %v5364 = vsel %vm5356, %v5339, %v5343
        %v5365 = vsel %vm5356, %v5333, %v5337
        %v5366 = vsel %vm5356, %v5335, %v5339
        %v5367 = vsel %vm5356, %v5329, %v5333
        %v5368 = vsel %vm5356, %v5331, %v5335
        %v5369 = vsel %vm5356, %v5325, %v5329
        %v5370 = vsel %vm5356, %v5327, %v5331
        %v5371 = vsel %vm5356, %v5353, %v5325
        %v5372 = vsel %vm5356, %v5355, %v5327
        %s5373 = scalar_lea.vmem %s5, 120
        %v5374 = vld [vmem:[%s5373] sm:$0xff]
        %v5375 = vld [vmem:[%s5373 + $0x8] sm:$0xff]
        %v5376 = vld [vmem:[%s5373 + $0x10] sm:$0xf]
        %v5378 = vsel %vm4056, %v5374, 0
        %v5381 = vsel %vm4056, %v5375, 0
        %v5384 = vsel %vm4056, %v5376, 0
        %5386 = vmatpush.msra.mxu0 0.0
        %5387 = vmatpush.msra.mxu0 0.0
        %5388 = vmatpush.msra.mxu0 0.0
        %5389 = vmatpush.msra.mxu0 0.0
        %5390 = vmatpush.msra.mxu0 0.0
        %5391 = vmatpush.msra.mxu0 0.0
        %5392 = vmatpush.msra.mxu0 0.0
        %5393 = vmatpush.msra.mxu0 0.0
        %5394 = vmatpush.msra.mxu0 0.0
        %5395 = vmatpush.msra.mxu0 0.0
        %5396 = vmatpush.msra.mxu0 0.0
        %5397 = vmatpush.msra.mxu0 0.0
        %5398 = vmatpush.msra.mxu0 0.0
        %5399 = vmatpush.msra.mxu0 0.0
        %5400 = vmatpush.msra.mxu0 %v5370
        %5401 = vmatpush.msra.mxu0 %v5369
        %5402 = vmatmul.f32.gmra.mxu0 %v5378
        %v5403 = vpop.f32.mrf.mxu0
        %v5404 = vadd.f32 0.0, %v5403
        %5405 = vmatmul.f32.gmra.mxu0 %v5381
        %v5406 = vpop.f32.mrf.mxu0
        %v5407 = vadd.f32 0.0, %v5406
        %5408 = vmatmul.f32.gmra.mxu0 %v5384
        %v5409 = vpop.f32.mrf.mxu0
        %v5410 = vadd.f32 0.0, %v5409
        %5411 = vdwg.mxu0
        %5412 = vmatpush.msra.mxu0 0.0
        %5413 = vmatpush.msra.mxu0 0.0
        %5414 = vmatpush.msra.mxu0 0.0
        %5415 = vmatpush.msra.mxu0 0.0
        %5416 = vmatpush.msra.mxu0 0.0
        %5417 = vmatpush.msra.mxu0 0.0
        %5418 = vmatpush.msra.mxu0 0.0
        %5419 = vmatpush.msra.mxu0 0.0
        %5420 = vmatpush.msra.mxu0 0.0
        %5421 = vmatpush.msra.mxu0 0.0
        %5422 = vmatpush.msra.mxu0 0.0
        %5423 = vmatpush.msra.mxu0 0.0
        %5424 = vmatpush.msra.mxu0 0.0
        %5425 = vmatpush.msra.mxu0 0.0
        %5426 = vmatpush.msra.mxu0 %v5368
        %5427 = vmatpush.msra.mxu0 %v5367
        %5428 = vmatmul.f32.gmra.mxu0 %v5378
        %v5429 = vpop.f32.mrf.mxu0
        %v5430 = vadd.f32 0.0, %v5429
        %5431 = vmatmul.f32.gmra.mxu0 %v5381
        %v5432 = vpop.f32.mrf.mxu0
        %v5433 = vadd.f32 0.0, %v5432
        %5434 = vmatmul.f32.gmra.mxu0 %v5384
        %v5435 = vpop.f32.mrf.mxu0
        %v5436 = vadd.f32 0.0, %v5435
        %5437 = vdwg.mxu0
        %5438 = vmatpush.msra.mxu0 0.0
        %5439 = vmatpush.msra.mxu0 0.0
        %5440 = vmatpush.msra.mxu0 0.0
        %5441 = vmatpush.msra.mxu0 0.0
        %5442 = vmatpush.msra.mxu0 0.0
        %5443 = vmatpush.msra.mxu0 0.0
        %5444 = vmatpush.msra.mxu0 0.0
        %5445 = vmatpush.msra.mxu0 0.0
        %5446 = vmatpush.msra.mxu0 0.0
        %5447 = vmatpush.msra.mxu0 0.0
        %5448 = vmatpush.msra.mxu0 0.0
        %5449 = vmatpush.msra.mxu0 0.0
        %5450 = vmatpush.msra.mxu0 0.0
        %5451 = vmatpush.msra.mxu0 0.0
        %5452 = vmatpush.msra.mxu0 %v5366
        %5453 = vmatpush.msra.mxu0 %v5365
        %5454 = vmatmul.f32.gmra.mxu0 %v5378
        %v5455 = vpop.f32.mrf.mxu0
        %v5456 = vadd.f32 0.0, %v5455
        %5457 = vmatmul.f32.gmra.mxu0 %v5381
        %v5458 = vpop.f32.mrf.mxu0
        %v5459 = vadd.f32 0.0, %v5458
        %5460 = vmatmul.f32.gmra.mxu0 %v5384
        %v5461 = vpop.f32.mrf.mxu0
        %v5462 = vadd.f32 0.0, %v5461
        %5463 = vdwg.mxu0
        %5464 = vmatpush.msra.mxu0 0.0
        %5465 = vmatpush.msra.mxu0 0.0
        %5466 = vmatpush.msra.mxu0 0.0
        %5467 = vmatpush.msra.mxu0 0.0
        %5468 = vmatpush.msra.mxu0 0.0
        %5469 = vmatpush.msra.mxu0 0.0
        %5470 = vmatpush.msra.mxu0 0.0
        %5471 = vmatpush.msra.mxu0 0.0
        %5472 = vmatpush.msra.mxu0 0.0
        %5473 = vmatpush.msra.mxu0 0.0
        %5474 = vmatpush.msra.mxu0 0.0
        %5475 = vmatpush.msra.mxu0 0.0
        %5476 = vmatpush.msra.mxu0 0.0
        %5477 = vmatpush.msra.mxu0 0.0
        %5478 = vmatpush.msra.mxu0 %v5364
        %5479 = vmatpush.msra.mxu0 %v5363
        %5480 = vmatmul.f32.gmra.mxu0 %v5378
        %v5481 = vpop.f32.mrf.mxu0
        %v5482 = vadd.f32 0.0, %v5481
        %5483 = vmatmul.f32.gmra.mxu0 %v5381
        %v5484 = vpop.f32.mrf.mxu0
        %v5485 = vadd.f32 0.0, %v5484
        %5486 = vmatmul.f32.gmra.mxu0 %v5384
        %v5487 = vpop.f32.mrf.mxu0
        %v5488 = vadd.f32 0.0, %v5487
        %5489 = vdwg.mxu0
        %5490 = vmatpush.msra.mxu0 0.0
        %5491 = vmatpush.msra.mxu0 0.0
        %5492 = vmatpush.msra.mxu0 0.0
        %5493 = vmatpush.msra.mxu0 0.0
        %5494 = vmatpush.msra.mxu0 0.0
        %5495 = vmatpush.msra.mxu0 0.0
        %5496 = vmatpush.msra.mxu0 0.0
        %5497 = vmatpush.msra.mxu0 0.0
        %5498 = vmatpush.msra.mxu0 0.0
        %5499 = vmatpush.msra.mxu0 0.0
        %5500 = vmatpush.msra.mxu0 0.0
        %5501 = vmatpush.msra.mxu0 0.0
        %5502 = vmatpush.msra.mxu0 0.0
        %5503 = vmatpush.msra.mxu0 0.0
        %5504 = vmatpush.msra.mxu0 %v5362
        %5505 = vmatpush.msra.mxu0 %v5361
        %5506 = vmatmul.f32.gmra.mxu0 %v5378
        %v5507 = vpop.f32.mrf.mxu0
        %v5508 = vadd.f32 0.0, %v5507
        %5509 = vmatmul.f32.gmra.mxu0 %v5381
        %v5510 = vpop.f32.mrf.mxu0
        %v5511 = vadd.f32 0.0, %v5510
        %5512 = vmatmul.f32.gmra.mxu0 %v5384
        %v5513 = vpop.f32.mrf.mxu0
        %v5514 = vadd.f32 0.0, %v5513
        %5515 = vdwg.mxu0
        %5516 = vmatpush.msra.mxu0 0.0
        %5517 = vmatpush.msra.mxu0 0.0
        %5518 = vmatpush.msra.mxu0 0.0
        %5519 = vmatpush.msra.mxu0 0.0
        %5520 = vmatpush.msra.mxu0 0.0
        %5521 = vmatpush.msra.mxu0 0.0
        %5522 = vmatpush.msra.mxu0 0.0
        %5523 = vmatpush.msra.mxu0 0.0
        %5524 = vmatpush.msra.mxu0 0.0
        %5525 = vmatpush.msra.mxu0 0.0
        %5526 = vmatpush.msra.mxu0 0.0
        %5527 = vmatpush.msra.mxu0 0.0
        %5528 = vmatpush.msra.mxu0 0.0
        %5529 = vmatpush.msra.mxu0 0.0
        %5530 = vmatpush.msra.mxu0 %v5360
        %5531 = vmatpush.msra.mxu0 %v5359
        %5532 = vmatmul.f32.gmra.mxu0 %v5378
        %v5533 = vpop.f32.mrf.mxu0
        %v5534 = vadd.f32 0.0, %v5533
        %5535 = vmatmul.f32.gmra.mxu0 %v5381
        %v5536 = vpop.f32.mrf.mxu0
        %v5537 = vadd.f32 0.0, %v5536
        %5538 = vmatmul.f32.gmra.mxu0 %v5384
        %v5539 = vpop.f32.mrf.mxu0
        %v5540 = vadd.f32 0.0, %v5539
        %5541 = vdwg.mxu0
        %5542 = vmatpush.msra.mxu0 0.0
        %5543 = vmatpush.msra.mxu0 0.0
        %5544 = vmatpush.msra.mxu0 0.0
        %5545 = vmatpush.msra.mxu0 0.0
        %5546 = vmatpush.msra.mxu0 0.0
        %5547 = vmatpush.msra.mxu0 0.0
        %5548 = vmatpush.msra.mxu0 0.0
        %5549 = vmatpush.msra.mxu0 0.0
        %5550 = vmatpush.msra.mxu0 0.0
        %5551 = vmatpush.msra.mxu0 0.0
        %5552 = vmatpush.msra.mxu0 0.0
        %5553 = vmatpush.msra.mxu0 0.0
        %5554 = vmatpush.msra.mxu0 0.0
        %5555 = vmatpush.msra.mxu0 0.0
        %5556 = vmatpush.msra.mxu0 %v5358
        %5557 = vmatpush.msra.mxu0 %v5357
        %5558 = vmatmul.f32.gmra.mxu0 %v5378
        %v5559 = vpop.f32.mrf.mxu0
        %v5560 = vadd.f32 0.0, %v5559
        %5561 = vmatmul.f32.gmra.mxu0 %v5381
        %v5562 = vpop.f32.mrf.mxu0
        %v5563 = vadd.f32 0.0, %v5562
        %5564 = vmatmul.f32.gmra.mxu0 %v5384
        %v5565 = vpop.f32.mrf.mxu0
        %v5566 = vadd.f32 0.0, %v5565
        %5567 = vdwg.mxu0
        %5568 = vmatpush.msra.mxu0 0.0
        %5569 = vmatpush.msra.mxu0 0.0
        %5570 = vmatpush.msra.mxu0 0.0
        %5571 = vmatpush.msra.mxu0 0.0
        %5572 = vmatpush.msra.mxu0 0.0
        %5573 = vmatpush.msra.mxu0 0.0
        %5574 = vmatpush.msra.mxu0 0.0
        %5575 = vmatpush.msra.mxu0 0.0
        %5576 = vmatpush.msra.mxu0 0.0
        %5577 = vmatpush.msra.mxu0 0.0
        %5578 = vmatpush.msra.mxu0 0.0
        %5579 = vmatpush.msra.mxu0 0.0
        %5580 = vmatpush.msra.mxu0 0.0
        %5581 = vmatpush.msra.mxu0 0.0
        %5582 = vmatpush.msra.mxu0 %v5372
        %5583 = vmatpush.msra.mxu0 %v5371
        %5584 = vmatmul.f32.gmra.mxu0 %v5378
        %v5585 = vpop.f32.mrf.mxu0
        %v5586 = vadd.f32 0.0, %v5585
        %5587 = vmatmul.f32.gmra.mxu0 %v5381
        %v5588 = vpop.f32.mrf.mxu0
        %v5589 = vadd.f32 0.0, %v5588
        %5590 = vmatmul.f32.gmra.mxu0 %v5384
        %v5591 = vpop.f32.mrf.mxu0
        %v5592 = vadd.f32 0.0, %v5591
        %5593 = vdwg.mxu0
        %v5594 = vadd.f32 %v5300, %v5404
        %v5595 = vadd.f32 %v5301, %v5430
        %v5596 = vadd.f32 %v5302, %v5456
        %v5597 = vadd.f32 %v5303, %v5482
        %v5598 = vadd.f32 %v5304, %v5508
        %v5599 = vadd.f32 %v5305, %v5534
        %v5600 = vadd.f32 %v5306, %v5560
        %v5601 = vadd.f32 %v5307, %v5586
        %v5602 = vadd.f32 %v5308, %v5407
        %v5603 = vadd.f32 %v5309, %v5433
        %v5604 = vadd.f32 %v5310, %v5459
        %v5605 = vadd.f32 %v5311, %v5485
        %v5606 = vadd.f32 %v5312, %v5511
        %v5607 = vadd.f32 %v5313, %v5537
        %v5608 = vadd.f32 %v5314, %v5563
        %v5609 = vadd.f32 %v5315, %v5589
        %v5610 = vadd.f32 %v5316, %v5410
        %v5611 = vadd.f32 %v5317, %v5436
        %v5612 = vadd.f32 %v5318, %v5462
        %v5613 = vadd.f32 %v5319, %v5488
        %v5614 = vadd.f32 %v5320, %v5514
        %v5615 = vadd.f32 %v5321, %v5540
        %v5616 = vadd.f32 %v5322, %v5566
        %v5617 = vadd.f32 %v5323, %v5592
        %s5618 = scalar_lea.vmem %s5, 144
        %v5619 = vld [vmem:[%s5618] sm:$0xff]
        %v5620 = vld [vmem:[%s5618 + $0x8] sm:$0xff]
        %v5621 = vld [vmem:[%s5618 + $0x10] sm:$0xf]
        %v5623 = vsel %vm4056, %v5619, 0
        %v5626 = vsel %vm4056, %v5620, 0
        %v5629 = vsel %vm4056, %v5621, 0
        %5631 = vmatpush.msra.mxu0 0.0
        %5632 = vmatpush.msra.mxu0 0.0
        %5633 = vmatpush.msra.mxu0 0.0
        %5634 = vmatpush.msra.mxu0 0.0
        %5635 = vmatpush.msra.mxu0 0.0
        %5636 = vmatpush.msra.mxu0 0.0
        %5637 = vmatpush.msra.mxu0 0.0
        %5638 = vmatpush.msra.mxu0 0.0
        %5639 = vmatpush.msra.mxu0 0.0
        %5640 = vmatpush.msra.mxu0 0.0
        %5641 = vmatpush.msra.mxu0 0.0
        %5642 = vmatpush.msra.mxu0 0.0
        %5643 = vmatpush.msra.mxu0 0.0
        %5644 = vmatpush.msra.mxu0 0.0
        %5645 = vmatpush.msra.mxu0 %v3997
        %5646 = vmatpush.msra.mxu0 %v3996
        %5647 = vmatmul.f32.gmra.mxu0 %v5623
        %v5648 = vpop.f32.mrf.mxu0
        %v5649 = vadd.f32 0.0, %v5648
        %5650 = vmatmul.f32.gmra.mxu0 %v5626
        %v5651 = vpop.f32.mrf.mxu0
        %v5652 = vadd.f32 0.0, %v5651
        %5653 = vmatmul.f32.gmra.mxu0 %v5629
        %v5654 = vpop.f32.mrf.mxu0
        %v5655 = vadd.f32 0.0, %v5654
        %5656 = vdwg.mxu0
        %5657 = vmatpush.msra.mxu0 0.0
        %5658 = vmatpush.msra.mxu0 0.0
        %5659 = vmatpush.msra.mxu0 0.0
        %5660 = vmatpush.msra.mxu0 0.0
        %5661 = vmatpush.msra.mxu0 0.0
        %5662 = vmatpush.msra.mxu0 0.0
        %5663 = vmatpush.msra.mxu0 0.0
        %5664 = vmatpush.msra.mxu0 0.0
        %5665 = vmatpush.msra.mxu0 0.0
        %5666 = vmatpush.msra.mxu0 0.0
        %5667 = vmatpush.msra.mxu0 0.0
        %5668 = vmatpush.msra.mxu0 0.0
        %5669 = vmatpush.msra.mxu0 0.0
        %5670 = vmatpush.msra.mxu0 0.0
        %5671 = vmatpush.msra.mxu0 %v3995
        %5672 = vmatpush.msra.mxu0 %v3994
        %5673 = vmatmul.f32.gmra.mxu0 %v5623
        %v5674 = vpop.f32.mrf.mxu0
        %v5675 = vadd.f32 0.0, %v5674
        %5676 = vmatmul.f32.gmra.mxu0 %v5626
        %v5677 = vpop.f32.mrf.mxu0
        %v5678 = vadd.f32 0.0, %v5677
        %5679 = vmatmul.f32.gmra.mxu0 %v5629
        %v5680 = vpop.f32.mrf.mxu0
        %v5681 = vadd.f32 0.0, %v5680
        %5682 = vdwg.mxu0
        %5683 = vmatpush.msra.mxu0 0.0
        %5684 = vmatpush.msra.mxu0 0.0
        %5685 = vmatpush.msra.mxu0 0.0
        %5686 = vmatpush.msra.mxu0 0.0
        %5687 = vmatpush.msra.mxu0 0.0
        %5688 = vmatpush.msra.mxu0 0.0
        %5689 = vmatpush.msra.mxu0 0.0
        %5690 = vmatpush.msra.mxu0 0.0
        %5691 = vmatpush.msra.mxu0 0.0
        %5692 = vmatpush.msra.mxu0 0.0
        %5693 = vmatpush.msra.mxu0 0.0
        %5694 = vmatpush.msra.mxu0 0.0
        %5695 = vmatpush.msra.mxu0 0.0
        %5696 = vmatpush.msra.mxu0 0.0
        %5697 = vmatpush.msra.mxu0 %v3993
        %5698 = vmatpush.msra.mxu0 %v3992
        %5699 = vmatmul.f32.gmra.mxu0 %v5623
        %v5700 = vpop.f32.mrf.mxu0
        %v5701 = vadd.f32 0.0, %v5700
        %5702 = vmatmul.f32.gmra.mxu0 %v5626
        %v5703 = vpop.f32.mrf.mxu0
        %v5704 = vadd.f32 0.0, %v5703
        %5705 = vmatmul.f32.gmra.mxu0 %v5629
        %v5706 = vpop.f32.mrf.mxu0
        %v5707 = vadd.f32 0.0, %v5706
        %5708 = vdwg.mxu0
        %5709 = vmatpush.msra.mxu0 0.0
        %5710 = vmatpush.msra.mxu0 0.0
        %5711 = vmatpush.msra.mxu0 0.0
        %5712 = vmatpush.msra.mxu0 0.0
        %5713 = vmatpush.msra.mxu0 0.0
        %5714 = vmatpush.msra.mxu0 0.0
        %5715 = vmatpush.msra.mxu0 0.0
        %5716 = vmatpush.msra.mxu0 0.0
        %5717 = vmatpush.msra.mxu0 0.0
        %5718 = vmatpush.msra.mxu0 0.0
        %5719 = vmatpush.msra.mxu0 0.0
        %5720 = vmatpush.msra.mxu0 0.0
        %5721 = vmatpush.msra.mxu0 0.0
        %5722 = vmatpush.msra.mxu0 0.0
        %5723 = vmatpush.msra.mxu0 %v3991
        %5724 = vmatpush.msra.mxu0 %v3990
        %5725 = vmatmul.f32.gmra.mxu0 %v5623
        %v5726 = vpop.f32.mrf.mxu0
        %v5727 = vadd.f32 0.0, %v5726
        %5728 = vmatmul.f32.gmra.mxu0 %v5626
        %v5729 = vpop.f32.mrf.mxu0
        %v5730 = vadd.f32 0.0, %v5729
        %5731 = vmatmul.f32.gmra.mxu0 %v5629
        %v5732 = vpop.f32.mrf.mxu0
        %v5733 = vadd.f32 0.0, %v5732
        %5734 = vdwg.mxu0
        %5735 = vmatpush.msra.mxu0 0.0
        %5736 = vmatpush.msra.mxu0 0.0
        %5737 = vmatpush.msra.mxu0 0.0
        %5738 = vmatpush.msra.mxu0 0.0
        %5739 = vmatpush.msra.mxu0 0.0
        %5740 = vmatpush.msra.mxu0 0.0
        %5741 = vmatpush.msra.mxu0 0.0
        %5742 = vmatpush.msra.mxu0 0.0
        %5743 = vmatpush.msra.mxu0 0.0
        %5744 = vmatpush.msra.mxu0 0.0
        %5745 = vmatpush.msra.mxu0 0.0
        %5746 = vmatpush.msra.mxu0 0.0
        %5747 = vmatpush.msra.mxu0 0.0
        %5748 = vmatpush.msra.mxu0 0.0
        %5749 = vmatpush.msra.mxu0 %v3989
        %5750 = vmatpush.msra.mxu0 %v3988
        %5751 = vmatmul.f32.gmra.mxu0 %v5623
        %v5752 = vpop.f32.mrf.mxu0
        %v5753 = vadd.f32 0.0, %v5752
        %5754 = vmatmul.f32.gmra.mxu0 %v5626
        %v5755 = vpop.f32.mrf.mxu0
        %v5756 = vadd.f32 0.0, %v5755
        %5757 = vmatmul.f32.gmra.mxu0 %v5629
        %v5758 = vpop.f32.mrf.mxu0
        %v5759 = vadd.f32 0.0, %v5758
        %5760 = vdwg.mxu0
        %5761 = vmatpush.msra.mxu0 0.0
        %5762 = vmatpush.msra.mxu0 0.0
        %5763 = vmatpush.msra.mxu0 0.0
        %5764 = vmatpush.msra.mxu0 0.0
        %5765 = vmatpush.msra.mxu0 0.0
        %5766 = vmatpush.msra.mxu0 0.0
        %5767 = vmatpush.msra.mxu0 0.0
        %5768 = vmatpush.msra.mxu0 0.0
        %5769 = vmatpush.msra.mxu0 0.0
        %5770 = vmatpush.msra.mxu0 0.0
        %5771 = vmatpush.msra.mxu0 0.0
        %5772 = vmatpush.msra.mxu0 0.0
        %5773 = vmatpush.msra.mxu0 0.0
        %5774 = vmatpush.msra.mxu0 0.0
        %5775 = vmatpush.msra.mxu0 %v3987
        %5776 = vmatpush.msra.mxu0 %v3986
        %5777 = vmatmul.f32.gmra.mxu0 %v5623
        %v5778 = vpop.f32.mrf.mxu0
        %v5779 = vadd.f32 0.0, %v5778
        %5780 = vmatmul.f32.gmra.mxu0 %v5626
        %v5781 = vpop.f32.mrf.mxu0
        %v5782 = vadd.f32 0.0, %v5781
        %5783 = vmatmul.f32.gmra.mxu0 %v5629
        %v5784 = vpop.f32.mrf.mxu0
        %v5785 = vadd.f32 0.0, %v5784
        %5786 = vdwg.mxu0
        %5787 = vmatpush.msra.mxu0 0.0
        %5788 = vmatpush.msra.mxu0 0.0
        %5789 = vmatpush.msra.mxu0 0.0
        %5790 = vmatpush.msra.mxu0 0.0
        %5791 = vmatpush.msra.mxu0 0.0
        %5792 = vmatpush.msra.mxu0 0.0
        %5793 = vmatpush.msra.mxu0 0.0
        %5794 = vmatpush.msra.mxu0 0.0
        %5795 = vmatpush.msra.mxu0 0.0
        %5796 = vmatpush.msra.mxu0 0.0
        %5797 = vmatpush.msra.mxu0 0.0
        %5798 = vmatpush.msra.mxu0 0.0
        %5799 = vmatpush.msra.mxu0 0.0
        %5800 = vmatpush.msra.mxu0 0.0
        %5801 = vmatpush.msra.mxu0 %v3985
        %5802 = vmatpush.msra.mxu0 %v3984
        %5803 = vmatmul.f32.gmra.mxu0 %v5623
        %v5804 = vpop.f32.mrf.mxu0
        %v5805 = vadd.f32 0.0, %v5804
        %5806 = vmatmul.f32.gmra.mxu0 %v5626
        %v5807 = vpop.f32.mrf.mxu0
        %v5808 = vadd.f32 0.0, %v5807
        %5809 = vmatmul.f32.gmra.mxu0 %v5629
        %v5810 = vpop.f32.mrf.mxu0
        %v5811 = vadd.f32 0.0, %v5810
        %5812 = vdwg.mxu0
        %5813 = vmatpush.msra.mxu0 0.0
        %5814 = vmatpush.msra.mxu0 0.0
        %5815 = vmatpush.msra.mxu0 0.0
        %5816 = vmatpush.msra.mxu0 0.0
        %5817 = vmatpush.msra.mxu0 0.0
        %5818 = vmatpush.msra.mxu0 0.0
        %5819 = vmatpush.msra.mxu0 0.0
        %5820 = vmatpush.msra.mxu0 0.0
        %5821 = vmatpush.msra.mxu0 0.0
        %5822 = vmatpush.msra.mxu0 0.0
        %5823 = vmatpush.msra.mxu0 0.0
        %5824 = vmatpush.msra.mxu0 0.0
        %5825 = vmatpush.msra.mxu0 0.0
        %5826 = vmatpush.msra.mxu0 0.0
        %5827 = vmatpush.msra.mxu0 %v3999
        %5828 = vmatpush.msra.mxu0 %v3998
        %5829 = vmatmul.f32.gmra.mxu0 %v5623
        %v5830 = vpop.f32.mrf.mxu0
        %v5831 = vadd.f32 0.0, %v5830
        %5832 = vmatmul.f32.gmra.mxu0 %v5626
        %v5833 = vpop.f32.mrf.mxu0
        %v5834 = vadd.f32 0.0, %v5833
        %5835 = vmatmul.f32.gmra.mxu0 %v5629
        %v5836 = vpop.f32.mrf.mxu0
        %v5837 = vadd.f32 0.0, %v5836
        %5838 = vdwg.mxu0
        %v5839 = vadd.f32 %v5594, %v5649
        %v5840 = vadd.f32 %v5595, %v5675
        %v5841 = vadd.f32 %v5596, %v5701
        %v5842 = vadd.f32 %v5597, %v5727
        %v5843 = vadd.f32 %v5598, %v5753
        %v5844 = vadd.f32 %v5599, %v5779
        %v5845 = vadd.f32 %v5600, %v5805
        %v5846 = vadd.f32 %v5601, %v5831
        %v5847 = vadd.f32 %v5602, %v5652
        %v5848 = vadd.f32 %v5603, %v5678
        %v5849 = vadd.f32 %v5604, %v5704
        %v5850 = vadd.f32 %v5605, %v5730
        %v5851 = vadd.f32 %v5606, %v5756
        %v5852 = vadd.f32 %v5607, %v5782
        %v5853 = vadd.f32 %v5608, %v5808
        %v5854 = vadd.f32 %v5609, %v5834
        %v5855 = vadd.f32 %v5610, %v5655
        %v5856 = vadd.f32 %v5611, %v5681
        %v5857 = vadd.f32 %v5612, %v5707
        %v5858 = vadd.f32 %v5613, %v5733
        %v5859 = vadd.f32 %v5614, %v5759
        %v5860 = vadd.f32 %v5615, %v5785
        %v5861 = vadd.f32 %v5616, %v5811
        %v5862 = vadd.f32 %v5617, %v5837
        %s5863 = scalar_lea.vmem %s5, 168
        %v5864 = vld [vmem:[%s5863] sm:$0xff]
        %v5865 = vld [vmem:[%s5863 + $0x8] sm:$0xff]
        %v5866 = vld [vmem:[%s5863 + $0x10] sm:$0xf]
        %v5868 = vsel %vm4056, %v5864, 0
        %v5871 = vsel %vm4056, %v5865, 0
        %v5874 = vsel %vm4056, %v5866, 0
        %5876 = vmatpush.msra.mxu0 0.0
        %5877 = vmatpush.msra.mxu0 0.0
        %5878 = vmatpush.msra.mxu0 0.0
        %5879 = vmatpush.msra.mxu0 0.0
        %5880 = vmatpush.msra.mxu0 0.0
        %5881 = vmatpush.msra.mxu0 0.0
        %5882 = vmatpush.msra.mxu0 0.0
        %5883 = vmatpush.msra.mxu0 0.0
        %5884 = vmatpush.msra.mxu0 0.0
        %5885 = vmatpush.msra.mxu0 0.0
        %5886 = vmatpush.msra.mxu0 0.0
        %5887 = vmatpush.msra.mxu0 0.0
        %5888 = vmatpush.msra.mxu0 0.0
        %5889 = vmatpush.msra.mxu0 0.0
        %5890 = vmatpush.msra.mxu0 %v4049
        %5891 = vmatpush.msra.mxu0 %v4048
        %5892 = vmatmul.f32.gmra.mxu0 %v5868
        %v5893 = vpop.f32.mrf.mxu0
        %v5894 = vadd.f32 0.0, %v5893
        %5895 = vmatmul.f32.gmra.mxu0 %v5871
        %v5896 = vpop.f32.mrf.mxu0
        %v5897 = vadd.f32 0.0, %v5896
        %5898 = vmatmul.f32.gmra.mxu0 %v5874
        %v5899 = vpop.f32.mrf.mxu0
        %v5900 = vadd.f32 0.0, %v5899
        %5901 = vdwg.mxu0
        %5902 = vmatpush.msra.mxu0 0.0
        %5903 = vmatpush.msra.mxu0 0.0
        %5904 = vmatpush.msra.mxu0 0.0
        %5905 = vmatpush.msra.mxu0 0.0
        %5906 = vmatpush.msra.mxu0 0.0
        %5907 = vmatpush.msra.mxu0 0.0
        %5908 = vmatpush.msra.mxu0 0.0
        %5909 = vmatpush.msra.mxu0 0.0
        %5910 = vmatpush.msra.mxu0 0.0
        %5911 = vmatpush.msra.mxu0 0.0
        %5912 = vmatpush.msra.mxu0 0.0
        %5913 = vmatpush.msra.mxu0 0.0
        %5914 = vmatpush.msra.mxu0 0.0
        %5915 = vmatpush.msra.mxu0 0.0
        %5916 = vmatpush.msra.mxu0 %v4047
        %5917 = vmatpush.msra.mxu0 %v4046
        %5918 = vmatmul.f32.gmra.mxu0 %v5868
        %v5919 = vpop.f32.mrf.mxu0
        %v5920 = vadd.f32 0.0, %v5919
        %5921 = vmatmul.f32.gmra.mxu0 %v5871
        %v5922 = vpop.f32.mrf.mxu0
        %v5923 = vadd.f32 0.0, %v5922
        %5924 = vmatmul.f32.gmra.mxu0 %v5874
        %v5925 = vpop.f32.mrf.mxu0
        %v5926 = vadd.f32 0.0, %v5925
        %5927 = vdwg.mxu0
        %5928 = vmatpush.msra.mxu0 0.0
        %5929 = vmatpush.msra.mxu0 0.0
        %5930 = vmatpush.msra.mxu0 0.0
        %5931 = vmatpush.msra.mxu0 0.0
        %5932 = vmatpush.msra.mxu0 0.0
        %5933 = vmatpush.msra.mxu0 0.0
        %5934 = vmatpush.msra.mxu0 0.0
        %5935 = vmatpush.msra.mxu0 0.0
        %5936 = vmatpush.msra.mxu0 0.0
        %5937 = vmatpush.msra.mxu0 0.0
        %5938 = vmatpush.msra.mxu0 0.0
        %5939 = vmatpush.msra.mxu0 0.0
        %5940 = vmatpush.msra.mxu0 0.0
        %5941 = vmatpush.msra.mxu0 0.0
        %5942 = vmatpush.msra.mxu0 %v4045
        %5943 = vmatpush.msra.mxu0 %v4044
        %5944 = vmatmul.f32.gmra.mxu0 %v5868
        %v5945 = vpop.f32.mrf.mxu0
        %v5946 = vadd.f32 0.0, %v5945
        %5947 = vmatmul.f32.gmra.mxu0 %v5871
        %v5948 = vpop.f32.mrf.mxu0
        %v5949 = vadd.f32 0.0, %v5948
        %5950 = vmatmul.f32.gmra.mxu0 %v5874
        %v5951 = vpop.f32.mrf.mxu0
        %v5952 = vadd.f32 0.0, %v5951
        %5953 = vdwg.mxu0
        %5954 = vmatpush.msra.mxu0 0.0
        %5955 = vmatpush.msra.mxu0 0.0
        %5956 = vmatpush.msra.mxu0 0.0
        %5957 = vmatpush.msra.mxu0 0.0
        %5958 = vmatpush.msra.mxu0 0.0
        %5959 = vmatpush.msra.mxu0 0.0
        %5960 = vmatpush.msra.mxu0 0.0
        %5961 = vmatpush.msra.mxu0 0.0
        %5962 = vmatpush.msra.mxu0 0.0
        %5963 = vmatpush.msra.mxu0 0.0
        %5964 = vmatpush.msra.mxu0 0.0
        %5965 = vmatpush.msra.mxu0 0.0
        %5966 = vmatpush.msra.mxu0 0.0
        %5967 = vmatpush.msra.mxu0 0.0
        %5968 = vmatpush.msra.mxu0 %v4043
        %5969 = vmatpush.msra.mxu0 %v4042
        %5970 = vmatmul.f32.gmra.mxu0 %v5868
        %v5971 = vpop.f32.mrf.mxu0
        %v5972 = vadd.f32 0.0, %v5971
        %5973 = vmatmul.f32.gmra.mxu0 %v5871
        %v5974 = vpop.f32.mrf.mxu0
        %v5975 = vadd.f32 0.0, %v5974
        %5976 = vmatmul.f32.gmra.mxu0 %v5874
        %v5977 = vpop.f32.mrf.mxu0
        %v5978 = vadd.f32 0.0, %v5977
        %5979 = vdwg.mxu0
        %5980 = vmatpush.msra.mxu0 0.0
        %5981 = vmatpush.msra.mxu0 0.0
        %5982 = vmatpush.msra.mxu0 0.0
        %5983 = vmatpush.msra.mxu0 0.0
        %5984 = vmatpush.msra.mxu0 0.0
        %5985 = vmatpush.msra.mxu0 0.0
        %5986 = vmatpush.msra.mxu0 0.0
        %5987 = vmatpush.msra.mxu0 0.0
        %5988 = vmatpush.msra.mxu0 0.0
        %5989 = vmatpush.msra.mxu0 0.0
        %5990 = vmatpush.msra.mxu0 0.0
        %5991 = vmatpush.msra.mxu0 0.0
        %5992 = vmatpush.msra.mxu0 0.0
        %5993 = vmatpush.msra.mxu0 0.0
        %5994 = vmatpush.msra.mxu0 %v4041
        %5995 = vmatpush.msra.mxu0 %v4040
        %5996 = vmatmul.f32.gmra.mxu0 %v5868
        %v5997 = vpop.f32.mrf.mxu0
        %v5998 = vadd.f32 0.0, %v5997
        %5999 = vmatmul.f32.gmra.mxu0 %v5871
        %v6000 = vpop.f32.mrf.mxu0
        %v6001 = vadd.f32 0.0, %v6000
        %6002 = vmatmul.f32.gmra.mxu0 %v5874
        %v6003 = vpop.f32.mrf.mxu0
        %v6004 = vadd.f32 0.0, %v6003
        %6005 = vdwg.mxu0
        %6006 = vmatpush.msra.mxu0 0.0
        %6007 = vmatpush.msra.mxu0 0.0
        %6008 = vmatpush.msra.mxu0 0.0
        %6009 = vmatpush.msra.mxu0 0.0
        %6010 = vmatpush.msra.mxu0 0.0
        %6011 = vmatpush.msra.mxu0 0.0
        %6012 = vmatpush.msra.mxu0 0.0
        %6013 = vmatpush.msra.mxu0 0.0
        %6014 = vmatpush.msra.mxu0 0.0
        %6015 = vmatpush.msra.mxu0 0.0
        %6016 = vmatpush.msra.mxu0 0.0
        %6017 = vmatpush.msra.mxu0 0.0
        %6018 = vmatpush.msra.mxu0 0.0
        %6019 = vmatpush.msra.mxu0 0.0
        %6020 = vmatpush.msra.mxu0 %v4039
        %6021 = vmatpush.msra.mxu0 %v4038
        %6022 = vmatmul.f32.gmra.mxu0 %v5868
        %v6023 = vpop.f32.mrf.mxu0
        %v6024 = vadd.f32 0.0, %v6023
        %6025 = vmatmul.f32.gmra.mxu0 %v5871
        %v6026 = vpop.f32.mrf.mxu0
        %v6027 = vadd.f32 0.0, %v6026
        %6028 = vmatmul.f32.gmra.mxu0 %v5874
        %v6029 = vpop.f32.mrf.mxu0
        %v6030 = vadd.f32 0.0, %v6029
        %6031 = vdwg.mxu0
        %6032 = vmatpush.msra.mxu0 0.0
        %6033 = vmatpush.msra.mxu0 0.0
        %6034 = vmatpush.msra.mxu0 0.0
        %6035 = vmatpush.msra.mxu0 0.0
        %6036 = vmatpush.msra.mxu0 0.0
        %6037 = vmatpush.msra.mxu0 0.0
        %6038 = vmatpush.msra.mxu0 0.0
        %6039 = vmatpush.msra.mxu0 0.0
        %6040 = vmatpush.msra.mxu0 0.0
        %6041 = vmatpush.msra.mxu0 0.0
        %6042 = vmatpush.msra.mxu0 0.0
        %6043 = vmatpush.msra.mxu0 0.0
        %6044 = vmatpush.msra.mxu0 0.0
        %6045 = vmatpush.msra.mxu0 0.0
        %6046 = vmatpush.msra.mxu0 %v4037
        %6047 = vmatpush.msra.mxu0 %v4036
        %6048 = vmatmul.f32.gmra.mxu0 %v5868
        %v6049 = vpop.f32.mrf.mxu0
        %v6050 = vadd.f32 0.0, %v6049
        %6051 = vmatmul.f32.gmra.mxu0 %v5871
        %v6052 = vpop.f32.mrf.mxu0
        %v6053 = vadd.f32 0.0, %v6052
        %6054 = vmatmul.f32.gmra.mxu0 %v5874
        %v6055 = vpop.f32.mrf.mxu0
        %v6056 = vadd.f32 0.0, %v6055
        %6057 = vdwg.mxu0
        %6058 = vmatpush.msra.mxu0 0.0
        %6059 = vmatpush.msra.mxu0 0.0
        %6060 = vmatpush.msra.mxu0 0.0
        %6061 = vmatpush.msra.mxu0 0.0
        %6062 = vmatpush.msra.mxu0 0.0
        %6063 = vmatpush.msra.mxu0 0.0
        %6064 = vmatpush.msra.mxu0 0.0
        %6065 = vmatpush.msra.mxu0 0.0
        %6066 = vmatpush.msra.mxu0 0.0
        %6067 = vmatpush.msra.mxu0 0.0
        %6068 = vmatpush.msra.mxu0 0.0
        %6069 = vmatpush.msra.mxu0 0.0
        %6070 = vmatpush.msra.mxu0 0.0
        %6071 = vmatpush.msra.mxu0 0.0
        %6072 = vmatpush.msra.mxu0 %v4051
        %6073 = vmatpush.msra.mxu0 %v4050
        %6074 = vmatmul.f32.gmra.mxu0 %v5868
        %v6075 = vpop.f32.mrf.mxu0
        %v6076 = vadd.f32 0.0, %v6075
        %6077 = vmatmul.f32.gmra.mxu0 %v5871
        %v6078 = vpop.f32.mrf.mxu0
        %v6079 = vadd.f32 0.0, %v6078
        %6080 = vmatmul.f32.gmra.mxu0 %v5874
        %v6081 = vpop.f32.mrf.mxu0
        %v6082 = vadd.f32 0.0, %v6081
        %6083 = vdwg.mxu0
        %v6084 = vadd.f32 %v5839, %v5894
        %v6085 = vadd.f32 %v5840, %v5920
        %v6086 = vadd.f32 %v5841, %v5946
        %v6087 = vadd.f32 %v5842, %v5972
        %v6088 = vadd.f32 %v5843, %v5998
        %v6089 = vadd.f32 %v5844, %v6024
        %v6090 = vadd.f32 %v5845, %v6050
        %v6091 = vadd.f32 %v5846, %v6076
        %v6092 = vadd.f32 %v5847, %v5897
        %v6093 = vadd.f32 %v5848, %v5923
        %v6094 = vadd.f32 %v5849, %v5949
        %v6095 = vadd.f32 %v5850, %v5975
        %v6096 = vadd.f32 %v5851, %v6001
        %v6097 = vadd.f32 %v5852, %v6027
        %v6098 = vadd.f32 %v5853, %v6053
        %v6099 = vadd.f32 %v5854, %v6079
        %v6100 = vadd.f32 %v5855, %v5900
        %v6101 = vadd.f32 %v5856, %v5926
        %v6102 = vadd.f32 %v5857, %v5952
        %v6103 = vadd.f32 %v5858, %v5978
        %v6104 = vadd.f32 %v5859, %v6004
        %v6105 = vadd.f32 %v5860, %v6030
        %v6106 = vadd.f32 %v5861, %v6056
        %v6107 = vadd.f32 %v5862, %v6082
        %s6108 = scalar_lea.vmem %s5, 192
        %v6109 = vld [vmem:[%s6108] sm:$0xff]
        %v6110 = vld [vmem:[%s6108 + $0x8] sm:$0xff]
        %v6111 = vld [vmem:[%s6108 + $0x10] sm:$0xf]
        %v6113 = vsel %vm4056, %v6109, 0
        %v6116 = vsel %vm4056, %v6110, 0
        %v6119 = vsel %vm4056, %v6111, 0
        %6121 = vmatpush.msra.mxu0 0.0
        %6122 = vmatpush.msra.mxu0 0.0
        %6123 = vmatpush.msra.mxu0 0.0
        %6124 = vmatpush.msra.mxu0 0.0
        %6125 = vmatpush.msra.mxu0 0.0
        %6126 = vmatpush.msra.mxu0 0.0
        %6127 = vmatpush.msra.mxu0 0.0
        %6128 = vmatpush.msra.mxu0 0.0
        %6129 = vmatpush.msra.mxu0 0.0
        %6130 = vmatpush.msra.mxu0 0.0
        %6131 = vmatpush.msra.mxu0 0.0
        %6132 = vmatpush.msra.mxu0 0.0
        %6133 = vmatpush.msra.mxu0 0.0
        %6134 = vmatpush.msra.mxu0 0.0
        %6135 = vmatpush.msra.mxu0 %v4537
        %6136 = vmatpush.msra.mxu0 %v4536
        %6137 = vmatmul.f32.gmra.mxu0 %v6113
        %v6138 = vpop.f32.mrf.mxu0
        %v6139 = vadd.f32 0.0, %v6138
        %6140 = vmatmul.f32.gmra.mxu0 %v6116
        %v6141 = vpop.f32.mrf.mxu0
        %v6142 = vadd.f32 0.0, %v6141
        %6143 = vmatmul.f32.gmra.mxu0 %v6119
        %v6144 = vpop.f32.mrf.mxu0
        %v6145 = vadd.f32 0.0, %v6144
        %6146 = vdwg.mxu0
        %6147 = vmatpush.msra.mxu0 0.0
        %6148 = vmatpush.msra.mxu0 0.0
        %6149 = vmatpush.msra.mxu0 0.0
        %6150 = vmatpush.msra.mxu0 0.0
        %6151 = vmatpush.msra.mxu0 0.0
        %6152 = vmatpush.msra.mxu0 0.0
        %6153 = vmatpush.msra.mxu0 0.0
        %6154 = vmatpush.msra.mxu0 0.0
        %6155 = vmatpush.msra.mxu0 0.0
        %6156 = vmatpush.msra.mxu0 0.0
        %6157 = vmatpush.msra.mxu0 0.0
        %6158 = vmatpush.msra.mxu0 0.0
        %6159 = vmatpush.msra.mxu0 0.0
        %6160 = vmatpush.msra.mxu0 0.0
        %6161 = vmatpush.msra.mxu0 %v4535
        %6162 = vmatpush.msra.mxu0 %v4534
        %6163 = vmatmul.f32.gmra.mxu0 %v6113
        %v6164 = vpop.f32.mrf.mxu0
        %v6165 = vadd.f32 0.0, %v6164
        %6166 = vmatmul.f32.gmra.mxu0 %v6116
        %v6167 = vpop.f32.mrf.mxu0
        %v6168 = vadd.f32 0.0, %v6167
        %6169 = vmatmul.f32.gmra.mxu0 %v6119
        %v6170 = vpop.f32.mrf.mxu0
        %v6171 = vadd.f32 0.0, %v6170
        %6172 = vdwg.mxu0
        %6173 = vmatpush.msra.mxu0 0.0
        %6174 = vmatpush.msra.mxu0 0.0
        %6175 = vmatpush.msra.mxu0 0.0
        %6176 = vmatpush.msra.mxu0 0.0
        %6177 = vmatpush.msra.mxu0 0.0
        %6178 = vmatpush.msra.mxu0 0.0
        %6179 = vmatpush.msra.mxu0 0.0
        %6180 = vmatpush.msra.mxu0 0.0
        %6181 = vmatpush.msra.mxu0 0.0
        %6182 = vmatpush.msra.mxu0 0.0
        %6183 = vmatpush.msra.mxu0 0.0
        %6184 = vmatpush.msra.mxu0 0.0
        %6185 = vmatpush.msra.mxu0 0.0
        %6186 = vmatpush.msra.mxu0 0.0
        %6187 = vmatpush.msra.mxu0 %v4533
        %6188 = vmatpush.msra.mxu0 %v4532
        %6189 = vmatmul.f32.gmra.mxu0 %v6113
        %v6190 = vpop.f32.mrf.mxu0
        %v6191 = vadd.f32 0.0, %v6190
        %6192 = vmatmul.f32.gmra.mxu0 %v6116
        %v6193 = vpop.f32.mrf.mxu0
        %v6194 = vadd.f32 0.0, %v6193
        %6195 = vmatmul.f32.gmra.mxu0 %v6119
        %v6196 = vpop.f32.mrf.mxu0
        %v6197 = vadd.f32 0.0, %v6196
        %6198 = vdwg.mxu0
        %6199 = vmatpush.msra.mxu0 0.0
        %6200 = vmatpush.msra.mxu0 0.0
        %6201 = vmatpush.msra.mxu0 0.0
        %6202 = vmatpush.msra.mxu0 0.0
        %6203 = vmatpush.msra.mxu0 0.0
        %6204 = vmatpush.msra.mxu0 0.0
        %6205 = vmatpush.msra.mxu0 0.0
        %6206 = vmatpush.msra.mxu0 0.0
        %6207 = vmatpush.msra.mxu0 0.0
        %6208 = vmatpush.msra.mxu0 0.0
        %6209 = vmatpush.msra.mxu0 0.0
        %6210 = vmatpush.msra.mxu0 0.0
        %6211 = vmatpush.msra.mxu0 0.0
        %6212 = vmatpush.msra.mxu0 0.0
        %6213 = vmatpush.msra.mxu0 %v4531
        %6214 = vmatpush.msra.mxu0 %v4530
        %6215 = vmatmul.f32.gmra.mxu0 %v6113
        %v6216 = vpop.f32.mrf.mxu0
        %v6217 = vadd.f32 0.0, %v6216
        %6218 = vmatmul.f32.gmra.mxu0 %v6116
        %v6219 = vpop.f32.mrf.mxu0
        %v6220 = vadd.f32 0.0, %v6219
        %6221 = vmatmul.f32.gmra.mxu0 %v6119
        %v6222 = vpop.f32.mrf.mxu0
        %v6223 = vadd.f32 0.0, %v6222
        %6224 = vdwg.mxu0
        %6225 = vmatpush.msra.mxu0 0.0
        %6226 = vmatpush.msra.mxu0 0.0
        %6227 = vmatpush.msra.mxu0 0.0
        %6228 = vmatpush.msra.mxu0 0.0
        %6229 = vmatpush.msra.mxu0 0.0
        %6230 = vmatpush.msra.mxu0 0.0
        %6231 = vmatpush.msra.mxu0 0.0
        %6232 = vmatpush.msra.mxu0 0.0
        %6233 = vmatpush.msra.mxu0 0.0
        %6234 = vmatpush.msra.mxu0 0.0
        %6235 = vmatpush.msra.mxu0 0.0
        %6236 = vmatpush.msra.mxu0 0.0
        %6237 = vmatpush.msra.mxu0 0.0
        %6238 = vmatpush.msra.mxu0 0.0
        %6239 = vmatpush.msra.mxu0 %v4529
        %6240 = vmatpush.msra.mxu0 %v4528
        %6241 = vmatmul.f32.gmra.mxu0 %v6113
        %v6242 = vpop.f32.mrf.mxu0
        %v6243 = vadd.f32 0.0, %v6242
        %6244 = vmatmul.f32.gmra.mxu0 %v6116
        %v6245 = vpop.f32.mrf.mxu0
        %v6246 = vadd.f32 0.0, %v6245
        %6247 = vmatmul.f32.gmra.mxu0 %v6119
        %v6248 = vpop.f32.mrf.mxu0
        %v6249 = vadd.f32 0.0, %v6248
        %6250 = vdwg.mxu0
        %6251 = vmatpush.msra.mxu0 0.0
        %6252 = vmatpush.msra.mxu0 0.0
        %6253 = vmatpush.msra.mxu0 0.0
        %6254 = vmatpush.msra.mxu0 0.0
        %6255 = vmatpush.msra.mxu0 0.0
        %6256 = vmatpush.msra.mxu0 0.0
        %6257 = vmatpush.msra.mxu0 0.0
        %6258 = vmatpush.msra.mxu0 0.0
        %6259 = vmatpush.msra.mxu0 0.0
        %6260 = vmatpush.msra.mxu0 0.0
        %6261 = vmatpush.msra.mxu0 0.0
        %6262 = vmatpush.msra.mxu0 0.0
        %6263 = vmatpush.msra.mxu0 0.0
        %6264 = vmatpush.msra.mxu0 0.0
        %6265 = vmatpush.msra.mxu0 %v4527
        %6266 = vmatpush.msra.mxu0 %v4526
        %6267 = vmatmul.f32.gmra.mxu0 %v6113
        %v6268 = vpop.f32.mrf.mxu0
        %v6269 = vadd.f32 0.0, %v6268
        %6270 = vmatmul.f32.gmra.mxu0 %v6116
        %v6271 = vpop.f32.mrf.mxu0
        %v6272 = vadd.f32 0.0, %v6271
        %6273 = vmatmul.f32.gmra.mxu0 %v6119
        %v6274 = vpop.f32.mrf.mxu0
        %v6275 = vadd.f32 0.0, %v6274
        %6276 = vdwg.mxu0
        %6277 = vmatpush.msra.mxu0 0.0
        %6278 = vmatpush.msra.mxu0 0.0
        %6279 = vmatpush.msra.mxu0 0.0
        %6280 = vmatpush.msra.mxu0 0.0
        %6281 = vmatpush.msra.mxu0 0.0
        %6282 = vmatpush.msra.mxu0 0.0
        %6283 = vmatpush.msra.mxu0 0.0
        %6284 = vmatpush.msra.mxu0 0.0
        %6285 = vmatpush.msra.mxu0 0.0
        %6286 = vmatpush.msra.mxu0 0.0
        %6287 = vmatpush.msra.mxu0 0.0
        %6288 = vmatpush.msra.mxu0 0.0
        %6289 = vmatpush.msra.mxu0 0.0
        %6290 = vmatpush.msra.mxu0 0.0
        %6291 = vmatpush.msra.mxu0 %v4525
        %6292 = vmatpush.msra.mxu0 %v4524
        %6293 = vmatmul.f32.gmra.mxu0 %v6113
        %v6294 = vpop.f32.mrf.mxu0
        %v6295 = vadd.f32 0.0, %v6294
        %6296 = vmatmul.f32.gmra.mxu0 %v6116
        %v6297 = vpop.f32.mrf.mxu0
        %v6298 = vadd.f32 0.0, %v6297
        %6299 = vmatmul.f32.gmra.mxu0 %v6119
        %v6300 = vpop.f32.mrf.mxu0
        %v6301 = vadd.f32 0.0, %v6300
        %6302 = vdwg.mxu0
        %6303 = vmatpush.msra.mxu0 0.0
        %6304 = vmatpush.msra.mxu0 0.0
        %6305 = vmatpush.msra.mxu0 0.0
        %6306 = vmatpush.msra.mxu0 0.0
        %6307 = vmatpush.msra.mxu0 0.0
        %6308 = vmatpush.msra.mxu0 0.0
        %6309 = vmatpush.msra.mxu0 0.0
        %6310 = vmatpush.msra.mxu0 0.0
        %6311 = vmatpush.msra.mxu0 0.0
        %6312 = vmatpush.msra.mxu0 0.0
        %6313 = vmatpush.msra.mxu0 0.0
        %6314 = vmatpush.msra.mxu0 0.0
        %6315 = vmatpush.msra.mxu0 0.0
        %6316 = vmatpush.msra.mxu0 0.0
        %6317 = vmatpush.msra.mxu0 %v4539
        %6318 = vmatpush.msra.mxu0 %v4538
        %6319 = vmatmul.f32.gmra.mxu0 %v6113
        %v6320 = vpop.f32.mrf.mxu0
        %v6321 = vadd.f32 0.0, %v6320
        %6322 = vmatmul.f32.gmra.mxu0 %v6116
        %v6323 = vpop.f32.mrf.mxu0
        %v6324 = vadd.f32 0.0, %v6323
        %6325 = vmatmul.f32.gmra.mxu0 %v6119
        %v6326 = vpop.f32.mrf.mxu0
        %v6327 = vadd.f32 0.0, %v6326
        %6328 = vdwg.mxu0
        %v6329 = vadd.f32 %v6084, %v6139
        %v6330 = vadd.f32 %v6085, %v6165
        %v6331 = vadd.f32 %v6086, %v6191
        %v6332 = vadd.f32 %v6087, %v6217
        %v6333 = vadd.f32 %v6088, %v6243
        %v6334 = vadd.f32 %v6089, %v6269
        %v6335 = vadd.f32 %v6090, %v6295
        %v6336 = vadd.f32 %v6091, %v6321
        %v6337 = vadd.f32 %v6092, %v6142
        %v6338 = vadd.f32 %v6093, %v6168
        %v6339 = vadd.f32 %v6094, %v6194
        %v6340 = vadd.f32 %v6095, %v6220
        %v6341 = vadd.f32 %v6096, %v6246
        %v6342 = vadd.f32 %v6097, %v6272
        %v6343 = vadd.f32 %v6098, %v6298
        %v6344 = vadd.f32 %v6099, %v6324
        %v6345 = vadd.f32 %v6100, %v6145
        %v6346 = vadd.f32 %v6101, %v6171
        %v6347 = vadd.f32 %v6102, %v6197
        %v6348 = vadd.f32 %v6103, %v6223
        %v6349 = vadd.f32 %v6104, %v6249
        %v6350 = vadd.f32 %v6105, %v6275
        %v6351 = vadd.f32 %v6106, %v6301
        %v6352 = vadd.f32 %v6107, %v6327
        %v6353 = vld [vmem:[%s6] sm:$0xff]
        %v6354 = vld [vmem:[%s6 + $0x8] sm:$0xff]
        %v6355 = vld [vmem:[%s6 + $0x10] sm:$0xf]
        %6357 = vset.pattern.permute.xlu0 0
        %6358 = vperm.xlu0 %6357, %v6353
        %v6359 = vpop.permute.xlu0 %6358
        %6362 = vset.pattern.permute.xlu0 0
        %6363 = vperm.xlu0 %6362, %v6354
        %v6364 = vpop.permute.xlu0 %6363
        %6367 = vset.pattern.permute.xlu0 0
        %6368 = vperm.xlu0 %6367, %v6355
        %v6369 = vpop.permute.xlu0 %6368
        %v6371 = vadd.f32 %v6329, %v6359
        %v6372 = vadd.f32 %v6330, %v6359
        %v6373 = vadd.f32 %v6331, %v6359
        %v6374 = vadd.f32 %v6332, %v6359
        %v6375 = vadd.f32 %v6333, %v6359
        %v6376 = vadd.f32 %v6334, %v6359
        %v6377 = vadd.f32 %v6335, %v6359
        %v6378 = vadd.f32 %v6336, %v6359
        %v6379 = vadd.f32 %v6337, %v6364
        %v6380 = vadd.f32 %v6338, %v6364
        %v6381 = vadd.f32 %v6339, %v6364
        %v6382 = vadd.f32 %v6340, %v6364
        %v6383 = vadd.f32 %v6341, %v6364
        %v6384 = vadd.f32 %v6342, %v6364
        %v6385 = vadd.f32 %v6343, %v6364
        %v6386 = vadd.f32 %v6344, %v6364
        %v6387 = vadd.f32 %v6345, %v6369
        %v6388 = vadd.f32 %v6346, %v6369
        %v6389 = vadd.f32 %v6347, %v6369
        %v6390 = vadd.f32 %v6348, %v6369
        %v6391 = vadd.f32 %v6349, %v6369
        %v6392 = vadd.f32 %v6350, %v6369
        %v6393 = vadd.f32 %v6351, %v6369
        %v6394 = vadd.f32 %v6352, %v6369
        %v6395 = vmax.f32 %v6371, 0.0
        %v6396 = vmax.f32 %v6372, 0.0
        %v6397 = vmax.f32 %v6373, 0.0
        %v6398 = vmax.f32 %v6374, 0.0
        %v6399 = vmax.f32 %v6375, 0.0
        %v6400 = vmax.f32 %v6376, 0.0
        %v6401 = vmax.f32 %v6377, 0.0
        %v6402 = vmax.f32 %v6378, 0.0
        %v6403 = vmax.f32 %v6379, 0.0
        %v6404 = vmax.f32 %v6380, 0.0
        %v6405 = vmax.f32 %v6381, 0.0
        %v6406 = vmax.f32 %v6382, 0.0
        %v6407 = vmax.f32 %v6383, 0.0
        %v6408 = vmax.f32 %v6384, 0.0
        %v6409 = vmax.f32 %v6385, 0.0
        %v6410 = vmax.f32 %v6386, 0.0
        %v6411 = vmax.f32 %v6387, 0.0
        %v6412 = vmax.f32 %v6388, 0.0
        %v6413 = vmax.f32 %v6389, 0.0
        %v6414 = vmax.f32 %v6390, 0.0
        %v6415 = vmax.f32 %v6391, 0.0
        %v6416 = vmax.f32 %v6392, 0.0
        %v6417 = vmax.f32 %v6393, 0.0
        %v6418 = vmax.f32 %v6394, 0.0
        %v6419 = vsel %vm3927, %v6395, 0.0
        %v6420 = vsel %vm3928, %v6396, 0.0
        %v6421 = vsel %vm3929, %v6397, 0.0
        %v6422 = vsel %vm3930, %v6398, 0.0
        %v6423 = vsel %vm3931, %v6399, 0.0
        %v6424 = vsel %vm3932, %v6400, 0.0
        %v6425 = vsel %vm3933, %v6401, 0.0
        %v6426 = vsel %vm3934, %v6402, 0.0
        %v6427 = vsel %vm3927, %v6403, 0.0
        %v6428 = vsel %vm3928, %v6404, 0.0
        %v6429 = vsel %vm3929, %v6405, 0.0
        %v6430 = vsel %vm3930, %v6406, 0.0
        %v6431 = vsel %vm3931, %v6407, 0.0
        %v6432 = vsel %vm3932, %v6408, 0.0
        %v6433 = vsel %vm3933, %v6409, 0.0
        %v6434 = vsel %vm3934, %v6410, 0.0
        %v6435 = vsel %vm3927, %v6411, 0.0
        %v6436 = vsel %vm3928, %v6412, 0.0
        %v6437 = vsel %vm3929, %v6413, 0.0
        %v6438 = vsel %vm3930, %v6414, 0.0
        %v6439 = vsel %vm3931, %v6415, 0.0
        %v6440 = vsel %vm3932, %v6416, 0.0
        %v6441 = vsel %vm3933, %v6417, 0.0
        %v6442 = vsel %vm3934, %v6418, 0.0
        %6443 = vrot.lane.b32.xlu0 %v6419, 66
        %v6444 = vpop.permute.xlu0 %6443
        %6445 = vrot.lane.b32.xlu0 %v6427, 66
        %v6446 = vpop.permute.xlu0 %6445
        %6447 = vrot.lane.b32.xlu0 %v6435, 66
        %v6448 = vpop.permute.xlu0 %6447
        %6449 = vrot.lane.b32.xlu0 %v6420, 66
        %v6450 = vpop.permute.xlu0 %6449
        %6451 = vrot.lane.b32.xlu0 %v6428, 66
        %v6452 = vpop.permute.xlu0 %6451
        %6453 = vrot.lane.b32.xlu0 %v6436, 66
        %v6454 = vpop.permute.xlu0 %6453
        %6455 = vrot.lane.b32.xlu0 %v6421, 66
        %v6456 = vpop.permute.xlu0 %6455
        %6457 = vrot.lane.b32.xlu0 %v6429, 66
        %v6458 = vpop.permute.xlu0 %6457
        %6459 = vrot.lane.b32.xlu0 %v6437, 66
        %v6460 = vpop.permute.xlu0 %6459
        %6461 = vrot.lane.b32.xlu0 %v6422, 66
        %v6462 = vpop.permute.xlu0 %6461
        %6463 = vrot.lane.b32.xlu0 %v6430, 66
        %v6464 = vpop.permute.xlu0 %6463
        %6465 = vrot.lane.b32.xlu0 %v6438, 66
        %v6466 = vpop.permute.xlu0 %6465
        %6467 = vrot.lane.b32.xlu0 %v6423, 66
        %v6468 = vpop.permute.xlu0 %6467
        %6469 = vrot.lane.b32.xlu0 %v6431, 66
        %v6470 = vpop.permute.xlu0 %6469
        %6471 = vrot.lane.b32.xlu0 %v6439, 66
        %v6472 = vpop.permute.xlu0 %6471
        %6473 = vrot.lane.b32.xlu0 %v6424, 66
        %v6474 = vpop.permute.xlu0 %6473
        %6475 = vrot.lane.b32.xlu0 %v6432, 66
        %v6476 = vpop.permute.xlu0 %6475
        %6477 = vrot.lane.b32.xlu0 %v6440, 66
        %v6478 = vpop.permute.xlu0 %6477
        %6479 = vrot.lane.b32.xlu0 %v6425, 66
        %v6480 = vpop.permute.xlu0 %6479
        %6481 = vrot.lane.b32.xlu0 %v6433, 66
        %v6482 = vpop.permute.xlu0 %6481
        %6483 = vrot.lane.b32.xlu0 %v6441, 66
        %v6484 = vpop.permute.xlu0 %6483
        %6485 = vrot.lane.b32.xlu0 %v6426, 66
        %v6486 = vpop.permute.xlu0 %6485
        %6487 = vrot.lane.b32.xlu0 %v6434, 66
        %v6488 = vpop.permute.xlu0 %6487
        %6489 = vrot.lane.b32.xlu0 %v6442, 66
        %v6490 = vpop.permute.xlu0 %6489
        %v6491 = vsel %vm3983, %v6480, %v6486
        %v6492 = vsel %vm3983, %v6482, %v6488
        %v6493 = vsel %vm3983, %v6484, %v6490
        %v6494 = vsel %vm3983, %v6474, %v6480
        %v6495 = vsel %vm3983, %v6476, %v6482
        %v6496 = vsel %vm3983, %v6478, %v6484
        %v6497 = vsel %vm3983, %v6468, %v6474
        %v6498 = vsel %vm3983, %v6470, %v6476
        %v6499 = vsel %vm3983, %v6472, %v6478
        %v6500 = vsel %vm3983, %v6462, %v6468
        %v6501 = vsel %vm3983, %v6464, %v6470
        %v6502 = vsel %vm3983, %v6466, %v6472
        %v6503 = vsel %vm3983, %v6456, %v6462
        %v6504 = vsel %vm3983, %v6458, %v6464
        %v6505 = vsel %vm3983, %v6460, %v6466
        %v6506 = vsel %vm3983, %v6450, %v6456
        %v6507 = vsel %vm3983, %v6452, %v6458
        %v6508 = vsel %vm3983, %v6454, %v6460
        %v6509 = vsel %vm3983, %v6444, %v6450
        %v6510 = vsel %vm3983, %v6446, %v6452
        %v6511 = vsel %vm3983, %v6448, %v6454
        %v6512 = vsel %vm3983, %v6486, %v6444
        %v6513 = vsel %vm3983, %v6488, %v6446
        %v6514 = vsel %vm3983, %v6490, %v6448
        %v6515 = vld [vmem:[%s7] sm:$0xff]
        %v6516 = vld [vmem:[%s7 + $0x8] sm:$0x3]
        %6517 = vrot.lane.b32.xlu0 %v6419, 64
        %v6518 = vpop.permute.xlu0 %6517
        %6519 = vrot.lane.b32.xlu0 %v6427, 64
        %v6520 = vpop.permute.xlu0 %6519
        %6521 = vrot.lane.b32.xlu0 %v6435, 64
        %v6522 = vpop.permute.xlu0 %6521
        %6523 = vrot.lane.b32.xlu0 %v6420, 64
        %v6524 = vpop.permute.xlu0 %6523
        %6525 = vrot.lane.b32.xlu0 %v6428, 64
        %v6526 = vpop.permute.xlu0 %6525
        %6527 = vrot.lane.b32.xlu0 %v6436, 64
        %v6528 = vpop.permute.xlu0 %6527
        %6529 = vrot.lane.b32.xlu0 %v6421, 64
        %v6530 = vpop.permute.xlu0 %6529
        %6531 = vrot.lane.b32.xlu0 %v6429, 64
        %v6532 = vpop.permute.xlu0 %6531
        %6533 = vrot.lane.b32.xlu0 %v6437, 64
        %v6534 = vpop.permute.xlu0 %6533
        %6535 = vrot.lane.b32.xlu0 %v6422, 64
        %v6536 = vpop.permute.xlu0 %6535
        %6537 = vrot.lane.b32.xlu0 %v6430, 64
        %v6538 = vpop.permute.xlu0 %6537
        %6539 = vrot.lane.b32.xlu0 %v6438, 64
        %v6540 = vpop.permute.xlu0 %6539
        %6541 = vrot.lane.b32.xlu0 %v6423, 64
        %v6542 = vpop.permute.xlu0 %6541
        %6543 = vrot.lane.b32.xlu0 %v6431, 64
        %v6544 = vpop.permute.xlu0 %6543
        %6545 = vrot.lane.b32.xlu0 %v6439, 64
        %v6546 = vpop.permute.xlu0 %6545
        %6547 = vrot.lane.b32.xlu0 %v6424, 64
        %v6548 = vpop.permute.xlu0 %6547
        %6549 = vrot.lane.b32.xlu0 %v6432, 64
        %v6550 = vpop.permute.xlu0 %6549
        %6551 = vrot.lane.b32.xlu0 %v6440, 64
        %v6552 = vpop.permute.xlu0 %6551
        %6553 = vrot.lane.b32.xlu0 %v6425, 64
        %v6554 = vpop.permute.xlu0 %6553
        %6555 = vrot.lane.b32.xlu0 %v6433, 64
        %v6556 = vpop.permute.xlu0 %6555
        %6557 = vrot.lane.b32.xlu0 %v6441, 64
        %v6558 = vpop.permute.xlu0 %6557
        %6559 = vrot.lane.b32.xlu0 %v6426, 64
        %v6560 = vpop.permute.xlu0 %6559
        %6561 = vrot.lane.b32.xlu0 %v6434, 64
        %v6562 = vpop.permute.xlu0 %6561
        %6563 = vrot.lane.b32.xlu0 %v6442, 64
        %v6564 = vpop.permute.xlu0 %6563
        %v6565 = vsel %vm4035, %v6554, %v6560
        %v6566 = vsel %vm4035, %v6556, %v6562
        %v6567 = vsel %vm4035, %v6558, %v6564
        %v6568 = vsel %vm4035, %v6548, %v6554
        %v6569 = vsel %vm4035, %v6550, %v6556
        %v6570 = vsel %vm4035, %v6552, %v6558
        %v6571 = vsel %vm4035, %v6542, %v6548
        %v6572 = vsel %vm4035, %v6544, %v6550
        %v6573 = vsel %vm4035, %v6546, %v6552
        %v6574 = vsel %vm4035, %v6536, %v6542
        %v6575 = vsel %vm4035, %v6538, %v6544
        %v6576 = vsel %vm4035, %v6540, %v6546
        %v6577 = vsel %vm4035, %v6530, %v6536
        %v6578 = vsel %vm4035, %v6532, %v6538
        %v6579 = vsel %vm4035, %v6534, %v6540
        %v6580 = vsel %vm4035, %v6524, %v6530
        %v6581 = vsel %vm4035, %v6526, %v6532
        %v6582 = vsel %vm4035, %v6528, %v6534
        %v6583 = vsel %vm4035, %v6518, %v6524
        %v6584 = vsel %vm4035, %v6520, %v6526
        %v6585 = vsel %vm4035, %v6522, %v6528
        %v6586 = vsel %vm4035, %v6560, %v6518
        %v6587 = vsel %vm4035, %v6562, %v6520
        %v6588 = vsel %vm4035, %v6564, %v6522
        %s6589 = scalar_lea.vmem %s7, 16
        %v6590 = vld [vmem:[%s6589] sm:$0xff]
        %v6591 = vld [vmem:[%s6589 + $0x8] sm:$0x3]
        %vm6592 = vcmask 162816
        %v6594 = vsel %vm6592, %v6590, 0
        %v6597 = vsel %vm6592, %v6591, 0
        %vm6599 = vcmask 1043456
        %v6601 = vsel %vm6599, %v6588, 0
        %v6604 = vsel %vm6599, %v6585, 0
        %v6607 = vsel %vm6599, %v6582, 0
        %v6610 = vsel %vm6599, %v6579, 0
        %v6613 = vsel %vm6599, %v6576, 0
        %v6616 = vsel %vm6599, %v6573, 0
        %v6619 = vsel %vm6599, %v6570, 0
        %v6622 = vsel %vm6599, %v6567, 0
        %6624 = vmatpush.msra.mxu0 0.0
        %6625 = vmatpush.msra.mxu0 0.0
        %6626 = vmatpush.msra.mxu0 0.0
        %6627 = vmatpush.msra.mxu0 0.0
        %6628 = vmatpush.msra.mxu0 0.0
        %6629 = vmatpush.msra.mxu0 0.0
        %6630 = vmatpush.msra.mxu0 0.0
        %6631 = vmatpush.msra.mxu0 0.0
        %6632 = vmatpush.msra.mxu0 0.0
        %6633 = vmatpush.msra.mxu0 0.0
        %6634 = vmatpush.msra.mxu0 0.0
        %6635 = vmatpush.msra.mxu0 0.0
        %6636 = vmatpush.msra.mxu0 0.0
        %6637 = vmatpush.msra.mxu0 %v6601
        %6638 = vmatpush.msra.mxu0 %v6587
        %6639 = vmatpush.msra.mxu0 %v6586
        %6640 = vmatmul.f32.gmra.mxu0 %v6594
        %v6641 = vpop.f32.mrf.mxu0
        %v6642 = vadd.f32 0.0, %v6641
        %6643 = vmatmul.f32.gmra.mxu0 %v6597
        %v6644 = vpop.f32.mrf.mxu0
        %v6645 = vadd.f32 0.0, %v6644
        %6646 = vdwg.mxu0
        %6647 = vmatpush.msra.mxu0 0.0
        %6648 = vmatpush.msra.mxu0 0.0
        %6649 = vmatpush.msra.mxu0 0.0
        %6650 = vmatpush.msra.mxu0 0.0
        %6651 = vmatpush.msra.mxu0 0.0
        %6652 = vmatpush.msra.mxu0 0.0
        %6653 = vmatpush.msra.mxu0 0.0
        %6654 = vmatpush.msra.mxu0 0.0
        %6655 = vmatpush.msra.mxu0 0.0
        %6656 = vmatpush.msra.mxu0 0.0
        %6657 = vmatpush.msra.mxu0 0.0
        %6658 = vmatpush.msra.mxu0 0.0
        %6659 = vmatpush.msra.mxu0 0.0
        %6660 = vmatpush.msra.mxu0 %v6604
        %6661 = vmatpush.msra.mxu0 %v6584
        %6662 = vmatpush.msra.mxu0 %v6583
        %6663 = vmatmul.f32.gmra.mxu0 %v6594
        %v6664 = vpop.f32.mrf.mxu0
        %v6665 = vadd.f32 0.0, %v6664
        %6666 = vmatmul.f32.gmra.mxu0 %v6597
        %v6667 = vpop.f32.mrf.mxu0
        %v6668 = vadd.f32 0.0, %v6667
        %6669 = vdwg.mxu0
        %6670 = vmatpush.msra.mxu0 0.0
        %6671 = vmatpush.msra.mxu0 0.0
        %6672 = vmatpush.msra.mxu0 0.0
        %6673 = vmatpush.msra.mxu0 0.0
        %6674 = vmatpush.msra.mxu0 0.0
        %6675 = vmatpush.msra.mxu0 0.0
        %6676 = vmatpush.msra.mxu0 0.0
        %6677 = vmatpush.msra.mxu0 0.0
        %6678 = vmatpush.msra.mxu0 0.0
        %6679 = vmatpush.msra.mxu0 0.0
        %6680 = vmatpush.msra.mxu0 0.0
        %6681 = vmatpush.msra.mxu0 0.0
        %6682 = vmatpush.msra.mxu0 0.0
        %6683 = vmatpush.msra.mxu0 %v6607
        %6684 = vmatpush.msra.mxu0 %v6581
        %6685 = vmatpush.msra.mxu0 %v6580
        %6686 = vmatmul.f32.gmra.mxu0 %v6594
        %v6687 = vpop.f32.mrf.mxu0
        %v6688 = vadd.f32 0.0, %v6687
        %6689 = vmatmul.f32.gmra.mxu0 %v6597
        %v6690 = vpop.f32.mrf.mxu0
        %v6691 = vadd.f32 0.0, %v6690
        %6692 = vdwg.mxu0
        %6693 = vmatpush.msra.mxu0 0.0
        %6694 = vmatpush.msra.mxu0 0.0
        %6695 = vmatpush.msra.mxu0 0.0
        %6696 = vmatpush.msra.mxu0 0.0
        %6697 = vmatpush.msra.mxu0 0.0
        %6698 = vmatpush.msra.mxu0 0.0
        %6699 = vmatpush.msra.mxu0 0.0
        %6700 = vmatpush.msra.mxu0 0.0
        %6701 = vmatpush.msra.mxu0 0.0
        %6702 = vmatpush.msra.mxu0 0.0
        %6703 = vmatpush.msra.mxu0 0.0
        %6704 = vmatpush.msra.mxu0 0.0
        %6705 = vmatpush.msra.mxu0 0.0
        %6706 = vmatpush.msra.mxu0 %v6610
        %6707 = vmatpush.msra.mxu0 %v6578
        %6708 = vmatpush.msra.mxu0 %v6577
        %6709 = vmatmul.f32.gmra.mxu0 %v6594
        %v6710 = vpop.f32.mrf.mxu0
        %v6711 = vadd.f32 0.0, %v6710
        %6712 = vmatmul.f32.gmra.mxu0 %v6597
        %v6713 = vpop.f32.mrf.mxu0
        %v6714 = vadd.f32 0.0, %v6713
        %6715 = vdwg.mxu0
        %6716 = vmatpush.msra.mxu0 0.0
        %6717 = vmatpush.msra.mxu0 0.0
        %6718 = vmatpush.msra.mxu0 0.0
        %6719 = vmatpush.msra.mxu0 0.0
        %6720 = vmatpush.msra.mxu0 0.0
        %6721 = vmatpush.msra.mxu0 0.0
        %6722 = vmatpush.msra.mxu0 0.0
        %6723 = vmatpush.msra.mxu0 0.0
        %6724 = vmatpush.msra.mxu0 0.0
        %6725 = vmatpush.msra.mxu0 0.0
        %6726 = vmatpush.msra.mxu0 0.0
        %6727 = vmatpush.msra.mxu0 0.0
        %6728 = vmatpush.msra.mxu0 0.0
        %6729 = vmatpush.msra.mxu0 %v6613
        %6730 = vmatpush.msra.mxu0 %v6575
        %6731 = vmatpush.msra.mxu0 %v6574
        %6732 = vmatmul.f32.gmra.mxu0 %v6594
        %v6733 = vpop.f32.mrf.mxu0
        %v6734 = vadd.f32 0.0, %v6733
        %6735 = vmatmul.f32.gmra.mxu0 %v6597
        %v6736 = vpop.f32.mrf.mxu0
        %v6737 = vadd.f32 0.0, %v6736
        %6738 = vdwg.mxu0
        %6739 = vmatpush.msra.mxu0 0.0
        %6740 = vmatpush.msra.mxu0 0.0
        %6741 = vmatpush.msra.mxu0 0.0
        %6742 = vmatpush.msra.mxu0 0.0
        %6743 = vmatpush.msra.mxu0 0.0
        %6744 = vmatpush.msra.mxu0 0.0
        %6745 = vmatpush.msra.mxu0 0.0
        %6746 = vmatpush.msra.mxu0 0.0
        %6747 = vmatpush.msra.mxu0 0.0
        %6748 = vmatpush.msra.mxu0 0.0
        %6749 = vmatpush.msra.mxu0 0.0
        %6750 = vmatpush.msra.mxu0 0.0
        %6751 = vmatpush.msra.mxu0 0.0
        %6752 = vmatpush.msra.mxu0 %v6616
        %6753 = vmatpush.msra.mxu0 %v6572
        %6754 = vmatpush.msra.mxu0 %v6571
        %6755 = vmatmul.f32.gmra.mxu0 %v6594
        %v6756 = vpop.f32.mrf.mxu0
        %v6757 = vadd.f32 0.0, %v6756
        %6758 = vmatmul.f32.gmra.mxu0 %v6597
        %v6759 = vpop.f32.mrf.mxu0
        %v6760 = vadd.f32 0.0, %v6759
        %6761 = vdwg.mxu0
        %6762 = vmatpush.msra.mxu0 0.0
        %6763 = vmatpush.msra.mxu0 0.0
        %6764 = vmatpush.msra.mxu0 0.0
        %6765 = vmatpush.msra.mxu0 0.0
        %6766 = vmatpush.msra.mxu0 0.0
        %6767 = vmatpush.msra.mxu0 0.0
        %6768 = vmatpush.msra.mxu0 0.0
        %6769 = vmatpush.msra.mxu0 0.0
        %6770 = vmatpush.msra.mxu0 0.0
        %6771 = vmatpush.msra.mxu0 0.0
        %6772 = vmatpush.msra.mxu0 0.0
        %6773 = vmatpush.msra.mxu0 0.0
        %6774 = vmatpush.msra.mxu0 0.0
        %6775 = vmatpush.msra.mxu0 %v6619
        %6776 = vmatpush.msra.mxu0 %v6569
        %6777 = vmatpush.msra.mxu0 %v6568
        %6778 = vmatmul.f32.gmra.mxu0 %v6594
        %v6779 = vpop.f32.mrf.mxu0
        %v6780 = vadd.f32 0.0, %v6779
        %6781 = vmatmul.f32.gmra.mxu0 %v6597
        %v6782 = vpop.f32.mrf.mxu0
        %v6783 = vadd.f32 0.0, %v6782
        %6784 = vdwg.mxu0
        %6785 = vmatpush.msra.mxu0 0.0
        %6786 = vmatpush.msra.mxu0 0.0
        %6787 = vmatpush.msra.mxu0 0.0
        %6788 = vmatpush.msra.mxu0 0.0
        %6789 = vmatpush.msra.mxu0 0.0
        %6790 = vmatpush.msra.mxu0 0.0
        %6791 = vmatpush.msra.mxu0 0.0
        %6792 = vmatpush.msra.mxu0 0.0
        %6793 = vmatpush.msra.mxu0 0.0
        %6794 = vmatpush.msra.mxu0 0.0
        %6795 = vmatpush.msra.mxu0 0.0
        %6796 = vmatpush.msra.mxu0 0.0
        %6797 = vmatpush.msra.mxu0 0.0
        %6798 = vmatpush.msra.mxu0 %v6622
        %6799 = vmatpush.msra.mxu0 %v6566
        %6800 = vmatpush.msra.mxu0 %v6565
        %6801 = vmatmul.f32.gmra.mxu0 %v6594
        %v6802 = vpop.f32.mrf.mxu0
        %v6803 = vadd.f32 0.0, %v6802
        %6804 = vmatmul.f32.gmra.mxu0 %v6597
        %v6805 = vpop.f32.mrf.mxu0
        %v6806 = vadd.f32 0.0, %v6805
        %6807 = vdwg.mxu0
        %v6809 = vsel %vm6592, %v6515, 0
        %v6812 = vsel %vm6592, %v6516, 0
        %v6815 = vsel %vm6599, %v6514, 0
        %v6818 = vsel %vm6599, %v6511, 0
        %v6821 = vsel %vm6599, %v6508, 0
        %v6824 = vsel %vm6599, %v6505, 0
        %v6827 = vsel %vm6599, %v6502, 0
        %v6830 = vsel %vm6599, %v6499, 0
        %v6833 = vsel %vm6599, %v6496, 0
        %v6836 = vsel %vm6599, %v6493, 0
        %6838 = vmatpush.msra.mxu0 0.0
        %6839 = vmatpush.msra.mxu0 0.0
        %6840 = vmatpush.msra.mxu0 0.0
        %6841 = vmatpush.msra.mxu0 0.0
        %6842 = vmatpush.msra.mxu0 0.0
        %6843 = vmatpush.msra.mxu0 0.0
        %6844 = vmatpush.msra.mxu0 0.0
        %6845 = vmatpush.msra.mxu0 0.0
        %6846 = vmatpush.msra.mxu0 0.0
        %6847 = vmatpush.msra.mxu0 0.0
        %6848 = vmatpush.msra.mxu0 0.0
        %6849 = vmatpush.msra.mxu0 0.0
        %6850 = vmatpush.msra.mxu0 0.0
        %6851 = vmatpush.msra.mxu0 %v6815
        %6852 = vmatpush.msra.mxu0 %v6513
        %6853 = vmatpush.msra.mxu0 %v6512
        %6854 = vmatmul.f32.gmra.mxu0 %v6809
        %v6855 = vpop.f32.mrf.mxu0
        %v6856 = vadd.f32 %v6642, %v6855
        %6857 = vmatmul.f32.gmra.mxu0 %v6812
        %v6858 = vpop.f32.mrf.mxu0
        %v6859 = vadd.f32 %v6645, %v6858
        %6860 = vdwg.mxu0
        %6861 = vmatpush.msra.mxu0 0.0
        %6862 = vmatpush.msra.mxu0 0.0
        %6863 = vmatpush.msra.mxu0 0.0
        %6864 = vmatpush.msra.mxu0 0.0
        %6865 = vmatpush.msra.mxu0 0.0
        %6866 = vmatpush.msra.mxu0 0.0
        %6867 = vmatpush.msra.mxu0 0.0
        %6868 = vmatpush.msra.mxu0 0.0
        %6869 = vmatpush.msra.mxu0 0.0
        %6870 = vmatpush.msra.mxu0 0.0
        %6871 = vmatpush.msra.mxu0 0.0
        %6872 = vmatpush.msra.mxu0 0.0
        %6873 = vmatpush.msra.mxu0 0.0
        %6874 = vmatpush.msra.mxu0 %v6818
        %6875 = vmatpush.msra.mxu0 %v6510
        %6876 = vmatpush.msra.mxu0 %v6509
        %6877 = vmatmul.f32.gmra.mxu0 %v6809
        %v6878 = vpop.f32.mrf.mxu0
        %v6879 = vadd.f32 %v6665, %v6878
        %6880 = vmatmul.f32.gmra.mxu0 %v6812
        %v6881 = vpop.f32.mrf.mxu0
        %v6882 = vadd.f32 %v6668, %v6881
        %6883 = vdwg.mxu0
        %6884 = vmatpush.msra.mxu0 0.0
        %6885 = vmatpush.msra.mxu0 0.0
        %6886 = vmatpush.msra.mxu0 0.0
        %6887 = vmatpush.msra.mxu0 0.0
        %6888 = vmatpush.msra.mxu0 0.0
        %6889 = vmatpush.msra.mxu0 0.0
        %6890 = vmatpush.msra.mxu0 0.0
        %6891 = vmatpush.msra.mxu0 0.0
        %6892 = vmatpush.msra.mxu0 0.0
        %6893 = vmatpush.msra.mxu0 0.0
        %6894 = vmatpush.msra.mxu0 0.0
        %6895 = vmatpush.msra.mxu0 0.0
        %6896 = vmatpush.msra.mxu0 0.0
        %6897 = vmatpush.msra.mxu0 %v6821
        %6898 = vmatpush.msra.mxu0 %v6507
        %6899 = vmatpush.msra.mxu0 %v6506
        %6900 = vmatmul.f32.gmra.mxu0 %v6809
        %v6901 = vpop.f32.mrf.mxu0
        %v6902 = vadd.f32 %v6688, %v6901
        %6903 = vmatmul.f32.gmra.mxu0 %v6812
        %v6904 = vpop.f32.mrf.mxu0
        %v6905 = vadd.f32 %v6691, %v6904
        %6906 = vdwg.mxu0
        %6907 = vmatpush.msra.mxu0 0.0
        %6908 = vmatpush.msra.mxu0 0.0
        %6909 = vmatpush.msra.mxu0 0.0
        %6910 = vmatpush.msra.mxu0 0.0
        %6911 = vmatpush.msra.mxu0 0.0
        %6912 = vmatpush.msra.mxu0 0.0
        %6913 = vmatpush.msra.mxu0 0.0
        %6914 = vmatpush.msra.mxu0 0.0
        %6915 = vmatpush.msra.mxu0 0.0
        %6916 = vmatpush.msra.mxu0 0.0
        %6917 = vmatpush.msra.mxu0 0.0
        %6918 = vmatpush.msra.mxu0 0.0
        %6919 = vmatpush.msra.mxu0 0.0
        %6920 = vmatpush.msra.mxu0 %v6824
        %6921 = vmatpush.msra.mxu0 %v6504
        %6922 = vmatpush.msra.mxu0 %v6503
        %6923 = vmatmul.f32.gmra.mxu0 %v6809
        %v6924 = vpop.f32.mrf.mxu0
        %v6925 = vadd.f32 %v6711, %v6924
        %6926 = vmatmul.f32.gmra.mxu0 %v6812
        %v6927 = vpop.f32.mrf.mxu0
        %v6928 = vadd.f32 %v6714, %v6927
        %6929 = vdwg.mxu0
        %6930 = vmatpush.msra.mxu0 0.0
        %6931 = vmatpush.msra.mxu0 0.0
        %6932 = vmatpush.msra.mxu0 0.0
        %6933 = vmatpush.msra.mxu0 0.0
        %6934 = vmatpush.msra.mxu0 0.0
        %6935 = vmatpush.msra.mxu0 0.0
        %6936 = vmatpush.msra.mxu0 0.0
        %6937 = vmatpush.msra.mxu0 0.0
        %6938 = vmatpush.msra.mxu0 0.0
        %6939 = vmatpush.msra.mxu0 0.0
        %6940 = vmatpush.msra.mxu0 0.0
        %6941 = vmatpush.msra.mxu0 0.0
        %6942 = vmatpush.msra.mxu0 0.0
        %6943 = vmatpush.msra.mxu0 %v6827
        %6944 = vmatpush.msra.mxu0 %v6501
        %6945 = vmatpush.msra.mxu0 %v6500
        %6946 = vmatmul.f32.gmra.mxu0 %v6809
        %v6947 = vpop.f32.mrf.mxu0
        %v6948 = vadd.f32 %v6734, %v6947
        %6949 = vmatmul.f32.gmra.mxu0 %v6812
        %v6950 = vpop.f32.mrf.mxu0
        %v6951 = vadd.f32 %v6737, %v6950
        %6952 = vdwg.mxu0
        %6953 = vmatpush.msra.mxu0 0.0
        %6954 = vmatpush.msra.mxu0 0.0
        %6955 = vmatpush.msra.mxu0 0.0
        %6956 = vmatpush.msra.mxu0 0.0
        %6957 = vmatpush.msra.mxu0 0.0
        %6958 = vmatpush.msra.mxu0 0.0
        %6959 = vmatpush.msra.mxu0 0.0
        %6960 = vmatpush.msra.mxu0 0.0
        %6961 = vmatpush.msra.mxu0 0.0
        %6962 = vmatpush.msra.mxu0 0.0
        %6963 = vmatpush.msra.mxu0 0.0
        %6964 = vmatpush.msra.mxu0 0.0
        %6965 = vmatpush.msra.mxu0 0.0
        %6966 = vmatpush.msra.mxu0 %v6830
        %6967 = vmatpush.msra.mxu0 %v6498
        %6968 = vmatpush.msra.mxu0 %v6497
        %6969 = vmatmul.f32.gmra.mxu0 %v6809
        %v6970 = vpop.f32.mrf.mxu0
        %v6971 = vadd.f32 %v6757, %v6970
        %6972 = vmatmul.f32.gmra.mxu0 %v6812
        %v6973 = vpop.f32.mrf.mxu0
        %v6974 = vadd.f32 %v6760, %v6973
        %6975 = vdwg.mxu0
        %6976 = vmatpush.msra.mxu0 0.0
        %6977 = vmatpush.msra.mxu0 0.0
        %6978 = vmatpush.msra.mxu0 0.0
        %6979 = vmatpush.msra.mxu0 0.0
        %6980 = vmatpush.msra.mxu0 0.0
        %6981 = vmatpush.msra.mxu0 0.0
        %6982 = vmatpush.msra.mxu0 0.0
        %6983 = vmatpush.msra.mxu0 0.0
        %6984 = vmatpush.msra.mxu0 0.0
        %6985 = vmatpush.msra.mxu0 0.0
        %6986 = vmatpush.msra.mxu0 0.0
        %6987 = vmatpush.msra.mxu0 0.0
        %6988 = vmatpush.msra.mxu0 0.0
        %6989 = vmatpush.msra.mxu0 %v6833
        %6990 = vmatpush.msra.mxu0 %v6495
        %6991 = vmatpush.msra.mxu0 %v6494
        %6992 = vmatmul.f32.gmra.mxu0 %v6809
        %v6993 = vpop.f32.mrf.mxu0
        %v6994 = vadd.f32 %v6780, %v6993
        %6995 = vmatmul.f32.gmra.mxu0 %v6812
        %v6996 = vpop.f32.mrf.mxu0
        %v6997 = vadd.f32 %v6783, %v6996
        %6998 = vdwg.mxu0
        %6999 = vmatpush.msra.mxu0 0.0
        %7000 = vmatpush.msra.mxu0 0.0
        %7001 = vmatpush.msra.mxu0 0.0
        %7002 = vmatpush.msra.mxu0 0.0
        %7003 = vmatpush.msra.mxu0 0.0
        %7004 = vmatpush.msra.mxu0 0.0
        %7005 = vmatpush.msra.mxu0 0.0
        %7006 = vmatpush.msra.mxu0 0.0
        %7007 = vmatpush.msra.mxu0 0.0
        %7008 = vmatpush.msra.mxu0 0.0
        %7009 = vmatpush.msra.mxu0 0.0
        %7010 = vmatpush.msra.mxu0 0.0
        %7011 = vmatpush.msra.mxu0 0.0
        %7012 = vmatpush.msra.mxu0 %v6836
        %7013 = vmatpush.msra.mxu0 %v6492
        %7014 = vmatpush.msra.mxu0 %v6491
        %7015 = vmatmul.f32.gmra.mxu0 %v6809
        %v7016 = vpop.f32.mrf.mxu0
        %v7017 = vadd.f32 %v6803, %v7016
        %7018 = vmatmul.f32.gmra.mxu0 %v6812
        %v7019 = vpop.f32.mrf.mxu0
        %v7020 = vadd.f32 %v6806, %v7019
        %7021 = vdwg.mxu0
        %7022 = vrot.lane.b32.xlu0 %v6419, 62
        %v7023 = vpop.permute.xlu0 %7022
        %7024 = vrot.lane.b32.xlu0 %v6427, 62
        %v7025 = vpop.permute.xlu0 %7024
        %7026 = vrot.lane.b32.xlu0 %v6435, 62
        %v7027 = vpop.permute.xlu0 %7026
        %7028 = vrot.lane.b32.xlu0 %v6420, 62
        %v7029 = vpop.permute.xlu0 %7028
        %7030 = vrot.lane.b32.xlu0 %v6428, 62
        %v7031 = vpop.permute.xlu0 %7030
        %7032 = vrot.lane.b32.xlu0 %v6436, 62
        %v7033 = vpop.permute.xlu0 %7032
        %7034 = vrot.lane.b32.xlu0 %v6421, 62
        %v7035 = vpop.permute.xlu0 %7034
        %7036 = vrot.lane.b32.xlu0 %v6429, 62
        %v7037 = vpop.permute.xlu0 %7036
        %7038 = vrot.lane.b32.xlu0 %v6437, 62
        %v7039 = vpop.permute.xlu0 %7038
        %7040 = vrot.lane.b32.xlu0 %v6422, 62
        %v7041 = vpop.permute.xlu0 %7040
        %7042 = vrot.lane.b32.xlu0 %v6430, 62
        %v7043 = vpop.permute.xlu0 %7042
        %7044 = vrot.lane.b32.xlu0 %v6438, 62
        %v7045 = vpop.permute.xlu0 %7044
        %7046 = vrot.lane.b32.xlu0 %v6423, 62
        %v7047 = vpop.permute.xlu0 %7046
        %7048 = vrot.lane.b32.xlu0 %v6431, 62
        %v7049 = vpop.permute.xlu0 %7048
        %7050 = vrot.lane.b32.xlu0 %v6439, 62
        %v7051 = vpop.permute.xlu0 %7050
        %7052 = vrot.lane.b32.xlu0 %v6424, 62
        %v7053 = vpop.permute.xlu0 %7052
        %7054 = vrot.lane.b32.xlu0 %v6432, 62
        %v7055 = vpop.permute.xlu0 %7054
        %7056 = vrot.lane.b32.xlu0 %v6440, 62
        %v7057 = vpop.permute.xlu0 %7056
        %7058 = vrot.lane.b32.xlu0 %v6425, 62
        %v7059 = vpop.permute.xlu0 %7058
        %7060 = vrot.lane.b32.xlu0 %v6433, 62
        %v7061 = vpop.permute.xlu0 %7060
        %7062 = vrot.lane.b32.xlu0 %v6441, 62
        %v7063 = vpop.permute.xlu0 %7062
        %7064 = vrot.lane.b32.xlu0 %v6426, 62
        %v7065 = vpop.permute.xlu0 %7064
        %7066 = vrot.lane.b32.xlu0 %v6434, 62
        %v7067 = vpop.permute.xlu0 %7066
        %7068 = vrot.lane.b32.xlu0 %v6442, 62
        %v7069 = vpop.permute.xlu0 %7068
        %v7070 = vsel %vm4523, %v7059, %v7065
        %v7071 = vsel %vm4523, %v7061, %v7067
        %v7072 = vsel %vm4523, %v7063, %v7069
        %v7073 = vsel %vm4523, %v7053, %v7059
        %v7074 = vsel %vm4523, %v7055, %v7061
        %v7075 = vsel %vm4523, %v7057, %v7063
        %v7076 = vsel %vm4523, %v7047, %v7053
        %v7077 = vsel %vm4523, %v7049, %v7055
        %v7078 = vsel %vm4523, %v7051, %v7057
        %v7079 = vsel %vm4523, %v7041, %v7047
        %v7080 = vsel %vm4523, %v7043, %v7049
        %v7081 = vsel %vm4523, %v7045, %v7051
        %v7082 = vsel %vm4523, %v7035, %v7041
        %v7083 = vsel %vm4523, %v7037, %v7043
        %v7084 = vsel %vm4523, %v7039, %v7045
        %v7085 = vsel %vm4523, %v7029, %v7035
        %v7086 = vsel %vm4523, %v7031, %v7037
        %v7087 = vsel %vm4523, %v7033, %v7039
        %v7088 = vsel %vm4523, %v7023, %v7029
        %v7089 = vsel %vm4523, %v7025, %v7031
        %v7090 = vsel %vm4523, %v7027, %v7033
        %v7091 = vsel %vm4523, %v7065, %v7023
        %v7092 = vsel %vm4523, %v7067, %v7025
        %v7093 = vsel %vm4523, %v7069, %v7027
        %s7094 = scalar_lea.vmem %s7, 32
        %v7095 = vld [vmem:[%s7094] sm:$0xff]
        %v7096 = vld [vmem:[%s7094 + $0x8] sm:$0x3]
        %v7098 = vsel %vm6592, %v7095, 0
        %v7101 = vsel %vm6592, %v7096, 0
        %v7104 = vsel %vm6599, %v7093, 0
        %v7107 = vsel %vm6599, %v7090, 0
        %v7110 = vsel %vm6599, %v7087, 0
        %v7113 = vsel %vm6599, %v7084, 0
        %v7116 = vsel %vm6599, %v7081, 0
        %v7119 = vsel %vm6599, %v7078, 0
        %v7122 = vsel %vm6599, %v7075, 0
        %v7125 = vsel %vm6599, %v7072, 0
        %7127 = vmatpush.msra.mxu0 0.0
        %7128 = vmatpush.msra.mxu0 0.0
        %7129 = vmatpush.msra.mxu0 0.0
        %7130 = vmatpush.msra.mxu0 0.0
        %7131 = vmatpush.msra.mxu0 0.0
        %7132 = vmatpush.msra.mxu0 0.0
        %7133 = vmatpush.msra.mxu0 0.0
        %7134 = vmatpush.msra.mxu0 0.0
        %7135 = vmatpush.msra.mxu0 0.0
        %7136 = vmatpush.msra.mxu0 0.0
        %7137 = vmatpush.msra.mxu0 0.0
        %7138 = vmatpush.msra.mxu0 0.0
        %7139 = vmatpush.msra.mxu0 0.0
        %7140 = vmatpush.msra.mxu0 %v7104
        %7141 = vmatpush.msra.mxu0 %v7092
        %7142 = vmatpush.msra.mxu0 %v7091
        %7143 = vmatmul.f32.gmra.mxu0 %v7098
        %v7144 = vpop.f32.mrf.mxu0
        %v7145 = vadd.f32 0.0, %v7144
        %7146 = vmatmul.f32.gmra.mxu0 %v7101
        %v7147 = vpop.f32.mrf.mxu0
        %v7148 = vadd.f32 0.0, %v7147
        %7149 = vdwg.mxu0
        %7150 = vmatpush.msra.mxu0 0.0
        %7151 = vmatpush.msra.mxu0 0.0
        %7152 = vmatpush.msra.mxu0 0.0
        %7153 = vmatpush.msra.mxu0 0.0
        %7154 = vmatpush.msra.mxu0 0.0
        %7155 = vmatpush.msra.mxu0 0.0
        %7156 = vmatpush.msra.mxu0 0.0
        %7157 = vmatpush.msra.mxu0 0.0
        %7158 = vmatpush.msra.mxu0 0.0
        %7159 = vmatpush.msra.mxu0 0.0
        %7160 = vmatpush.msra.mxu0 0.0
        %7161 = vmatpush.msra.mxu0 0.0
        %7162 = vmatpush.msra.mxu0 0.0
        %7163 = vmatpush.msra.mxu0 %v7107
        %7164 = vmatpush.msra.mxu0 %v7089
        %7165 = vmatpush.msra.mxu0 %v7088
        %7166 = vmatmul.f32.gmra.mxu0 %v7098
        %v7167 = vpop.f32.mrf.mxu0
        %v7168 = vadd.f32 0.0, %v7167
        %7169 = vmatmul.f32.gmra.mxu0 %v7101
        %v7170 = vpop.f32.mrf.mxu0
        %v7171 = vadd.f32 0.0, %v7170
        %7172 = vdwg.mxu0
        %7173 = vmatpush.msra.mxu0 0.0
        %7174 = vmatpush.msra.mxu0 0.0
        %7175 = vmatpush.msra.mxu0 0.0
        %7176 = vmatpush.msra.mxu0 0.0
        %7177 = vmatpush.msra.mxu0 0.0
        %7178 = vmatpush.msra.mxu0 0.0
        %7179 = vmatpush.msra.mxu0 0.0
        %7180 = vmatpush.msra.mxu0 0.0
        %7181 = vmatpush.msra.mxu0 0.0
        %7182 = vmatpush.msra.mxu0 0.0
        %7183 = vmatpush.msra.mxu0 0.0
        %7184 = vmatpush.msra.mxu0 0.0
        %7185 = vmatpush.msra.mxu0 0.0
        %7186 = vmatpush.msra.mxu0 %v7110
        %7187 = vmatpush.msra.mxu0 %v7086
        %7188 = vmatpush.msra.mxu0 %v7085
        %7189 = vmatmul.f32.gmra.mxu0 %v7098
        %v7190 = vpop.f32.mrf.mxu0
        %v7191 = vadd.f32 0.0, %v7190
        %7192 = vmatmul.f32.gmra.mxu0 %v7101
        %v7193 = vpop.f32.mrf.mxu0
        %v7194 = vadd.f32 0.0, %v7193
        %7195 = vdwg.mxu0
        %7196 = vmatpush.msra.mxu0 0.0
        %7197 = vmatpush.msra.mxu0 0.0
        %7198 = vmatpush.msra.mxu0 0.0
        %7199 = vmatpush.msra.mxu0 0.0
        %7200 = vmatpush.msra.mxu0 0.0
        %7201 = vmatpush.msra.mxu0 0.0
        %7202 = vmatpush.msra.mxu0 0.0
        %7203 = vmatpush.msra.mxu0 0.0
        %7204 = vmatpush.msra.mxu0 0.0
        %7205 = vmatpush.msra.mxu0 0.0
        %7206 = vmatpush.msra.mxu0 0.0
        %7207 = vmatpush.msra.mxu0 0.0
        %7208 = vmatpush.msra.mxu0 0.0
        %7209 = vmatpush.msra.mxu0 %v7113
        %7210 = vmatpush.msra.mxu0 %v7083
        %7211 = vmatpush.msra.mxu0 %v7082
        %7212 = vmatmul.f32.gmra.mxu0 %v7098
        %v7213 = vpop.f32.mrf.mxu0
        %v7214 = vadd.f32 0.0, %v7213
        %7215 = vmatmul.f32.gmra.mxu0 %v7101
        %v7216 = vpop.f32.mrf.mxu0
        %v7217 = vadd.f32 0.0, %v7216
        %7218 = vdwg.mxu0
        %7219 = vmatpush.msra.mxu0 0.0
        %7220 = vmatpush.msra.mxu0 0.0
        %7221 = vmatpush.msra.mxu0 0.0
        %7222 = vmatpush.msra.mxu0 0.0
        %7223 = vmatpush.msra.mxu0 0.0
        %7224 = vmatpush.msra.mxu0 0.0
        %7225 = vmatpush.msra.mxu0 0.0
        %7226 = vmatpush.msra.mxu0 0.0
        %7227 = vmatpush.msra.mxu0 0.0
        %7228 = vmatpush.msra.mxu0 0.0
        %7229 = vmatpush.msra.mxu0 0.0
        %7230 = vmatpush.msra.mxu0 0.0
        %7231 = vmatpush.msra.mxu0 0.0
        %7232 = vmatpush.msra.mxu0 %v7116
        %7233 = vmatpush.msra.mxu0 %v7080
        %7234 = vmatpush.msra.mxu0 %v7079
        %7235 = vmatmul.f32.gmra.mxu0 %v7098
        %v7236 = vpop.f32.mrf.mxu0
        %v7237 = vadd.f32 0.0, %v7236
        %7238 = vmatmul.f32.gmra.mxu0 %v7101
        %v7239 = vpop.f32.mrf.mxu0
        %v7240 = vadd.f32 0.0, %v7239
        %7241 = vdwg.mxu0
        %7242 = vmatpush.msra.mxu0 0.0
        %7243 = vmatpush.msra.mxu0 0.0
        %7244 = vmatpush.msra.mxu0 0.0
        %7245 = vmatpush.msra.mxu0 0.0
        %7246 = vmatpush.msra.mxu0 0.0
        %7247 = vmatpush.msra.mxu0 0.0
        %7248 = vmatpush.msra.mxu0 0.0
        %7249 = vmatpush.msra.mxu0 0.0
        %7250 = vmatpush.msra.mxu0 0.0
        %7251 = vmatpush.msra.mxu0 0.0
        %7252 = vmatpush.msra.mxu0 0.0
        %7253 = vmatpush.msra.mxu0 0.0
        %7254 = vmatpush.msra.mxu0 0.0
        %7255 = vmatpush.msra.mxu0 %v7119
        %7256 = vmatpush.msra.mxu0 %v7077
        %7257 = vmatpush.msra.mxu0 %v7076
        %7258 = vmatmul.f32.gmra.mxu0 %v7098
        %v7259 = vpop.f32.mrf.mxu0
        %v7260 = vadd.f32 0.0, %v7259
        %7261 = vmatmul.f32.gmra.mxu0 %v7101
        %v7262 = vpop.f32.mrf.mxu0
        %v7263 = vadd.f32 0.0, %v7262
        %7264 = vdwg.mxu0
        %7265 = vmatpush.msra.mxu0 0.0
        %7266 = vmatpush.msra.mxu0 0.0
        %7267 = vmatpush.msra.mxu0 0.0
        %7268 = vmatpush.msra.mxu0 0.0
        %7269 = vmatpush.msra.mxu0 0.0
        %7270 = vmatpush.msra.mxu0 0.0
        %7271 = vmatpush.msra.mxu0 0.0
        %7272 = vmatpush.msra.mxu0 0.0
        %7273 = vmatpush.msra.mxu0 0.0
        %7274 = vmatpush.msra.mxu0 0.0
        %7275 = vmatpush.msra.mxu0 0.0
        %7276 = vmatpush.msra.mxu0 0.0
        %7277 = vmatpush.msra.mxu0 0.0
        %7278 = vmatpush.msra.mxu0 %v7122
        %7279 = vmatpush.msra.mxu0 %v7074
        %7280 = vmatpush.msra.mxu0 %v7073
        %7281 = vmatmul.f32.gmra.mxu0 %v7098
        %v7282 = vpop.f32.mrf.mxu0
        %v7283 = vadd.f32 0.0, %v7282
        %7284 = vmatmul.f32.gmra.mxu0 %v7101
        %v7285 = vpop.f32.mrf.mxu0
        %v7286 = vadd.f32 0.0, %v7285
        %7287 = vdwg.mxu0
        %7288 = vmatpush.msra.mxu0 0.0
        %7289 = vmatpush.msra.mxu0 0.0
        %7290 = vmatpush.msra.mxu0 0.0
        %7291 = vmatpush.msra.mxu0 0.0
        %7292 = vmatpush.msra.mxu0 0.0
        %7293 = vmatpush.msra.mxu0 0.0
        %7294 = vmatpush.msra.mxu0 0.0
        %7295 = vmatpush.msra.mxu0 0.0
        %7296 = vmatpush.msra.mxu0 0.0
        %7297 = vmatpush.msra.mxu0 0.0
        %7298 = vmatpush.msra.mxu0 0.0
        %7299 = vmatpush.msra.mxu0 0.0
        %7300 = vmatpush.msra.mxu0 0.0
        %7301 = vmatpush.msra.mxu0 %v7125
        %7302 = vmatpush.msra.mxu0 %v7071
        %7303 = vmatpush.msra.mxu0 %v7070
        %7304 = vmatmul.f32.gmra.mxu0 %v7098
        %v7305 = vpop.f32.mrf.mxu0
        %v7306 = vadd.f32 0.0, %v7305
        %7307 = vmatmul.f32.gmra.mxu0 %v7101
        %v7308 = vpop.f32.mrf.mxu0
        %v7309 = vadd.f32 0.0, %v7308
        %7310 = vdwg.mxu0
        %v7311 = vadd.f32 %v6856, %v7145
        %v7312 = vadd.f32 %v6879, %v7168
        %v7313 = vadd.f32 %v6902, %v7191
        %v7314 = vadd.f32 %v6925, %v7214
        %v7315 = vadd.f32 %v6948, %v7237
        %v7316 = vadd.f32 %v6971, %v7260
        %v7317 = vadd.f32 %v6994, %v7283
        %v7318 = vadd.f32 %v7017, %v7306
        %v7319 = vadd.f32 %v6859, %v7148
        %v7320 = vadd.f32 %v6882, %v7171
        %v7321 = vadd.f32 %v6905, %v7194
        %v7322 = vadd.f32 %v6928, %v7217
        %v7323 = vadd.f32 %v6951, %v7240
        %v7324 = vadd.f32 %v6974, %v7263
        %v7325 = vadd.f32 %v6997, %v7286
        %v7326 = vadd.f32 %v7020, %v7309
        %7327 = vrot.lane.b32.xlu0 %v6419, 2
        %v7328 = vpop.permute.xlu0 %7327
        %7329 = vrot.lane.b32.xlu0 %v6427, 2
        %v7330 = vpop.permute.xlu0 %7329
        %7331 = vrot.lane.b32.xlu0 %v6435, 2
        %v7332 = vpop.permute.xlu0 %7331
        %7333 = vrot.lane.b32.xlu0 %v6420, 2
        %v7334 = vpop.permute.xlu0 %7333
        %7335 = vrot.lane.b32.xlu0 %v6428, 2
        %v7336 = vpop.permute.xlu0 %7335
        %7337 = vrot.lane.b32.xlu0 %v6436, 2
        %v7338 = vpop.permute.xlu0 %7337
        %7339 = vrot.lane.b32.xlu0 %v6421, 2
        %v7340 = vpop.permute.xlu0 %7339
        %7341 = vrot.lane.b32.xlu0 %v6429, 2
        %v7342 = vpop.permute.xlu0 %7341
        %7343 = vrot.lane.b32.xlu0 %v6437, 2
        %v7344 = vpop.permute.xlu0 %7343
        %7345 = vrot.lane.b32.xlu0 %v6422, 2
        %v7346 = vpop.permute.xlu0 %7345
        %7347 = vrot.lane.b32.xlu0 %v6430, 2
        %v7348 = vpop.permute.xlu0 %7347
        %7349 = vrot.lane.b32.xlu0 %v6438, 2
        %v7350 = vpop.permute.xlu0 %7349
        %7351 = vrot.lane.b32.xlu0 %v6423, 2
        %v7352 = vpop.permute.xlu0 %7351
        %7353 = vrot.lane.b32.xlu0 %v6431, 2
        %v7354 = vpop.permute.xlu0 %7353
        %7355 = vrot.lane.b32.xlu0 %v6439, 2
        %v7356 = vpop.permute.xlu0 %7355
        %7357 = vrot.lane.b32.xlu0 %v6424, 2
        %v7358 = vpop.permute.xlu0 %7357
        %7359 = vrot.lane.b32.xlu0 %v6432, 2
        %v7360 = vpop.permute.xlu0 %7359
        %7361 = vrot.lane.b32.xlu0 %v6440, 2
        %v7362 = vpop.permute.xlu0 %7361
        %7363 = vrot.lane.b32.xlu0 %v6425, 2
        %v7364 = vpop.permute.xlu0 %7363
        %7365 = vrot.lane.b32.xlu0 %v6433, 2
        %v7366 = vpop.permute.xlu0 %7365
        %7367 = vrot.lane.b32.xlu0 %v6441, 2
        %v7368 = vpop.permute.xlu0 %7367
        %7369 = vrot.lane.b32.xlu0 %v6426, 2
        %v7370 = vpop.permute.xlu0 %7369
        %7371 = vrot.lane.b32.xlu0 %v6434, 2
        %v7372 = vpop.permute.xlu0 %7371
        %7373 = vrot.lane.b32.xlu0 %v6442, 2
        %v7374 = vpop.permute.xlu0 %7373
        %v7375 = vsel %vm4817, %v7364, %v7370
        %v7376 = vsel %vm4817, %v7366, %v7372
        %v7377 = vsel %vm4817, %v7368, %v7374
        %v7378 = vsel %vm4817, %v7358, %v7364
        %v7379 = vsel %vm4817, %v7360, %v7366
        %v7380 = vsel %vm4817, %v7362, %v7368
        %v7381 = vsel %vm4817, %v7352, %v7358
        %v7382 = vsel %vm4817, %v7354, %v7360
        %v7383 = vsel %vm4817, %v7356, %v7362
        %v7384 = vsel %vm4817, %v7346, %v7352
        %v7385 = vsel %vm4817, %v7348, %v7354
        %v7386 = vsel %vm4817, %v7350, %v7356
        %v7387 = vsel %vm4817, %v7340, %v7346
        %v7388 = vsel %vm4817, %v7342, %v7348
        %v7389 = vsel %vm4817, %v7344, %v7350
        %v7390 = vsel %vm4817, %v7334, %v7340
        %v7391 = vsel %vm4817, %v7336, %v7342
        %v7392 = vsel %vm4817, %v7338, %v7344
        %v7393 = vsel %vm4817, %v7328, %v7334
        %v7394 = vsel %vm4817, %v7330, %v7336
        %v7395 = vsel %vm4817, %v7332, %v7338
        %v7396 = vsel %vm4817, %v7370, %v7328
        %v7397 = vsel %vm4817, %v7372, %v7330
        %v7398 = vsel %vm4817, %v7374, %v7332
        %s7399 = scalar_lea.vmem %s7, 48
        %v7400 = vld [vmem:[%s7399] sm:$0xff]
        %v7401 = vld [vmem:[%s7399 + $0x8] sm:$0x3]
        %v7403 = vsel %vm6592, %v7400, 0
        %v7406 = vsel %vm6592, %v7401, 0
        %v7409 = vsel %vm6599, %v7398, 0
        %v7412 = vsel %vm6599, %v7395, 0
        %v7415 = vsel %vm6599, %v7392, 0
        %v7418 = vsel %vm6599, %v7389, 0
        %v7421 = vsel %vm6599, %v7386, 0
        %v7424 = vsel %vm6599, %v7383, 0
        %v7427 = vsel %vm6599, %v7380, 0
        %v7430 = vsel %vm6599, %v7377, 0
        %7432 = vmatpush.msra.mxu0 0.0
        %7433 = vmatpush.msra.mxu0 0.0
        %7434 = vmatpush.msra.mxu0 0.0
        %7435 = vmatpush.msra.mxu0 0.0
        %7436 = vmatpush.msra.mxu0 0.0
        %7437 = vmatpush.msra.mxu0 0.0
        %7438 = vmatpush.msra.mxu0 0.0
        %7439 = vmatpush.msra.mxu0 0.0
        %7440 = vmatpush.msra.mxu0 0.0
        %7441 = vmatpush.msra.mxu0 0.0
        %7442 = vmatpush.msra.mxu0 0.0
        %7443 = vmatpush.msra.mxu0 0.0
        %7444 = vmatpush.msra.mxu0 0.0
        %7445 = vmatpush.msra.mxu0 %v7409
        %7446 = vmatpush.msra.mxu0 %v7397
        %7447 = vmatpush.msra.mxu0 %v7396
        %7448 = vmatmul.f32.gmra.mxu0 %v7403
        %v7449 = vpop.f32.mrf.mxu0
        %v7450 = vadd.f32 0.0, %v7449
        %7451 = vmatmul.f32.gmra.mxu0 %v7406
        %v7452 = vpop.f32.mrf.mxu0
        %v7453 = vadd.f32 0.0, %v7452
        %7454 = vdwg.mxu0
        %7455 = vmatpush.msra.mxu0 0.0
        %7456 = vmatpush.msra.mxu0 0.0
        %7457 = vmatpush.msra.mxu0 0.0
        %7458 = vmatpush.msra.mxu0 0.0
        %7459 = vmatpush.msra.mxu0 0.0
        %7460 = vmatpush.msra.mxu0 0.0
        %7461 = vmatpush.msra.mxu0 0.0
        %7462 = vmatpush.msra.mxu0 0.0
        %7463 = vmatpush.msra.mxu0 0.0
        %7464 = vmatpush.msra.mxu0 0.0
        %7465 = vmatpush.msra.mxu0 0.0
        %7466 = vmatpush.msra.mxu0 0.0
        %7467 = vmatpush.msra.mxu0 0.0
        %7468 = vmatpush.msra.mxu0 %v7412
        %7469 = vmatpush.msra.mxu0 %v7394
        %7470 = vmatpush.msra.mxu0 %v7393
        %7471 = vmatmul.f32.gmra.mxu0 %v7403
        %v7472 = vpop.f32.mrf.mxu0
        %v7473 = vadd.f32 0.0, %v7472
        %7474 = vmatmul.f32.gmra.mxu0 %v7406
        %v7475 = vpop.f32.mrf.mxu0
        %v7476 = vadd.f32 0.0, %v7475
        %7477 = vdwg.mxu0
        %7478 = vmatpush.msra.mxu0 0.0
        %7479 = vmatpush.msra.mxu0 0.0
        %7480 = vmatpush.msra.mxu0 0.0
        %7481 = vmatpush.msra.mxu0 0.0
        %7482 = vmatpush.msra.mxu0 0.0
        %7483 = vmatpush.msra.mxu0 0.0
        %7484 = vmatpush.msra.mxu0 0.0
        %7485 = vmatpush.msra.mxu0 0.0
        %7486 = vmatpush.msra.mxu0 0.0
        %7487 = vmatpush.msra.mxu0 0.0
        %7488 = vmatpush.msra.mxu0 0.0
        %7489 = vmatpush.msra.mxu0 0.0
        %7490 = vmatpush.msra.mxu0 0.0
        %7491 = vmatpush.msra.mxu0 %v7415
        %7492 = vmatpush.msra.mxu0 %v7391
        %7493 = vmatpush.msra.mxu0 %v7390
        %7494 = vmatmul.f32.gmra.mxu0 %v7403
        %v7495 = vpop.f32.mrf.mxu0
        %v7496 = vadd.f32 0.0, %v7495
        %7497 = vmatmul.f32.gmra.mxu0 %v7406
        %v7498 = vpop.f32.mrf.mxu0
        %v7499 = vadd.f32 0.0, %v7498
        %7500 = vdwg.mxu0
        %7501 = vmatpush.msra.mxu0 0.0
        %7502 = vmatpush.msra.mxu0 0.0
        %7503 = vmatpush.msra.mxu0 0.0
        %7504 = vmatpush.msra.mxu0 0.0
        %7505 = vmatpush.msra.mxu0 0.0
        %7506 = vmatpush.msra.mxu0 0.0
        %7507 = vmatpush.msra.mxu0 0.0
        %7508 = vmatpush.msra.mxu0 0.0
        %7509 = vmatpush.msra.mxu0 0.0
        %7510 = vmatpush.msra.mxu0 0.0
        %7511 = vmatpush.msra.mxu0 0.0
        %7512 = vmatpush.msra.mxu0 0.0
        %7513 = vmatpush.msra.mxu0 0.0
        %7514 = vmatpush.msra.mxu0 %v7418
        %7515 = vmatpush.msra.mxu0 %v7388
        %7516 = vmatpush.msra.mxu0 %v7387
        %7517 = vmatmul.f32.gmra.mxu0 %v7403
        %v7518 = vpop.f32.mrf.mxu0
        %v7519 = vadd.f32 0.0, %v7518
        %7520 = vmatmul.f32.gmra.mxu0 %v7406
        %v7521 = vpop.f32.mrf.mxu0
        %v7522 = vadd.f32 0.0, %v7521
        %7523 = vdwg.mxu0
        %7524 = vmatpush.msra.mxu0 0.0
        %7525 = vmatpush.msra.mxu0 0.0
        %7526 = vmatpush.msra.mxu0 0.0
        %7527 = vmatpush.msra.mxu0 0.0
        %7528 = vmatpush.msra.mxu0 0.0
        %7529 = vmatpush.msra.mxu0 0.0
        %7530 = vmatpush.msra.mxu0 0.0
        %7531 = vmatpush.msra.mxu0 0.0
        %7532 = vmatpush.msra.mxu0 0.0
        %7533 = vmatpush.msra.mxu0 0.0
        %7534 = vmatpush.msra.mxu0 0.0
        %7535 = vmatpush.msra.mxu0 0.0
        %7536 = vmatpush.msra.mxu0 0.0
        %7537 = vmatpush.msra.mxu0 %v7421
        %7538 = vmatpush.msra.mxu0 %v7385
        %7539 = vmatpush.msra.mxu0 %v7384
        %7540 = vmatmul.f32.gmra.mxu0 %v7403
        %v7541 = vpop.f32.mrf.mxu0
        %v7542 = vadd.f32 0.0, %v7541
        %7543 = vmatmul.f32.gmra.mxu0 %v7406
        %v7544 = vpop.f32.mrf.mxu0
        %v7545 = vadd.f32 0.0, %v7544
        %7546 = vdwg.mxu0
        %7547 = vmatpush.msra.mxu0 0.0
        %7548 = vmatpush.msra.mxu0 0.0
        %7549 = vmatpush.msra.mxu0 0.0
        %7550 = vmatpush.msra.mxu0 0.0
        %7551 = vmatpush.msra.mxu0 0.0
        %7552 = vmatpush.msra.mxu0 0.0
        %7553 = vmatpush.msra.mxu0 0.0
        %7554 = vmatpush.msra.mxu0 0.0
        %7555 = vmatpush.msra.mxu0 0.0
        %7556 = vmatpush.msra.mxu0 0.0
        %7557 = vmatpush.msra.mxu0 0.0
        %7558 = vmatpush.msra.mxu0 0.0
        %7559 = vmatpush.msra.mxu0 0.0
        %7560 = vmatpush.msra.mxu0 %v7424
        %7561 = vmatpush.msra.mxu0 %v7382
        %7562 = vmatpush.msra.mxu0 %v7381
        %7563 = vmatmul.f32.gmra.mxu0 %v7403
        %v7564 = vpop.f32.mrf.mxu0
        %v7565 = vadd.f32 0.0, %v7564
        %7566 = vmatmul.f32.gmra.mxu0 %v7406
        %v7567 = vpop.f32.mrf.mxu0
        %v7568 = vadd.f32 0.0, %v7567
        %7569 = vdwg.mxu0
        %7570 = vmatpush.msra.mxu0 0.0
        %7571 = vmatpush.msra.mxu0 0.0
        %7572 = vmatpush.msra.mxu0 0.0
        %7573 = vmatpush.msra.mxu0 0.0
        %7574 = vmatpush.msra.mxu0 0.0
        %7575 = vmatpush.msra.mxu0 0.0
        %7576 = vmatpush.msra.mxu0 0.0
        %7577 = vmatpush.msra.mxu0 0.0
        %7578 = vmatpush.msra.mxu0 0.0
        %7579 = vmatpush.msra.mxu0 0.0
        %7580 = vmatpush.msra.mxu0 0.0
        %7581 = vmatpush.msra.mxu0 0.0
        %7582 = vmatpush.msra.mxu0 0.0
        %7583 = vmatpush.msra.mxu0 %v7427
        %7584 = vmatpush.msra.mxu0 %v7379
        %7585 = vmatpush.msra.mxu0 %v7378
        %7586 = vmatmul.f32.gmra.mxu0 %v7403
        %v7587 = vpop.f32.mrf.mxu0
        %v7588 = vadd.f32 0.0, %v7587
        %7589 = vmatmul.f32.gmra.mxu0 %v7406
        %v7590 = vpop.f32.mrf.mxu0
        %v7591 = vadd.f32 0.0, %v7590
        %7592 = vdwg.mxu0
        %7593 = vmatpush.msra.mxu0 0.0
        %7594 = vmatpush.msra.mxu0 0.0
        %7595 = vmatpush.msra.mxu0 0.0
        %7596 = vmatpush.msra.mxu0 0.0
        %7597 = vmatpush.msra.mxu0 0.0
        %7598 = vmatpush.msra.mxu0 0.0
        %7599 = vmatpush.msra.mxu0 0.0
        %7600 = vmatpush.msra.mxu0 0.0
        %7601 = vmatpush.msra.mxu0 0.0
        %7602 = vmatpush.msra.mxu0 0.0
        %7603 = vmatpush.msra.mxu0 0.0
        %7604 = vmatpush.msra.mxu0 0.0
        %7605 = vmatpush.msra.mxu0 0.0
        %7606 = vmatpush.msra.mxu0 %v7430
        %7607 = vmatpush.msra.mxu0 %v7376
        %7608 = vmatpush.msra.mxu0 %v7375
        %7609 = vmatmul.f32.gmra.mxu0 %v7403
        %v7610 = vpop.f32.mrf.mxu0
        %v7611 = vadd.f32 0.0, %v7610
        %7612 = vmatmul.f32.gmra.mxu0 %v7406
        %v7613 = vpop.f32.mrf.mxu0
        %v7614 = vadd.f32 0.0, %v7613
        %7615 = vdwg.mxu0
        %v7616 = vadd.f32 %v7311, %v7450
        %v7617 = vadd.f32 %v7312, %v7473
        %v7618 = vadd.f32 %v7313, %v7496
        %v7619 = vadd.f32 %v7314, %v7519
        %v7620 = vadd.f32 %v7315, %v7542
        %v7621 = vadd.f32 %v7316, %v7565
        %v7622 = vadd.f32 %v7317, %v7588
        %v7623 = vadd.f32 %v7318, %v7611
        %v7624 = vadd.f32 %v7319, %v7453
        %v7625 = vadd.f32 %v7320, %v7476
        %v7626 = vadd.f32 %v7321, %v7499
        %v7627 = vadd.f32 %v7322, %v7522
        %v7628 = vadd.f32 %v7323, %v7545
        %v7629 = vadd.f32 %v7324, %v7568
        %v7630 = vadd.f32 %v7325, %v7591
        %v7631 = vadd.f32 %v7326, %v7614
        %s7632 = scalar_lea.vmem %s7, 64
        %v7633 = vld [vmem:[%s7632] sm:$0xff]
        %v7634 = vld [vmem:[%s7632 + $0x8] sm:$0x3]
        %v7636 = vsel %vm6592, %v7633, 0
        %v7639 = vsel %vm6592, %v7634, 0
        %v7642 = vsel %vm6599, %v6435, 0
        %v7645 = vsel %vm6599, %v6436, 0
        %v7648 = vsel %vm6599, %v6437, 0
        %v7651 = vsel %vm6599, %v6438, 0
        %v7654 = vsel %vm6599, %v6439, 0
        %v7657 = vsel %vm6599, %v6440, 0
        %v7660 = vsel %vm6599, %v6441, 0
        %v7663 = vsel %vm6599, %v6442, 0
        %7665 = vmatpush.msra.mxu0 0.0
        %7666 = vmatpush.msra.mxu0 0.0
        %7667 = vmatpush.msra.mxu0 0.0
        %7668 = vmatpush.msra.mxu0 0.0
        %7669 = vmatpush.msra.mxu0 0.0
        %7670 = vmatpush.msra.mxu0 0.0
        %7671 = vmatpush.msra.mxu0 0.0
        %7672 = vmatpush.msra.mxu0 0.0
        %7673 = vmatpush.msra.mxu0 0.0
        %7674 = vmatpush.msra.mxu0 0.0
        %7675 = vmatpush.msra.mxu0 0.0
        %7676 = vmatpush.msra.mxu0 0.0
        %7677 = vmatpush.msra.mxu0 0.0
        %7678 = vmatpush.msra.mxu0 %v7642
        %7679 = vmatpush.msra.mxu0 %v6427
        %7680 = vmatpush.msra.mxu0 %v6419
        %7681 = vmatmul.f32.gmra.mxu0 %v7636
        %v7682 = vpop.f32.mrf.mxu0
        %v7683 = vadd.f32 0.0, %v7682
        %7684 = vmatmul.f32.gmra.mxu0 %v7639
        %v7685 = vpop.f32.mrf.mxu0
        %v7686 = vadd.f32 0.0, %v7685
        %7687 = vdwg.mxu0
        %7688 = vmatpush.msra.mxu0 0.0
        %7689 = vmatpush.msra.mxu0 0.0
        %7690 = vmatpush.msra.mxu0 0.0
        %7691 = vmatpush.msra.mxu0 0.0
        %7692 = vmatpush.msra.mxu0 0.0
        %7693 = vmatpush.msra.mxu0 0.0
        %7694 = vmatpush.msra.mxu0 0.0
        %7695 = vmatpush.msra.mxu0 0.0
        %7696 = vmatpush.msra.mxu0 0.0
        %7697 = vmatpush.msra.mxu0 0.0
        %7698 = vmatpush.msra.mxu0 0.0
        %7699 = vmatpush.msra.mxu0 0.0
        %7700 = vmatpush.msra.mxu0 0.0
        %7701 = vmatpush.msra.mxu0 %v7645
        %7702 = vmatpush.msra.mxu0 %v6428
        %7703 = vmatpush.msra.mxu0 %v6420
        %7704 = vmatmul.f32.gmra.mxu0 %v7636
        %v7705 = vpop.f32.mrf.mxu0
        %v7706 = vadd.f32 0.0, %v7705
        %7707 = vmatmul.f32.gmra.mxu0 %v7639
        %v7708 = vpop.f32.mrf.mxu0
        %v7709 = vadd.f32 0.0, %v7708
        %7710 = vdwg.mxu0
        %7711 = vmatpush.msra.mxu0 0.0
        %7712 = vmatpush.msra.mxu0 0.0
        %7713 = vmatpush.msra.mxu0 0.0
        %7714 = vmatpush.msra.mxu0 0.0
        %7715 = vmatpush.msra.mxu0 0.0
        %7716 = vmatpush.msra.mxu0 0.0
        %7717 = vmatpush.msra.mxu0 0.0
        %7718 = vmatpush.msra.mxu0 0.0
        %7719 = vmatpush.msra.mxu0 0.0
        %7720 = vmatpush.msra.mxu0 0.0
        %7721 = vmatpush.msra.mxu0 0.0
        %7722 = vmatpush.msra.mxu0 0.0
        %7723 = vmatpush.msra.mxu0 0.0
        %7724 = vmatpush.msra.mxu0 %v7648
        %7725 = vmatpush.msra.mxu0 %v6429
        %7726 = vmatpush.msra.mxu0 %v6421
        %7727 = vmatmul.f32.gmra.mxu0 %v7636
        %v7728 = vpop.f32.mrf.mxu0
        %v7729 = vadd.f32 0.0, %v7728
        %7730 = vmatmul.f32.gmra.mxu0 %v7639
        %v7731 = vpop.f32.mrf.mxu0
        %v7732 = vadd.f32 0.0, %v7731
        %7733 = vdwg.mxu0
        %7734 = vmatpush.msra.mxu0 0.0
        %7735 = vmatpush.msra.mxu0 0.0
        %7736 = vmatpush.msra.mxu0 0.0
        %7737 = vmatpush.msra.mxu0 0.0
        %7738 = vmatpush.msra.mxu0 0.0
        %7739 = vmatpush.msra.mxu0 0.0
        %7740 = vmatpush.msra.mxu0 0.0
        %7741 = vmatpush.msra.mxu0 0.0
        %7742 = vmatpush.msra.mxu0 0.0
        %7743 = vmatpush.msra.mxu0 0.0
        %7744 = vmatpush.msra.mxu0 0.0
        %7745 = vmatpush.msra.mxu0 0.0
        %7746 = vmatpush.msra.mxu0 0.0
        %7747 = vmatpush.msra.mxu0 %v7651
        %7748 = vmatpush.msra.mxu0 %v6430
        %7749 = vmatpush.msra.mxu0 %v6422
        %7750 = vmatmul.f32.gmra.mxu0 %v7636
        %v7751 = vpop.f32.mrf.mxu0
        %v7752 = vadd.f32 0.0, %v7751
        %7753 = vmatmul.f32.gmra.mxu0 %v7639
        %v7754 = vpop.f32.mrf.mxu0
        %v7755 = vadd.f32 0.0, %v7754
        %7756 = vdwg.mxu0
        %7757 = vmatpush.msra.mxu0 0.0
        %7758 = vmatpush.msra.mxu0 0.0
        %7759 = vmatpush.msra.mxu0 0.0
        %7760 = vmatpush.msra.mxu0 0.0
        %7761 = vmatpush.msra.mxu0 0.0
        %7762 = vmatpush.msra.mxu0 0.0
        %7763 = vmatpush.msra.mxu0 0.0
        %7764 = vmatpush.msra.mxu0 0.0
        %7765 = vmatpush.msra.mxu0 0.0
        %7766 = vmatpush.msra.mxu0 0.0
        %7767 = vmatpush.msra.mxu0 0.0
        %7768 = vmatpush.msra.mxu0 0.0
        %7769 = vmatpush.msra.mxu0 0.0
        %7770 = vmatpush.msra.mxu0 %v7654
        %7771 = vmatpush.msra.mxu0 %v6431
        %7772 = vmatpush.msra.mxu0 %v6423
        %7773 = vmatmul.f32.gmra.mxu0 %v7636
        %v7774 = vpop.f32.mrf.mxu0
        %v7775 = vadd.f32 0.0, %v7774
        %7776 = vmatmul.f32.gmra.mxu0 %v7639
        %v7777 = vpop.f32.mrf.mxu0
        %v7778 = vadd.f32 0.0, %v7777
        %7779 = vdwg.mxu0
        %7780 = vmatpush.msra.mxu0 0.0
        %7781 = vmatpush.msra.mxu0 0.0
        %7782 = vmatpush.msra.mxu0 0.0
        %7783 = vmatpush.msra.mxu0 0.0
        %7784 = vmatpush.msra.mxu0 0.0
        %7785 = vmatpush.msra.mxu0 0.0
        %7786 = vmatpush.msra.mxu0 0.0
        %7787 = vmatpush.msra.mxu0 0.0
        %7788 = vmatpush.msra.mxu0 0.0
        %7789 = vmatpush.msra.mxu0 0.0
        %7790 = vmatpush.msra.mxu0 0.0
        %7791 = vmatpush.msra.mxu0 0.0
        %7792 = vmatpush.msra.mxu0 0.0
        %7793 = vmatpush.msra.mxu0 %v7657
        %7794 = vmatpush.msra.mxu0 %v6432
        %7795 = vmatpush.msra.mxu0 %v6424
        %7796 = vmatmul.f32.gmra.mxu0 %v7636
        %v7797 = vpop.f32.mrf.mxu0
        %v7798 = vadd.f32 0.0, %v7797
        %7799 = vmatmul.f32.gmra.mxu0 %v7639
        %v7800 = vpop.f32.mrf.mxu0
        %v7801 = vadd.f32 0.0, %v7800
        %7802 = vdwg.mxu0
        %7803 = vmatpush.msra.mxu0 0.0
        %7804 = vmatpush.msra.mxu0 0.0
        %7805 = vmatpush.msra.mxu0 0.0
        %7806 = vmatpush.msra.mxu0 0.0
        %7807 = vmatpush.msra.mxu0 0.0
        %7808 = vmatpush.msra.mxu0 0.0
        %7809 = vmatpush.msra.mxu0 0.0
        %7810 = vmatpush.msra.mxu0 0.0
        %7811 = vmatpush.msra.mxu0 0.0
        %7812 = vmatpush.msra.mxu0 0.0
        %7813 = vmatpush.msra.mxu0 0.0
        %7814 = vmatpush.msra.mxu0 0.0
        %7815 = vmatpush.msra.mxu0 0.0
        %7816 = vmatpush.msra.mxu0 %v7660
        %7817 = vmatpush.msra.mxu0 %v6433
        %7818 = vmatpush.msra.mxu0 %v6425
        %7819 = vmatmul.f32.gmra.mxu0 %v7636
        %v7820 = vpop.f32.mrf.mxu0
        %v7821 = vadd.f32 0.0, %v7820
        %7822 = vmatmul.f32.gmra.mxu0 %v7639
        %v7823 = vpop.f32.mrf.mxu0
        %v7824 = vadd.f32 0.0, %v7823
        %7825 = vdwg.mxu0
        %7826 = vmatpush.msra.mxu0 0.0
        %7827 = vmatpush.msra.mxu0 0.0
        %7828 = vmatpush.msra.mxu0 0.0
        %7829 = vmatpush.msra.mxu0 0.0
        %7830 = vmatpush.msra.mxu0 0.0
        %7831 = vmatpush.msra.mxu0 0.0
        %7832 = vmatpush.msra.mxu0 0.0
        %7833 = vmatpush.msra.mxu0 0.0
        %7834 = vmatpush.msra.mxu0 0.0
        %7835 = vmatpush.msra.mxu0 0.0
        %7836 = vmatpush.msra.mxu0 0.0
        %7837 = vmatpush.msra.mxu0 0.0
        %7838 = vmatpush.msra.mxu0 0.0
        %7839 = vmatpush.msra.mxu0 %v7663
        %7840 = vmatpush.msra.mxu0 %v6434
        %7841 = vmatpush.msra.mxu0 %v6426
        %7842 = vmatmul.f32.gmra.mxu0 %v7636
        %v7843 = vpop.f32.mrf.mxu0
        %v7844 = vadd.f32 0.0, %v7843
        %7845 = vmatmul.f32.gmra.mxu0 %v7639
        %v7846 = vpop.f32.mrf.mxu0
        %v7847 = vadd.f32 0.0, %v7846
        %7848 = vdwg.mxu0
        %v7849 = vadd.f32 %v7616, %v7683
        %v7850 = vadd.f32 %v7617, %v7706
        %v7851 = vadd.f32 %v7618, %v7729
        %v7852 = vadd.f32 %v7619, %v7752
        %v7853 = vadd.f32 %v7620, %v7775
        %v7854 = vadd.f32 %v7621, %v7798
        %v7855 = vadd.f32 %v7622, %v7821
        %v7856 = vadd.f32 %v7623, %v7844
        %v7857 = vadd.f32 %v7624, %v7686
        %v7858 = vadd.f32 %v7625, %v7709
        %v7859 = vadd.f32 %v7626, %v7732
        %v7860 = vadd.f32 %v7627, %v7755
        %v7861 = vadd.f32 %v7628, %v7778
        %v7862 = vadd.f32 %v7629, %v7801
        %v7863 = vadd.f32 %v7630, %v7824
        %v7864 = vadd.f32 %v7631, %v7847
        %7865 = vrot.lane.b32.xlu0 %v6419, 126
        %v7866 = vpop.permute.xlu0 %7865
        %7867 = vrot.lane.b32.xlu0 %v6427, 126
        %v7868 = vpop.permute.xlu0 %7867
        %7869 = vrot.lane.b32.xlu0 %v6435, 126
        %v7870 = vpop.permute.xlu0 %7869
        %7871 = vrot.lane.b32.xlu0 %v6420, 126
        %v7872 = vpop.permute.xlu0 %7871
        %7873 = vrot.lane.b32.xlu0 %v6428, 126
        %v7874 = vpop.permute.xlu0 %7873
        %7875 = vrot.lane.b32.xlu0 %v6436, 126
        %v7876 = vpop.permute.xlu0 %7875
        %7877 = vrot.lane.b32.xlu0 %v6421, 126
        %v7878 = vpop.permute.xlu0 %7877
        %7879 = vrot.lane.b32.xlu0 %v6429, 126
        %v7880 = vpop.permute.xlu0 %7879
        %7881 = vrot.lane.b32.xlu0 %v6437, 126
        %v7882 = vpop.permute.xlu0 %7881
        %7883 = vrot.lane.b32.xlu0 %v6422, 126
        %v7884 = vpop.permute.xlu0 %7883
        %7885 = vrot.lane.b32.xlu0 %v6430, 126
        %v7886 = vpop.permute.xlu0 %7885
        %7887 = vrot.lane.b32.xlu0 %v6438, 126
        %v7888 = vpop.permute.xlu0 %7887
        %7889 = vrot.lane.b32.xlu0 %v6423, 126
        %v7890 = vpop.permute.xlu0 %7889
        %7891 = vrot.lane.b32.xlu0 %v6431, 126
        %v7892 = vpop.permute.xlu0 %7891
        %7893 = vrot.lane.b32.xlu0 %v6439, 126
        %v7894 = vpop.permute.xlu0 %7893
        %7895 = vrot.lane.b32.xlu0 %v6424, 126
        %v7896 = vpop.permute.xlu0 %7895
        %7897 = vrot.lane.b32.xlu0 %v6432, 126
        %v7898 = vpop.permute.xlu0 %7897
        %7899 = vrot.lane.b32.xlu0 %v6440, 126
        %v7900 = vpop.permute.xlu0 %7899
        %7901 = vrot.lane.b32.xlu0 %v6425, 126
        %v7902 = vpop.permute.xlu0 %7901
        %7903 = vrot.lane.b32.xlu0 %v6433, 126
        %v7904 = vpop.permute.xlu0 %7903
        %7905 = vrot.lane.b32.xlu0 %v6441, 126
        %v7906 = vpop.permute.xlu0 %7905
        %7907 = vrot.lane.b32.xlu0 %v6426, 126
        %v7908 = vpop.permute.xlu0 %7907
        %7909 = vrot.lane.b32.xlu0 %v6434, 126
        %v7910 = vpop.permute.xlu0 %7909
        %7911 = vrot.lane.b32.xlu0 %v6442, 126
        %v7912 = vpop.permute.xlu0 %7911
        %v7913 = vsel %vm5356, %v7902, %v7908
        %v7914 = vsel %vm5356, %v7904, %v7910
        %v7915 = vsel %vm5356, %v7906, %v7912
        %v7916 = vsel %vm5356, %v7896, %v7902
        %v7917 = vsel %vm5356, %v7898, %v7904
        %v7918 = vsel %vm5356, %v7900, %v7906
        %v7919 = vsel %vm5356, %v7890, %v7896
        %v7920 = vsel %vm5356, %v7892, %v7898
        %v7921 = vsel %vm5356, %v7894, %v7900
        %v7922 = vsel %vm5356, %v7884, %v7890
        %v7923 = vsel %vm5356, %v7886, %v7892
        %v7924 = vsel %vm5356, %v7888, %v7894
        %v7925 = vsel %vm5356, %v7878, %v7884
        %v7926 = vsel %vm5356, %v7880, %v7886
        %v7927 = vsel %vm5356, %v7882, %v7888
        %v7928 = vsel %vm5356, %v7872, %v7878
        %v7929 = vsel %vm5356, %v7874, %v7880
        %v7930 = vsel %vm5356, %v7876, %v7882
        %v7931 = vsel %vm5356, %v7866, %v7872
        %v7932 = vsel %vm5356, %v7868, %v7874
        %v7933 = vsel %vm5356, %v7870, %v7876
        %v7934 = vsel %vm5356, %v7908, %v7866
        %v7935 = vsel %vm5356, %v7910, %v7868
        %v7936 = vsel %vm5356, %v7912, %v7870
        %s7937 = scalar_lea.vmem %s7, 80
        %v7938 = vld [vmem:[%s7937] sm:$0xff]
        %v7939 = vld [vmem:[%s7937 + $0x8] sm:$0x3]
        %v7941 = vsel %vm6592, %v7938, 0
        %v7944 = vsel %vm6592, %v7939, 0
        %v7947 = vsel %vm6599, %v7933, 0
        %v7950 = vsel %vm6599, %v7930, 0
        %v7953 = vsel %vm6599, %v7927, 0
        %v7956 = vsel %vm6599, %v7924, 0
        %v7959 = vsel %vm6599, %v7921, 0
        %v7962 = vsel %vm6599, %v7918, 0
        %v7965 = vsel %vm6599, %v7915, 0
        %v7968 = vsel %vm6599, %v7936, 0
        %7970 = vmatpush.msra.mxu0 0.0
        %7971 = vmatpush.msra.mxu0 0.0
        %7972 = vmatpush.msra.mxu0 0.0
        %7973 = vmatpush.msra.mxu0 0.0
        %7974 = vmatpush.msra.mxu0 0.0
        %7975 = vmatpush.msra.mxu0 0.0
        %7976 = vmatpush.msra.mxu0 0.0
        %7977 = vmatpush.msra.mxu0 0.0
        %7978 = vmatpush.msra.mxu0 0.0
        %7979 = vmatpush.msra.mxu0 0.0
        %7980 = vmatpush.msra.mxu0 0.0
        %7981 = vmatpush.msra.mxu0 0.0
        %7982 = vmatpush.msra.mxu0 0.0
        %7983 = vmatpush.msra.mxu0 %v7947
        %7984 = vmatpush.msra.mxu0 %v7932
        %7985 = vmatpush.msra.mxu0 %v7931
        %7986 = vmatmul.f32.gmra.mxu0 %v7941
        %v7987 = vpop.f32.mrf.mxu0
        %v7988 = vadd.f32 0.0, %v7987
        %7989 = vmatmul.f32.gmra.mxu0 %v7944
        %v7990 = vpop.f32.mrf.mxu0
        %v7991 = vadd.f32 0.0, %v7990
        %7992 = vdwg.mxu0
        %7993 = vmatpush.msra.mxu0 0.0
        %7994 = vmatpush.msra.mxu0 0.0
        %7995 = vmatpush.msra.mxu0 0.0
        %7996 = vmatpush.msra.mxu0 0.0
        %7997 = vmatpush.msra.mxu0 0.0
        %7998 = vmatpush.msra.mxu0 0.0
        %7999 = vmatpush.msra.mxu0 0.0
        %8000 = vmatpush.msra.mxu0 0.0
        %8001 = vmatpush.msra.mxu0 0.0
        %8002 = vmatpush.msra.mxu0 0.0
        %8003 = vmatpush.msra.mxu0 0.0
        %8004 = vmatpush.msra.mxu0 0.0
        %8005 = vmatpush.msra.mxu0 0.0
        %8006 = vmatpush.msra.mxu0 %v7950
        %8007 = vmatpush.msra.mxu0 %v7929
        %8008 = vmatpush.msra.mxu0 %v7928
        %8009 = vmatmul.f32.gmra.mxu0 %v7941
        %v8010 = vpop.f32.mrf.mxu0
        %v8011 = vadd.f32 0.0, %v8010
        %8012 = vmatmul.f32.gmra.mxu0 %v7944
        %v8013 = vpop.f32.mrf.mxu0
        %v8014 = vadd.f32 0.0, %v8013
        %8015 = vdwg.mxu0
        %8016 = vmatpush.msra.mxu0 0.0
        %8017 = vmatpush.msra.mxu0 0.0
        %8018 = vmatpush.msra.mxu0 0.0
        %8019 = vmatpush.msra.mxu0 0.0
        %8020 = vmatpush.msra.mxu0 0.0
        %8021 = vmatpush.msra.mxu0 0.0
        %8022 = vmatpush.msra.mxu0 0.0
        %8023 = vmatpush.msra.mxu0 0.0
        %8024 = vmatpush.msra.mxu0 0.0
        %8025 = vmatpush.msra.mxu0 0.0
        %8026 = vmatpush.msra.mxu0 0.0
        %8027 = vmatpush.msra.mxu0 0.0
        %8028 = vmatpush.msra.mxu0 0.0
        %8029 = vmatpush.msra.mxu0 %v7953
        %8030 = vmatpush.msra.mxu0 %v7926
        %8031 = vmatpush.msra.mxu0 %v7925
        %8032 = vmatmul.f32.gmra.mxu0 %v7941
        %v8033 = vpop.f32.mrf.mxu0
        %v8034 = vadd.f32 0.0, %v8033
        %8035 = vmatmul.f32.gmra.mxu0 %v7944
        %v8036 = vpop.f32.mrf.mxu0
        %v8037 = vadd.f32 0.0, %v8036
        %8038 = vdwg.mxu0
        %8039 = vmatpush.msra.mxu0 0.0
        %8040 = vmatpush.msra.mxu0 0.0
        %8041 = vmatpush.msra.mxu0 0.0
        %8042 = vmatpush.msra.mxu0 0.0
        %8043 = vmatpush.msra.mxu0 0.0
        %8044 = vmatpush.msra.mxu0 0.0
        %8045 = vmatpush.msra.mxu0 0.0
        %8046 = vmatpush.msra.mxu0 0.0
        %8047 = vmatpush.msra.mxu0 0.0
        %8048 = vmatpush.msra.mxu0 0.0
        %8049 = vmatpush.msra.mxu0 0.0
        %8050 = vmatpush.msra.mxu0 0.0
        %8051 = vmatpush.msra.mxu0 0.0
        %8052 = vmatpush.msra.mxu0 %v7956
        %8053 = vmatpush.msra.mxu0 %v7923
        %8054 = vmatpush.msra.mxu0 %v7922
        %8055 = vmatmul.f32.gmra.mxu0 %v7941
        %v8056 = vpop.f32.mrf.mxu0
        %v8057 = vadd.f32 0.0, %v8056
        %8058 = vmatmul.f32.gmra.mxu0 %v7944
        %v8059 = vpop.f32.mrf.mxu0
        %v8060 = vadd.f32 0.0, %v8059
        %8061 = vdwg.mxu0
        %8062 = vmatpush.msra.mxu0 0.0
        %8063 = vmatpush.msra.mxu0 0.0
        %8064 = vmatpush.msra.mxu0 0.0
        %8065 = vmatpush.msra.mxu0 0.0
        %8066 = vmatpush.msra.mxu0 0.0
        %8067 = vmatpush.msra.mxu0 0.0
        %8068 = vmatpush.msra.mxu0 0.0
        %8069 = vmatpush.msra.mxu0 0.0
        %8070 = vmatpush.msra.mxu0 0.0
        %8071 = vmatpush.msra.mxu0 0.0
        %8072 = vmatpush.msra.mxu0 0.0
        %8073 = vmatpush.msra.mxu0 0.0
        %8074 = vmatpush.msra.mxu0 0.0
        %8075 = vmatpush.msra.mxu0 %v7959
        %8076 = vmatpush.msra.mxu0 %v7920
        %8077 = vmatpush.msra.mxu0 %v7919
        %8078 = vmatmul.f32.gmra.mxu0 %v7941
        %v8079 = vpop.f32.mrf.mxu0
        %v8080 = vadd.f32 0.0, %v8079
        %8081 = vmatmul.f32.gmra.mxu0 %v7944
        %v8082 = vpop.f32.mrf.mxu0
        %v8083 = vadd.f32 0.0, %v8082
        %8084 = vdwg.mxu0
        %8085 = vmatpush.msra.mxu0 0.0
        %8086 = vmatpush.msra.mxu0 0.0
        %8087 = vmatpush.msra.mxu0 0.0
        %8088 = vmatpush.msra.mxu0 0.0
        %8089 = vmatpush.msra.mxu0 0.0
        %8090 = vmatpush.msra.mxu0 0.0
        %8091 = vmatpush.msra.mxu0 0.0
        %8092 = vmatpush.msra.mxu0 0.0
        %8093 = vmatpush.msra.mxu0 0.0
        %8094 = vmatpush.msra.mxu0 0.0
        %8095 = vmatpush.msra.mxu0 0.0
        %8096 = vmatpush.msra.mxu0 0.0
        %8097 = vmatpush.msra.mxu0 0.0
        %8098 = vmatpush.msra.mxu0 %v7962
        %8099 = vmatpush.msra.mxu0 %v7917
        %8100 = vmatpush.msra.mxu0 %v7916
        %8101 = vmatmul.f32.gmra.mxu0 %v7941
        %v8102 = vpop.f32.mrf.mxu0
        %v8103 = vadd.f32 0.0, %v8102
        %8104 = vmatmul.f32.gmra.mxu0 %v7944
        %v8105 = vpop.f32.mrf.mxu0
        %v8106 = vadd.f32 0.0, %v8105
        %8107 = vdwg.mxu0
        %8108 = vmatpush.msra.mxu0 0.0
        %8109 = vmatpush.msra.mxu0 0.0
        %8110 = vmatpush.msra.mxu0 0.0
        %8111 = vmatpush.msra.mxu0 0.0
        %8112 = vmatpush.msra.mxu0 0.0
        %8113 = vmatpush.msra.mxu0 0.0
        %8114 = vmatpush.msra.mxu0 0.0
        %8115 = vmatpush.msra.mxu0 0.0
        %8116 = vmatpush.msra.mxu0 0.0
        %8117 = vmatpush.msra.mxu0 0.0
        %8118 = vmatpush.msra.mxu0 0.0
        %8119 = vmatpush.msra.mxu0 0.0
        %8120 = vmatpush.msra.mxu0 0.0
        %8121 = vmatpush.msra.mxu0 %v7965
        %8122 = vmatpush.msra.mxu0 %v7914
        %8123 = vmatpush.msra.mxu0 %v7913
        %8124 = vmatmul.f32.gmra.mxu0 %v7941
        %v8125 = vpop.f32.mrf.mxu0
        %v8126 = vadd.f32 0.0, %v8125
        %8127 = vmatmul.f32.gmra.mxu0 %v7944
        %v8128 = vpop.f32.mrf.mxu0
        %v8129 = vadd.f32 0.0, %v8128
        %8130 = vdwg.mxu0
        %8131 = vmatpush.msra.mxu0 0.0
        %8132 = vmatpush.msra.mxu0 0.0
        %8133 = vmatpush.msra.mxu0 0.0
        %8134 = vmatpush.msra.mxu0 0.0
        %8135 = vmatpush.msra.mxu0 0.0
        %8136 = vmatpush.msra.mxu0 0.0
        %8137 = vmatpush.msra.mxu0 0.0
        %8138 = vmatpush.msra.mxu0 0.0
        %8139 = vmatpush.msra.mxu0 0.0
        %8140 = vmatpush.msra.mxu0 0.0
        %8141 = vmatpush.msra.mxu0 0.0
        %8142 = vmatpush.msra.mxu0 0.0
        %8143 = vmatpush.msra.mxu0 0.0
        %8144 = vmatpush.msra.mxu0 %v7968
        %8145 = vmatpush.msra.mxu0 %v7935
        %8146 = vmatpush.msra.mxu0 %v7934
        %8147 = vmatmul.f32.gmra.mxu0 %v7941
        %v8148 = vpop.f32.mrf.mxu0
        %v8149 = vadd.f32 0.0, %v8148
        %8150 = vmatmul.f32.gmra.mxu0 %v7944
        %v8151 = vpop.f32.mrf.mxu0
        %v8152 = vadd.f32 0.0, %v8151
        %8153 = vdwg.mxu0
        %v8154 = vadd.f32 %v7849, %v7988
        %v8155 = vadd.f32 %v7850, %v8011
        %v8156 = vadd.f32 %v7851, %v8034
        %v8157 = vadd.f32 %v7852, %v8057
        %v8158 = vadd.f32 %v7853, %v8080
        %v8159 = vadd.f32 %v7854, %v8103
        %v8160 = vadd.f32 %v7855, %v8126
        %v8161 = vadd.f32 %v7856, %v8149
        %v8162 = vadd.f32 %v7857, %v7991
        %v8163 = vadd.f32 %v7858, %v8014
        %v8164 = vadd.f32 %v7859, %v8037
        %v8165 = vadd.f32 %v7860, %v8060
        %v8166 = vadd.f32 %v7861, %v8083
        %v8167 = vadd.f32 %v7862, %v8106
        %v8168 = vadd.f32 %v7863, %v8129
        %v8169 = vadd.f32 %v7864, %v8152
        %s8170 = scalar_lea.vmem %s7, 96
        %v8171 = vld [vmem:[%s8170] sm:$0xff]
        %v8172 = vld [vmem:[%s8170 + $0x8] sm:$0x3]
        %v8174 = vsel %vm6592, %v8171, 0
        %v8177 = vsel %vm6592, %v8172, 0
        %8179 = vmatpush.msra.mxu0 0.0
        %8180 = vmatpush.msra.mxu0 0.0
        %8181 = vmatpush.msra.mxu0 0.0
        %8182 = vmatpush.msra.mxu0 0.0
        %8183 = vmatpush.msra.mxu0 0.0
        %8184 = vmatpush.msra.mxu0 0.0
        %8185 = vmatpush.msra.mxu0 0.0
        %8186 = vmatpush.msra.mxu0 0.0
        %8187 = vmatpush.msra.mxu0 0.0
        %8188 = vmatpush.msra.mxu0 0.0
        %8189 = vmatpush.msra.mxu0 0.0
        %8190 = vmatpush.msra.mxu0 0.0
        %8191 = vmatpush.msra.mxu0 0.0
        %8192 = vmatpush.msra.mxu0 %v6818
        %8193 = vmatpush.msra.mxu0 %v6510
        %8194 = vmatpush.msra.mxu0 %v6509
        %8195 = vmatmul.f32.gmra.mxu0 %v8174
        %v8196 = vpop.f32.mrf.mxu0
        %v8197 = vadd.f32 0.0, %v8196
        %8198 = vmatmul.f32.gmra.mxu0 %v8177
        %v8199 = vpop.f32.mrf.mxu0
        %v8200 = vadd.f32 0.0, %v8199
        %8201 = vdwg.mxu0
        %8202 = vmatpush.msra.mxu0 0.0
        %8203 = vmatpush.msra.mxu0 0.0
        %8204 = vmatpush.msra.mxu0 0.0
        %8205 = vmatpush.msra.mxu0 0.0
        %8206 = vmatpush.msra.mxu0 0.0
        %8207 = vmatpush.msra.mxu0 0.0
        %8208 = vmatpush.msra.mxu0 0.0
        %8209 = vmatpush.msra.mxu0 0.0
        %8210 = vmatpush.msra.mxu0 0.0
        %8211 = vmatpush.msra.mxu0 0.0
        %8212 = vmatpush.msra.mxu0 0.0
        %8213 = vmatpush.msra.mxu0 0.0
        %8214 = vmatpush.msra.mxu0 0.0
        %8215 = vmatpush.msra.mxu0 %v6821
        %8216 = vmatpush.msra.mxu0 %v6507
        %8217 = vmatpush.msra.mxu0 %v6506
        %8218 = vmatmul.f32.gmra.mxu0 %v8174
        %v8219 = vpop.f32.mrf.mxu0
        %v8220 = vadd.f32 0.0, %v8219
        %8221 = vmatmul.f32.gmra.mxu0 %v8177
        %v8222 = vpop.f32.mrf.mxu0
        %v8223 = vadd.f32 0.0, %v8222
        %8224 = vdwg.mxu0
        %8225 = vmatpush.msra.mxu0 0.0
        %8226 = vmatpush.msra.mxu0 0.0
        %8227 = vmatpush.msra.mxu0 0.0
        %8228 = vmatpush.msra.mxu0 0.0
        %8229 = vmatpush.msra.mxu0 0.0
        %8230 = vmatpush.msra.mxu0 0.0
        %8231 = vmatpush.msra.mxu0 0.0
        %8232 = vmatpush.msra.mxu0 0.0
        %8233 = vmatpush.msra.mxu0 0.0
        %8234 = vmatpush.msra.mxu0 0.0
        %8235 = vmatpush.msra.mxu0 0.0
        %8236 = vmatpush.msra.mxu0 0.0
        %8237 = vmatpush.msra.mxu0 0.0
        %8238 = vmatpush.msra.mxu0 %v6824
        %8239 = vmatpush.msra.mxu0 %v6504
        %8240 = vmatpush.msra.mxu0 %v6503
        %8241 = vmatmul.f32.gmra.mxu0 %v8174
        %v8242 = vpop.f32.mrf.mxu0
        %v8243 = vadd.f32 0.0, %v8242
        %8244 = vmatmul.f32.gmra.mxu0 %v8177
        %v8245 = vpop.f32.mrf.mxu0
        %v8246 = vadd.f32 0.0, %v8245
        %8247 = vdwg.mxu0
        %8248 = vmatpush.msra.mxu0 0.0
        %8249 = vmatpush.msra.mxu0 0.0
        %8250 = vmatpush.msra.mxu0 0.0
        %8251 = vmatpush.msra.mxu0 0.0
        %8252 = vmatpush.msra.mxu0 0.0
        %8253 = vmatpush.msra.mxu0 0.0
        %8254 = vmatpush.msra.mxu0 0.0
        %8255 = vmatpush.msra.mxu0 0.0
        %8256 = vmatpush.msra.mxu0 0.0
        %8257 = vmatpush.msra.mxu0 0.0
        %8258 = vmatpush.msra.mxu0 0.0
        %8259 = vmatpush.msra.mxu0 0.0
        %8260 = vmatpush.msra.mxu0 0.0
        %8261 = vmatpush.msra.mxu0 %v6827
        %8262 = vmatpush.msra.mxu0 %v6501
        %8263 = vmatpush.msra.mxu0 %v6500
        %8264 = vmatmul.f32.gmra.mxu0 %v8174
        %v8265 = vpop.f32.mrf.mxu0
        %v8266 = vadd.f32 0.0, %v8265
        %8267 = vmatmul.f32.gmra.mxu0 %v8177
        %v8268 = vpop.f32.mrf.mxu0
        %v8269 = vadd.f32 0.0, %v8268
        %8270 = vdwg.mxu0
        %8271 = vmatpush.msra.mxu0 0.0
        %8272 = vmatpush.msra.mxu0 0.0
        %8273 = vmatpush.msra.mxu0 0.0
        %8274 = vmatpush.msra.mxu0 0.0
        %8275 = vmatpush.msra.mxu0 0.0
        %8276 = vmatpush.msra.mxu0 0.0
        %8277 = vmatpush.msra.mxu0 0.0
        %8278 = vmatpush.msra.mxu0 0.0
        %8279 = vmatpush.msra.mxu0 0.0
        %8280 = vmatpush.msra.mxu0 0.0
        %8281 = vmatpush.msra.mxu0 0.0
        %8282 = vmatpush.msra.mxu0 0.0
        %8283 = vmatpush.msra.mxu0 0.0
        %8284 = vmatpush.msra.mxu0 %v6830
        %8285 = vmatpush.msra.mxu0 %v6498
        %8286 = vmatpush.msra.mxu0 %v6497
        %8287 = vmatmul.f32.gmra.mxu0 %v8174
        %v8288 = vpop.f32.mrf.mxu0
        %v8289 = vadd.f32 0.0, %v8288
        %8290 = vmatmul.f32.gmra.mxu0 %v8177
        %v8291 = vpop.f32.mrf.mxu0
        %v8292 = vadd.f32 0.0, %v8291
        %8293 = vdwg.mxu0
        %8294 = vmatpush.msra.mxu0 0.0
        %8295 = vmatpush.msra.mxu0 0.0
        %8296 = vmatpush.msra.mxu0 0.0
        %8297 = vmatpush.msra.mxu0 0.0
        %8298 = vmatpush.msra.mxu0 0.0
        %8299 = vmatpush.msra.mxu0 0.0
        %8300 = vmatpush.msra.mxu0 0.0
        %8301 = vmatpush.msra.mxu0 0.0
        %8302 = vmatpush.msra.mxu0 0.0
        %8303 = vmatpush.msra.mxu0 0.0
        %8304 = vmatpush.msra.mxu0 0.0
        %8305 = vmatpush.msra.mxu0 0.0
        %8306 = vmatpush.msra.mxu0 0.0
        %8307 = vmatpush.msra.mxu0 %v6833
        %8308 = vmatpush.msra.mxu0 %v6495
        %8309 = vmatpush.msra.mxu0 %v6494
        %8310 = vmatmul.f32.gmra.mxu0 %v8174
        %v8311 = vpop.f32.mrf.mxu0
        %v8312 = vadd.f32 0.0, %v8311
        %8313 = vmatmul.f32.gmra.mxu0 %v8177
        %v8314 = vpop.f32.mrf.mxu0
        %v8315 = vadd.f32 0.0, %v8314
        %8316 = vdwg.mxu0
        %8317 = vmatpush.msra.mxu0 0.0
        %8318 = vmatpush.msra.mxu0 0.0
        %8319 = vmatpush.msra.mxu0 0.0
        %8320 = vmatpush.msra.mxu0 0.0
        %8321 = vmatpush.msra.mxu0 0.0
        %8322 = vmatpush.msra.mxu0 0.0
        %8323 = vmatpush.msra.mxu0 0.0
        %8324 = vmatpush.msra.mxu0 0.0
        %8325 = vmatpush.msra.mxu0 0.0
        %8326 = vmatpush.msra.mxu0 0.0
        %8327 = vmatpush.msra.mxu0 0.0
        %8328 = vmatpush.msra.mxu0 0.0
        %8329 = vmatpush.msra.mxu0 0.0
        %8330 = vmatpush.msra.mxu0 %v6836
        %8331 = vmatpush.msra.mxu0 %v6492
        %8332 = vmatpush.msra.mxu0 %v6491
        %8333 = vmatmul.f32.gmra.mxu0 %v8174
        %v8334 = vpop.f32.mrf.mxu0
        %v8335 = vadd.f32 0.0, %v8334
        %8336 = vmatmul.f32.gmra.mxu0 %v8177
        %v8337 = vpop.f32.mrf.mxu0
        %v8338 = vadd.f32 0.0, %v8337
        %8339 = vdwg.mxu0
        %8340 = vmatpush.msra.mxu0 0.0
        %8341 = vmatpush.msra.mxu0 0.0
        %8342 = vmatpush.msra.mxu0 0.0
        %8343 = vmatpush.msra.mxu0 0.0
        %8344 = vmatpush.msra.mxu0 0.0
        %8345 = vmatpush.msra.mxu0 0.0
        %8346 = vmatpush.msra.mxu0 0.0
        %8347 = vmatpush.msra.mxu0 0.0
        %8348 = vmatpush.msra.mxu0 0.0
        %8349 = vmatpush.msra.mxu0 0.0
        %8350 = vmatpush.msra.mxu0 0.0
        %8351 = vmatpush.msra.mxu0 0.0
        %8352 = vmatpush.msra.mxu0 0.0
        %8353 = vmatpush.msra.mxu0 %v6815
        %8354 = vmatpush.msra.mxu0 %v6513
        %8355 = vmatpush.msra.mxu0 %v6512
        %8356 = vmatmul.f32.gmra.mxu0 %v8174
        %v8357 = vpop.f32.mrf.mxu0
        %v8358 = vadd.f32 0.0, %v8357
        %8359 = vmatmul.f32.gmra.mxu0 %v8177
        %v8360 = vpop.f32.mrf.mxu0
        %v8361 = vadd.f32 0.0, %v8360
        %8362 = vdwg.mxu0
        %v8363 = vadd.f32 %v8154, %v8197
        %v8364 = vadd.f32 %v8155, %v8220
        %v8365 = vadd.f32 %v8156, %v8243
        %v8366 = vadd.f32 %v8157, %v8266
        %v8367 = vadd.f32 %v8158, %v8289
        %v8368 = vadd.f32 %v8159, %v8312
        %v8369 = vadd.f32 %v8160, %v8335
        %v8370 = vadd.f32 %v8161, %v8358
        %v8371 = vadd.f32 %v8162, %v8200
        %v8372 = vadd.f32 %v8163, %v8223
        %v8373 = vadd.f32 %v8164, %v8246
        %v8374 = vadd.f32 %v8165, %v8269
        %v8375 = vadd.f32 %v8166, %v8292
        %v8376 = vadd.f32 %v8167, %v8315
        %v8377 = vadd.f32 %v8168, %v8338
        %v8378 = vadd.f32 %v8169, %v8361
        %s8379 = scalar_lea.vmem %s7, 112
        %v8380 = vld [vmem:[%s8379] sm:$0xff]
        %v8381 = vld [vmem:[%s8379 + $0x8] sm:$0x3]
        %v8383 = vsel %vm6592, %v8380, 0
        %v8386 = vsel %vm6592, %v8381, 0
        %8388 = vmatpush.msra.mxu0 0.0
        %8389 = vmatpush.msra.mxu0 0.0
        %8390 = vmatpush.msra.mxu0 0.0
        %8391 = vmatpush.msra.mxu0 0.0
        %8392 = vmatpush.msra.mxu0 0.0
        %8393 = vmatpush.msra.mxu0 0.0
        %8394 = vmatpush.msra.mxu0 0.0
        %8395 = vmatpush.msra.mxu0 0.0
        %8396 = vmatpush.msra.mxu0 0.0
        %8397 = vmatpush.msra.mxu0 0.0
        %8398 = vmatpush.msra.mxu0 0.0
        %8399 = vmatpush.msra.mxu0 0.0
        %8400 = vmatpush.msra.mxu0 0.0
        %8401 = vmatpush.msra.mxu0 %v6604
        %8402 = vmatpush.msra.mxu0 %v6584
        %8403 = vmatpush.msra.mxu0 %v6583
        %8404 = vmatmul.f32.gmra.mxu0 %v8383
        %v8405 = vpop.f32.mrf.mxu0
        %v8406 = vadd.f32 0.0, %v8405
        %8407 = vmatmul.f32.gmra.mxu0 %v8386
        %v8408 = vpop.f32.mrf.mxu0
        %v8409 = vadd.f32 0.0, %v8408
        %8410 = vdwg.mxu0
        %8411 = vmatpush.msra.mxu0 0.0
        %8412 = vmatpush.msra.mxu0 0.0
        %8413 = vmatpush.msra.mxu0 0.0
        %8414 = vmatpush.msra.mxu0 0.0
        %8415 = vmatpush.msra.mxu0 0.0
        %8416 = vmatpush.msra.mxu0 0.0
        %8417 = vmatpush.msra.mxu0 0.0
        %8418 = vmatpush.msra.mxu0 0.0
        %8419 = vmatpush.msra.mxu0 0.0
        %8420 = vmatpush.msra.mxu0 0.0
        %8421 = vmatpush.msra.mxu0 0.0
        %8422 = vmatpush.msra.mxu0 0.0
        %8423 = vmatpush.msra.mxu0 0.0
        %8424 = vmatpush.msra.mxu0 %v6607
        %8425 = vmatpush.msra.mxu0 %v6581
        %8426 = vmatpush.msra.mxu0 %v6580
        %8427 = vmatmul.f32.gmra.mxu0 %v8383
        %v8428 = vpop.f32.mrf.mxu0
        %v8429 = vadd.f32 0.0, %v8428
        %8430 = vmatmul.f32.gmra.mxu0 %v8386
        %v8431 = vpop.f32.mrf.mxu0
        %v8432 = vadd.f32 0.0, %v8431
        %8433 = vdwg.mxu0
        %8434 = vmatpush.msra.mxu0 0.0
        %8435 = vmatpush.msra.mxu0 0.0
        %8436 = vmatpush.msra.mxu0 0.0
        %8437 = vmatpush.msra.mxu0 0.0
        %8438 = vmatpush.msra.mxu0 0.0
        %8439 = vmatpush.msra.mxu0 0.0
        %8440 = vmatpush.msra.mxu0 0.0
        %8441 = vmatpush.msra.mxu0 0.0
        %8442 = vmatpush.msra.mxu0 0.0
        %8443 = vmatpush.msra.mxu0 0.0
        %8444 = vmatpush.msra.mxu0 0.0
        %8445 = vmatpush.msra.mxu0 0.0
        %8446 = vmatpush.msra.mxu0 0.0
        %8447 = vmatpush.msra.mxu0 %v6610
        %8448 = vmatpush.msra.mxu0 %v6578
        %8449 = vmatpush.msra.mxu0 %v6577
        %8450 = vmatmul.f32.gmra.mxu0 %v8383
        %v8451 = vpop.f32.mrf.mxu0
        %v8452 = vadd.f32 0.0, %v8451
        %8453 = vmatmul.f32.gmra.mxu0 %v8386
        %v8454 = vpop.f32.mrf.mxu0
        %v8455 = vadd.f32 0.0, %v8454
        %8456 = vdwg.mxu0
        %8457 = vmatpush.msra.mxu0 0.0
        %8458 = vmatpush.msra.mxu0 0.0
        %8459 = vmatpush.msra.mxu0 0.0
        %8460 = vmatpush.msra.mxu0 0.0
        %8461 = vmatpush.msra.mxu0 0.0
        %8462 = vmatpush.msra.mxu0 0.0
        %8463 = vmatpush.msra.mxu0 0.0
        %8464 = vmatpush.msra.mxu0 0.0
        %8465 = vmatpush.msra.mxu0 0.0
        %8466 = vmatpush.msra.mxu0 0.0
        %8467 = vmatpush.msra.mxu0 0.0
        %8468 = vmatpush.msra.mxu0 0.0
        %8469 = vmatpush.msra.mxu0 0.0
        %8470 = vmatpush.msra.mxu0 %v6613
        %8471 = vmatpush.msra.mxu0 %v6575
        %8472 = vmatpush.msra.mxu0 %v6574
        %8473 = vmatmul.f32.gmra.mxu0 %v8383
        %v8474 = vpop.f32.mrf.mxu0
        %v8475 = vadd.f32 0.0, %v8474
        %8476 = vmatmul.f32.gmra.mxu0 %v8386
        %v8477 = vpop.f32.mrf.mxu0
        %v8478 = vadd.f32 0.0, %v8477
        %8479 = vdwg.mxu0
        %8480 = vmatpush.msra.mxu0 0.0
        %8481 = vmatpush.msra.mxu0 0.0
        %8482 = vmatpush.msra.mxu0 0.0
        %8483 = vmatpush.msra.mxu0 0.0
        %8484 = vmatpush.msra.mxu0 0.0
        %8485 = vmatpush.msra.mxu0 0.0
        %8486 = vmatpush.msra.mxu0 0.0
        %8487 = vmatpush.msra.mxu0 0.0
        %8488 = vmatpush.msra.mxu0 0.0
        %8489 = vmatpush.msra.mxu0 0.0
        %8490 = vmatpush.msra.mxu0 0.0
        %8491 = vmatpush.msra.mxu0 0.0
        %8492 = vmatpush.msra.mxu0 0.0
        %8493 = vmatpush.msra.mxu0 %v6616
        %8494 = vmatpush.msra.mxu0 %v6572
        %8495 = vmatpush.msra.mxu0 %v6571
        %8496 = vmatmul.f32.gmra.mxu0 %v8383
        %v8497 = vpop.f32.mrf.mxu0
        %v8498 = vadd.f32 0.0, %v8497
        %8499 = vmatmul.f32.gmra.mxu0 %v8386
        %v8500 = vpop.f32.mrf.mxu0
        %v8501 = vadd.f32 0.0, %v8500
        %8502 = vdwg.mxu0
        %8503 = vmatpush.msra.mxu0 0.0
        %8504 = vmatpush.msra.mxu0 0.0
        %8505 = vmatpush.msra.mxu0 0.0
        %8506 = vmatpush.msra.mxu0 0.0
        %8507 = vmatpush.msra.mxu0 0.0
        %8508 = vmatpush.msra.mxu0 0.0
        %8509 = vmatpush.msra.mxu0 0.0
        %8510 = vmatpush.msra.mxu0 0.0
        %8511 = vmatpush.msra.mxu0 0.0
        %8512 = vmatpush.msra.mxu0 0.0
        %8513 = vmatpush.msra.mxu0 0.0
        %8514 = vmatpush.msra.mxu0 0.0
        %8515 = vmatpush.msra.mxu0 0.0
        %8516 = vmatpush.msra.mxu0 %v6619
        %8517 = vmatpush.msra.mxu0 %v6569
        %8518 = vmatpush.msra.mxu0 %v6568
        %8519 = vmatmul.f32.gmra.mxu0 %v8383
        %v8520 = vpop.f32.mrf.mxu0
        %v8521 = vadd.f32 0.0, %v8520
        %8522 = vmatmul.f32.gmra.mxu0 %v8386
        %v8523 = vpop.f32.mrf.mxu0
        %v8524 = vadd.f32 0.0, %v8523
        %8525 = vdwg.mxu0
        %8526 = vmatpush.msra.mxu0 0.0
        %8527 = vmatpush.msra.mxu0 0.0
        %8528 = vmatpush.msra.mxu0 0.0
        %8529 = vmatpush.msra.mxu0 0.0
        %8530 = vmatpush.msra.mxu0 0.0
        %8531 = vmatpush.msra.mxu0 0.0
        %8532 = vmatpush.msra.mxu0 0.0
        %8533 = vmatpush.msra.mxu0 0.0
        %8534 = vmatpush.msra.mxu0 0.0
        %8535 = vmatpush.msra.mxu0 0.0
        %8536 = vmatpush.msra.mxu0 0.0
        %8537 = vmatpush.msra.mxu0 0.0
        %8538 = vmatpush.msra.mxu0 0.0
        %8539 = vmatpush.msra.mxu0 %v6622
        %8540 = vmatpush.msra.mxu0 %v6566
        %8541 = vmatpush.msra.mxu0 %v6565
        %8542 = vmatmul.f32.gmra.mxu0 %v8383
        %v8543 = vpop.f32.mrf.mxu0
        %v8544 = vadd.f32 0.0, %v8543
        %8545 = vmatmul.f32.gmra.mxu0 %v8386
        %v8546 = vpop.f32.mrf.mxu0
        %v8547 = vadd.f32 0.0, %v8546
        %8548 = vdwg.mxu0
        %8549 = vmatpush.msra.mxu0 0.0
        %8550 = vmatpush.msra.mxu0 0.0
        %8551 = vmatpush.msra.mxu0 0.0
        %8552 = vmatpush.msra.mxu0 0.0
        %8553 = vmatpush.msra.mxu0 0.0
        %8554 = vmatpush.msra.mxu0 0.0
        %8555 = vmatpush.msra.mxu0 0.0
        %8556 = vmatpush.msra.mxu0 0.0
        %8557 = vmatpush.msra.mxu0 0.0
        %8558 = vmatpush.msra.mxu0 0.0
        %8559 = vmatpush.msra.mxu0 0.0
        %8560 = vmatpush.msra.mxu0 0.0
        %8561 = vmatpush.msra.mxu0 0.0
        %8562 = vmatpush.msra.mxu0 %v6601
        %8563 = vmatpush.msra.mxu0 %v6587
        %8564 = vmatpush.msra.mxu0 %v6586
        %8565 = vmatmul.f32.gmra.mxu0 %v8383
        %v8566 = vpop.f32.mrf.mxu0
        %v8567 = vadd.f32 0.0, %v8566
        %8568 = vmatmul.f32.gmra.mxu0 %v8386
        %v8569 = vpop.f32.mrf.mxu0
        %v8570 = vadd.f32 0.0, %v8569
        %8571 = vdwg.mxu0
        %v8572 = vadd.f32 %v8363, %v8406
        %v8573 = vadd.f32 %v8364, %v8429
        %v8574 = vadd.f32 %v8365, %v8452
        %v8575 = vadd.f32 %v8366, %v8475
        %v8576 = vadd.f32 %v8367, %v8498
        %v8577 = vadd.f32 %v8368, %v8521
        %v8578 = vadd.f32 %v8369, %v8544
        %v8579 = vadd.f32 %v8370, %v8567
        %v8580 = vadd.f32 %v8371, %v8409
        %v8581 = vadd.f32 %v8372, %v8432
        %v8582 = vadd.f32 %v8373, %v8455
        %v8583 = vadd.f32 %v8374, %v8478
        %v8584 = vadd.f32 %v8375, %v8501
        %v8585 = vadd.f32 %v8376, %v8524
        %v8586 = vadd.f32 %v8377, %v8547
        %v8587 = vadd.f32 %v8378, %v8570
        %s8588 = scalar_lea.vmem %s7, 128
        %v8589 = vld [vmem:[%s8588] sm:$0xff]
        %v8590 = vld [vmem:[%s8588 + $0x8] sm:$0x3]
        %v8592 = vsel %vm6592, %v8589, 0
        %v8595 = vsel %vm6592, %v8590, 0
        %8597 = vmatpush.msra.mxu0 0.0
        %8598 = vmatpush.msra.mxu0 0.0
        %8599 = vmatpush.msra.mxu0 0.0
        %8600 = vmatpush.msra.mxu0 0.0
        %8601 = vmatpush.msra.mxu0 0.0
        %8602 = vmatpush.msra.mxu0 0.0
        %8603 = vmatpush.msra.mxu0 0.0
        %8604 = vmatpush.msra.mxu0 0.0
        %8605 = vmatpush.msra.mxu0 0.0
        %8606 = vmatpush.msra.mxu0 0.0
        %8607 = vmatpush.msra.mxu0 0.0
        %8608 = vmatpush.msra.mxu0 0.0
        %8609 = vmatpush.msra.mxu0 0.0
        %8610 = vmatpush.msra.mxu0 %v7107
        %8611 = vmatpush.msra.mxu0 %v7089
        %8612 = vmatpush.msra.mxu0 %v7088
        %8613 = vmatmul.f32.gmra.mxu0 %v8592
        %v8614 = vpop.f32.mrf.mxu0
        %v8615 = vadd.f32 0.0, %v8614
        %8616 = vmatmul.f32.gmra.mxu0 %v8595
        %v8617 = vpop.f32.mrf.mxu0
        %v8618 = vadd.f32 0.0, %v8617
        %8619 = vdwg.mxu0
        %8620 = vmatpush.msra.mxu0 0.0
        %8621 = vmatpush.msra.mxu0 0.0
        %8622 = vmatpush.msra.mxu0 0.0
        %8623 = vmatpush.msra.mxu0 0.0
        %8624 = vmatpush.msra.mxu0 0.0
        %8625 = vmatpush.msra.mxu0 0.0
        %8626 = vmatpush.msra.mxu0 0.0
        %8627 = vmatpush.msra.mxu0 0.0
        %8628 = vmatpush.msra.mxu0 0.0
        %8629 = vmatpush.msra.mxu0 0.0
        %8630 = vmatpush.msra.mxu0 0.0
        %8631 = vmatpush.msra.mxu0 0.0
        %8632 = vmatpush.msra.mxu0 0.0
        %8633 = vmatpush.msra.mxu0 %v7110
        %8634 = vmatpush.msra.mxu0 %v7086
        %8635 = vmatpush.msra.mxu0 %v7085
        %8636 = vmatmul.f32.gmra.mxu0 %v8592
        %v8637 = vpop.f32.mrf.mxu0
        %v8638 = vadd.f32 0.0, %v8637
        %8639 = vmatmul.f32.gmra.mxu0 %v8595
        %v8640 = vpop.f32.mrf.mxu0
        %v8641 = vadd.f32 0.0, %v8640
        %8642 = vdwg.mxu0
        %8643 = vmatpush.msra.mxu0 0.0
        %8644 = vmatpush.msra.mxu0 0.0
        %8645 = vmatpush.msra.mxu0 0.0
        %8646 = vmatpush.msra.mxu0 0.0
        %8647 = vmatpush.msra.mxu0 0.0
        %8648 = vmatpush.msra.mxu0 0.0
        %8649 = vmatpush.msra.mxu0 0.0
        %8650 = vmatpush.msra.mxu0 0.0
        %8651 = vmatpush.msra.mxu0 0.0
        %8652 = vmatpush.msra.mxu0 0.0
        %8653 = vmatpush.msra.mxu0 0.0
        %8654 = vmatpush.msra.mxu0 0.0
        %8655 = vmatpush.msra.mxu0 0.0
        %8656 = vmatpush.msra.mxu0 %v7113
        %8657 = vmatpush.msra.mxu0 %v7083
        %8658 = vmatpush.msra.mxu0 %v7082
        %8659 = vmatmul.f32.gmra.mxu0 %v8592
        %v8660 = vpop.f32.mrf.mxu0
        %v8661 = vadd.f32 0.0, %v8660
        %8662 = vmatmul.f32.gmra.mxu0 %v8595
        %v8663 = vpop.f32.mrf.mxu0
        %v8664 = vadd.f32 0.0, %v8663
        %8665 = vdwg.mxu0
        %8666 = vmatpush.msra.mxu0 0.0
        %8667 = vmatpush.msra.mxu0 0.0
        %8668 = vmatpush.msra.mxu0 0.0
        %8669 = vmatpush.msra.mxu0 0.0
        %8670 = vmatpush.msra.mxu0 0.0
        %8671 = vmatpush.msra.mxu0 0.0
        %8672 = vmatpush.msra.mxu0 0.0
        %8673 = vmatpush.msra.mxu0 0.0
        %8674 = vmatpush.msra.mxu0 0.0
        %8675 = vmatpush.msra.mxu0 0.0
        %8676 = vmatpush.msra.mxu0 0.0
        %8677 = vmatpush.msra.mxu0 0.0
        %8678 = vmatpush.msra.mxu0 0.0
        %8679 = vmatpush.msra.mxu0 %v7116
        %8680 = vmatpush.msra.mxu0 %v7080
        %8681 = vmatpush.msra.mxu0 %v7079
        %8682 = vmatmul.f32.gmra.mxu0 %v8592
        %v8683 = vpop.f32.mrf.mxu0
        %v8684 = vadd.f32 0.0, %v8683
        %8685 = vmatmul.f32.gmra.mxu0 %v8595
        %v8686 = vpop.f32.mrf.mxu0
        %v8687 = vadd.f32 0.0, %v8686
        %8688 = vdwg.mxu0
        %8689 = vmatpush.msra.mxu0 0.0
        %8690 = vmatpush.msra.mxu0 0.0
        %8691 = vmatpush.msra.mxu0 0.0
        %8692 = vmatpush.msra.mxu0 0.0
        %8693 = vmatpush.msra.mxu0 0.0
        %8694 = vmatpush.msra.mxu0 0.0
        %8695 = vmatpush.msra.mxu0 0.0
        %8696 = vmatpush.msra.mxu0 0.0
        %8697 = vmatpush.msra.mxu0 0.0
        %8698 = vmatpush.msra.mxu0 0.0
        %8699 = vmatpush.msra.mxu0 0.0
        %8700 = vmatpush.msra.mxu0 0.0
        %8701 = vmatpush.msra.mxu0 0.0
        %8702 = vmatpush.msra.mxu0 %v7119
        %8703 = vmatpush.msra.mxu0 %v7077
        %8704 = vmatpush.msra.mxu0 %v7076
        %8705 = vmatmul.f32.gmra.mxu0 %v8592
        %v8706 = vpop.f32.mrf.mxu0
        %v8707 = vadd.f32 0.0, %v8706
        %8708 = vmatmul.f32.gmra.mxu0 %v8595
        %v8709 = vpop.f32.mrf.mxu0
        %v8710 = vadd.f32 0.0, %v8709
        %8711 = vdwg.mxu0
        %8712 = vmatpush.msra.mxu0 0.0
        %8713 = vmatpush.msra.mxu0 0.0
        %8714 = vmatpush.msra.mxu0 0.0
        %8715 = vmatpush.msra.mxu0 0.0
        %8716 = vmatpush.msra.mxu0 0.0
        %8717 = vmatpush.msra.mxu0 0.0
        %8718 = vmatpush.msra.mxu0 0.0
        %8719 = vmatpush.msra.mxu0 0.0
        %8720 = vmatpush.msra.mxu0 0.0
        %8721 = vmatpush.msra.mxu0 0.0
        %8722 = vmatpush.msra.mxu0 0.0
        %8723 = vmatpush.msra.mxu0 0.0
        %8724 = vmatpush.msra.mxu0 0.0
        %8725 = vmatpush.msra.mxu0 %v7122
        %8726 = vmatpush.msra.mxu0 %v7074
        %8727 = vmatpush.msra.mxu0 %v7073
        %8728 = vmatmul.f32.gmra.mxu0 %v8592
        %v8729 = vpop.f32.mrf.mxu0
        %v8730 = vadd.f32 0.0, %v8729
        %8731 = vmatmul.f32.gmra.mxu0 %v8595
        %v8732 = vpop.f32.mrf.mxu0
        %v8733 = vadd.f32 0.0, %v8732
        %8734 = vdwg.mxu0
        %8735 = vmatpush.msra.mxu0 0.0
        %8736 = vmatpush.msra.mxu0 0.0
        %8737 = vmatpush.msra.mxu0 0.0
        %8738 = vmatpush.msra.mxu0 0.0
        %8739 = vmatpush.msra.mxu0 0.0
        %8740 = vmatpush.msra.mxu0 0.0
        %8741 = vmatpush.msra.mxu0 0.0
        %8742 = vmatpush.msra.mxu0 0.0
        %8743 = vmatpush.msra.mxu0 0.0
        %8744 = vmatpush.msra.mxu0 0.0
        %8745 = vmatpush.msra.mxu0 0.0
        %8746 = vmatpush.msra.mxu0 0.0
        %8747 = vmatpush.msra.mxu0 0.0
        %8748 = vmatpush.msra.mxu0 %v7125
        %8749 = vmatpush.msra.mxu0 %v7071
        %8750 = vmatpush.msra.mxu0 %v7070
        %8751 = vmatmul.f32.gmra.mxu0 %v8592
        %v8752 = vpop.f32.mrf.mxu0
        %v8753 = vadd.f32 0.0, %v8752
        %8754 = vmatmul.f32.gmra.mxu0 %v8595
        %v8755 = vpop.f32.mrf.mxu0
        %v8756 = vadd.f32 0.0, %v8755
        %8757 = vdwg.mxu0
        %8758 = vmatpush.msra.mxu0 0.0
        %8759 = vmatpush.msra.mxu0 0.0
        %8760 = vmatpush.msra.mxu0 0.0
        %8761 = vmatpush.msra.mxu0 0.0
        %8762 = vmatpush.msra.mxu0 0.0
        %8763 = vmatpush.msra.mxu0 0.0
        %8764 = vmatpush.msra.mxu0 0.0
        %8765 = vmatpush.msra.mxu0 0.0
        %8766 = vmatpush.msra.mxu0 0.0
        %8767 = vmatpush.msra.mxu0 0.0
        %8768 = vmatpush.msra.mxu0 0.0
        %8769 = vmatpush.msra.mxu0 0.0
        %8770 = vmatpush.msra.mxu0 0.0
        %8771 = vmatpush.msra.mxu0 %v7104
        %8772 = vmatpush.msra.mxu0 %v7092
        %8773 = vmatpush.msra.mxu0 %v7091
        %8774 = vmatmul.f32.gmra.mxu0 %v8592
        %v8775 = vpop.f32.mrf.mxu0
        %v8776 = vadd.f32 0.0, %v8775
        %8777 = vmatmul.f32.gmra.mxu0 %v8595
        %v8778 = vpop.f32.mrf.mxu0
        %v8779 = vadd.f32 0.0, %v8778
        %8780 = vdwg.mxu0
        %v8781 = vadd.f32 %v8572, %v8615
        %v8782 = vadd.f32 %v8573, %v8638
        %v8783 = vadd.f32 %v8574, %v8661
        %v8784 = vadd.f32 %v8575, %v8684
        %v8785 = vadd.f32 %v8576, %v8707
        %v8786 = vadd.f32 %v8577, %v8730
        %v8787 = vadd.f32 %v8578, %v8753
        %v8788 = vadd.f32 %v8579, %v8776
        %v8789 = vadd.f32 %v8580, %v8618
        %v8790 = vadd.f32 %v8581, %v8641
        %v8791 = vadd.f32 %v8582, %v8664
        %v8792 = vadd.f32 %v8583, %v8687
        %v8793 = vadd.f32 %v8584, %v8710
        %v8794 = vadd.f32 %v8585, %v8733
        %v8795 = vadd.f32 %v8586, %v8756
        %v8796 = vadd.f32 %v8587, %v8779
        %v8797 = vld [vmem:[%s8] sm:$0xff]
        %v8798 = vld [vmem:[%s8 + $0x8] sm:$0x3]
        %8800 = vset.pattern.permute.xlu0 0
        %8801 = vperm.xlu0 %8800, %v8797
        %v8802 = vpop.permute.xlu0 %8801
        %8805 = vset.pattern.permute.xlu0 0
        %8806 = vperm.xlu0 %8805, %v8798
        %v8807 = vpop.permute.xlu0 %8806
        %v8809 = vadd.f32 %v8781, %v8802
        %v8810 = vadd.f32 %v8782, %v8802
        %v8811 = vadd.f32 %v8783, %v8802
        %v8812 = vadd.f32 %v8784, %v8802
        %v8813 = vadd.f32 %v8785, %v8802
        %v8814 = vadd.f32 %v8786, %v8802
        %v8815 = vadd.f32 %v8787, %v8802
        %v8816 = vadd.f32 %v8788, %v8802
        %v8817 = vadd.f32 %v8789, %v8807
        %v8818 = vadd.f32 %v8790, %v8807
        %v8819 = vadd.f32 %v8791, %v8807
        %v8820 = vadd.f32 %v8792, %v8807
        %v8821 = vadd.f32 %v8793, %v8807
        %v8822 = vadd.f32 %v8794, %v8807
        %v8823 = vadd.f32 %v8795, %v8807
        %v8824 = vadd.f32 %v8796, %v8807
        %v8825 = vmax.f32 %v8809, 0.0
        %v8826 = vmax.f32 %v8810, 0.0
        %v8827 = vmax.f32 %v8811, 0.0
        %v8828 = vmax.f32 %v8812, 0.0
        %v8829 = vmax.f32 %v8813, 0.0
        %v8830 = vmax.f32 %v8814, 0.0
        %v8831 = vmax.f32 %v8815, 0.0
        %v8832 = vmax.f32 %v8816, 0.0
        %v8833 = vmax.f32 %v8817, 0.0
        %v8834 = vmax.f32 %v8818, 0.0
        %v8835 = vmax.f32 %v8819, 0.0
        %v8836 = vmax.f32 %v8820, 0.0
        %v8837 = vmax.f32 %v8821, 0.0
        %v8838 = vmax.f32 %v8822, 0.0
        %v8839 = vmax.f32 %v8823, 0.0
        %v8840 = vmax.f32 %v8824, 0.0
        %8841 = vrot.lane.b32.xlu0 %v8825, 126
        %v8842 = vpop.permute.xlu0 %8841
        %8843 = vrot.lane.b32.xlu0 %v8833, 126
        %v8844 = vpop.permute.xlu0 %8843
        %8845 = vrot.lane.b32.xlu0 %v8826, 126
        %v8846 = vpop.permute.xlu0 %8845
        %8847 = vrot.lane.b32.xlu0 %v8834, 126
        %v8848 = vpop.permute.xlu0 %8847
        %8849 = vrot.lane.b32.xlu0 %v8827, 126
        %v8850 = vpop.permute.xlu0 %8849
        %8851 = vrot.lane.b32.xlu0 %v8835, 126
        %v8852 = vpop.permute.xlu0 %8851
        %8853 = vrot.lane.b32.xlu0 %v8828, 126
        %v8854 = vpop.permute.xlu0 %8853
        %8855 = vrot.lane.b32.xlu0 %v8836, 126
        %v8856 = vpop.permute.xlu0 %8855
        %8857 = vrot.lane.b32.xlu0 %v8829, 126
        %v8858 = vpop.permute.xlu0 %8857
        %8859 = vrot.lane.b32.xlu0 %v8837, 126
        %v8860 = vpop.permute.xlu0 %8859
        %8861 = vrot.lane.b32.xlu0 %v8830, 126
        %v8862 = vpop.permute.xlu0 %8861
        %8863 = vrot.lane.b32.xlu0 %v8838, 126
        %v8864 = vpop.permute.xlu0 %8863
        %8865 = vrot.lane.b32.xlu0 %v8831, 126
        %v8866 = vpop.permute.xlu0 %8865
        %8867 = vrot.lane.b32.xlu0 %v8839, 126
        %v8868 = vpop.permute.xlu0 %8867
        %8869 = vrot.lane.b32.xlu0 %v8832, 126
        %v8870 = vpop.permute.xlu0 %8869
        %8871 = vrot.lane.b32.xlu0 %v8840, 126
        %v8872 = vpop.permute.xlu0 %8871
        %v8873 = vsel %vm5356, %v8866, %v8870
        %v8874 = vsel %vm5356, %v8868, %v8872
        %v8875 = vsel %vm5356, %v8862, %v8866
        %v8876 = vsel %vm5356, %v8864, %v8868
        %v8877 = vsel %vm5356, %v8858, %v8862
        %v8878 = vsel %vm5356, %v8860, %v8864
        %v8879 = vsel %vm5356, %v8854, %v8858
        %v8880 = vsel %vm5356, %v8856, %v8860
        %v8881 = vsel %vm5356, %v8850, %v8854
        %v8882 = vsel %vm5356, %v8852, %v8856
        %v8883 = vsel %vm5356, %v8846, %v8850
        %v8884 = vsel %vm5356, %v8848, %v8852
        %v8885 = vsel %vm5356, %v8842, %v8846
        %v8886 = vsel %vm5356, %v8844, %v8848
        %v8887 = vsel %vm5356, %v8870, %v8842
        %v8888 = vsel %vm5356, %v8872, %v8844
        %v8889 = vmax.f32 %v8825, %v8885
        %v8890 = vmax.f32 %v8826, %v8883
        %v8891 = vmax.f32 %v8827, %v8881
        %v8892 = vmax.f32 %v8828, %v8879
        %v8893 = vmax.f32 %v8829, %v8877
        %v8894 = vmax.f32 %v8830, %v8875
        %v8895 = vmax.f32 %v8831, %v8873
        %v8896 = vmax.f32 %v8832, %v8887
        %v8897 = vmax.f32 %v8833, %v8886
        %v8898 = vmax.f32 %v8834, %v8884
        %v8899 = vmax.f32 %v8835, %v8882
        %v8900 = vmax.f32 %v8836, %v8880
        %v8901 = vmax.f32 %v8837, %v8878
        %v8902 = vmax.f32 %v8838, %v8876
        %v8903 = vmax.f32 %v8839, %v8874
        %v8904 = vmax.f32 %v8840, %v8888
        %8905 = vrot.lane.b32.xlu0 %v8889, 64
        %v8906 = vpop.permute.xlu0 %8905
        %8907 = vrot.lane.b32.xlu0 %v8897, 64
        %v8908 = vpop.permute.xlu0 %8907
        %8909 = vrot.lane.b32.xlu0 %v8890, 64
        %v8910 = vpop.permute.xlu0 %8909
        %8911 = vrot.lane.b32.xlu0 %v8898, 64
        %v8912 = vpop.permute.xlu0 %8911
        %8913 = vrot.lane.b32.xlu0 %v8891, 64
        %v8914 = vpop.permute.xlu0 %8913
        %8915 = vrot.lane.b32.xlu0 %v8899, 64
        %v8916 = vpop.permute.xlu0 %8915
        %8917 = vrot.lane.b32.xlu0 %v8892, 64
        %v8918 = vpop.permute.xlu0 %8917
        %8919 = vrot.lane.b32.xlu0 %v8900, 64
        %v8920 = vpop.permute.xlu0 %8919
        %8921 = vrot.lane.b32.xlu0 %v8893, 64
        %v8922 = vpop.permute.xlu0 %8921
        %8923 = vrot.lane.b32.xlu0 %v8901, 64
        %v8924 = vpop.permute.xlu0 %8923
        %8925 = vrot.lane.b32.xlu0 %v8894, 64
        %v8926 = vpop.permute.xlu0 %8925
        %8927 = vrot.lane.b32.xlu0 %v8902, 64
        %v8928 = vpop.permute.xlu0 %8927
        %8929 = vrot.lane.b32.xlu0 %v8895, 64
        %v8930 = vpop.permute.xlu0 %8929
        %8931 = vrot.lane.b32.xlu0 %v8903, 64
        %v8932 = vpop.permute.xlu0 %8931
        %8933 = vrot.lane.b32.xlu0 %v8896, 64
        %v8934 = vpop.permute.xlu0 %8933
        %8935 = vrot.lane.b32.xlu0 %v8904, 64
        %v8936 = vpop.permute.xlu0 %8935
        %v8937 = vsel %vm4035, %v8930, %v8934
        %v8938 = vsel %vm4035, %v8932, %v8936
        %v8939 = vsel %vm4035, %v8926, %v8930
        %v8940 = vsel %vm4035, %v8928, %v8932
        %v8941 = vsel %vm4035, %v8922, %v8926
        %v8942 = vsel %vm4035, %v8924, %v8928
        %v8943 = vsel %vm4035, %v8918, %v8922
        %v8944 = vsel %vm4035, %v8920, %v8924
        %v8945 = vsel %vm4035, %v8914, %v8918
        %v8946 = vsel %vm4035, %v8916, %v8920
        %v8947 = vsel %vm4035, %v8910, %v8914
        %v8948 = vsel %vm4035, %v8912, %v8916
        %v8949 = vsel %vm4035, %v8906, %v8910
        %v8950 = vsel %vm4035, %v8908, %v8912
        %v8951 = vsel %vm4035, %v8934, %v8906
        %v8952 = vsel %vm4035, %v8936, %v8908
        %v8953 = vmax.f32 %v8889, %v8949
        %v8954 = vmax.f32 %v8890, %v8947
        %v8955 = vmax.f32 %v8891, %v8945
        %v8956 = vmax.f32 %v8892, %v8943
        %v8957 = vmax.f32 %v8893, %v8941
        %v8958 = vmax.f32 %v8894, %v8939
        %v8959 = vmax.f32 %v8895, %v8937
        %v8960 = vmax.f32 %v8896, %v8951
        %v8961 = vmax.f32 %v8897, %v8950
        %v8962 = vmax.f32 %v8898, %v8948
        %v8963 = vmax.f32 %v8899, %v8946
        %v8964 = vmax.f32 %v8900, %v8944
        %v8965 = vmax.f32 %v8901, %v8942
        %v8966 = vmax.f32 %v8902, %v8940
        %v8967 = vmax.f32 %v8903, %v8938
        %v8968 = vmax.f32 %v8904, %v8952
        %v8969 = vld [vmem:[%s10] sm:$0x1]
        %v8970 = vld [vmem:[#allocation2] sm:$0xff]
        %v8971 = vld [vmem:[#allocation2 + $0x8] sm:$0xff]
        %v8972 = vld [vmem:[#allocation2 + $0x10] sm:$0xff]
        %v8973 = vld [vmem:[#allocation2 + $0x18] sm:$0xff]
        %v8974 = vld [vmem:[#allocation2 + $0x20] sm:$0xff]
        %v8975 = vld [vmem:[#allocation2 + $0x28] sm:$0xff]
        %v8976 = vld [vmem:[#allocation2 + $0x30] sm:$0xff]
        %v8977 = vld [vmem:[#allocation2 + $0x38] sm:$0xff]
        %v8978 = vld [vmem:[#allocation2 + $0x40] sm:$0x3]
        %v8979 = vld [vmem:[#allocation2 + $0x48] sm:$0x3]
        %v8980 = vld [vmem:[#allocation2 + $0x50] sm:$0x3]
        %v8981 = vld [vmem:[#allocation2 + $0x58] sm:$0x3]
        %v8982 = vld [vmem:[#allocation2 + $0x60] sm:$0x3]
        %v8983 = vld [vmem:[#allocation2 + $0x68] sm:$0x3]
        %v8984 = vld [vmem:[#allocation2 + $0x70] sm:$0x3]
        %v8985 = vld [vmem:[#allocation2 + $0x78] sm:$0x3]
        %8986 = vmatpush.xpose.msra.mxu0 0.0
        %8987 = vmatpush.xpose.msra.mxu0 0.0
        %8988 = vmatpush.xpose.msra.mxu0 0.0
        %8989 = vmatpush.xpose.msra.mxu0 0.0
        %8990 = vmatpush.xpose.msra.mxu0 0.0
        %8991 = vmatpush.xpose.msra.mxu0 0.0
        %8992 = vmatpush.xpose.msra.mxu0 0.0
        %8993 = vmatpush.xpose.msra.mxu0 0.0
        %8994 = vmatpush.xpose.msra.mxu0 0.0
        %8995 = vmatpush.xpose.msra.mxu0 0.0
        %8996 = vmatpush.xpose.msra.mxu0 0.0
        %8997 = vmatpush.xpose.msra.mxu0 0.0
        %8998 = vmatpush.xpose.msra.mxu0 0.0
        %8999 = vmatpush.xpose.msra.mxu0 0.0
        %9000 = vmatpush.xpose.msra.mxu0 %v8978
        %9001 = vmatpush.xpose.msra.mxu0 %v8970
        %9002 = vmatmul.f32.gmra.mxu0 %v8953
        %v9003 = vpop.f32.mrf.mxu0
        %v9004 = vadd.f32 0.0, %v9003
        %9005 = vdwg.mxu0
        %9006 = vmatpush.xpose.msra.mxu0 0.0
        %9007 = vmatpush.xpose.msra.mxu0 0.0
        %9008 = vmatpush.xpose.msra.mxu0 0.0
        %9009 = vmatpush.xpose.msra.mxu0 0.0
        %9010 = vmatpush.xpose.msra.mxu0 0.0
        %9011 = vmatpush.xpose.msra.mxu0 0.0
        %9012 = vmatpush.xpose.msra.mxu0 0.0
        %9013 = vmatpush.xpose.msra.mxu0 0.0
        %9014 = vmatpush.xpose.msra.mxu0 0.0
        %9015 = vmatpush.xpose.msra.mxu0 0.0
        %9016 = vmatpush.xpose.msra.mxu0 0.0
        %9017 = vmatpush.xpose.msra.mxu0 0.0
        %9018 = vmatpush.xpose.msra.mxu0 0.0
        %9019 = vmatpush.xpose.msra.mxu0 0.0
        %9020 = vmatpush.xpose.msra.mxu0 %v8979
        %9021 = vmatpush.xpose.msra.mxu0 %v8971
        %9022 = vmatmul.f32.gmra.mxu0 %v8954
        %v9023 = vpop.f32.mrf.mxu0
        %v9024 = vadd.f32 %v9004, %v9023
        %9025 = vdwg.mxu0
        %9026 = vmatpush.xpose.msra.mxu0 0.0
        %9027 = vmatpush.xpose.msra.mxu0 0.0
        %9028 = vmatpush.xpose.msra.mxu0 0.0
        %9029 = vmatpush.xpose.msra.mxu0 0.0
        %9030 = vmatpush.xpose.msra.mxu0 0.0
        %9031 = vmatpush.xpose.msra.mxu0 0.0
        %9032 = vmatpush.xpose.msra.mxu0 0.0
        %9033 = vmatpush.xpose.msra.mxu0 0.0
        %9034 = vmatpush.xpose.msra.mxu0 0.0
        %9035 = vmatpush.xpose.msra.mxu0 0.0
        %9036 = vmatpush.xpose.msra.mxu0 0.0
        %9037 = vmatpush.xpose.msra.mxu0 0.0
        %9038 = vmatpush.xpose.msra.mxu0 0.0
        %9039 = vmatpush.xpose.msra.mxu0 0.0
        %9040 = vmatpush.xpose.msra.mxu0 %v8980
        %9041 = vmatpush.xpose.msra.mxu0 %v8972
        %9042 = vmatmul.f32.gmra.mxu0 %v8955
        %v9043 = vpop.f32.mrf.mxu0
        %v9044 = vadd.f32 %v9024, %v9043
        %9045 = vdwg.mxu0
        %9046 = vmatpush.xpose.msra.mxu0 0.0
        %9047 = vmatpush.xpose.msra.mxu0 0.0
        %9048 = vmatpush.xpose.msra.mxu0 0.0
        %9049 = vmatpush.xpose.msra.mxu0 0.0
        %9050 = vmatpush.xpose.msra.mxu0 0.0
        %9051 = vmatpush.xpose.msra.mxu0 0.0
        %9052 = vmatpush.xpose.msra.mxu0 0.0
        %9053 = vmatpush.xpose.msra.mxu0 0.0
        %9054 = vmatpush.xpose.msra.mxu0 0.0
        %9055 = vmatpush.xpose.msra.mxu0 0.0
        %9056 = vmatpush.xpose.msra.mxu0 0.0
        %9057 = vmatpush.xpose.msra.mxu0 0.0
        %9058 = vmatpush.xpose.msra.mxu0 0.0
        %9059 = vmatpush.xpose.msra.mxu0 0.0
        %9060 = vmatpush.xpose.msra.mxu0 %v8981
        %9061 = vmatpush.xpose.msra.mxu0 %v8973
        %9062 = vmatmul.f32.gmra.mxu0 %v8956
        %v9063 = vpop.f32.mrf.mxu0
        %v9064 = vadd.f32 %v9044, %v9063
        %9065 = vdwg.mxu0
        %9066 = vmatpush.xpose.msra.mxu0 0.0
        %9067 = vmatpush.xpose.msra.mxu0 0.0
        %9068 = vmatpush.xpose.msra.mxu0 0.0
        %9069 = vmatpush.xpose.msra.mxu0 0.0
        %9070 = vmatpush.xpose.msra.mxu0 0.0
        %9071 = vmatpush.xpose.msra.mxu0 0.0
        %9072 = vmatpush.xpose.msra.mxu0 0.0
        %9073 = vmatpush.xpose.msra.mxu0 0.0
        %9074 = vmatpush.xpose.msra.mxu0 0.0
        %9075 = vmatpush.xpose.msra.mxu0 0.0
        %9076 = vmatpush.xpose.msra.mxu0 0.0
        %9077 = vmatpush.xpose.msra.mxu0 0.0
        %9078 = vmatpush.xpose.msra.mxu0 0.0
        %9079 = vmatpush.xpose.msra.mxu0 0.0
        %9080 = vmatpush.xpose.msra.mxu0 %v8982
        %9081 = vmatpush.xpose.msra.mxu0 %v8974
        %9082 = vmatmul.f32.gmra.mxu0 %v8957
        %v9083 = vpop.f32.mrf.mxu0
        %v9084 = vadd.f32 %v9064, %v9083
        %9085 = vdwg.mxu0
        %9086 = vmatpush.xpose.msra.mxu0 0.0
        %9087 = vmatpush.xpose.msra.mxu0 0.0
        %9088 = vmatpush.xpose.msra.mxu0 0.0
        %9089 = vmatpush.xpose.msra.mxu0 0.0
        %9090 = vmatpush.xpose.msra.mxu0 0.0
        %9091 = vmatpush.xpose.msra.mxu0 0.0
        %9092 = vmatpush.xpose.msra.mxu0 0.0
        %9093 = vmatpush.xpose.msra.mxu0 0.0
        %9094 = vmatpush.xpose.msra.mxu0 0.0
        %9095 = vmatpush.xpose.msra.mxu0 0.0
        %9096 = vmatpush.xpose.msra.mxu0 0.0
        %9097 = vmatpush.xpose.msra.mxu0 0.0
        %9098 = vmatpush.xpose.msra.mxu0 0.0
        %9099 = vmatpush.xpose.msra.mxu0 0.0
        %9100 = vmatpush.xpose.msra.mxu0 %v8983
        %9101 = vmatpush.xpose.msra.mxu0 %v8975
        %9102 = vmatmul.f32.gmra.mxu0 %v8958
        %v9103 = vpop.f32.mrf.mxu0
        %v9104 = vadd.f32 %v9084, %v9103
        %9105 = vdwg.mxu0
        %9106 = vmatpush.xpose.msra.mxu0 0.0
        %9107 = vmatpush.xpose.msra.mxu0 0.0
        %9108 = vmatpush.xpose.msra.mxu0 0.0
        %9109 = vmatpush.xpose.msra.mxu0 0.0
        %9110 = vmatpush.xpose.msra.mxu0 0.0
        %9111 = vmatpush.xpose.msra.mxu0 0.0
        %9112 = vmatpush.xpose.msra.mxu0 0.0
        %9113 = vmatpush.xpose.msra.mxu0 0.0
        %9114 = vmatpush.xpose.msra.mxu0 0.0
        %9115 = vmatpush.xpose.msra.mxu0 0.0
        %9116 = vmatpush.xpose.msra.mxu0 0.0
        %9117 = vmatpush.xpose.msra.mxu0 0.0
        %9118 = vmatpush.xpose.msra.mxu0 0.0
        %9119 = vmatpush.xpose.msra.mxu0 0.0
        %9120 = vmatpush.xpose.msra.mxu0 %v8984
        %9121 = vmatpush.xpose.msra.mxu0 %v8976
        %9122 = vmatmul.f32.gmra.mxu0 %v8959
        %v9123 = vpop.f32.mrf.mxu0
        %v9124 = vadd.f32 %v9104, %v9123
        %9125 = vdwg.mxu0
        %9126 = vmatpush.xpose.msra.mxu0 0.0
        %9127 = vmatpush.xpose.msra.mxu0 0.0
        %9128 = vmatpush.xpose.msra.mxu0 0.0
        %9129 = vmatpush.xpose.msra.mxu0 0.0
        %9130 = vmatpush.xpose.msra.mxu0 0.0
        %9131 = vmatpush.xpose.msra.mxu0 0.0
        %9132 = vmatpush.xpose.msra.mxu0 0.0
        %9133 = vmatpush.xpose.msra.mxu0 0.0
        %9134 = vmatpush.xpose.msra.mxu0 0.0
        %9135 = vmatpush.xpose.msra.mxu0 0.0
        %9136 = vmatpush.xpose.msra.mxu0 0.0
        %9137 = vmatpush.xpose.msra.mxu0 0.0
        %9138 = vmatpush.xpose.msra.mxu0 0.0
        %9139 = vmatpush.xpose.msra.mxu0 0.0
        %9140 = vmatpush.xpose.msra.mxu0 %v8985
        %9141 = vmatpush.xpose.msra.mxu0 %v8977
        %9142 = vmatmul.f32.gmra.mxu0 %v8960
        %v9143 = vpop.f32.mrf.mxu0
        %v9144 = vadd.f32 %v9124, %v9143
        %9145 = vdwg.mxu0
        %v9146 = vadd.f32 %v8969, %v9144
        %s9147 = scalar_lea.vmem [#allocation2], 128
        %v9148 = vld [vmem:[%s9147] sm:$0xff]
        %v9149 = vld [vmem:[%s9147 + $0x8] sm:$0xff]
        %v9150 = vld [vmem:[%s9147 + $0x10] sm:$0xff]
        %v9151 = vld [vmem:[%s9147 + $0x18] sm:$0xff]
        %v9152 = vld [vmem:[%s9147 + $0x20] sm:$0xff]
        %v9153 = vld [vmem:[%s9147 + $0x28] sm:$0xff]
        %v9154 = vld [vmem:[%s9147 + $0x30] sm:$0xff]
        %v9155 = vld [vmem:[%s9147 + $0x38] sm:$0xff]
        %v9156 = vld [vmem:[%s9147 + $0x40] sm:$0x3]
        %v9157 = vld [vmem:[%s9147 + $0x48] sm:$0x3]
        %v9158 = vld [vmem:[%s9147 + $0x50] sm:$0x3]
        %v9159 = vld [vmem:[%s9147 + $0x58] sm:$0x3]
        %v9160 = vld [vmem:[%s9147 + $0x60] sm:$0x3]
        %v9161 = vld [vmem:[%s9147 + $0x68] sm:$0x3]
        %v9162 = vld [vmem:[%s9147 + $0x70] sm:$0x3]
        %v9163 = vld [vmem:[%s9147 + $0x78] sm:$0x3]
        %v9172 = vrot.slane %v8953, 1
        %v9173 = vrot.slane %v8954, 1
        %v9174 = vrot.slane %v8955, 1
        %v9175 = vrot.slane %v8956, 1
        %v9176 = vrot.slane %v8957, 1
        %v9177 = vrot.slane %v8958, 1
        %v9178 = vrot.slane %v8959, 1
        %v9179 = vrot.slane %v8960, 1
        %9188 = vmatpush.xpose.msra.mxu0 0.0
        %9189 = vmatpush.xpose.msra.mxu0 0.0
        %9190 = vmatpush.xpose.msra.mxu0 0.0
        %9191 = vmatpush.xpose.msra.mxu0 0.0
        %9192 = vmatpush.xpose.msra.mxu0 0.0
        %9193 = vmatpush.xpose.msra.mxu0 0.0
        %9194 = vmatpush.xpose.msra.mxu0 0.0
        %9195 = vmatpush.xpose.msra.mxu0 0.0
        %9196 = vmatpush.xpose.msra.mxu0 0.0
        %9197 = vmatpush.xpose.msra.mxu0 0.0
        %9198 = vmatpush.xpose.msra.mxu0 0.0
        %9199 = vmatpush.xpose.msra.mxu0 0.0
        %9200 = vmatpush.xpose.msra.mxu0 0.0
        %9201 = vmatpush.xpose.msra.mxu0 0.0
        %9202 = vmatpush.xpose.msra.mxu0 %v9156
        %9203 = vmatpush.xpose.msra.mxu0 %v9148
        %9204 = vmatmul.f32.gmra.mxu0 %v9172
        %v9205 = vpop.f32.mrf.mxu0
        %v9206 = vadd.f32 0.0, %v9205
        %9207 = vdwg.mxu0
        %9208 = vmatpush.xpose.msra.mxu0 0.0
        %9209 = vmatpush.xpose.msra.mxu0 0.0
        %9210 = vmatpush.xpose.msra.mxu0 0.0
        %9211 = vmatpush.xpose.msra.mxu0 0.0
        %9212 = vmatpush.xpose.msra.mxu0 0.0
        %9213 = vmatpush.xpose.msra.mxu0 0.0
        %9214 = vmatpush.xpose.msra.mxu0 0.0
        %9215 = vmatpush.xpose.msra.mxu0 0.0
        %9216 = vmatpush.xpose.msra.mxu0 0.0
        %9217 = vmatpush.xpose.msra.mxu0 0.0
        %9218 = vmatpush.xpose.msra.mxu0 0.0
        %9219 = vmatpush.xpose.msra.mxu0 0.0
        %9220 = vmatpush.xpose.msra.mxu0 0.0
        %9221 = vmatpush.xpose.msra.mxu0 0.0
        %9222 = vmatpush.xpose.msra.mxu0 %v9157
        %9223 = vmatpush.xpose.msra.mxu0 %v9149
        %9224 = vmatmul.f32.gmra.mxu0 %v9173
        %v9225 = vpop.f32.mrf.mxu0
        %v9226 = vadd.f32 %v9206, %v9225
        %9227 = vdwg.mxu0
        %9228 = vmatpush.xpose.msra.mxu0 0.0
        %9229 = vmatpush.xpose.msra.mxu0 0.0
        %9230 = vmatpush.xpose.msra.mxu0 0.0
        %9231 = vmatpush.xpose.msra.mxu0 0.0
        %9232 = vmatpush.xpose.msra.mxu0 0.0
        %9233 = vmatpush.xpose.msra.mxu0 0.0
        %9234 = vmatpush.xpose.msra.mxu0 0.0
        %9235 = vmatpush.xpose.msra.mxu0 0.0
        %9236 = vmatpush.xpose.msra.mxu0 0.0
        %9237 = vmatpush.xpose.msra.mxu0 0.0
        %9238 = vmatpush.xpose.msra.mxu0 0.0
        %9239 = vmatpush.xpose.msra.mxu0 0.0
        %9240 = vmatpush.xpose.msra.mxu0 0.0
        %9241 = vmatpush.xpose.msra.mxu0 0.0
        %9242 = vmatpush.xpose.msra.mxu0 %v9158
        %9243 = vmatpush.xpose.msra.mxu0 %v9150
        %9244 = vmatmul.f32.gmra.mxu0 %v9174
        %v9245 = vpop.f32.mrf.mxu0
        %v9246 = vadd.f32 %v9226, %v9245
        %9247 = vdwg.mxu0
        %9248 = vmatpush.xpose.msra.mxu0 0.0
        %9249 = vmatpush.xpose.msra.mxu0 0.0
        %9250 = vmatpush.xpose.msra.mxu0 0.0
        %9251 = vmatpush.xpose.msra.mxu0 0.0
        %9252 = vmatpush.xpose.msra.mxu0 0.0
        %9253 = vmatpush.xpose.msra.mxu0 0.0
        %9254 = vmatpush.xpose.msra.mxu0 0.0
        %9255 = vmatpush.xpose.msra.mxu0 0.0
        %9256 = vmatpush.xpose.msra.mxu0 0.0
        %9257 = vmatpush.xpose.msra.mxu0 0.0
        %9258 = vmatpush.xpose.msra.mxu0 0.0
        %9259 = vmatpush.xpose.msra.mxu0 0.0
        %9260 = vmatpush.xpose.msra.mxu0 0.0
        %9261 = vmatpush.xpose.msra.mxu0 0.0
        %9262 = vmatpush.xpose.msra.mxu0 %v9159
        %9263 = vmatpush.xpose.msra.mxu0 %v9151
        %9264 = vmatmul.f32.gmra.mxu0 %v9175
        %v9265 = vpop.f32.mrf.mxu0
        %v9266 = vadd.f32 %v9246, %v9265
        %9267 = vdwg.mxu0
        %9268 = vmatpush.xpose.msra.mxu0 0.0
        %9269 = vmatpush.xpose.msra.mxu0 0.0
        %9270 = vmatpush.xpose.msra.mxu0 0.0
        %9271 = vmatpush.xpose.msra.mxu0 0.0
        %9272 = vmatpush.xpose.msra.mxu0 0.0
        %9273 = vmatpush.xpose.msra.mxu0 0.0
        %9274 = vmatpush.xpose.msra.mxu0 0.0
        %9275 = vmatpush.xpose.msra.mxu0 0.0
        %9276 = vmatpush.xpose.msra.mxu0 0.0
        %9277 = vmatpush.xpose.msra.mxu0 0.0
        %9278 = vmatpush.xpose.msra.mxu0 0.0
        %9279 = vmatpush.xpose.msra.mxu0 0.0
        %9280 = vmatpush.xpose.msra.mxu0 0.0
        %9281 = vmatpush.xpose.msra.mxu0 0.0
        %9282 = vmatpush.xpose.msra.mxu0 %v9160
        %9283 = vmatpush.xpose.msra.mxu0 %v9152
        %9284 = vmatmul.f32.gmra.mxu0 %v9176
        %v9285 = vpop.f32.mrf.mxu0
        %v9286 = vadd.f32 %v9266, %v9285
        %9287 = vdwg.mxu0
        %9288 = vmatpush.xpose.msra.mxu0 0.0
        %9289 = vmatpush.xpose.msra.mxu0 0.0
        %9290 = vmatpush.xpose.msra.mxu0 0.0
        %9291 = vmatpush.xpose.msra.mxu0 0.0
        %9292 = vmatpush.xpose.msra.mxu0 0.0
        %9293 = vmatpush.xpose.msra.mxu0 0.0
        %9294 = vmatpush.xpose.msra.mxu0 0.0
        %9295 = vmatpush.xpose.msra.mxu0 0.0
        %9296 = vmatpush.xpose.msra.mxu0 0.0
        %9297 = vmatpush.xpose.msra.mxu0 0.0
        %9298 = vmatpush.xpose.msra.mxu0 0.0
        %9299 = vmatpush.xpose.msra.mxu0 0.0
        %9300 = vmatpush.xpose.msra.mxu0 0.0
        %9301 = vmatpush.xpose.msra.mxu0 0.0
        %9302 = vmatpush.xpose.msra.mxu0 %v9161
        %9303 = vmatpush.xpose.msra.mxu0 %v9153
        %9304 = vmatmul.f32.gmra.mxu0 %v9177
        %v9305 = vpop.f32.mrf.mxu0
        %v9306 = vadd.f32 %v9286, %v9305
        %9307 = vdwg.mxu0
        %9308 = vmatpush.xpose.msra.mxu0 0.0
        %9309 = vmatpush.xpose.msra.mxu0 0.0
        %9310 = vmatpush.xpose.msra.mxu0 0.0
        %9311 = vmatpush.xpose.msra.mxu0 0.0
        %9312 = vmatpush.xpose.msra.mxu0 0.0
        %9313 = vmatpush.xpose.msra.mxu0 0.0
        %9314 = vmatpush.xpose.msra.mxu0 0.0
        %9315 = vmatpush.xpose.msra.mxu0 0.0
        %9316 = vmatpush.xpose.msra.mxu0 0.0
        %9317 = vmatpush.xpose.msra.mxu0 0.0
        %9318 = vmatpush.xpose.msra.mxu0 0.0
        %9319 = vmatpush.xpose.msra.mxu0 0.0
        %9320 = vmatpush.xpose.msra.mxu0 0.0
        %9321 = vmatpush.xpose.msra.mxu0 0.0
        %9322 = vmatpush.xpose.msra.mxu0 %v9162
        %9323 = vmatpush.xpose.msra.mxu0 %v9154
        %9324 = vmatmul.f32.gmra.mxu0 %v9178
        %v9325 = vpop.f32.mrf.mxu0
        %v9326 = vadd.f32 %v9306, %v9325
        %9327 = vdwg.mxu0
        %9328 = vmatpush.xpose.msra.mxu0 0.0
        %9329 = vmatpush.xpose.msra.mxu0 0.0
        %9330 = vmatpush.xpose.msra.mxu0 0.0
        %9331 = vmatpush.xpose.msra.mxu0 0.0
        %9332 = vmatpush.xpose.msra.mxu0 0.0
        %9333 = vmatpush.xpose.msra.mxu0 0.0
        %9334 = vmatpush.xpose.msra.mxu0 0.0
        %9335 = vmatpush.xpose.msra.mxu0 0.0
        %9336 = vmatpush.xpose.msra.mxu0 0.0
        %9337 = vmatpush.xpose.msra.mxu0 0.0
        %9338 = vmatpush.xpose.msra.mxu0 0.0
        %9339 = vmatpush.xpose.msra.mxu0 0.0
        %9340 = vmatpush.xpose.msra.mxu0 0.0
        %9341 = vmatpush.xpose.msra.mxu0 0.0
        %9342 = vmatpush.xpose.msra.mxu0 %v9163
        %9343 = vmatpush.xpose.msra.mxu0 %v9155
        %9344 = vmatmul.f32.gmra.mxu0 %v9179
        %v9345 = vpop.f32.mrf.mxu0
        %v9346 = vadd.f32 %v9326, %v9345
        %9347 = vdwg.mxu0
        %v9348 = vadd.f32 %v9146, %v9346
        %s9349 = scalar_lea.vmem [#allocation2], 256
        %v9350 = vld [vmem:[%s9349] sm:$0xff]
        %v9351 = vld [vmem:[%s9349 + $0x8] sm:$0xff]
        %v9352 = vld [vmem:[%s9349 + $0x10] sm:$0xff]
        %v9353 = vld [vmem:[%s9349 + $0x18] sm:$0xff]
        %v9354 = vld [vmem:[%s9349 + $0x20] sm:$0xff]
        %v9355 = vld [vmem:[%s9349 + $0x28] sm:$0xff]
        %v9356 = vld [vmem:[%s9349 + $0x30] sm:$0xff]
        %v9357 = vld [vmem:[%s9349 + $0x38] sm:$0xff]
        %v9358 = vld [vmem:[%s9349 + $0x40] sm:$0x3]
        %v9359 = vld [vmem:[%s9349 + $0x48] sm:$0x3]
        %v9360 = vld [vmem:[%s9349 + $0x50] sm:$0x3]
        %v9361 = vld [vmem:[%s9349 + $0x58] sm:$0x3]
        %v9362 = vld [vmem:[%s9349 + $0x60] sm:$0x3]
        %v9363 = vld [vmem:[%s9349 + $0x68] sm:$0x3]
        %v9364 = vld [vmem:[%s9349 + $0x70] sm:$0x3]
        %v9365 = vld [vmem:[%s9349 + $0x78] sm:$0x3]
        %v9366 = vrot.slane %v8953, 2
        %v9367 = vrot.slane %v8954, 2
        %v9368 = vrot.slane %v8955, 2
        %v9369 = vrot.slane %v8956, 2
        %v9370 = vrot.slane %v8957, 2
        %v9371 = vrot.slane %v8958, 2
        %v9372 = vrot.slane %v8959, 2
        %v9373 = vrot.slane %v8960, 2
        %9382 = vmatpush.xpose.msra.mxu0 0.0
        %9383 = vmatpush.xpose.msra.mxu0 0.0
        %9384 = vmatpush.xpose.msra.mxu0 0.0
        %9385 = vmatpush.xpose.msra.mxu0 0.0
        %9386 = vmatpush.xpose.msra.mxu0 0.0
        %9387 = vmatpush.xpose.msra.mxu0 0.0
        %9388 = vmatpush.xpose.msra.mxu0 0.0
        %9389 = vmatpush.xpose.msra.mxu0 0.0
        %9390 = vmatpush.xpose.msra.mxu0 0.0
        %9391 = vmatpush.xpose.msra.mxu0 0.0
        %9392 = vmatpush.xpose.msra.mxu0 0.0
        %9393 = vmatpush.xpose.msra.mxu0 0.0
        %9394 = vmatpush.xpose.msra.mxu0 0.0
        %9395 = vmatpush.xpose.msra.mxu0 0.0
        %9396 = vmatpush.xpose.msra.mxu0 %v9358
        %9397 = vmatpush.xpose.msra.mxu0 %v9350
        %9398 = vmatmul.f32.gmra.mxu0 %v9366
        %v9399 = vpop.f32.mrf.mxu0
        %v9400 = vadd.f32 0.0, %v9399
        %9401 = vdwg.mxu0
        %9402 = vmatpush.xpose.msra.mxu0 0.0
        %9403 = vmatpush.xpose.msra.mxu0 0.0
        %9404 = vmatpush.xpose.msra.mxu0 0.0
        %9405 = vmatpush.xpose.msra.mxu0 0.0
        %9406 = vmatpush.xpose.msra.mxu0 0.0
        %9407 = vmatpush.xpose.msra.mxu0 0.0
        %9408 = vmatpush.xpose.msra.mxu0 0.0
        %9409 = vmatpush.xpose.msra.mxu0 0.0
        %9410 = vmatpush.xpose.msra.mxu0 0.0
        %9411 = vmatpush.xpose.msra.mxu0 0.0
        %9412 = vmatpush.xpose.msra.mxu0 0.0
        %9413 = vmatpush.xpose.msra.mxu0 0.0
        %9414 = vmatpush.xpose.msra.mxu0 0.0
        %9415 = vmatpush.xpose.msra.mxu0 0.0
        %9416 = vmatpush.xpose.msra.mxu0 %v9359
        %9417 = vmatpush.xpose.msra.mxu0 %v9351
        %9418 = vmatmul.f32.gmra.mxu0 %v9367
        %v9419 = vpop.f32.mrf.mxu0
        %v9420 = vadd.f32 %v9400, %v9419
        %9421 = vdwg.mxu0
        %9422 = vmatpush.xpose.msra.mxu0 0.0
        %9423 = vmatpush.xpose.msra.mxu0 0.0
        %9424 = vmatpush.xpose.msra.mxu0 0.0
        %9425 = vmatpush.xpose.msra.mxu0 0.0
        %9426 = vmatpush.xpose.msra.mxu0 0.0
        %9427 = vmatpush.xpose.msra.mxu0 0.0
        %9428 = vmatpush.xpose.msra.mxu0 0.0
        %9429 = vmatpush.xpose.msra.mxu0 0.0
        %9430 = vmatpush.xpose.msra.mxu0 0.0
        %9431 = vmatpush.xpose.msra.mxu0 0.0
        %9432 = vmatpush.xpose.msra.mxu0 0.0
        %9433 = vmatpush.xpose.msra.mxu0 0.0
        %9434 = vmatpush.xpose.msra.mxu0 0.0
        %9435 = vmatpush.xpose.msra.mxu0 0.0
        %9436 = vmatpush.xpose.msra.mxu0 %v9360
        %9437 = vmatpush.xpose.msra.mxu0 %v9352
        %9438 = vmatmul.f32.gmra.mxu0 %v9368
        %v9439 = vpop.f32.mrf.mxu0
        %v9440 = vadd.f32 %v9420, %v9439
        %9441 = vdwg.mxu0
        %9442 = vmatpush.xpose.msra.mxu0 0.0
        %9443 = vmatpush.xpose.msra.mxu0 0.0
        %9444 = vmatpush.xpose.msra.mxu0 0.0
        %9445 = vmatpush.xpose.msra.mxu0 0.0
        %9446 = vmatpush.xpose.msra.mxu0 0.0
        %9447 = vmatpush.xpose.msra.mxu0 0.0
        %9448 = vmatpush.xpose.msra.mxu0 0.0
        %9449 = vmatpush.xpose.msra.mxu0 0.0
        %9450 = vmatpush.xpose.msra.mxu0 0.0
        %9451 = vmatpush.xpose.msra.mxu0 0.0
        %9452 = vmatpush.xpose.msra.mxu0 0.0
        %9453 = vmatpush.xpose.msra.mxu0 0.0
        %9454 = vmatpush.xpose.msra.mxu0 0.0
        %9455 = vmatpush.xpose.msra.mxu0 0.0
        %9456 = vmatpush.xpose.msra.mxu0 %v9361
        %9457 = vmatpush.xpose.msra.mxu0 %v9353
        %9458 = vmatmul.f32.gmra.mxu0 %v9369
        %v9459 = vpop.f32.mrf.mxu0
        %v9460 = vadd.f32 %v9440, %v9459
        %9461 = vdwg.mxu0
        %9462 = vmatpush.xpose.msra.mxu0 0.0
        %9463 = vmatpush.xpose.msra.mxu0 0.0
        %9464 = vmatpush.xpose.msra.mxu0 0.0
        %9465 = vmatpush.xpose.msra.mxu0 0.0
        %9466 = vmatpush.xpose.msra.mxu0 0.0
        %9467 = vmatpush.xpose.msra.mxu0 0.0
        %9468 = vmatpush.xpose.msra.mxu0 0.0
        %9469 = vmatpush.xpose.msra.mxu0 0.0
        %9470 = vmatpush.xpose.msra.mxu0 0.0
        %9471 = vmatpush.xpose.msra.mxu0 0.0
        %9472 = vmatpush.xpose.msra.mxu0 0.0
        %9473 = vmatpush.xpose.msra.mxu0 0.0
        %9474 = vmatpush.xpose.msra.mxu0 0.0
        %9475 = vmatpush.xpose.msra.mxu0 0.0
        %9476 = vmatpush.xpose.msra.mxu0 %v9362
        %9477 = vmatpush.xpose.msra.mxu0 %v9354
        %9478 = vmatmul.f32.gmra.mxu0 %v9370
        %v9479 = vpop.f32.mrf.mxu0
        %v9480 = vadd.f32 %v9460, %v9479
        %9481 = vdwg.mxu0
        %9482 = vmatpush.xpose.msra.mxu0 0.0
        %9483 = vmatpush.xpose.msra.mxu0 0.0
        %9484 = vmatpush.xpose.msra.mxu0 0.0
        %9485 = vmatpush.xpose.msra.mxu0 0.0
        %9486 = vmatpush.xpose.msra.mxu0 0.0
        %9487 = vmatpush.xpose.msra.mxu0 0.0
        %9488 = vmatpush.xpose.msra.mxu0 0.0
        %9489 = vmatpush.xpose.msra.mxu0 0.0
        %9490 = vmatpush.xpose.msra.mxu0 0.0
        %9491 = vmatpush.xpose.msra.mxu0 0.0
        %9492 = vmatpush.xpose.msra.mxu0 0.0
        %9493 = vmatpush.xpose.msra.mxu0 0.0
        %9494 = vmatpush.xpose.msra.mxu0 0.0
        %9495 = vmatpush.xpose.msra.mxu0 0.0
        %9496 = vmatpush.xpose.msra.mxu0 %v9363
        %9497 = vmatpush.xpose.msra.mxu0 %v9355
        %9498 = vmatmul.f32.gmra.mxu0 %v9371
        %v9499 = vpop.f32.mrf.mxu0
        %v9500 = vadd.f32 %v9480, %v9499
        %9501 = vdwg.mxu0
        %9502 = vmatpush.xpose.msra.mxu0 0.0
        %9503 = vmatpush.xpose.msra.mxu0 0.0
        %9504 = vmatpush.xpose.msra.mxu0 0.0
        %9505 = vmatpush.xpose.msra.mxu0 0.0
        %9506 = vmatpush.xpose.msra.mxu0 0.0
        %9507 = vmatpush.xpose.msra.mxu0 0.0
        %9508 = vmatpush.xpose.msra.mxu0 0.0
        %9509 = vmatpush.xpose.msra.mxu0 0.0
        %9510 = vmatpush.xpose.msra.mxu0 0.0
        %9511 = vmatpush.xpose.msra.mxu0 0.0
        %9512 = vmatpush.xpose.msra.mxu0 0.0
        %9513 = vmatpush.xpose.msra.mxu0 0.0
        %9514 = vmatpush.xpose.msra.mxu0 0.0
        %9515 = vmatpush.xpose.msra.mxu0 0.0
        %9516 = vmatpush.xpose.msra.mxu0 %v9364
        %9517 = vmatpush.xpose.msra.mxu0 %v9356
        %9518 = vmatmul.f32.gmra.mxu0 %v9372
        %v9519 = vpop.f32.mrf.mxu0
        %v9520 = vadd.f32 %v9500, %v9519
        %9521 = vdwg.mxu0
        %9522 = vmatpush.xpose.msra.mxu0 0.0
        %9523 = vmatpush.xpose.msra.mxu0 0.0
        %9524 = vmatpush.xpose.msra.mxu0 0.0
        %9525 = vmatpush.xpose.msra.mxu0 0.0
        %9526 = vmatpush.xpose.msra.mxu0 0.0
        %9527 = vmatpush.xpose.msra.mxu0 0.0
        %9528 = vmatpush.xpose.msra.mxu0 0.0
        %9529 = vmatpush.xpose.msra.mxu0 0.0
        %9530 = vmatpush.xpose.msra.mxu0 0.0
        %9531 = vmatpush.xpose.msra.mxu0 0.0
        %9532 = vmatpush.xpose.msra.mxu0 0.0
        %9533 = vmatpush.xpose.msra.mxu0 0.0
        %9534 = vmatpush.xpose.msra.mxu0 0.0
        %9535 = vmatpush.xpose.msra.mxu0 0.0
        %9536 = vmatpush.xpose.msra.mxu0 %v9365
        %9537 = vmatpush.xpose.msra.mxu0 %v9357
        %9538 = vmatmul.f32.gmra.mxu0 %v9373
        %v9539 = vpop.f32.mrf.mxu0
        %v9540 = vadd.f32 %v9520, %v9539
        %9541 = vdwg.mxu0
        %v9542 = vadd.f32 %v9348, %v9540
        %s9543 = scalar_lea.vmem [#allocation2], 384
        %v9544 = vld [vmem:[%s9543] sm:$0xff]
        %v9545 = vld [vmem:[%s9543 + $0x8] sm:$0xff]
        %v9546 = vld [vmem:[%s9543 + $0x10] sm:$0xff]
        %v9547 = vld [vmem:[%s9543 + $0x18] sm:$0xff]
        %v9548 = vld [vmem:[%s9543 + $0x20] sm:$0xff]
        %v9549 = vld [vmem:[%s9543 + $0x28] sm:$0xff]
        %v9550 = vld [vmem:[%s9543 + $0x30] sm:$0xff]
        %v9551 = vld [vmem:[%s9543 + $0x38] sm:$0xff]
        %v9552 = vld [vmem:[%s9543 + $0x40] sm:$0x3]
        %v9553 = vld [vmem:[%s9543 + $0x48] sm:$0x3]
        %v9554 = vld [vmem:[%s9543 + $0x50] sm:$0x3]
        %v9555 = vld [vmem:[%s9543 + $0x58] sm:$0x3]
        %v9556 = vld [vmem:[%s9543 + $0x60] sm:$0x3]
        %v9557 = vld [vmem:[%s9543 + $0x68] sm:$0x3]
        %v9558 = vld [vmem:[%s9543 + $0x70] sm:$0x3]
        %v9559 = vld [vmem:[%s9543 + $0x78] sm:$0x3]
        %v9560 = vrot.slane %v8953, 3
        %v9561 = vrot.slane %v8954, 3
        %v9562 = vrot.slane %v8955, 3
        %v9563 = vrot.slane %v8956, 3
        %v9564 = vrot.slane %v8957, 3
        %v9565 = vrot.slane %v8958, 3
        %v9566 = vrot.slane %v8959, 3
        %v9567 = vrot.slane %v8960, 3
        %9576 = vmatpush.xpose.msra.mxu0 0.0
        %9577 = vmatpush.xpose.msra.mxu0 0.0
        %9578 = vmatpush.xpose.msra.mxu0 0.0
        %9579 = vmatpush.xpose.msra.mxu0 0.0
        %9580 = vmatpush.xpose.msra.mxu0 0.0
        %9581 = vmatpush.xpose.msra.mxu0 0.0
        %9582 = vmatpush.xpose.msra.mxu0 0.0
        %9583 = vmatpush.xpose.msra.mxu0 0.0
        %9584 = vmatpush.xpose.msra.mxu0 0.0
        %9585 = vmatpush.xpose.msra.mxu0 0.0
        %9586 = vmatpush.xpose.msra.mxu0 0.0
        %9587 = vmatpush.xpose.msra.mxu0 0.0
        %9588 = vmatpush.xpose.msra.mxu0 0.0
        %9589 = vmatpush.xpose.msra.mxu0 0.0
        %9590 = vmatpush.xpose.msra.mxu0 %v9552
        %9591 = vmatpush.xpose.msra.mxu0 %v9544
        %9592 = vmatmul.f32.gmra.mxu0 %v9560
        %v9593 = vpop.f32.mrf.mxu0
        %v9594 = vadd.f32 0.0, %v9593
        %9595 = vdwg.mxu0
        %9596 = vmatpush.xpose.msra.mxu0 0.0
        %9597 = vmatpush.xpose.msra.mxu0 0.0
        %9598 = vmatpush.xpose.msra.mxu0 0.0
        %9599 = vmatpush.xpose.msra.mxu0 0.0
        %9600 = vmatpush.xpose.msra.mxu0 0.0
        %9601 = vmatpush.xpose.msra.mxu0 0.0
        %9602 = vmatpush.xpose.msra.mxu0 0.0
        %9603 = vmatpush.xpose.msra.mxu0 0.0
        %9604 = vmatpush.xpose.msra.mxu0 0.0
        %9605 = vmatpush.xpose.msra.mxu0 0.0
        %9606 = vmatpush.xpose.msra.mxu0 0.0
        %9607 = vmatpush.xpose.msra.mxu0 0.0
        %9608 = vmatpush.xpose.msra.mxu0 0.0
        %9609 = vmatpush.xpose.msra.mxu0 0.0
        %9610 = vmatpush.xpose.msra.mxu0 %v9553
        %9611 = vmatpush.xpose.msra.mxu0 %v9545
        %9612 = vmatmul.f32.gmra.mxu0 %v9561
        %v9613 = vpop.f32.mrf.mxu0
        %v9614 = vadd.f32 %v9594, %v9613
        %9615 = vdwg.mxu0
        %9616 = vmatpush.xpose.msra.mxu0 0.0
        %9617 = vmatpush.xpose.msra.mxu0 0.0
        %9618 = vmatpush.xpose.msra.mxu0 0.0
        %9619 = vmatpush.xpose.msra.mxu0 0.0
        %9620 = vmatpush.xpose.msra.mxu0 0.0
        %9621 = vmatpush.xpose.msra.mxu0 0.0
        %9622 = vmatpush.xpose.msra.mxu0 0.0
        %9623 = vmatpush.xpose.msra.mxu0 0.0
        %9624 = vmatpush.xpose.msra.mxu0 0.0
        %9625 = vmatpush.xpose.msra.mxu0 0.0
        %9626 = vmatpush.xpose.msra.mxu0 0.0
        %9627 = vmatpush.xpose.msra.mxu0 0.0
        %9628 = vmatpush.xpose.msra.mxu0 0.0
        %9629 = vmatpush.xpose.msra.mxu0 0.0
        %9630 = vmatpush.xpose.msra.mxu0 %v9554
        %9631 = vmatpush.xpose.msra.mxu0 %v9546
        %9632 = vmatmul.f32.gmra.mxu0 %v9562
        %v9633 = vpop.f32.mrf.mxu0
        %v9634 = vadd.f32 %v9614, %v9633
        %9635 = vdwg.mxu0
        %9636 = vmatpush.xpose.msra.mxu0 0.0
        %9637 = vmatpush.xpose.msra.mxu0 0.0
        %9638 = vmatpush.xpose.msra.mxu0 0.0
        %9639 = vmatpush.xpose.msra.mxu0 0.0
        %9640 = vmatpush.xpose.msra.mxu0 0.0
        %9641 = vmatpush.xpose.msra.mxu0 0.0
        %9642 = vmatpush.xpose.msra.mxu0 0.0
        %9643 = vmatpush.xpose.msra.mxu0 0.0
        %9644 = vmatpush.xpose.msra.mxu0 0.0
        %9645 = vmatpush.xpose.msra.mxu0 0.0
        %9646 = vmatpush.xpose.msra.mxu0 0.0
        %9647 = vmatpush.xpose.msra.mxu0 0.0
        %9648 = vmatpush.xpose.msra.mxu0 0.0
        %9649 = vmatpush.xpose.msra.mxu0 0.0
        %9650 = vmatpush.xpose.msra.mxu0 %v9555
        %9651 = vmatpush.xpose.msra.mxu0 %v9547
        %9652 = vmatmul.f32.gmra.mxu0 %v9563
        %v9653 = vpop.f32.mrf.mxu0
        %v9654 = vadd.f32 %v9634, %v9653
        %9655 = vdwg.mxu0
        %9656 = vmatpush.xpose.msra.mxu0 0.0
        %9657 = vmatpush.xpose.msra.mxu0 0.0
        %9658 = vmatpush.xpose.msra.mxu0 0.0
        %9659 = vmatpush.xpose.msra.mxu0 0.0
        %9660 = vmatpush.xpose.msra.mxu0 0.0
        %9661 = vmatpush.xpose.msra.mxu0 0.0
        %9662 = vmatpush.xpose.msra.mxu0 0.0
        %9663 = vmatpush.xpose.msra.mxu0 0.0
        %9664 = vmatpush.xpose.msra.mxu0 0.0
        %9665 = vmatpush.xpose.msra.mxu0 0.0
        %9666 = vmatpush.xpose.msra.mxu0 0.0
        %9667 = vmatpush.xpose.msra.mxu0 0.0
        %9668 = vmatpush.xpose.msra.mxu0 0.0
        %9669 = vmatpush.xpose.msra.mxu0 0.0
        %9670 = vmatpush.xpose.msra.mxu0 %v9556
        %9671 = vmatpush.xpose.msra.mxu0 %v9548
        %9672 = vmatmul.f32.gmra.mxu0 %v9564
        %v9673 = vpop.f32.mrf.mxu0
        %v9674 = vadd.f32 %v9654, %v9673
        %9675 = vdwg.mxu0
        %9676 = vmatpush.xpose.msra.mxu0 0.0
        %9677 = vmatpush.xpose.msra.mxu0 0.0
        %9678 = vmatpush.xpose.msra.mxu0 0.0
        %9679 = vmatpush.xpose.msra.mxu0 0.0
        %9680 = vmatpush.xpose.msra.mxu0 0.0
        %9681 = vmatpush.xpose.msra.mxu0 0.0
        %9682 = vmatpush.xpose.msra.mxu0 0.0
        %9683 = vmatpush.xpose.msra.mxu0 0.0
        %9684 = vmatpush.xpose.msra.mxu0 0.0
        %9685 = vmatpush.xpose.msra.mxu0 0.0
        %9686 = vmatpush.xpose.msra.mxu0 0.0
        %9687 = vmatpush.xpose.msra.mxu0 0.0
        %9688 = vmatpush.xpose.msra.mxu0 0.0
        %9689 = vmatpush.xpose.msra.mxu0 0.0
        %9690 = vmatpush.xpose.msra.mxu0 %v9557
        %9691 = vmatpush.xpose.msra.mxu0 %v9549
        %9692 = vmatmul.f32.gmra.mxu0 %v9565
        %v9693 = vpop.f32.mrf.mxu0
        %v9694 = vadd.f32 %v9674, %v9693
        %9695 = vdwg.mxu0
        %9696 = vmatpush.xpose.msra.mxu0 0.0
        %9697 = vmatpush.xpose.msra.mxu0 0.0
        %9698 = vmatpush.xpose.msra.mxu0 0.0
        %9699 = vmatpush.xpose.msra.mxu0 0.0
        %9700 = vmatpush.xpose.msra.mxu0 0.0
        %9701 = vmatpush.xpose.msra.mxu0 0.0
        %9702 = vmatpush.xpose.msra.mxu0 0.0
        %9703 = vmatpush.xpose.msra.mxu0 0.0
        %9704 = vmatpush.xpose.msra.mxu0 0.0
        %9705 = vmatpush.xpose.msra.mxu0 0.0
        %9706 = vmatpush.xpose.msra.mxu0 0.0
        %9707 = vmatpush.xpose.msra.mxu0 0.0
        %9708 = vmatpush.xpose.msra.mxu0 0.0
        %9709 = vmatpush.xpose.msra.mxu0 0.0
        %9710 = vmatpush.xpose.msra.mxu0 %v9558
        %9711 = vmatpush.xpose.msra.mxu0 %v9550
        %9712 = vmatmul.f32.gmra.mxu0 %v9566
        %v9713 = vpop.f32.mrf.mxu0
        %v9714 = vadd.f32 %v9694, %v9713
        %9715 = vdwg.mxu0
        %9716 = vmatpush.xpose.msra.mxu0 0.0
        %9717 = vmatpush.xpose.msra.mxu0 0.0
        %9718 = vmatpush.xpose.msra.mxu0 0.0
        %9719 = vmatpush.xpose.msra.mxu0 0.0
        %9720 = vmatpush.xpose.msra.mxu0 0.0
        %9721 = vmatpush.xpose.msra.mxu0 0.0
        %9722 = vmatpush.xpose.msra.mxu0 0.0
        %9723 = vmatpush.xpose.msra.mxu0 0.0
        %9724 = vmatpush.xpose.msra.mxu0 0.0
        %9725 = vmatpush.xpose.msra.mxu0 0.0
        %9726 = vmatpush.xpose.msra.mxu0 0.0
        %9727 = vmatpush.xpose.msra.mxu0 0.0
        %9728 = vmatpush.xpose.msra.mxu0 0.0
        %9729 = vmatpush.xpose.msra.mxu0 0.0
        %9730 = vmatpush.xpose.msra.mxu0 %v9559
        %9731 = vmatpush.xpose.msra.mxu0 %v9551
        %9732 = vmatmul.f32.gmra.mxu0 %v9567
        %v9733 = vpop.f32.mrf.mxu0
        %v9734 = vadd.f32 %v9714, %v9733
        %9735 = vdwg.mxu0
        %v9736 = vadd.f32 %v9542, %v9734
        %s9737 = scalar_lea.vmem [#allocation2], 512
        %v9738 = vld [vmem:[%s9737] sm:$0xff]
        %v9739 = vld [vmem:[%s9737 + $0x8] sm:$0xff]
        %v9740 = vld [vmem:[%s9737 + $0x10] sm:$0xff]
        %v9741 = vld [vmem:[%s9737 + $0x18] sm:$0xff]
        %v9742 = vld [vmem:[%s9737 + $0x20] sm:$0xff]
        %v9743 = vld [vmem:[%s9737 + $0x28] sm:$0xff]
        %v9744 = vld [vmem:[%s9737 + $0x30] sm:$0xff]
        %v9745 = vld [vmem:[%s9737 + $0x38] sm:$0xff]
        %v9746 = vld [vmem:[%s9737 + $0x40] sm:$0x3]
        %v9747 = vld [vmem:[%s9737 + $0x48] sm:$0x3]
        %v9748 = vld [vmem:[%s9737 + $0x50] sm:$0x3]
        %v9749 = vld [vmem:[%s9737 + $0x58] sm:$0x3]
        %v9750 = vld [vmem:[%s9737 + $0x60] sm:$0x3]
        %v9751 = vld [vmem:[%s9737 + $0x68] sm:$0x3]
        %v9752 = vld [vmem:[%s9737 + $0x70] sm:$0x3]
        %v9753 = vld [vmem:[%s9737 + $0x78] sm:$0x3]
        %v9754 = vrot.slane %v8953, 4
        %v9755 = vrot.slane %v8954, 4
        %v9756 = vrot.slane %v8955, 4
        %v9757 = vrot.slane %v8956, 4
        %v9758 = vrot.slane %v8957, 4
        %v9759 = vrot.slane %v8958, 4
        %v9760 = vrot.slane %v8959, 4
        %v9761 = vrot.slane %v8960, 4
        %9770 = vmatpush.xpose.msra.mxu0 0.0
        %9771 = vmatpush.xpose.msra.mxu0 0.0
        %9772 = vmatpush.xpose.msra.mxu0 0.0
        %9773 = vmatpush.xpose.msra.mxu0 0.0
        %9774 = vmatpush.xpose.msra.mxu0 0.0
        %9775 = vmatpush.xpose.msra.mxu0 0.0
        %9776 = vmatpush.xpose.msra.mxu0 0.0
        %9777 = vmatpush.xpose.msra.mxu0 0.0
        %9778 = vmatpush.xpose.msra.mxu0 0.0
        %9779 = vmatpush.xpose.msra.mxu0 0.0
        %9780 = vmatpush.xpose.msra.mxu0 0.0
        %9781 = vmatpush.xpose.msra.mxu0 0.0
        %9782 = vmatpush.xpose.msra.mxu0 0.0
        %9783 = vmatpush.xpose.msra.mxu0 0.0
        %9784 = vmatpush.xpose.msra.mxu0 %v9746
        %9785 = vmatpush.xpose.msra.mxu0 %v9738
        %9786 = vmatmul.f32.gmra.mxu0 %v9754
        %v9787 = vpop.f32.mrf.mxu0
        %v9788 = vadd.f32 0.0, %v9787
        %9789 = vdwg.mxu0
        %9790 = vmatpush.xpose.msra.mxu0 0.0
        %9791 = vmatpush.xpose.msra.mxu0 0.0
        %9792 = vmatpush.xpose.msra.mxu0 0.0
        %9793 = vmatpush.xpose.msra.mxu0 0.0
        %9794 = vmatpush.xpose.msra.mxu0 0.0
        %9795 = vmatpush.xpose.msra.mxu0 0.0
        %9796 = vmatpush.xpose.msra.mxu0 0.0
        %9797 = vmatpush.xpose.msra.mxu0 0.0
        %9798 = vmatpush.xpose.msra.mxu0 0.0
        %9799 = vmatpush.xpose.msra.mxu0 0.0
        %9800 = vmatpush.xpose.msra.mxu0 0.0
        %9801 = vmatpush.xpose.msra.mxu0 0.0
        %9802 = vmatpush.xpose.msra.mxu0 0.0
        %9803 = vmatpush.xpose.msra.mxu0 0.0
        %9804 = vmatpush.xpose.msra.mxu0 %v9747
        %9805 = vmatpush.xpose.msra.mxu0 %v9739
        %9806 = vmatmul.f32.gmra.mxu0 %v9755
        %v9807 = vpop.f32.mrf.mxu0
        %v9808 = vadd.f32 %v9788, %v9807
        %9809 = vdwg.mxu0
        %9810 = vmatpush.xpose.msra.mxu0 0.0
        %9811 = vmatpush.xpose.msra.mxu0 0.0
        %9812 = vmatpush.xpose.msra.mxu0 0.0
        %9813 = vmatpush.xpose.msra.mxu0 0.0
        %9814 = vmatpush.xpose.msra.mxu0 0.0
        %9815 = vmatpush.xpose.msra.mxu0 0.0
        %9816 = vmatpush.xpose.msra.mxu0 0.0
        %9817 = vmatpush.xpose.msra.mxu0 0.0
        %9818 = vmatpush.xpose.msra.mxu0 0.0
        %9819 = vmatpush.xpose.msra.mxu0 0.0
        %9820 = vmatpush.xpose.msra.mxu0 0.0
        %9821 = vmatpush.xpose.msra.mxu0 0.0
        %9822 = vmatpush.xpose.msra.mxu0 0.0
        %9823 = vmatpush.xpose.msra.mxu0 0.0
        %9824 = vmatpush.xpose.msra.mxu0 %v9748
        %9825 = vmatpush.xpose.msra.mxu0 %v9740
        %9826 = vmatmul.f32.gmra.mxu0 %v9756
        %v9827 = vpop.f32.mrf.mxu0
        %v9828 = vadd.f32 %v9808, %v9827
        %9829 = vdwg.mxu0
        %9830 = vmatpush.xpose.msra.mxu0 0.0
        %9831 = vmatpush.xpose.msra.mxu0 0.0
        %9832 = vmatpush.xpose.msra.mxu0 0.0
        %9833 = vmatpush.xpose.msra.mxu0 0.0
        %9834 = vmatpush.xpose.msra.mxu0 0.0
        %9835 = vmatpush.xpose.msra.mxu0 0.0
        %9836 = vmatpush.xpose.msra.mxu0 0.0
        %9837 = vmatpush.xpose.msra.mxu0 0.0
        %9838 = vmatpush.xpose.msra.mxu0 0.0
        %9839 = vmatpush.xpose.msra.mxu0 0.0
        %9840 = vmatpush.xpose.msra.mxu0 0.0
        %9841 = vmatpush.xpose.msra.mxu0 0.0
        %9842 = vmatpush.xpose.msra.mxu0 0.0
        %9843 = vmatpush.xpose.msra.mxu0 0.0
        %9844 = vmatpush.xpose.msra.mxu0 %v9749
        %9845 = vmatpush.xpose.msra.mxu0 %v9741
        %9846 = vmatmul.f32.gmra.mxu0 %v9757
        %v9847 = vpop.f32.mrf.mxu0
        %v9848 = vadd.f32 %v9828, %v9847
        %9849 = vdwg.mxu0
        %9850 = vmatpush.xpose.msra.mxu0 0.0
        %9851 = vmatpush.xpose.msra.mxu0 0.0
        %9852 = vmatpush.xpose.msra.mxu0 0.0
        %9853 = vmatpush.xpose.msra.mxu0 0.0
        %9854 = vmatpush.xpose.msra.mxu0 0.0
        %9855 = vmatpush.xpose.msra.mxu0 0.0
        %9856 = vmatpush.xpose.msra.mxu0 0.0
        %9857 = vmatpush.xpose.msra.mxu0 0.0
        %9858 = vmatpush.xpose.msra.mxu0 0.0
        %9859 = vmatpush.xpose.msra.mxu0 0.0
        %9860 = vmatpush.xpose.msra.mxu0 0.0
        %9861 = vmatpush.xpose.msra.mxu0 0.0
        %9862 = vmatpush.xpose.msra.mxu0 0.0
        %9863 = vmatpush.xpose.msra.mxu0 0.0
        %9864 = vmatpush.xpose.msra.mxu0 %v9750
        %9865 = vmatpush.xpose.msra.mxu0 %v9742
        %9866 = vmatmul.f32.gmra.mxu0 %v9758
        %v9867 = vpop.f32.mrf.mxu0
        %v9868 = vadd.f32 %v9848, %v9867
        %9869 = vdwg.mxu0
        %9870 = vmatpush.xpose.msra.mxu0 0.0
        %9871 = vmatpush.xpose.msra.mxu0 0.0
        %9872 = vmatpush.xpose.msra.mxu0 0.0
        %9873 = vmatpush.xpose.msra.mxu0 0.0
        %9874 = vmatpush.xpose.msra.mxu0 0.0
        %9875 = vmatpush.xpose.msra.mxu0 0.0
        %9876 = vmatpush.xpose.msra.mxu0 0.0
        %9877 = vmatpush.xpose.msra.mxu0 0.0
        %9878 = vmatpush.xpose.msra.mxu0 0.0
        %9879 = vmatpush.xpose.msra.mxu0 0.0
        %9880 = vmatpush.xpose.msra.mxu0 0.0
        %9881 = vmatpush.xpose.msra.mxu0 0.0
        %9882 = vmatpush.xpose.msra.mxu0 0.0
        %9883 = vmatpush.xpose.msra.mxu0 0.0
        %9884 = vmatpush.xpose.msra.mxu0 %v9751
        %9885 = vmatpush.xpose.msra.mxu0 %v9743
        %9886 = vmatmul.f32.gmra.mxu0 %v9759
        %v9887 = vpop.f32.mrf.mxu0
        %v9888 = vadd.f32 %v9868, %v9887
        %9889 = vdwg.mxu0
        %9890 = vmatpush.xpose.msra.mxu0 0.0
        %9891 = vmatpush.xpose.msra.mxu0 0.0
        %9892 = vmatpush.xpose.msra.mxu0 0.0
        %9893 = vmatpush.xpose.msra.mxu0 0.0
        %9894 = vmatpush.xpose.msra.mxu0 0.0
        %9895 = vmatpush.xpose.msra.mxu0 0.0
        %9896 = vmatpush.xpose.msra.mxu0 0.0
        %9897 = vmatpush.xpose.msra.mxu0 0.0
        %9898 = vmatpush.xpose.msra.mxu0 0.0
        %9899 = vmatpush.xpose.msra.mxu0 0.0
        %9900 = vmatpush.xpose.msra.mxu0 0.0
        %9901 = vmatpush.xpose.msra.mxu0 0.0
        %9902 = vmatpush.xpose.msra.mxu0 0.0
        %9903 = vmatpush.xpose.msra.mxu0 0.0
        %9904 = vmatpush.xpose.msra.mxu0 %v9752
        %9905 = vmatpush.xpose.msra.mxu0 %v9744
        %9906 = vmatmul.f32.gmra.mxu0 %v9760
        %v9907 = vpop.f32.mrf.mxu0
        %v9908 = vadd.f32 %v9888, %v9907
        %9909 = vdwg.mxu0
        %9910 = vmatpush.xpose.msra.mxu0 0.0
        %9911 = vmatpush.xpose.msra.mxu0 0.0
        %9912 = vmatpush.xpose.msra.mxu0 0.0
        %9913 = vmatpush.xpose.msra.mxu0 0.0
        %9914 = vmatpush.xpose.msra.mxu0 0.0
        %9915 = vmatpush.xpose.msra.mxu0 0.0
        %9916 = vmatpush.xpose.msra.mxu0 0.0
        %9917 = vmatpush.xpose.msra.mxu0 0.0
        %9918 = vmatpush.xpose.msra.mxu0 0.0
        %9919 = vmatpush.xpose.msra.mxu0 0.0
        %9920 = vmatpush.xpose.msra.mxu0 0.0
        %9921 = vmatpush.xpose.msra.mxu0 0.0
        %9922 = vmatpush.xpose.msra.mxu0 0.0
        %9923 = vmatpush.xpose.msra.mxu0 0.0
        %9924 = vmatpush.xpose.msra.mxu0 %v9753
        %9925 = vmatpush.xpose.msra.mxu0 %v9745
        %9926 = vmatmul.f32.gmra.mxu0 %v9761
        %v9927 = vpop.f32.mrf.mxu0
        %v9928 = vadd.f32 %v9908, %v9927
        %9929 = vdwg.mxu0
        %v9930 = vadd.f32 %v9736, %v9928
        %s9931 = scalar_lea.vmem [#allocation2], 640
        %v9932 = vld [vmem:[%s9931] sm:$0xff]
        %v9933 = vld [vmem:[%s9931 + $0x8] sm:$0xff]
        %v9934 = vld [vmem:[%s9931 + $0x10] sm:$0xff]
        %v9935 = vld [vmem:[%s9931 + $0x18] sm:$0xff]
        %v9936 = vld [vmem:[%s9931 + $0x20] sm:$0xff]
        %v9937 = vld [vmem:[%s9931 + $0x28] sm:$0xff]
        %v9938 = vld [vmem:[%s9931 + $0x30] sm:$0xff]
        %v9939 = vld [vmem:[%s9931 + $0x38] sm:$0xff]
        %v9940 = vld [vmem:[%s9931 + $0x40] sm:$0x3]
        %v9941 = vld [vmem:[%s9931 + $0x48] sm:$0x3]
        %v9942 = vld [vmem:[%s9931 + $0x50] sm:$0x3]
        %v9943 = vld [vmem:[%s9931 + $0x58] sm:$0x3]
        %v9944 = vld [vmem:[%s9931 + $0x60] sm:$0x3]
        %v9945 = vld [vmem:[%s9931 + $0x68] sm:$0x3]
        %v9946 = vld [vmem:[%s9931 + $0x70] sm:$0x3]
        %v9947 = vld [vmem:[%s9931 + $0x78] sm:$0x3]
        %v9948 = vrot.slane %v8953, 5
        %v9949 = vrot.slane %v8954, 5
        %v9950 = vrot.slane %v8955, 5
        %v9951 = vrot.slane %v8956, 5
        %v9952 = vrot.slane %v8957, 5
        %v9953 = vrot.slane %v8958, 5
        %v9954 = vrot.slane %v8959, 5
        %v9955 = vrot.slane %v8960, 5
        %9964 = vmatpush.xpose.msra.mxu0 0.0
        %9965 = vmatpush.xpose.msra.mxu0 0.0
        %9966 = vmatpush.xpose.msra.mxu0 0.0
        %9967 = vmatpush.xpose.msra.mxu0 0.0
        %9968 = vmatpush.xpose.msra.mxu0 0.0
        %9969 = vmatpush.xpose.msra.mxu0 0.0
        %9970 = vmatpush.xpose.msra.mxu0 0.0
        %9971 = vmatpush.xpose.msra.mxu0 0.0
        %9972 = vmatpush.xpose.msra.mxu0 0.0
        %9973 = vmatpush.xpose.msra.mxu0 0.0
        %9974 = vmatpush.xpose.msra.mxu0 0.0
        %9975 = vmatpush.xpose.msra.mxu0 0.0
        %9976 = vmatpush.xpose.msra.mxu0 0.0
        %9977 = vmatpush.xpose.msra.mxu0 0.0
        %9978 = vmatpush.xpose.msra.mxu0 %v9940
        %9979 = vmatpush.xpose.msra.mxu0 %v9932
        %9980 = vmatmul.f32.gmra.mxu0 %v9948
        %v9981 = vpop.f32.mrf.mxu0
        %v9982 = vadd.f32 0.0, %v9981
        %9983 = vdwg.mxu0
        %9984 = vmatpush.xpose.msra.mxu0 0.0
        %9985 = vmatpush.xpose.msra.mxu0 0.0
        %9986 = vmatpush.xpose.msra.mxu0 0.0
        %9987 = vmatpush.xpose.msra.mxu0 0.0
        %9988 = vmatpush.xpose.msra.mxu0 0.0
        %9989 = vmatpush.xpose.msra.mxu0 0.0
        %9990 = vmatpush.xpose.msra.mxu0 0.0
        %9991 = vmatpush.xpose.msra.mxu0 0.0
        %9992 = vmatpush.xpose.msra.mxu0 0.0
        %9993 = vmatpush.xpose.msra.mxu0 0.0
        %9994 = vmatpush.xpose.msra.mxu0 0.0
        %9995 = vmatpush.xpose.msra.mxu0 0.0
        %9996 = vmatpush.xpose.msra.mxu0 0.0
        %9997 = vmatpush.xpose.msra.mxu0 0.0
        %9998 = vmatpush.xpose.msra.mxu0 %v9941
        %9999 = vmatpush.xpose.msra.mxu0 %v9933
        %10000 = vmatmul.f32.gmra.mxu0 %v9949
        %v10001 = vpop.f32.mrf.mxu0
        %v10002 = vadd.f32 %v9982, %v10001
        %10003 = vdwg.mxu0
        %10004 = vmatpush.xpose.msra.mxu0 0.0
        %10005 = vmatpush.xpose.msra.mxu0 0.0
        %10006 = vmatpush.xpose.msra.mxu0 0.0
        %10007 = vmatpush.xpose.msra.mxu0 0.0
        %10008 = vmatpush.xpose.msra.mxu0 0.0
        %10009 = vmatpush.xpose.msra.mxu0 0.0
        %10010 = vmatpush.xpose.msra.mxu0 0.0
        %10011 = vmatpush.xpose.msra.mxu0 0.0
        %10012 = vmatpush.xpose.msra.mxu0 0.0
        %10013 = vmatpush.xpose.msra.mxu0 0.0
        %10014 = vmatpush.xpose.msra.mxu0 0.0
        %10015 = vmatpush.xpose.msra.mxu0 0.0
        %10016 = vmatpush.xpose.msra.mxu0 0.0
        %10017 = vmatpush.xpose.msra.mxu0 0.0
        %10018 = vmatpush.xpose.msra.mxu0 %v9942
        %10019 = vmatpush.xpose.msra.mxu0 %v9934
        %10020 = vmatmul.f32.gmra.mxu0 %v9950
        %v10021 = vpop.f32.mrf.mxu0
        %v10022 = vadd.f32 %v10002, %v10021
        %10023 = vdwg.mxu0
        %10024 = vmatpush.xpose.msra.mxu0 0.0
        %10025 = vmatpush.xpose.msra.mxu0 0.0
        %10026 = vmatpush.xpose.msra.mxu0 0.0
        %10027 = vmatpush.xpose.msra.mxu0 0.0
        %10028 = vmatpush.xpose.msra.mxu0 0.0
        %10029 = vmatpush.xpose.msra.mxu0 0.0
        %10030 = vmatpush.xpose.msra.mxu0 0.0
        %10031 = vmatpush.xpose.msra.mxu0 0.0
        %10032 = vmatpush.xpose.msra.mxu0 0.0
        %10033 = vmatpush.xpose.msra.mxu0 0.0
        %10034 = vmatpush.xpose.msra.mxu0 0.0
        %10035 = vmatpush.xpose.msra.mxu0 0.0
        %10036 = vmatpush.xpose.msra.mxu0 0.0
        %10037 = vmatpush.xpose.msra.mxu0 0.0
        %10038 = vmatpush.xpose.msra.mxu0 %v9943
        %10039 = vmatpush.xpose.msra.mxu0 %v9935
        %10040 = vmatmul.f32.gmra.mxu0 %v9951
        %v10041 = vpop.f32.mrf.mxu0
        %v10042 = vadd.f32 %v10022, %v10041
        %10043 = vdwg.mxu0
        %10044 = vmatpush.xpose.msra.mxu0 0.0
        %10045 = vmatpush.xpose.msra.mxu0 0.0
        %10046 = vmatpush.xpose.msra.mxu0 0.0
        %10047 = vmatpush.xpose.msra.mxu0 0.0
        %10048 = vmatpush.xpose.msra.mxu0 0.0
        %10049 = vmatpush.xpose.msra.mxu0 0.0
        %10050 = vmatpush.xpose.msra.mxu0 0.0
        %10051 = vmatpush.xpose.msra.mxu0 0.0
        %10052 = vmatpush.xpose.msra.mxu0 0.0
        %10053 = vmatpush.xpose.msra.mxu0 0.0
        %10054 = vmatpush.xpose.msra.mxu0 0.0
        %10055 = vmatpush.xpose.msra.mxu0 0.0
        %10056 = vmatpush.xpose.msra.mxu0 0.0
        %10057 = vmatpush.xpose.msra.mxu0 0.0
        %10058 = vmatpush.xpose.msra.mxu0 %v9944
        %10059 = vmatpush.xpose.msra.mxu0 %v9936
        %10060 = vmatmul.f32.gmra.mxu0 %v9952
        %v10061 = vpop.f32.mrf.mxu0
        %v10062 = vadd.f32 %v10042, %v10061
        %10063 = vdwg.mxu0
        %10064 = vmatpush.xpose.msra.mxu0 0.0
        %10065 = vmatpush.xpose.msra.mxu0 0.0
        %10066 = vmatpush.xpose.msra.mxu0 0.0
        %10067 = vmatpush.xpose.msra.mxu0 0.0
        %10068 = vmatpush.xpose.msra.mxu0 0.0
        %10069 = vmatpush.xpose.msra.mxu0 0.0
        %10070 = vmatpush.xpose.msra.mxu0 0.0
        %10071 = vmatpush.xpose.msra.mxu0 0.0
        %10072 = vmatpush.xpose.msra.mxu0 0.0
        %10073 = vmatpush.xpose.msra.mxu0 0.0
        %10074 = vmatpush.xpose.msra.mxu0 0.0
        %10075 = vmatpush.xpose.msra.mxu0 0.0
        %10076 = vmatpush.xpose.msra.mxu0 0.0
        %10077 = vmatpush.xpose.msra.mxu0 0.0
        %10078 = vmatpush.xpose.msra.mxu0 %v9945
        %10079 = vmatpush.xpose.msra.mxu0 %v9937
        %10080 = vmatmul.f32.gmra.mxu0 %v9953
        %v10081 = vpop.f32.mrf.mxu0
        %v10082 = vadd.f32 %v10062, %v10081
        %10083 = vdwg.mxu0
        %10084 = vmatpush.xpose.msra.mxu0 0.0
        %10085 = vmatpush.xpose.msra.mxu0 0.0
        %10086 = vmatpush.xpose.msra.mxu0 0.0
        %10087 = vmatpush.xpose.msra.mxu0 0.0
        %10088 = vmatpush.xpose.msra.mxu0 0.0
        %10089 = vmatpush.xpose.msra.mxu0 0.0
        %10090 = vmatpush.xpose.msra.mxu0 0.0
        %10091 = vmatpush.xpose.msra.mxu0 0.0
        %10092 = vmatpush.xpose.msra.mxu0 0.0
        %10093 = vmatpush.xpose.msra.mxu0 0.0
        %10094 = vmatpush.xpose.msra.mxu0 0.0
        %10095 = vmatpush.xpose.msra.mxu0 0.0
        %10096 = vmatpush.xpose.msra.mxu0 0.0
        %10097 = vmatpush.xpose.msra.mxu0 0.0
        %10098 = vmatpush.xpose.msra.mxu0 %v9946
        %10099 = vmatpush.xpose.msra.mxu0 %v9938
        %10100 = vmatmul.f32.gmra.mxu0 %v9954
        %v10101 = vpop.f32.mrf.mxu0
        %v10102 = vadd.f32 %v10082, %v10101
        %10103 = vdwg.mxu0
        %10104 = vmatpush.xpose.msra.mxu0 0.0
        %10105 = vmatpush.xpose.msra.mxu0 0.0
        %10106 = vmatpush.xpose.msra.mxu0 0.0
        %10107 = vmatpush.xpose.msra.mxu0 0.0
        %10108 = vmatpush.xpose.msra.mxu0 0.0
        %10109 = vmatpush.xpose.msra.mxu0 0.0
        %10110 = vmatpush.xpose.msra.mxu0 0.0
        %10111 = vmatpush.xpose.msra.mxu0 0.0
        %10112 = vmatpush.xpose.msra.mxu0 0.0
        %10113 = vmatpush.xpose.msra.mxu0 0.0
        %10114 = vmatpush.xpose.msra.mxu0 0.0
        %10115 = vmatpush.xpose.msra.mxu0 0.0
        %10116 = vmatpush.xpose.msra.mxu0 0.0
        %10117 = vmatpush.xpose.msra.mxu0 0.0
        %10118 = vmatpush.xpose.msra.mxu0 %v9947
        %10119 = vmatpush.xpose.msra.mxu0 %v9939
        %10120 = vmatmul.f32.gmra.mxu0 %v9955
        %v10121 = vpop.f32.mrf.mxu0
        %v10122 = vadd.f32 %v10102, %v10121
        %10123 = vdwg.mxu0
        %v10124 = vadd.f32 %v9930, %v10122
        %s10125 = scalar_lea.vmem [#allocation2], 768
        %v10126 = vld [vmem:[%s10125] sm:$0xff]
        %v10127 = vld [vmem:[%s10125 + $0x8] sm:$0xff]
        %v10128 = vld [vmem:[%s10125 + $0x10] sm:$0xff]
        %v10129 = vld [vmem:[%s10125 + $0x18] sm:$0xff]
        %v10130 = vld [vmem:[%s10125 + $0x20] sm:$0xff]
        %v10131 = vld [vmem:[%s10125 + $0x28] sm:$0xff]
        %v10132 = vld [vmem:[%s10125 + $0x30] sm:$0xff]
        %v10133 = vld [vmem:[%s10125 + $0x38] sm:$0xff]
        %v10134 = vld [vmem:[%s10125 + $0x40] sm:$0x3]
        %v10135 = vld [vmem:[%s10125 + $0x48] sm:$0x3]
        %v10136 = vld [vmem:[%s10125 + $0x50] sm:$0x3]
        %v10137 = vld [vmem:[%s10125 + $0x58] sm:$0x3]
        %v10138 = vld [vmem:[%s10125 + $0x60] sm:$0x3]
        %v10139 = vld [vmem:[%s10125 + $0x68] sm:$0x3]
        %v10140 = vld [vmem:[%s10125 + $0x70] sm:$0x3]
        %v10141 = vld [vmem:[%s10125 + $0x78] sm:$0x3]
        %v10142 = vrot.slane %v8953, 6
        %v10143 = vrot.slane %v8954, 6
        %v10144 = vrot.slane %v8955, 6
        %v10145 = vrot.slane %v8956, 6
        %v10146 = vrot.slane %v8957, 6
        %v10147 = vrot.slane %v8958, 6
        %v10148 = vrot.slane %v8959, 6
        %v10149 = vrot.slane %v8960, 6
        %10158 = vmatpush.xpose.msra.mxu0 0.0
        %10159 = vmatpush.xpose.msra.mxu0 0.0
        %10160 = vmatpush.xpose.msra.mxu0 0.0
        %10161 = vmatpush.xpose.msra.mxu0 0.0
        %10162 = vmatpush.xpose.msra.mxu0 0.0
        %10163 = vmatpush.xpose.msra.mxu0 0.0
        %10164 = vmatpush.xpose.msra.mxu0 0.0
        %10165 = vmatpush.xpose.msra.mxu0 0.0
        %10166 = vmatpush.xpose.msra.mxu0 0.0
        %10167 = vmatpush.xpose.msra.mxu0 0.0
        %10168 = vmatpush.xpose.msra.mxu0 0.0
        %10169 = vmatpush.xpose.msra.mxu0 0.0
        %10170 = vmatpush.xpose.msra.mxu0 0.0
        %10171 = vmatpush.xpose.msra.mxu0 0.0
        %10172 = vmatpush.xpose.msra.mxu0 %v10134
        %10173 = vmatpush.xpose.msra.mxu0 %v10126
        %10174 = vmatmul.f32.gmra.mxu0 %v10142
        %v10175 = vpop.f32.mrf.mxu0
        %v10176 = vadd.f32 0.0, %v10175
        %10177 = vdwg.mxu0
        %10178 = vmatpush.xpose.msra.mxu0 0.0
        %10179 = vmatpush.xpose.msra.mxu0 0.0
        %10180 = vmatpush.xpose.msra.mxu0 0.0
        %10181 = vmatpush.xpose.msra.mxu0 0.0
        %10182 = vmatpush.xpose.msra.mxu0 0.0
        %10183 = vmatpush.xpose.msra.mxu0 0.0
        %10184 = vmatpush.xpose.msra.mxu0 0.0
        %10185 = vmatpush.xpose.msra.mxu0 0.0
        %10186 = vmatpush.xpose.msra.mxu0 0.0
        %10187 = vmatpush.xpose.msra.mxu0 0.0
        %10188 = vmatpush.xpose.msra.mxu0 0.0
        %10189 = vmatpush.xpose.msra.mxu0 0.0
        %10190 = vmatpush.xpose.msra.mxu0 0.0
        %10191 = vmatpush.xpose.msra.mxu0 0.0
        %10192 = vmatpush.xpose.msra.mxu0 %v10135
        %10193 = vmatpush.xpose.msra.mxu0 %v10127
        %10194 = vmatmul.f32.gmra.mxu0 %v10143
        %v10195 = vpop.f32.mrf.mxu0
        %v10196 = vadd.f32 %v10176, %v10195
        %10197 = vdwg.mxu0
        %10198 = vmatpush.xpose.msra.mxu0 0.0
        %10199 = vmatpush.xpose.msra.mxu0 0.0
        %10200 = vmatpush.xpose.msra.mxu0 0.0
        %10201 = vmatpush.xpose.msra.mxu0 0.0
        %10202 = vmatpush.xpose.msra.mxu0 0.0
        %10203 = vmatpush.xpose.msra.mxu0 0.0
        %10204 = vmatpush.xpose.msra.mxu0 0.0
        %10205 = vmatpush.xpose.msra.mxu0 0.0
        %10206 = vmatpush.xpose.msra.mxu0 0.0
        %10207 = vmatpush.xpose.msra.mxu0 0.0
        %10208 = vmatpush.xpose.msra.mxu0 0.0
        %10209 = vmatpush.xpose.msra.mxu0 0.0
        %10210 = vmatpush.xpose.msra.mxu0 0.0
        %10211 = vmatpush.xpose.msra.mxu0 0.0
        %10212 = vmatpush.xpose.msra.mxu0 %v10136
        %10213 = vmatpush.xpose.msra.mxu0 %v10128
        %10214 = vmatmul.f32.gmra.mxu0 %v10144
        %v10215 = vpop.f32.mrf.mxu0
        %v10216 = vadd.f32 %v10196, %v10215
        %10217 = vdwg.mxu0
        %10218 = vmatpush.xpose.msra.mxu0 0.0
        %10219 = vmatpush.xpose.msra.mxu0 0.0
        %10220 = vmatpush.xpose.msra.mxu0 0.0
        %10221 = vmatpush.xpose.msra.mxu0 0.0
        %10222 = vmatpush.xpose.msra.mxu0 0.0
        %10223 = vmatpush.xpose.msra.mxu0 0.0
        %10224 = vmatpush.xpose.msra.mxu0 0.0
        %10225 = vmatpush.xpose.msra.mxu0 0.0
        %10226 = vmatpush.xpose.msra.mxu0 0.0
        %10227 = vmatpush.xpose.msra.mxu0 0.0
        %10228 = vmatpush.xpose.msra.mxu0 0.0
        %10229 = vmatpush.xpose.msra.mxu0 0.0
        %10230 = vmatpush.xpose.msra.mxu0 0.0
        %10231 = vmatpush.xpose.msra.mxu0 0.0
        %10232 = vmatpush.xpose.msra.mxu0 %v10137
        %10233 = vmatpush.xpose.msra.mxu0 %v10129
        %10234 = vmatmul.f32.gmra.mxu0 %v10145
        %v10235 = vpop.f32.mrf.mxu0
        %v10236 = vadd.f32 %v10216, %v10235
        %10237 = vdwg.mxu0
        %10238 = vmatpush.xpose.msra.mxu0 0.0
        %10239 = vmatpush.xpose.msra.mxu0 0.0
        %10240 = vmatpush.xpose.msra.mxu0 0.0
        %10241 = vmatpush.xpose.msra.mxu0 0.0
        %10242 = vmatpush.xpose.msra.mxu0 0.0
        %10243 = vmatpush.xpose.msra.mxu0 0.0
        %10244 = vmatpush.xpose.msra.mxu0 0.0
        %10245 = vmatpush.xpose.msra.mxu0 0.0
        %10246 = vmatpush.xpose.msra.mxu0 0.0
        %10247 = vmatpush.xpose.msra.mxu0 0.0
        %10248 = vmatpush.xpose.msra.mxu0 0.0
        %10249 = vmatpush.xpose.msra.mxu0 0.0
        %10250 = vmatpush.xpose.msra.mxu0 0.0
        %10251 = vmatpush.xpose.msra.mxu0 0.0
        %10252 = vmatpush.xpose.msra.mxu0 %v10138
        %10253 = vmatpush.xpose.msra.mxu0 %v10130
        %10254 = vmatmul.f32.gmra.mxu0 %v10146
        %v10255 = vpop.f32.mrf.mxu0
        %v10256 = vadd.f32 %v10236, %v10255
        %10257 = vdwg.mxu0
        %10258 = vmatpush.xpose.msra.mxu0 0.0
        %10259 = vmatpush.xpose.msra.mxu0 0.0
        %10260 = vmatpush.xpose.msra.mxu0 0.0
        %10261 = vmatpush.xpose.msra.mxu0 0.0
        %10262 = vmatpush.xpose.msra.mxu0 0.0
        %10263 = vmatpush.xpose.msra.mxu0 0.0
        %10264 = vmatpush.xpose.msra.mxu0 0.0
        %10265 = vmatpush.xpose.msra.mxu0 0.0
        %10266 = vmatpush.xpose.msra.mxu0 0.0
        %10267 = vmatpush.xpose.msra.mxu0 0.0
        %10268 = vmatpush.xpose.msra.mxu0 0.0
        %10269 = vmatpush.xpose.msra.mxu0 0.0
        %10270 = vmatpush.xpose.msra.mxu0 0.0
        %10271 = vmatpush.xpose.msra.mxu0 0.0
        %10272 = vmatpush.xpose.msra.mxu0 %v10139
        %10273 = vmatpush.xpose.msra.mxu0 %v10131
        %10274 = vmatmul.f32.gmra.mxu0 %v10147
        %v10275 = vpop.f32.mrf.mxu0
        %v10276 = vadd.f32 %v10256, %v10275
        %10277 = vdwg.mxu0
        %10278 = vmatpush.xpose.msra.mxu0 0.0
        %10279 = vmatpush.xpose.msra.mxu0 0.0
        %10280 = vmatpush.xpose.msra.mxu0 0.0
        %10281 = vmatpush.xpose.msra.mxu0 0.0
        %10282 = vmatpush.xpose.msra.mxu0 0.0
        %10283 = vmatpush.xpose.msra.mxu0 0.0
        %10284 = vmatpush.xpose.msra.mxu0 0.0
        %10285 = vmatpush.xpose.msra.mxu0 0.0
        %10286 = vmatpush.xpose.msra.mxu0 0.0
        %10287 = vmatpush.xpose.msra.mxu0 0.0
        %10288 = vmatpush.xpose.msra.mxu0 0.0
        %10289 = vmatpush.xpose.msra.mxu0 0.0
        %10290 = vmatpush.xpose.msra.mxu0 0.0
        %10291 = vmatpush.xpose.msra.mxu0 0.0
        %10292 = vmatpush.xpose.msra.mxu0 %v10140
        %10293 = vmatpush.xpose.msra.mxu0 %v10132
        %10294 = vmatmul.f32.gmra.mxu0 %v10148
        %v10295 = vpop.f32.mrf.mxu0
        %v10296 = vadd.f32 %v10276, %v10295
        %10297 = vdwg.mxu0
        %10298 = vmatpush.xpose.msra.mxu0 0.0
        %10299 = vmatpush.xpose.msra.mxu0 0.0
        %10300 = vmatpush.xpose.msra.mxu0 0.0
        %10301 = vmatpush.xpose.msra.mxu0 0.0
        %10302 = vmatpush.xpose.msra.mxu0 0.0
        %10303 = vmatpush.xpose.msra.mxu0 0.0
        %10304 = vmatpush.xpose.msra.mxu0 0.0
        %10305 = vmatpush.xpose.msra.mxu0 0.0
        %10306 = vmatpush.xpose.msra.mxu0 0.0
        %10307 = vmatpush.xpose.msra.mxu0 0.0
        %10308 = vmatpush.xpose.msra.mxu0 0.0
        %10309 = vmatpush.xpose.msra.mxu0 0.0
        %10310 = vmatpush.xpose.msra.mxu0 0.0
        %10311 = vmatpush.xpose.msra.mxu0 0.0
        %10312 = vmatpush.xpose.msra.mxu0 %v10141
        %10313 = vmatpush.xpose.msra.mxu0 %v10133
        %10314 = vmatmul.f32.gmra.mxu0 %v10149
        %v10315 = vpop.f32.mrf.mxu0
        %v10316 = vadd.f32 %v10296, %v10315
        %10317 = vdwg.mxu0
        %v10318 = vadd.f32 %v10124, %v10316
        %s10319 = scalar_lea.vmem [#allocation2], 896
        %v10320 = vld [vmem:[%s10319] sm:$0xff]
        %v10321 = vld [vmem:[%s10319 + $0x8] sm:$0xff]
        %v10322 = vld [vmem:[%s10319 + $0x10] sm:$0xff]
        %v10323 = vld [vmem:[%s10319 + $0x18] sm:$0xff]
        %v10324 = vld [vmem:[%s10319 + $0x20] sm:$0xff]
        %v10325 = vld [vmem:[%s10319 + $0x28] sm:$0xff]
        %v10326 = vld [vmem:[%s10319 + $0x30] sm:$0xff]
        %v10327 = vld [vmem:[%s10319 + $0x38] sm:$0xff]
        %v10328 = vld [vmem:[%s10319 + $0x40] sm:$0x3]
        %v10329 = vld [vmem:[%s10319 + $0x48] sm:$0x3]
        %v10330 = vld [vmem:[%s10319 + $0x50] sm:$0x3]
        %v10331 = vld [vmem:[%s10319 + $0x58] sm:$0x3]
        %v10332 = vld [vmem:[%s10319 + $0x60] sm:$0x3]
        %v10333 = vld [vmem:[%s10319 + $0x68] sm:$0x3]
        %v10334 = vld [vmem:[%s10319 + $0x70] sm:$0x3]
        %v10335 = vld [vmem:[%s10319 + $0x78] sm:$0x3]
        %v10336 = vrot.slane %v8953, 7
        %v10337 = vrot.slane %v8954, 7
        %v10338 = vrot.slane %v8955, 7
        %v10339 = vrot.slane %v8956, 7
        %v10340 = vrot.slane %v8957, 7
        %v10341 = vrot.slane %v8958, 7
        %v10342 = vrot.slane %v8959, 7
        %v10343 = vrot.slane %v8960, 7
        %10352 = vmatpush.xpose.msra.mxu0 0.0
        %10353 = vmatpush.xpose.msra.mxu0 0.0
        %10354 = vmatpush.xpose.msra.mxu0 0.0
        %10355 = vmatpush.xpose.msra.mxu0 0.0
        %10356 = vmatpush.xpose.msra.mxu0 0.0
        %10357 = vmatpush.xpose.msra.mxu0 0.0
        %10358 = vmatpush.xpose.msra.mxu0 0.0
        %10359 = vmatpush.xpose.msra.mxu0 0.0
        %10360 = vmatpush.xpose.msra.mxu0 0.0
        %10361 = vmatpush.xpose.msra.mxu0 0.0
        %10362 = vmatpush.xpose.msra.mxu0 0.0
        %10363 = vmatpush.xpose.msra.mxu0 0.0
        %10364 = vmatpush.xpose.msra.mxu0 0.0
        %10365 = vmatpush.xpose.msra.mxu0 0.0
        %10366 = vmatpush.xpose.msra.mxu0 %v10328
        %10367 = vmatpush.xpose.msra.mxu0 %v10320
        %10368 = vmatmul.f32.gmra.mxu0 %v10336
        %v10369 = vpop.f32.mrf.mxu0
        %v10370 = vadd.f32 0.0, %v10369
        %10371 = vdwg.mxu0
        %10372 = vmatpush.xpose.msra.mxu0 0.0
        %10373 = vmatpush.xpose.msra.mxu0 0.0
        %10374 = vmatpush.xpose.msra.mxu0 0.0
        %10375 = vmatpush.xpose.msra.mxu0 0.0
        %10376 = vmatpush.xpose.msra.mxu0 0.0
        %10377 = vmatpush.xpose.msra.mxu0 0.0
        %10378 = vmatpush.xpose.msra.mxu0 0.0
        %10379 = vmatpush.xpose.msra.mxu0 0.0
        %10380 = vmatpush.xpose.msra.mxu0 0.0
        %10381 = vmatpush.xpose.msra.mxu0 0.0
        %10382 = vmatpush.xpose.msra.mxu0 0.0
        %10383 = vmatpush.xpose.msra.mxu0 0.0
        %10384 = vmatpush.xpose.msra.mxu0 0.0
        %10385 = vmatpush.xpose.msra.mxu0 0.0
        %10386 = vmatpush.xpose.msra.mxu0 %v10329
        %10387 = vmatpush.xpose.msra.mxu0 %v10321
        %10388 = vmatmul.f32.gmra.mxu0 %v10337
        %v10389 = vpop.f32.mrf.mxu0
        %v10390 = vadd.f32 %v10370, %v10389
        %10391 = vdwg.mxu0
        %10392 = vmatpush.xpose.msra.mxu0 0.0
        %10393 = vmatpush.xpose.msra.mxu0 0.0
        %10394 = vmatpush.xpose.msra.mxu0 0.0
        %10395 = vmatpush.xpose.msra.mxu0 0.0
        %10396 = vmatpush.xpose.msra.mxu0 0.0
        %10397 = vmatpush.xpose.msra.mxu0 0.0
        %10398 = vmatpush.xpose.msra.mxu0 0.0
        %10399 = vmatpush.xpose.msra.mxu0 0.0
        %10400 = vmatpush.xpose.msra.mxu0 0.0
        %10401 = vmatpush.xpose.msra.mxu0 0.0
        %10402 = vmatpush.xpose.msra.mxu0 0.0
        %10403 = vmatpush.xpose.msra.mxu0 0.0
        %10404 = vmatpush.xpose.msra.mxu0 0.0
        %10405 = vmatpush.xpose.msra.mxu0 0.0
        %10406 = vmatpush.xpose.msra.mxu0 %v10330
        %10407 = vmatpush.xpose.msra.mxu0 %v10322
        %10408 = vmatmul.f32.gmra.mxu0 %v10338
        %v10409 = vpop.f32.mrf.mxu0
        %v10410 = vadd.f32 %v10390, %v10409
        %10411 = vdwg.mxu0
        %10412 = vmatpush.xpose.msra.mxu0 0.0
        %10413 = vmatpush.xpose.msra.mxu0 0.0
        %10414 = vmatpush.xpose.msra.mxu0 0.0
        %10415 = vmatpush.xpose.msra.mxu0 0.0
        %10416 = vmatpush.xpose.msra.mxu0 0.0
        %10417 = vmatpush.xpose.msra.mxu0 0.0
        %10418 = vmatpush.xpose.msra.mxu0 0.0
        %10419 = vmatpush.xpose.msra.mxu0 0.0
        %10420 = vmatpush.xpose.msra.mxu0 0.0
        %10421 = vmatpush.xpose.msra.mxu0 0.0
        %10422 = vmatpush.xpose.msra.mxu0 0.0
        %10423 = vmatpush.xpose.msra.mxu0 0.0
        %10424 = vmatpush.xpose.msra.mxu0 0.0
        %10425 = vmatpush.xpose.msra.mxu0 0.0
        %10426 = vmatpush.xpose.msra.mxu0 %v10331
        %10427 = vmatpush.xpose.msra.mxu0 %v10323
        %10428 = vmatmul.f32.gmra.mxu0 %v10339
        %v10429 = vpop.f32.mrf.mxu0
        %v10430 = vadd.f32 %v10410, %v10429
        %10431 = vdwg.mxu0
        %10432 = vmatpush.xpose.msra.mxu0 0.0
        %10433 = vmatpush.xpose.msra.mxu0 0.0
        %10434 = vmatpush.xpose.msra.mxu0 0.0
        %10435 = vmatpush.xpose.msra.mxu0 0.0
        %10436 = vmatpush.xpose.msra.mxu0 0.0
        %10437 = vmatpush.xpose.msra.mxu0 0.0
        %10438 = vmatpush.xpose.msra.mxu0 0.0
        %10439 = vmatpush.xpose.msra.mxu0 0.0
        %10440 = vmatpush.xpose.msra.mxu0 0.0
        %10441 = vmatpush.xpose.msra.mxu0 0.0
        %10442 = vmatpush.xpose.msra.mxu0 0.0
        %10443 = vmatpush.xpose.msra.mxu0 0.0
        %10444 = vmatpush.xpose.msra.mxu0 0.0
        %10445 = vmatpush.xpose.msra.mxu0 0.0
        %10446 = vmatpush.xpose.msra.mxu0 %v10332
        %10447 = vmatpush.xpose.msra.mxu0 %v10324
        %10448 = vmatmul.f32.gmra.mxu0 %v10340
        %v10449 = vpop.f32.mrf.mxu0
        %v10450 = vadd.f32 %v10430, %v10449
        %10451 = vdwg.mxu0
        %10452 = vmatpush.xpose.msra.mxu0 0.0
        %10453 = vmatpush.xpose.msra.mxu0 0.0
        %10454 = vmatpush.xpose.msra.mxu0 0.0
        %10455 = vmatpush.xpose.msra.mxu0 0.0
        %10456 = vmatpush.xpose.msra.mxu0 0.0
        %10457 = vmatpush.xpose.msra.mxu0 0.0
        %10458 = vmatpush.xpose.msra.mxu0 0.0
        %10459 = vmatpush.xpose.msra.mxu0 0.0
        %10460 = vmatpush.xpose.msra.mxu0 0.0
        %10461 = vmatpush.xpose.msra.mxu0 0.0
        %10462 = vmatpush.xpose.msra.mxu0 0.0
        %10463 = vmatpush.xpose.msra.mxu0 0.0
        %10464 = vmatpush.xpose.msra.mxu0 0.0
        %10465 = vmatpush.xpose.msra.mxu0 0.0
        %10466 = vmatpush.xpose.msra.mxu0 %v10333
        %10467 = vmatpush.xpose.msra.mxu0 %v10325
        %10468 = vmatmul.f32.gmra.mxu0 %v10341
        %v10469 = vpop.f32.mrf.mxu0
        %v10470 = vadd.f32 %v10450, %v10469
        %10471 = vdwg.mxu0
        %10472 = vmatpush.xpose.msra.mxu0 0.0
        %10473 = vmatpush.xpose.msra.mxu0 0.0
        %10474 = vmatpush.xpose.msra.mxu0 0.0
        %10475 = vmatpush.xpose.msra.mxu0 0.0
        %10476 = vmatpush.xpose.msra.mxu0 0.0
        %10477 = vmatpush.xpose.msra.mxu0 0.0
        %10478 = vmatpush.xpose.msra.mxu0 0.0
        %10479 = vmatpush.xpose.msra.mxu0 0.0
        %10480 = vmatpush.xpose.msra.mxu0 0.0
        %10481 = vmatpush.xpose.msra.mxu0 0.0
        %10482 = vmatpush.xpose.msra.mxu0 0.0
        %10483 = vmatpush.xpose.msra.mxu0 0.0
        %10484 = vmatpush.xpose.msra.mxu0 0.0
        %10485 = vmatpush.xpose.msra.mxu0 0.0
        %10486 = vmatpush.xpose.msra.mxu0 %v10334
        %10487 = vmatpush.xpose.msra.mxu0 %v10326
        %10488 = vmatmul.f32.gmra.mxu0 %v10342
        %v10489 = vpop.f32.mrf.mxu0
        %v10490 = vadd.f32 %v10470, %v10489
        %10491 = vdwg.mxu0
        %10492 = vmatpush.xpose.msra.mxu0 0.0
        %10493 = vmatpush.xpose.msra.mxu0 0.0
        %10494 = vmatpush.xpose.msra.mxu0 0.0
        %10495 = vmatpush.xpose.msra.mxu0 0.0
        %10496 = vmatpush.xpose.msra.mxu0 0.0
        %10497 = vmatpush.xpose.msra.mxu0 0.0
        %10498 = vmatpush.xpose.msra.mxu0 0.0
        %10499 = vmatpush.xpose.msra.mxu0 0.0
        %10500 = vmatpush.xpose.msra.mxu0 0.0
        %10501 = vmatpush.xpose.msra.mxu0 0.0
        %10502 = vmatpush.xpose.msra.mxu0 0.0
        %10503 = vmatpush.xpose.msra.mxu0 0.0
        %10504 = vmatpush.xpose.msra.mxu0 0.0
        %10505 = vmatpush.xpose.msra.mxu0 0.0
        %10506 = vmatpush.xpose.msra.mxu0 %v10335
        %10507 = vmatpush.xpose.msra.mxu0 %v10327
        %10508 = vmatmul.f32.gmra.mxu0 %v10343
        %v10509 = vpop.f32.mrf.mxu0
        %v10510 = vadd.f32 %v10490, %v10509
        %10511 = vdwg.mxu0
        %v10512 = vadd.f32 %v10318, %v10510
        %s10513 = scalar_lea.vmem [#allocation2], 1024
        %v10514 = vld [vmem:[%s10513] sm:$0xff]
        %v10515 = vld [vmem:[%s10513 + $0x8] sm:$0xff]
        %v10516 = vld [vmem:[%s10513 + $0x10] sm:$0xff]
        %v10517 = vld [vmem:[%s10513 + $0x18] sm:$0xff]
        %v10518 = vld [vmem:[%s10513 + $0x20] sm:$0xff]
        %v10519 = vld [vmem:[%s10513 + $0x28] sm:$0xff]
        %v10520 = vld [vmem:[%s10513 + $0x30] sm:$0xff]
        %v10521 = vld [vmem:[%s10513 + $0x38] sm:$0xff]
        %v10522 = vld [vmem:[%s10513 + $0x40] sm:$0x3]
        %v10523 = vld [vmem:[%s10513 + $0x48] sm:$0x3]
        %v10524 = vld [vmem:[%s10513 + $0x50] sm:$0x3]
        %v10525 = vld [vmem:[%s10513 + $0x58] sm:$0x3]
        %v10526 = vld [vmem:[%s10513 + $0x60] sm:$0x3]
        %v10527 = vld [vmem:[%s10513 + $0x68] sm:$0x3]
        %v10528 = vld [vmem:[%s10513 + $0x70] sm:$0x3]
        %v10529 = vld [vmem:[%s10513 + $0x78] sm:$0x3]
        %10530 = vmatpush.xpose.msra.mxu0 0.0
        %10531 = vmatpush.xpose.msra.mxu0 0.0
        %10532 = vmatpush.xpose.msra.mxu0 0.0
        %10533 = vmatpush.xpose.msra.mxu0 0.0
        %10534 = vmatpush.xpose.msra.mxu0 0.0
        %10535 = vmatpush.xpose.msra.mxu0 0.0
        %10536 = vmatpush.xpose.msra.mxu0 0.0
        %10537 = vmatpush.xpose.msra.mxu0 0.0
        %10538 = vmatpush.xpose.msra.mxu0 0.0
        %10539 = vmatpush.xpose.msra.mxu0 0.0
        %10540 = vmatpush.xpose.msra.mxu0 0.0
        %10541 = vmatpush.xpose.msra.mxu0 0.0
        %10542 = vmatpush.xpose.msra.mxu0 0.0
        %10543 = vmatpush.xpose.msra.mxu0 0.0
        %10544 = vmatpush.xpose.msra.mxu0 %v10522
        %10545 = vmatpush.xpose.msra.mxu0 %v10514
        %10546 = vmatmul.f32.gmra.mxu0 %v8961
        %v10547 = vpop.f32.mrf.mxu0
        %v10548 = vadd.f32 0.0, %v10547
        %10549 = vdwg.mxu0
        %10550 = vmatpush.xpose.msra.mxu0 0.0
        %10551 = vmatpush.xpose.msra.mxu0 0.0
        %10552 = vmatpush.xpose.msra.mxu0 0.0
        %10553 = vmatpush.xpose.msra.mxu0 0.0
        %10554 = vmatpush.xpose.msra.mxu0 0.0
        %10555 = vmatpush.xpose.msra.mxu0 0.0
        %10556 = vmatpush.xpose.msra.mxu0 0.0
        %10557 = vmatpush.xpose.msra.mxu0 0.0
        %10558 = vmatpush.xpose.msra.mxu0 0.0
        %10559 = vmatpush.xpose.msra.mxu0 0.0
        %10560 = vmatpush.xpose.msra.mxu0 0.0
        %10561 = vmatpush.xpose.msra.mxu0 0.0
        %10562 = vmatpush.xpose.msra.mxu0 0.0
        %10563 = vmatpush.xpose.msra.mxu0 0.0
        %10564 = vmatpush.xpose.msra.mxu0 %v10523
        %10565 = vmatpush.xpose.msra.mxu0 %v10515
        %10566 = vmatmul.f32.gmra.mxu0 %v8962
        %v10567 = vpop.f32.mrf.mxu0
        %v10568 = vadd.f32 %v10548, %v10567
        %10569 = vdwg.mxu0
        %10570 = vmatpush.xpose.msra.mxu0 0.0
        %10571 = vmatpush.xpose.msra.mxu0 0.0
        %10572 = vmatpush.xpose.msra.mxu0 0.0
        %10573 = vmatpush.xpose.msra.mxu0 0.0
        %10574 = vmatpush.xpose.msra.mxu0 0.0
        %10575 = vmatpush.xpose.msra.mxu0 0.0
        %10576 = vmatpush.xpose.msra.mxu0 0.0
        %10577 = vmatpush.xpose.msra.mxu0 0.0
        %10578 = vmatpush.xpose.msra.mxu0 0.0
        %10579 = vmatpush.xpose.msra.mxu0 0.0
        %10580 = vmatpush.xpose.msra.mxu0 0.0
        %10581 = vmatpush.xpose.msra.mxu0 0.0
        %10582 = vmatpush.xpose.msra.mxu0 0.0
        %10583 = vmatpush.xpose.msra.mxu0 0.0
        %10584 = vmatpush.xpose.msra.mxu0 %v10524
        %10585 = vmatpush.xpose.msra.mxu0 %v10516
        %10586 = vmatmul.f32.gmra.mxu0 %v8963
        %v10587 = vpop.f32.mrf.mxu0
        %v10588 = vadd.f32 %v10568, %v10587
        %10589 = vdwg.mxu0
        %10590 = vmatpush.xpose.msra.mxu0 0.0
        %10591 = vmatpush.xpose.msra.mxu0 0.0
        %10592 = vmatpush.xpose.msra.mxu0 0.0
        %10593 = vmatpush.xpose.msra.mxu0 0.0
        %10594 = vmatpush.xpose.msra.mxu0 0.0
        %10595 = vmatpush.xpose.msra.mxu0 0.0
        %10596 = vmatpush.xpose.msra.mxu0 0.0
        %10597 = vmatpush.xpose.msra.mxu0 0.0
        %10598 = vmatpush.xpose.msra.mxu0 0.0
        %10599 = vmatpush.xpose.msra.mxu0 0.0
        %10600 = vmatpush.xpose.msra.mxu0 0.0
        %10601 = vmatpush.xpose.msra.mxu0 0.0
        %10602 = vmatpush.xpose.msra.mxu0 0.0
        %10603 = vmatpush.xpose.msra.mxu0 0.0
        %10604 = vmatpush.xpose.msra.mxu0 %v10525
        %10605 = vmatpush.xpose.msra.mxu0 %v10517
        %10606 = vmatmul.f32.gmra.mxu0 %v8964
        %v10607 = vpop.f32.mrf.mxu0
        %v10608 = vadd.f32 %v10588, %v10607
        %10609 = vdwg.mxu0
        %10610 = vmatpush.xpose.msra.mxu0 0.0
        %10611 = vmatpush.xpose.msra.mxu0 0.0
        %10612 = vmatpush.xpose.msra.mxu0 0.0
        %10613 = vmatpush.xpose.msra.mxu0 0.0
        %10614 = vmatpush.xpose.msra.mxu0 0.0
        %10615 = vmatpush.xpose.msra.mxu0 0.0
        %10616 = vmatpush.xpose.msra.mxu0 0.0
        %10617 = vmatpush.xpose.msra.mxu0 0.0
        %10618 = vmatpush.xpose.msra.mxu0 0.0
        %10619 = vmatpush.xpose.msra.mxu0 0.0
        %10620 = vmatpush.xpose.msra.mxu0 0.0
        %10621 = vmatpush.xpose.msra.mxu0 0.0
        %10622 = vmatpush.xpose.msra.mxu0 0.0
        %10623 = vmatpush.xpose.msra.mxu0 0.0
        %10624 = vmatpush.xpose.msra.mxu0 %v10526
        %10625 = vmatpush.xpose.msra.mxu0 %v10518
        %10626 = vmatmul.f32.gmra.mxu0 %v8965
        %v10627 = vpop.f32.mrf.mxu0
        %v10628 = vadd.f32 %v10608, %v10627
        %10629 = vdwg.mxu0
        %10630 = vmatpush.xpose.msra.mxu0 0.0
        %10631 = vmatpush.xpose.msra.mxu0 0.0
        %10632 = vmatpush.xpose.msra.mxu0 0.0
        %10633 = vmatpush.xpose.msra.mxu0 0.0
        %10634 = vmatpush.xpose.msra.mxu0 0.0
        %10635 = vmatpush.xpose.msra.mxu0 0.0
        %10636 = vmatpush.xpose.msra.mxu0 0.0
        %10637 = vmatpush.xpose.msra.mxu0 0.0
        %10638 = vmatpush.xpose.msra.mxu0 0.0
        %10639 = vmatpush.xpose.msra.mxu0 0.0
        %10640 = vmatpush.xpose.msra.mxu0 0.0
        %10641 = vmatpush.xpose.msra.mxu0 0.0
        %10642 = vmatpush.xpose.msra.mxu0 0.0
        %10643 = vmatpush.xpose.msra.mxu0 0.0
        %10644 = vmatpush.xpose.msra.mxu0 %v10527
        %10645 = vmatpush.xpose.msra.mxu0 %v10519
        %10646 = vmatmul.f32.gmra.mxu0 %v8966
        %v10647 = vpop.f32.mrf.mxu0
        %v10648 = vadd.f32 %v10628, %v10647
        %10649 = vdwg.mxu0
        %10650 = vmatpush.xpose.msra.mxu0 0.0
        %10651 = vmatpush.xpose.msra.mxu0 0.0
        %10652 = vmatpush.xpose.msra.mxu0 0.0
        %10653 = vmatpush.xpose.msra.mxu0 0.0
        %10654 = vmatpush.xpose.msra.mxu0 0.0
        %10655 = vmatpush.xpose.msra.mxu0 0.0
        %10656 = vmatpush.xpose.msra.mxu0 0.0
        %10657 = vmatpush.xpose.msra.mxu0 0.0
        %10658 = vmatpush.xpose.msra.mxu0 0.0
        %10659 = vmatpush.xpose.msra.mxu0 0.0
        %10660 = vmatpush.xpose.msra.mxu0 0.0
        %10661 = vmatpush.xpose.msra.mxu0 0.0
        %10662 = vmatpush.xpose.msra.mxu0 0.0
        %10663 = vmatpush.xpose.msra.mxu0 0.0
        %10664 = vmatpush.xpose.msra.mxu0 %v10528
        %10665 = vmatpush.xpose.msra.mxu0 %v10520
        %10666 = vmatmul.f32.gmra.mxu0 %v8967
        %v10667 = vpop.f32.mrf.mxu0
        %v10668 = vadd.f32 %v10648, %v10667
        %10669 = vdwg.mxu0
        %10670 = vmatpush.xpose.msra.mxu0 0.0
        %10671 = vmatpush.xpose.msra.mxu0 0.0
        %10672 = vmatpush.xpose.msra.mxu0 0.0
        %10673 = vmatpush.xpose.msra.mxu0 0.0
        %10674 = vmatpush.xpose.msra.mxu0 0.0
        %10675 = vmatpush.xpose.msra.mxu0 0.0
        %10676 = vmatpush.xpose.msra.mxu0 0.0
        %10677 = vmatpush.xpose.msra.mxu0 0.0
        %10678 = vmatpush.xpose.msra.mxu0 0.0
        %10679 = vmatpush.xpose.msra.mxu0 0.0
        %10680 = vmatpush.xpose.msra.mxu0 0.0
        %10681 = vmatpush.xpose.msra.mxu0 0.0
        %10682 = vmatpush.xpose.msra.mxu0 0.0
        %10683 = vmatpush.xpose.msra.mxu0 0.0
        %10684 = vmatpush.xpose.msra.mxu0 %v10529
        %10685 = vmatpush.xpose.msra.mxu0 %v10521
        %10686 = vmatmul.f32.gmra.mxu0 %v8968
        %v10687 = vpop.f32.mrf.mxu0
        %v10688 = vadd.f32 %v10668, %v10687
        %10689 = vdwg.mxu0
        %v10690 = vadd.f32 %v10512, %v10688
        %s10691 = scalar_lea.vmem [#allocation2], 1152
        %v10692 = vld [vmem:[%s10691] sm:$0xff]
        %v10693 = vld [vmem:[%s10691 + $0x8] sm:$0xff]
        %v10694 = vld [vmem:[%s10691 + $0x10] sm:$0xff]
        %v10695 = vld [vmem:[%s10691 + $0x18] sm:$0xff]
        %v10696 = vld [vmem:[%s10691 + $0x20] sm:$0xff]
        %v10697 = vld [vmem:[%s10691 + $0x28] sm:$0xff]
        %v10698 = vld [vmem:[%s10691 + $0x30] sm:$0xff]
        %v10699 = vld [vmem:[%s10691 + $0x38] sm:$0xff]
        %v10700 = vld [vmem:[%s10691 + $0x40] sm:$0x3]
        %v10701 = vld [vmem:[%s10691 + $0x48] sm:$0x3]
        %v10702 = vld [vmem:[%s10691 + $0x50] sm:$0x3]
        %v10703 = vld [vmem:[%s10691 + $0x58] sm:$0x3]
        %v10704 = vld [vmem:[%s10691 + $0x60] sm:$0x3]
        %v10705 = vld [vmem:[%s10691 + $0x68] sm:$0x3]
        %v10706 = vld [vmem:[%s10691 + $0x70] sm:$0x3]
        %v10707 = vld [vmem:[%s10691 + $0x78] sm:$0x3]
        %v10716 = vrot.slane %v8961, 1
        %v10717 = vrot.slane %v8962, 1
        %v10718 = vrot.slane %v8963, 1
        %v10719 = vrot.slane %v8964, 1
        %v10720 = vrot.slane %v8965, 1
        %v10721 = vrot.slane %v8966, 1
        %v10722 = vrot.slane %v8967, 1
        %v10723 = vrot.slane %v8968, 1
        %10732 = vmatpush.xpose.msra.mxu0 0.0
        %10733 = vmatpush.xpose.msra.mxu0 0.0
        %10734 = vmatpush.xpose.msra.mxu0 0.0
        %10735 = vmatpush.xpose.msra.mxu0 0.0
        %10736 = vmatpush.xpose.msra.mxu0 0.0
        %10737 = vmatpush.xpose.msra.mxu0 0.0
        %10738 = vmatpush.xpose.msra.mxu0 0.0
        %10739 = vmatpush.xpose.msra.mxu0 0.0
        %10740 = vmatpush.xpose.msra.mxu0 0.0
        %10741 = vmatpush.xpose.msra.mxu0 0.0
        %10742 = vmatpush.xpose.msra.mxu0 0.0
        %10743 = vmatpush.xpose.msra.mxu0 0.0
        %10744 = vmatpush.xpose.msra.mxu0 0.0
        %10745 = vmatpush.xpose.msra.mxu0 0.0
        %10746 = vmatpush.xpose.msra.mxu0 %v10700
        %10747 = vmatpush.xpose.msra.mxu0 %v10692
        %10748 = vmatmul.f32.gmra.mxu0 %v10716
        %v10749 = vpop.f32.mrf.mxu0
        %v10750 = vadd.f32 0.0, %v10749
        %10751 = vdwg.mxu0
        %10752 = vmatpush.xpose.msra.mxu0 0.0
        %10753 = vmatpush.xpose.msra.mxu0 0.0
        %10754 = vmatpush.xpose.msra.mxu0 0.0
        %10755 = vmatpush.xpose.msra.mxu0 0.0
        %10756 = vmatpush.xpose.msra.mxu0 0.0
        %10757 = vmatpush.xpose.msra.mxu0 0.0
        %10758 = vmatpush.xpose.msra.mxu0 0.0
        %10759 = vmatpush.xpose.msra.mxu0 0.0
        %10760 = vmatpush.xpose.msra.mxu0 0.0
        %10761 = vmatpush.xpose.msra.mxu0 0.0
        %10762 = vmatpush.xpose.msra.mxu0 0.0
        %10763 = vmatpush.xpose.msra.mxu0 0.0
        %10764 = vmatpush.xpose.msra.mxu0 0.0
        %10765 = vmatpush.xpose.msra.mxu0 0.0
        %10766 = vmatpush.xpose.msra.mxu0 %v10701
        %10767 = vmatpush.xpose.msra.mxu0 %v10693
        %10768 = vmatmul.f32.gmra.mxu0 %v10717
        %v10769 = vpop.f32.mrf.mxu0
        %v10770 = vadd.f32 %v10750, %v10769
        %10771 = vdwg.mxu0
        %10772 = vmatpush.xpose.msra.mxu0 0.0
        %10773 = vmatpush.xpose.msra.mxu0 0.0
        %10774 = vmatpush.xpose.msra.mxu0 0.0
        %10775 = vmatpush.xpose.msra.mxu0 0.0
        %10776 = vmatpush.xpose.msra.mxu0 0.0
        %10777 = vmatpush.xpose.msra.mxu0 0.0
        %10778 = vmatpush.xpose.msra.mxu0 0.0
        %10779 = vmatpush.xpose.msra.mxu0 0.0
        %10780 = vmatpush.xpose.msra.mxu0 0.0
        %10781 = vmatpush.xpose.msra.mxu0 0.0
        %10782 = vmatpush.xpose.msra.mxu0 0.0
        %10783 = vmatpush.xpose.msra.mxu0 0.0
        %10784 = vmatpush.xpose.msra.mxu0 0.0
        %10785 = vmatpush.xpose.msra.mxu0 0.0
        %10786 = vmatpush.xpose.msra.mxu0 %v10702
        %10787 = vmatpush.xpose.msra.mxu0 %v10694
        %10788 = vmatmul.f32.gmra.mxu0 %v10718
        %v10789 = vpop.f32.mrf.mxu0
        %v10790 = vadd.f32 %v10770, %v10789
        %10791 = vdwg.mxu0
        %10792 = vmatpush.xpose.msra.mxu0 0.0
        %10793 = vmatpush.xpose.msra.mxu0 0.0
        %10794 = vmatpush.xpose.msra.mxu0 0.0
        %10795 = vmatpush.xpose.msra.mxu0 0.0
        %10796 = vmatpush.xpose.msra.mxu0 0.0
        %10797 = vmatpush.xpose.msra.mxu0 0.0
        %10798 = vmatpush.xpose.msra.mxu0 0.0
        %10799 = vmatpush.xpose.msra.mxu0 0.0
        %10800 = vmatpush.xpose.msra.mxu0 0.0
        %10801 = vmatpush.xpose.msra.mxu0 0.0
        %10802 = vmatpush.xpose.msra.mxu0 0.0
        %10803 = vmatpush.xpose.msra.mxu0 0.0
        %10804 = vmatpush.xpose.msra.mxu0 0.0
        %10805 = vmatpush.xpose.msra.mxu0 0.0
        %10806 = vmatpush.xpose.msra.mxu0 %v10703
        %10807 = vmatpush.xpose.msra.mxu0 %v10695
        %10808 = vmatmul.f32.gmra.mxu0 %v10719
        %v10809 = vpop.f32.mrf.mxu0
        %v10810 = vadd.f32 %v10790, %v10809
        %10811 = vdwg.mxu0
        %10812 = vmatpush.xpose.msra.mxu0 0.0
        %10813 = vmatpush.xpose.msra.mxu0 0.0
        %10814 = vmatpush.xpose.msra.mxu0 0.0
        %10815 = vmatpush.xpose.msra.mxu0 0.0
        %10816 = vmatpush.xpose.msra.mxu0 0.0
        %10817 = vmatpush.xpose.msra.mxu0 0.0
        %10818 = vmatpush.xpose.msra.mxu0 0.0
        %10819 = vmatpush.xpose.msra.mxu0 0.0
        %10820 = vmatpush.xpose.msra.mxu0 0.0
        %10821 = vmatpush.xpose.msra.mxu0 0.0
        %10822 = vmatpush.xpose.msra.mxu0 0.0
        %10823 = vmatpush.xpose.msra.mxu0 0.0
        %10824 = vmatpush.xpose.msra.mxu0 0.0
        %10825 = vmatpush.xpose.msra.mxu0 0.0
        %10826 = vmatpush.xpose.msra.mxu0 %v10704
        %10827 = vmatpush.xpose.msra.mxu0 %v10696
        %10828 = vmatmul.f32.gmra.mxu0 %v10720
        %v10829 = vpop.f32.mrf.mxu0
        %v10830 = vadd.f32 %v10810, %v10829
        %10831 = vdwg.mxu0
        %10832 = vmatpush.xpose.msra.mxu0 0.0
        %10833 = vmatpush.xpose.msra.mxu0 0.0
        %10834 = vmatpush.xpose.msra.mxu0 0.0
        %10835 = vmatpush.xpose.msra.mxu0 0.0
        %10836 = vmatpush.xpose.msra.mxu0 0.0
        %10837 = vmatpush.xpose.msra.mxu0 0.0
        %10838 = vmatpush.xpose.msra.mxu0 0.0
        %10839 = vmatpush.xpose.msra.mxu0 0.0
        %10840 = vmatpush.xpose.msra.mxu0 0.0
        %10841 = vmatpush.xpose.msra.mxu0 0.0
        %10842 = vmatpush.xpose.msra.mxu0 0.0
        %10843 = vmatpush.xpose.msra.mxu0 0.0
        %10844 = vmatpush.xpose.msra.mxu0 0.0
        %10845 = vmatpush.xpose.msra.mxu0 0.0
        %10846 = vmatpush.xpose.msra.mxu0 %v10705
        %10847 = vmatpush.xpose.msra.mxu0 %v10697
        %10848 = vmatmul.f32.gmra.mxu0 %v10721
        %v10849 = vpop.f32.mrf.mxu0
        %v10850 = vadd.f32 %v10830, %v10849
        %10851 = vdwg.mxu0
        %10852 = vmatpush.xpose.msra.mxu0 0.0
        %10853 = vmatpush.xpose.msra.mxu0 0.0
        %10854 = vmatpush.xpose.msra.mxu0 0.0
        %10855 = vmatpush.xpose.msra.mxu0 0.0
        %10856 = vmatpush.xpose.msra.mxu0 0.0
        %10857 = vmatpush.xpose.msra.mxu0 0.0
        %10858 = vmatpush.xpose.msra.mxu0 0.0
        %10859 = vmatpush.xpose.msra.mxu0 0.0
        %10860 = vmatpush.xpose.msra.mxu0 0.0
        %10861 = vmatpush.xpose.msra.mxu0 0.0
        %10862 = vmatpush.xpose.msra.mxu0 0.0
        %10863 = vmatpush.xpose.msra.mxu0 0.0
        %10864 = vmatpush.xpose.msra.mxu0 0.0
        %10865 = vmatpush.xpose.msra.mxu0 0.0
        %10866 = vmatpush.xpose.msra.mxu0 %v10706
        %10867 = vmatpush.xpose.msra.mxu0 %v10698
        %10868 = vmatmul.f32.gmra.mxu0 %v10722
        %v10869 = vpop.f32.mrf.mxu0
        %v10870 = vadd.f32 %v10850, %v10869
        %10871 = vdwg.mxu0
        %10872 = vmatpush.xpose.msra.mxu0 0.0
        %10873 = vmatpush.xpose.msra.mxu0 0.0
        %10874 = vmatpush.xpose.msra.mxu0 0.0
        %10875 = vmatpush.xpose.msra.mxu0 0.0
        %10876 = vmatpush.xpose.msra.mxu0 0.0
        %10877 = vmatpush.xpose.msra.mxu0 0.0
        %10878 = vmatpush.xpose.msra.mxu0 0.0
        %10879 = vmatpush.xpose.msra.mxu0 0.0
        %10880 = vmatpush.xpose.msra.mxu0 0.0
        %10881 = vmatpush.xpose.msra.mxu0 0.0
        %10882 = vmatpush.xpose.msra.mxu0 0.0
        %10883 = vmatpush.xpose.msra.mxu0 0.0
        %10884 = vmatpush.xpose.msra.mxu0 0.0
        %10885 = vmatpush.xpose.msra.mxu0 0.0
        %10886 = vmatpush.xpose.msra.mxu0 %v10707
        %10887 = vmatpush.xpose.msra.mxu0 %v10699
        %10888 = vmatmul.f32.gmra.mxu0 %v10723
        %v10889 = vpop.f32.mrf.mxu0
        %v10890 = vadd.f32 %v10870, %v10889
        %10891 = vdwg.mxu0
        %v10892 = vadd.f32 %v10690, %v10890
        %vm10893 = vcmask 73728
        %10894 = vst.msk [vmem:[%s393] sm:$0x1] %vm10893, %v10892
        %s10895 = sand.u32 %s270, 1
        %s10896 = scalar_lea.sflag [#allocation4], %s10895
        %s10897 = sand.u32 %s270, 1
        %s10898 = scalar_lea.vmem [#allocation5], %s10897
        // Predicated region
        $region69: #{simple_cnn_forward.1} parent=63 // pred_check
          %p10899 = pneg %p280
        $region70: #{simple_cnn_forward.1} parent=63 // pred_check_branch
          %10901 = sbr.rel (%p10899) target = $region72
        $region71: #{simple_cnn_forward.1} parent=63 // pred_region
          %10903 = vsyncadd %s10896, 0
          %s10904 = scalar_lea.hbm %s11, %s26
          %s10906 = sshll.u32 %s10898, 4
          %s10907 = int_to_ptr.vmem [resolvable:$true] %s10906
          %s10908 = sshll.u32 %s10904, 4
          %s10909 = int_to_ptr.hbm [resolvable:$true] %s10908
          %10911 = dma.vmem_to_hbm [thread:$0]  %s10907, 16, %s10909, %s10896
        $region72: #{simple_cnn_forward.1} parent=63 // pred_fallthru
          _
      $region64: #{simple_cnn_forward.1} parent=5 // pred_fallthru
        _
      %p10912 = scmp.le.s32.totalorder 2, %s21
      // Predicated region
      $region73: #{simple_cnn_forward.1} parent=5 // pred_check
        %p10913 = pneg %p10912
      $region74: #{simple_cnn_forward.1} parent=5 // pred_check_branch
        %10915 = sbr.rel (%p10913) target = $region76
      $region75: #{simple_cnn_forward.1} parent=5 // pred_region
        %s10916 = ssub.s32 %s21, 2
        // Predicated region
        $region77: #{simple_cnn_forward.1} parent=75 // pred_check
          %p10917 = pneg %p286
        $region78: #{simple_cnn_forward.1} parent=75 // pred_check_branch
          %10919 = sbr.rel (%p10917) target = $region80
        $region79: #{simple_cnn_forward.1} parent=75 // pred_region
          %s10920 = sand.u32 %s271, 1
          %s10921 = scalar_lea.sflag [#allocation4], %s10920
          %s10922 = sand.u32 %s271, 1
          %s10923 = scalar_lea.vmem [#allocation5], %s10922
          %10925 = dma.done %s10921, 16
        $region80: #{simple_cnn_forward.1} parent=75 // pred_fallthru
          _
      $region76: #{simple_cnn_forward.1} parent=5 // pred_fallthru
        _
    $region6: #{simple_cnn_forward.1} parent=1 // loop_footer
      %s25 = sadd.s32 1, %s21
    $region7: #{simple_cnn_forward.1} parent=1 // loop_footer_branch
      %20 = sbr.rel target = $region3
    $region8: #{simple_cnn_forward.1} parent=1 // loop_exit
      _
    %10926 = vsyncpa [#allocation3], 1
    %s10927 = scalar_lea.sflag [#allocation3], 1
    %10928 = vsyncpa %s10927, 1
    %10929 = vsyncpa [#allocation4], 1
    %s10930 = scalar_lea.sflag [#allocation4], 1
    %10931 = vsyncpa %s10930, 1

</llo_original>
